<compile_context>
chip_gen: v7x
topology: tpu7x:2x2x1
jax: 0.10.0
libtpu: 0.0.40
codegen_flags: <defaults>
</compile_context>

<pallas_src>
import functools

import jax
import jax.numpy as jnp
import numpy as np
from jax.experimental import pallas as pl
from jax.experimental.pallas import tpu as pltpu

CHANNELS = 1
IMG_SIZE = 16
N_CLASSES = 10
CODE_DIM = 2
BN_EPS = 0.8          # nn.BatchNorm3d(out_filters, 0.8) -> eps = 0.8
LEAKY_SLOPE = 0.2

# (cin, cout, bn) per block; spatial side halves every block: 16 -> 8 -> 4 -> 2 -> 1
BLOCK_CFG = [(CHANNELS, 16, False), (16, 32, True), (32, 64, True), (64, 128, True)]


# ----------------------------------------------------------------------------
# The single fused Pallas kernel
# ----------------------------------------------------------------------------
def _leaky(x):
    return jnp.where(x >= 0, x, LEAKY_SLOPE * x)


def _fused_disc_kernel(p0_ref, w0_ref, b0_ref,
                       s1_ref, w1_ref, a1_ref, q1_ref,
                       s2_ref, w2_ref, a2_ref, q2_ref,
                       s3_ref, w3_ref, a3_ref,
                       wa_ref, ba_ref, wx_ref, bx_ref, wl_ref, bl_ref,
                       adv_ref, aux_ref, lat_ref, *, counts):
    """Whole Discriminator forward, activations resident in VMEM.

    Activation layout everywhere: rows = (n, d, h), lanes = (w, c); every conv
    output has exactly Wo*Cout = 128 lanes.  Conv3d(k3,s2,p1) is lowered to
    sum_t (S_t @ X) @ B_t (t = the 9 (kd,kh) taps); BatchNorm uses train-mode
    batch statistics (eps=0.8) with one-pass sums pooled per channel via Q and a
    fused scale/shift.
    """
    f32 = jnp.float32

    # ---- block 0: conv(C->16) + LeakyReLU (no BN); taps pre-gathered into p0 ----
    x = jnp.dot(p0_ref[...], w0_ref[...], preferred_element_type=f32) + b0_ref[...]
    x = _leaky(x)                                            # (N*8*8, 128)

    def conv_bn_block(x, s_ref, w_ref, a_ref, q_ref, count):
        acc = None
        for t in range(9):                                   # static unroll: MXU only
            rows = jnp.dot(s_ref[t], x, preferred_element_type=f32)      # D/H gather
            part = jnp.dot(rows, w_ref[t], preferred_element_type=f32)   # kw, cin contraction
            acc = part if acc is None else acc + part
        acc = _leaky(acc + a_ref[0:1, :])                    # bias + LeakyReLU(0.2)
        # train-mode BatchNorm, eps=0.8: one-pass stats, folded scale/shift
        # (E[x^2]-E[x]^2 form is safe here because eps=0.8 is large).
        s1 = jnp.sum(acc, axis=0, keepdims=True)
        s2 = jnp.sum(acc * acc, axis=0, keepdims=True)
        if q_ref is not None:                                # pool the Wo lane groups / channel
            s1 = jnp.dot(s1, q_ref[...], preferred_element_type=f32)
            s2 = jnp.dot(s2, q_ref[...], preferred_element_type=f32)
        mean = s1 * (1.0 / count)
        var = s2 * (1.0 / count) - mean * mean               # biased variance
        scale = a_ref[1:2, :] * jax.lax.rsqrt(var + BN_EPS)  # gamma * inv_std
        shift = a_ref[2:3, :] - mean * scale                 # beta - mean * scale
        return acc * scale + shift

    x = conv_bn_block(x, s1_ref, w1_ref, a1_ref, q1_ref, counts[0])   # (N*4*4, 128)
    x = conv_bn_block(x, s2_ref, w2_ref, a2_ref, q2_ref, counts[1])   # (N*2*2, 128)
    x = conv_bn_block(x, s3_ref, w3_ref, a3_ref, None, counts[2])     # (N, 128) = feats

    # ---- fused heads (feature lane order == PyTorch .view(N, -1) since ds=1) ----
    adv_ref[...] = jnp.dot(x, wa_ref[...], preferred_element_type=f32) + ba_ref[...]
    logits = jnp.dot(x, wx_ref[...], preferred_element_type=f32) + bx_ref[...]
    m = jnp.max(logits, axis=-1, keepdims=True)
    e = jnp.exp(logits - m)
    aux_ref[...] = e / jnp.sum(e, axis=-1, keepdims=True)    # nn.Softmax() -> dim=1
    lat_ref[...] = jnp.dot(x, wl_ref[...], preferred_element_type=f32) + bl_ref[...]


# ----------------------------------------------------------------------------
# pallas_call wrapper
# ----------------------------------------------------------------------------
def _full_spec(shape):
    nd = len(shape)
    return pl.BlockSpec(shape, lambda i: (0,) * nd)


def _discriminator_pallas(p0, packed, n):
    # elements per channel for the BN of blocks 1..3 (N * Do * Ho * Wo)
    counts = tuple(float(n * (IMG_SIZE // 2 ** (i + 1)) ** 3) for i in (1, 2, 3))
    kernel = functools.partial(_fused_disc_kernel, counts=counts)
    args = (p0,
            packed["w0"], packed["b0"],
            packed["s1"], packed["w1"], packed["a1"], packed["q1"],
            packed["s2"], packed["w2"], packed["a2"], packed["q2"],
            packed["s3"], packed["w3"], packed["a3"],
            packed["wa"], packed["ba"], packed["wx"], packed["bx"],
            packed["wl"], packed["bl"])
    out_shape = (jax.ShapeDtypeStruct((n, 1), jnp.float32),
                 jax.ShapeDtypeStruct((n, N_CLASSES), jnp.float32),
                 jax.ShapeDtypeStruct((n, CODE_DIM), jnp.float32))
    return pl.pallas_call(
        kernel,
        grid=(1,),
        in_specs=[_full_spec(a.shape) for a in args],
        out_specs=tuple(_full_spec(s.shape) for s in out_shape),
        out_shape=out_shape,
        compiler_params=pltpu.CompilerParams(dimension_semantics=("arbitrary",)),
        cost_estimate=pl.CostEstimate(flops=28_000_000, transcendentals=512,
                                      bytes_accessed=2_500_000),
    )(*args)


def discriminator_forward(img, packed):
    """img: (N, C, D, H, W) float32, PyTorch NCDHW layout."""
    n, c, d, h, w = img.shape
    do, ho = d // 2, h // 2
    # Block-0 tap gather: the only XLA glue (9 strided D/H slices of a ~32 KiB input),
    # producing rows = (n, do, ho), lanes = (tap, w, c).
    x = jnp.transpose(img, (0, 2, 3, 4, 1)).reshape(n, d, h, w * c)
    xp = jnp.pad(x, ((0, 0), (1, 1), (1, 1), (0, 0)))
    taps = []
    for kd in range(3):
        for kh in range(3):
            t = xp[:, kd:kd + 2 * do - 1:2, kh:kh + 2 * ho - 1:2, :]
            taps.append(t.reshape(n * do * ho, w * c))
    p0 = jnp.concatenate(taps, axis=1)          # (N*Do*Ho, 9*W*C) = (128, 144)
    return _discriminator_pallas(p0, packed, n)


# ----------------------------------------------------------------------------
# Host-side packing of constants (done once, outside jit)
# ----------------------------------------------------------------------------
def _banded_weight(w, wi, wo):
    """w: (cout, cin, 3, 3, 3) -> B: (9, wi*cin, wo*cout) banded matrices.

    B[t=kd*3+kh, wpos*cin+ci, o*cout+co] = w[co, ci, kd, kh, wpos - 2*o + 1]
    (zero where the kw index falls outside [0,3), i.e. in the W zero padding).
    """
    w = np.asarray(w, np.float32)
    cout, cin = w.shape[0], w.shape[1]
    B = np.zeros((9, wi * cin, wo * cout), np.float32)
    for kd in range(3):
        for kh in range(3):
            t = kd * 3 + kh
            for o in range(wo):
                for kw in range(3):
                    i = 2 * o + kw - 1
                    if 0 <= i < wi:
                        B[t, i * cin:(i + 1) * cin, o * cout:(o + 1) * cout] = \
                            w[:, :, kd, kh, kw].T
    return B


def _row_select(n, si, so):
    """0/1 gather matrices S: (9, n*so*so, n*si*si).

    S[t=kd*3+kh] selects input row (b, 2d+kd-1, 2h+kh-1) for output row (b, d, h);
    rows whose tap lands in the D/H zero padding stay all-zero.
    """
    S = np.zeros((9, n * so * so, n * si * si), np.float32)
    for kd in range(3):
        for kh in range(3):
            t = kd * 3 + kh
            for b in range(n):
                for d in range(so):
                    dd = 2 * d + kd - 1
                    if not 0 <= dd < si:
                        continue
                    for h in range(so):
                        hh = 2 * h + kh - 1
                        if not 0 <= hh < si:
                            continue
                        S[t, (b * so + d) * so + h, (b * si + dd) * si + hh] = 1.0
    return S


def _chan_pool(wo, cout):
    """Q: (wo*cout, wo*cout) summing each channel's wo lane-group and broadcasting
    the per-channel total back to every lane of that channel (tile of I_cout)."""
    return np.tile(np.eye(cout, dtype=np.float32), (wo, wo))


def pack_params(params, batch):
    """Kernel-ready constant operands.  Bakes in batch size and IMG_SIZE."""
    packed = {}

    # block 0: banded weight + lane-tiled bias (taps are gathered in the wrapper)
    cin0, cout0, _ = BLOCK_CFG[0]
    wo0 = IMG_SIZE // 2
    w0b = _banded_weight(params["conv0_w"], IMG_SIZE, wo0)        # (9, 16, 128)
    packed["w0"] = jnp.asarray(w0b.reshape(9 * IMG_SIZE * cin0, wo0 * cout0))
    packed["b0"] = jnp.asarray(
        np.tile(np.asarray(params["conv0_b"], np.float32), wo0)[None, :])

    for i in (1, 2, 3):
        cin, cout, _ = BLOCK_CFG[i]
        si = IMG_SIZE // 2 ** i
        so = si // 2
        packed[f"s{i}"] = jnp.asarray(_row_select(batch, si, so))
        packed[f"w{i}"] = jnp.asarray(_banded_weight(params[f"conv{i}_w"], si, so))
        bias = np.tile(np.asarray(params[f"conv{i}_b"], np.float32), so)
        gamma = np.tile(np.asarray(params[f"bn{i}_g"], np.float32), so)
        beta = np.tile(np.asarray(params[f"bn{i}_b"], np.float32), so)
        packed[f"a{i}"] = jnp.asarray(np.stack([bias, gamma, beta], axis=0))
        if so > 1:                       # block 3 has Wo=1 -> pooling is identity
            packed[f"q{i}"] = jnp.asarray(_chan_pool(so, cout))

    packed["wa"] = jnp.asarray(params["adv_w"], jnp.float32)
    packed["ba"] = jnp.asarray(params["adv_b"], jnp.float32).reshape(1, 1)
    packed["wx"] = jnp.asarray(params["aux_w"], jnp.float32)
    packed["bx"] = jnp.asarray(params["aux_b"], jnp.float32).reshape(1, N_CLASSES)
    packed["wl"] = jnp.asarray(params["lat_w"], jnp.float32)
    packed["bl"] = jnp.asarray(params["lat_b"], jnp.float32).reshape(1, CODE_DIM)
    return packed


# ----------------------------------------------------------------------------
# Parameter init (deterministic, synthetic) + pure-JAX reference for self-check
# ----------------------------------------------------------------------------
def init_params(key):
    params = {}
    for i, (cin, cout, bn) in enumerate(BLOCK_CFG):
        key, kw, kb = jax.random.split(key, 3)
        params[f"conv{i}_w"] = 0.05 * jax.random.normal(kw, (cout, cin, 3, 3, 3), jnp.float32)
        params[f"conv{i}_b"] = 0.05 * jax.random.normal(kb, (cout,), jnp.float32)
        if bn:
            key, kg, kbt = jax.random.split(key, 3)
            # randomized (instead of PyTorch's 1/0 default) so the self-check
            # also exercises the gamma/beta lane packing
            params[f"bn{i}_g"] = 1.0 + 0.1 * jax.random.normal(kg, (cout,), jnp.float32)
            params[f"bn{i}_b"] = 0.1 * jax.random.normal(kbt, (cout,), jnp.float32)

    ds = IMG_SIZE // 2 ** 4
    feat = 128 * ds ** 3
    key, k1, k2, k3, k4, k5, k6 = jax.random.split(key, 7)
    params["adv_w"] = 0.05 * jax.random.normal(k1, (feat, 1), jnp.float32)
    params["adv_b"] = 0.05 * jax.random.normal(k2, (1,), jnp.float32)
    params["aux_w"] = 0.05 * jax.random.normal(k3, (feat, N_CLASSES), jnp.float32)
    params["aux_b"] = 0.05 * jax.random.normal(k4, (N_CLASSES,), jnp.float32)
    params["lat_w"] = 0.05 * jax.random.normal(k5, (feat, CODE_DIM), jnp.float32)
    params["lat_b"] = 0.05 * jax.random.normal(k6, (CODE_DIM,), jnp.float32)
    return params


def _reference_forward(img, params):
    """Pure-JAX (XLA) reference with PyTorch train-mode semantics."""
    dn = ("NCDHW", "OIDHW", "NCDHW")
    x = img
    for i, (_, _, bn) in enumerate(BLOCK_CFG):
        x = jax.lax.conv_general_dilated(
            x, params[f"conv{i}_w"], window_strides=(2, 2, 2),
            padding=((1, 1), (1, 1), (1, 1)), dimension_numbers=dn)
        x = x + params[f"conv{i}_b"][None, :, None, None, None]
        x = jnp.where(x >= 0, x, LEAKY_SLOPE * x)
        if bn:
            mean = jnp.mean(x, axis=(0, 2, 3, 4), keepdims=True)
            var = jnp.mean(jnp.square(x - mean), axis=(0, 2, 3, 4), keepdims=True)
            x = (x - mean) * jax.lax.rsqrt(var + BN_EPS)
            x = (x * params[f"bn{i}_g"][None, :, None, None, None]
                 + params[f"bn{i}_b"][None, :, None, None, None])
    f = x.reshape(x.shape[0], -1)
    validity = f @ params["adv_w"] + params["adv_b"]
    label = jax.nn.softmax(f @ params["aux_w"] + params["aux_b"], axis=-1)
    latent = f @ params["lat_w"] + params["lat_b"]
    return validity, label, latent


if __name__ == "__main__":
    key = jax.random.PRNGKey(0)
    pkey, xkey = jax.random.split(key)
    params = init_params(pkey)

    N = 2
    img = jax.random.normal(xkey, (N, CHANNELS, IMG_SIZE, IMG_SIZE, IMG_SIZE), jnp.float32)

    packed = pack_params(params, batch=N)
    fwd = jax.jit(discriminator_forward)
    validity, label, latent_code = fwd(img, packed)
    jax.block_until_ready((validity, label, latent_code))

    assert validity.shape == (N, 1)
    assert label.shape == (N, N_CLASSES)
    assert latent_code.shape == (N, CODE_DIM)
    assert bool(jnp.all(jnp.abs(jnp.sum(label, axis=-1) - 1.0) < 1e-4))

    # numerical self-check against a pure-JAX/XLA reference of the same module
    ref_v, ref_l, ref_c = jax.jit(_reference_forward)(img, params)
    tol = 3e-2
    assert bool(jnp.max(jnp.abs(validity - ref_v)) < tol)
    assert bool(jnp.max(jnp.abs(label - ref_l)) < tol)
    assert bool(jnp.max(jnp.abs(latent_code - ref_c)) < tol)

    print("KERNEL_OK")
</pallas_src>

<mosaic_0001>
module attributes {stable_mosaic.version = 11 : i64} {
  func.func @_fused_disc_kernel(%arg0: i32, %arg1: memref<128x144xf32, #tpu.memory_space<vmem>>, %arg2: memref<144x128xf32, #tpu.memory_space<vmem>>, %arg3: memref<1x128xf32, #tpu.memory_space<vmem>>, %arg4: memref<9x32x128xf32, #tpu.memory_space<vmem>>, %arg5: memref<9x128x128xf32, #tpu.memory_space<vmem>>, %arg6: memref<3x128xf32, #tpu.memory_space<vmem>>, %arg7: memref<128x128xf32, #tpu.memory_space<vmem>>, %arg8: memref<9x8x32xf32, #tpu.memory_space<vmem>>, %arg9: memref<9x128x128xf32, #tpu.memory_space<vmem>>, %arg10: memref<3x128xf32, #tpu.memory_space<vmem>>, %arg11: memref<128x128xf32, #tpu.memory_space<vmem>>, %arg12: memref<9x2x8xf32, #tpu.memory_space<vmem>>, %arg13: memref<9x128x128xf32, #tpu.memory_space<vmem>>, %arg14: memref<3x128xf32, #tpu.memory_space<vmem>>, %arg15: memref<128x1xf32, #tpu.memory_space<vmem>>, %arg16: memref<1x1xf32, #tpu.memory_space<vmem>>, %arg17: memref<128x10xf32, #tpu.memory_space<vmem>>, %arg18: memref<1x10xf32, #tpu.memory_space<vmem>>, %arg19: memref<128x2xf32, #tpu.memory_space<vmem>>, %arg20: memref<1x2xf32, #tpu.memory_space<vmem>>, %arg21: memref<2x1xf32, #tpu.memory_space<vmem>>, %arg22: memref<2x10xf32, #tpu.memory_space<vmem>>, %arg23: memref<2x2xf32, #tpu.memory_space<vmem>>) attributes {dimension_semantics = [#tpu.dimension_semantics<arbitrary>], iteration_bounds = array<i64: 1>, scalar_prefetch = 0 : i64, scratch_operands = 0 : i64, tpu.core_type = #tpu.core_type<tc>, window_params = [{pipeline_mode = #tpu.pipeline_mode<synchronous>, transform_indices = @transform_0, window_bounds = array<i64: 128, 144>}, {pipeline_mode = #tpu.pipeline_mode<synchronous>, transform_indices = @transform_1, window_bounds = array<i64: 144, 128>}, {pipeline_mode = #tpu.pipeline_mode<synchronous>, transform_indices = @transform_2, window_bounds = array<i64: 1, 128>}, {pipeline_mode = #tpu.pipeline_mode<synchronous>, transform_indices = @transform_3, window_bounds = array<i64: 9, 32, 128>}, {pipeline_mode = #tpu.pipeline_mode<synchronous>, transform_indices = @transform_4, window_bounds = array<i64: 9, 128, 128>}, {pipeline_mode = #tpu.pipeline_mode<synchronous>, transform_indices = @transform_5, window_bounds = array<i64: 3, 128>}, {pipeline_mode = #tpu.pipeline_mode<synchronous>, transform_indices = @transform_6, window_bounds = array<i64: 128, 128>}, {pipeline_mode = #tpu.pipeline_mode<synchronous>, transform_indices = @transform_7, window_bounds = array<i64: 9, 8, 32>}, {pipeline_mode = #tpu.pipeline_mode<synchronous>, transform_indices = @transform_8, window_bounds = array<i64: 9, 128, 128>}, {pipeline_mode = #tpu.pipeline_mode<synchronous>, transform_indices = @transform_9, window_bounds = array<i64: 3, 128>}, {pipeline_mode = #tpu.pipeline_mode<synchronous>, transform_indices = @transform_10, window_bounds = array<i64: 128, 128>}, {pipeline_mode = #tpu.pipeline_mode<synchronous>, transform_indices = @transform_11, window_bounds = array<i64: 9, 2, 8>}, {pipeline_mode = #tpu.pipeline_mode<synchronous>, transform_indices = @transform_12, window_bounds = array<i64: 9, 128, 128>}, {pipeline_mode = #tpu.pipeline_mode<synchronous>, transform_indices = @transform_13, window_bounds = array<i64: 3, 128>}, {pipeline_mode = #tpu.pipeline_mode<synchronous>, transform_indices = @transform_14, window_bounds = array<i64: 128, 1>}, {pipeline_mode = #tpu.pipeline_mode<synchronous>, transform_indices = @transform_15, window_bounds = array<i64: 1, 1>}, {pipeline_mode = #tpu.pipeline_mode<synchronous>, transform_indices = @transform_16, window_bounds = array<i64: 128, 10>}, {pipeline_mode = #tpu.pipeline_mode<synchronous>, transform_indices = @transform_17, window_bounds = array<i64: 1, 10>}, {pipeline_mode = #tpu.pipeline_mode<synchronous>, transform_indices = @transform_18, window_bounds = array<i64: 128, 2>}, {pipeline_mode = #tpu.pipeline_mode<synchronous>, transform_indices = @transform_19, window_bounds = array<i64: 1, 2>}, {pipeline_mode = #tpu.pipeline_mode<synchronous>, transform_indices = @transform_20, window_bounds = array<i64: 2, 1>}, {pipeline_mode = #tpu.pipeline_mode<synchronous>, transform_indices = @transform_21, window_bounds = array<i64: 2, 10>}, {pipeline_mode = #tpu.pipeline_mode<synchronous>, transform_indices = @transform_22, window_bounds = array<i64: 2, 2>}]} {
    %c0 = arith.constant 0 : index
    %c0_0 = arith.constant 0 : index
    %0 = vector.load %arg1[%c0, %c0_0] : memref<128x144xf32, #tpu.memory_space<vmem>>, vector<128x144xf32>
    %c0_1 = arith.constant 0 : index
    %c0_2 = arith.constant 0 : index
    %1 = vector.load %arg2[%c0_1, %c0_2] : memref<144x128xf32, #tpu.memory_space<vmem>>, vector<144x128xf32>
    %cst = arith.constant dense<0.000000e+00> : vector<128x128xf32>
    %2 = tpu.matmul %0, %1, %cst {dimension_numbers = #tpu.dot_dimension_numbers<[1], [0], [0], [1], [0, 0, 1, 1], [], []>} : vector<128x144xf32>, vector<144x128xf32>, vector<128x128xf32> -> vector<128x128xf32>
    %c0_3 = arith.constant 0 : index
    %c0_4 = arith.constant 0 : index
    %3 = vector.load %arg3[%c0_3, %c0_4] : memref<1x128xf32, #tpu.memory_space<vmem>>, vector<1x128xf32>
    %4 = vector.broadcast %3 : vector<1x128xf32> to vector<128x128xf32>
    %5 = arith.addf %2, %4 : vector<128x128xf32>
    %cst_5 = arith.constant 0.000000e+00 : f32
    %6 = vector.broadcast %cst_5 : f32 to vector<128x128xf32>
    %7 = arith.cmpf oge, %5, %6 : vector<128x128xf32>
    %cst_6 = arith.constant 2.000000e-01 : f32
    %8 = vector.broadcast %cst_6 : f32 to vector<128x128xf32>
    %9 = arith.mulf %8, %5 : vector<128x128xf32>
    %10 = arith.select %7, %5, %9 : vector<128x128xi1>, vector<128x128xf32>
    %c0_7 = arith.constant 0 : index
    %c0_8 = arith.constant 0 : index
    %c0_9 = arith.constant 0 : index
    %11 = vector.load %arg4[%c0_7, %c0_8, %c0_9] : memref<9x32x128xf32, #tpu.memory_space<vmem>>, vector<1x32x128xf32>
    %12 = vector.shape_cast %11 : vector<1x32x128xf32> to vector<32x128xf32>
    %cst_10 = arith.constant dense<0.000000e+00> : vector<32x128xf32>
    %13 = tpu.matmul %12, %10, %cst_10 {dimension_numbers = #tpu.dot_dimension_numbers<[1], [0], [0], [1], [0, 0, 1, 1], [], []>} : vector<32x128xf32>, vector<128x128xf32>, vector<32x128xf32> -> vector<32x128xf32>
    %c0_11 = arith.constant 0 : index
    %c0_12 = arith.constant 0 : index
    %c0_13 = arith.constant 0 : index
    %14 = vector.load %arg5[%c0_11, %c0_12, %c0_13] : memref<9x128x128xf32, #tpu.memory_space<vmem>>, vector<1x128x128xf32>
    %15 = vector.shape_cast %14 : vector<1x128x128xf32> to vector<128x128xf32>
    %cst_14 = arith.constant dense<0.000000e+00> : vector<32x128xf32>
    %16 = tpu.matmul %13, %15, %cst_14 {dimension_numbers = #tpu.dot_dimension_numbers<[1], [0], [0], [1], [0, 0, 1, 1], [], []>} : vector<32x128xf32>, vector<128x128xf32>, vector<32x128xf32> -> vector<32x128xf32>
    %c1 = arith.constant 1 : index
    %c0_15 = arith.constant 0 : index
    %c0_16 = arith.constant 0 : index
    %17 = vector.load %arg4[%c1, %c0_15, %c0_16] : memref<9x32x128xf32, #tpu.memory_space<vmem>>, vector<1x32x128xf32>
    %18 = vector.shape_cast %17 : vector<1x32x128xf32> to vector<32x128xf32>
    %cst_17 = arith.constant dense<0.000000e+00> : vector<32x128xf32>
    %19 = tpu.matmul %18, %10, %cst_17 {dimension_numbers = #tpu.dot_dimension_numbers<[1], [0], [0], [1], [0, 0, 1, 1], [], []>} : vector<32x128xf32>, vector<128x128xf32>, vector<32x128xf32> -> vector<32x128xf32>
    %c1_18 = arith.constant 1 : index
    %c0_19 = arith.constant 0 : index
    %c0_20 = arith.constant 0 : index
    %20 = vector.load %arg5[%c1_18, %c0_19, %c0_20] : memref<9x128x128xf32, #tpu.memory_space<vmem>>, vector<1x128x128xf32>
    %21 = vector.shape_cast %20 : vector<1x128x128xf32> to vector<128x128xf32>
    %cst_21 = arith.constant dense<0.000000e+00> : vector<32x128xf32>
    %22 = tpu.matmul %19, %21, %cst_21 {dimension_numbers = #tpu.dot_dimension_numbers<[1], [0], [0], [1], [0, 0, 1, 1], [], []>} : vector<32x128xf32>, vector<128x128xf32>, vector<32x128xf32> -> vector<32x128xf32>
    %23 = arith.addf %16, %22 : vector<32x128xf32>
    %c2 = arith.constant 2 : index
    %c0_22 = arith.constant 0 : index
    %c0_23 = arith.constant 0 : index
    %24 = vector.load %arg4[%c2, %c0_22, %c0_23] : memref<9x32x128xf32, #tpu.memory_space<vmem>>, vector<1x32x128xf32>
    %25 = vector.shape_cast %24 : vector<1x32x128xf32> to vector<32x128xf32>
    %cst_24 = arith.constant dense<0.000000e+00> : vector<32x128xf32>
    %26 = tpu.matmul %25, %10, %cst_24 {dimension_numbers = #tpu.dot_dimension_numbers<[1], [0], [0], [1], [0, 0, 1, 1], [], []>} : vector<32x128xf32>, vector<128x128xf32>, vector<32x128xf32> -> vector<32x128xf32>
    %c2_25 = arith.constant 2 : index
    %c0_26 = arith.constant 0 : index
    %c0_27 = arith.constant 0 : index
    %27 = vector.load %arg5[%c2_25, %c0_26, %c0_27] : memref<9x128x128xf32, #tpu.memory_space<vmem>>, vector<1x128x128xf32>
    %28 = vector.shape_cast %27 : vector<1x128x128xf32> to vector<128x128xf32>
    %cst_28 = arith.constant dense<0.000000e+00> : vector<32x128xf32>
    %29 = tpu.matmul %26, %28, %cst_28 {dimension_numbers = #tpu.dot_dimension_numbers<[1], [0], [0], [1], [0, 0, 1, 1], [], []>} : vector<32x128xf32>, vector<128x128xf32>, vector<32x128xf32> -> vector<32x128xf32>
    %30 = arith.addf %23, %29 : vector<32x128xf32>
    %c3 = arith.constant 3 : index
    %c0_29 = arith.constant 0 : index
    %c0_30 = arith.constant 0 : index
    %31 = vector.load %arg4[%c3, %c0_29, %c0_30] : memref<9x32x128xf32, #tpu.memory_space<vmem>>, vector<1x32x128xf32>
    %32 = vector.shape_cast %31 : vector<1x32x128xf32> to vector<32x128xf32>
    %cst_31 = arith.constant dense<0.000000e+00> : vector<32x128xf32>
    %33 = tpu.matmul %32, %10, %cst_31 {dimension_numbers = #tpu.dot_dimension_numbers<[1], [0], [0], [1], [0, 0, 1, 1], [], []>} : vector<32x128xf32>, vector<128x128xf32>, vector<32x128xf32> -> vector<32x128xf32>
    %c3_32 = arith.constant 3 : index
    %c0_33 = arith.constant 0 : index
    %c0_34 = arith.constant 0 : index
    %34 = vector.load %arg5[%c3_32, %c0_33, %c0_34] : memref<9x128x128xf32, #tpu.memory_space<vmem>>, vector<1x128x128xf32>
    %35 = vector.shape_cast %34 : vector<1x128x128xf32> to vector<128x128xf32>
    %cst_35 = arith.constant dense<0.000000e+00> : vector<32x128xf32>
    %36 = tpu.matmul %33, %35, %cst_35 {dimension_numbers = #tpu.dot_dimension_numbers<[1], [0], [0], [1], [0, 0, 1, 1], [], []>} : vector<32x128xf32>, vector<128x128xf32>, vector<32x128xf32> -> vector<32x128xf32>
    %37 = arith.addf %30, %36 : vector<32x128xf32>
    %c4 = arith.constant 4 : index
    %c0_36 = arith.constant 0 : index
    %c0_37 = arith.constant 0 : index
    %38 = vector.load %arg4[%c4, %c0_36, %c0_37] : memref<9x32x128xf32, #tpu.memory_space<vmem>>, vector<1x32x128xf32>
    %39 = vector.shape_cast %38 : vector<1x32x128xf32> to vector<32x128xf32>
    %cst_38 = arith.constant dense<0.000000e+00> : vector<32x128xf32>
    %40 = tpu.matmul %39, %10, %cst_38 {dimension_numbers = #tpu.dot_dimension_numbers<[1], [0], [0], [1], [0, 0, 1, 1], [], []>} : vector<32x128xf32>, vector<128x128xf32>, vector<32x128xf32> -> vector<32x128xf32>
    %c4_39 = arith.constant 4 : index
    %c0_40 = arith.constant 0 : index
    %c0_41 = arith.constant 0 : index
    %41 = vector.load %arg5[%c4_39, %c0_40, %c0_41] : memref<9x128x128xf32, #tpu.memory_space<vmem>>, vector<1x128x128xf32>
    %42 = vector.shape_cast %41 : vector<1x128x128xf32> to vector<128x128xf32>
    %cst_42 = arith.constant dense<0.000000e+00> : vector<32x128xf32>
    %43 = tpu.matmul %40, %42, %cst_42 {dimension_numbers = #tpu.dot_dimension_numbers<[1], [0], [0], [1], [0, 0, 1, 1], [], []>} : vector<32x128xf32>, vector<128x128xf32>, vector<32x128xf32> -> vector<32x128xf32>
    %44 = arith.addf %37, %43 : vector<32x128xf32>
    %c5 = arith.constant 5 : index
    %c0_43 = arith.constant 0 : index
    %c0_44 = arith.constant 0 : index
    %45 = vector.load %arg4[%c5, %c0_43, %c0_44] : memref<9x32x128xf32, #tpu.memory_space<vmem>>, vector<1x32x128xf32>
    %46 = vector.shape_cast %45 : vector<1x32x128xf32> to vector<32x128xf32>
    %cst_45 = arith.constant dense<0.000000e+00> : vector<32x128xf32>
    %47 = tpu.matmul %46, %10, %cst_45 {dimension_numbers = #tpu.dot_dimension_numbers<[1], [0], [0], [1], [0, 0, 1, 1], [], []>} : vector<32x128xf32>, vector<128x128xf32>, vector<32x128xf32> -> vector<32x128xf32>
    %c5_46 = arith.constant 5 : index
    %c0_47 = arith.constant 0 : index
    %c0_48 = arith.constant 0 : index
    %48 = vector.load %arg5[%c5_46, %c0_47, %c0_48] : memref<9x128x128xf32, #tpu.memory_space<vmem>>, vector<1x128x128xf32>
    %49 = vector.shape_cast %48 : vector<1x128x128xf32> to vector<128x128xf32>
    %cst_49 = arith.constant dense<0.000000e+00> : vector<32x128xf32>
    %50 = tpu.matmul %47, %49, %cst_49 {dimension_numbers = #tpu.dot_dimension_numbers<[1], [0], [0], [1], [0, 0, 1, 1], [], []>} : vector<32x128xf32>, vector<128x128xf32>, vector<32x128xf32> -> vector<32x128xf32>
    %51 = arith.addf %44, %50 : vector<32x128xf32>
    %c6 = arith.constant 6 : index
    %c0_50 = arith.constant 0 : index
    %c0_51 = arith.constant 0 : index
    %52 = vector.load %arg4[%c6, %c0_50, %c0_51] : memref<9x32x128xf32, #tpu.memory_space<vmem>>, vector<1x32x128xf32>
    %53 = vector.shape_cast %52 : vector<1x32x128xf32> to vector<32x128xf32>
    %cst_52 = arith.constant dense<0.000000e+00> : vector<32x128xf32>
    %54 = tpu.matmul %53, %10, %cst_52 {dimension_numbers = #tpu.dot_dimension_numbers<[1], [0], [0], [1], [0, 0, 1, 1], [], []>} : vector<32x128xf32>, vector<128x128xf32>, vector<32x128xf32> -> vector<32x128xf32>
    %c6_53 = arith.constant 6 : index
    %c0_54 = arith.constant 0 : index
    %c0_55 = arith.constant 0 : index
    %55 = vector.load %arg5[%c6_53, %c0_54, %c0_55] : memref<9x128x128xf32, #tpu.memory_space<vmem>>, vector<1x128x128xf32>
    %56 = vector.shape_cast %55 : vector<1x128x128xf32> to vector<128x128xf32>
    %cst_56 = arith.constant dense<0.000000e+00> : vector<32x128xf32>
    %57 = tpu.matmul %54, %56, %cst_56 {dimension_numbers = #tpu.dot_dimension_numbers<[1], [0], [0], [1], [0, 0, 1, 1], [], []>} : vector<32x128xf32>, vector<128x128xf32>, vector<32x128xf32> -> vector<32x128xf32>
    %58 = arith.addf %51, %57 : vector<32x128xf32>
    %c7 = arith.constant 7 : index
    %c0_57 = arith.constant 0 : index
    %c0_58 = arith.constant 0 : index
    %59 = vector.load %arg4[%c7, %c0_57, %c0_58] : memref<9x32x128xf32, #tpu.memory_space<vmem>>, vector<1x32x128xf32>
    %60 = vector.shape_cast %59 : vector<1x32x128xf32> to vector<32x128xf32>
    %cst_59 = arith.constant dense<0.000000e+00> : vector<32x128xf32>
    %61 = tpu.matmul %60, %10, %cst_59 {dimension_numbers = #tpu.dot_dimension_numbers<[1], [0], [0], [1], [0, 0, 1, 1], [], []>} : vector<32x128xf32>, vector<128x128xf32>, vector<32x128xf32> -> vector<32x128xf32>
    %c7_60 = arith.constant 7 : index
    %c0_61 = arith.constant 0 : index
    %c0_62 = arith.constant 0 : index
    %62 = vector.load %arg5[%c7_60, %c0_61, %c0_62] : memref<9x128x128xf32, #tpu.memory_space<vmem>>, vector<1x128x128xf32>
    %63 = vector.shape_cast %62 : vector<1x128x128xf32> to vector<128x128xf32>
    %cst_63 = arith.constant dense<0.000000e+00> : vector<32x128xf32>
    %64 = tpu.matmul %61, %63, %cst_63 {dimension_numbers = #tpu.dot_dimension_numbers<[1], [0], [0], [1], [0, 0, 1, 1], [], []>} : vector<32x128xf32>, vector<128x128xf32>, vector<32x128xf32> -> vector<32x128xf32>
    %65 = arith.addf %58, %64 : vector<32x128xf32>
    %c8 = arith.constant 8 : index
    %c0_64 = arith.constant 0 : index
    %c0_65 = arith.constant 0 : index
    %66 = vector.load %arg4[%c8, %c0_64, %c0_65] : memref<9x32x128xf32, #tpu.memory_space<vmem>>, vector<1x32x128xf32>
    %67 = vector.shape_cast %66 : vector<1x32x128xf32> to vector<32x128xf32>
    %cst_66 = arith.constant dense<0.000000e+00> : vector<32x128xf32>
    %68 = tpu.matmul %67, %10, %cst_66 {dimension_numbers = #tpu.dot_dimension_numbers<[1], [0], [0], [1], [0, 0, 1, 1], [], []>} : vector<32x128xf32>, vector<128x128xf32>, vector<32x128xf32> -> vector<32x128xf32>
    %c8_67 = arith.constant 8 : index
    %c0_68 = arith.constant 0 : index
    %c0_69 = arith.constant 0 : index
    %69 = vector.load %arg5[%c8_67, %c0_68, %c0_69] : memref<9x128x128xf32, #tpu.memory_space<vmem>>, vector<1x128x128xf32>
    %70 = vector.shape_cast %69 : vector<1x128x128xf32> to vector<128x128xf32>
    %cst_70 = arith.constant dense<0.000000e+00> : vector<32x128xf32>
    %71 = tpu.matmul %68, %70, %cst_70 {dimension_numbers = #tpu.dot_dimension_numbers<[1], [0], [0], [1], [0, 0, 1, 1], [], []>} : vector<32x128xf32>, vector<128x128xf32>, vector<32x128xf32> -> vector<32x128xf32>
    %72 = arith.addf %65, %71 : vector<32x128xf32>
    %c0_71 = arith.constant 0 : index
    %c0_72 = arith.constant 0 : index
    %73 = vector.load %arg6[%c0_71, %c0_72] : memref<3x128xf32, #tpu.memory_space<vmem>>, vector<1x128xf32>
    %74 = vector.broadcast %73 : vector<1x128xf32> to vector<32x128xf32>
    %75 = arith.addf %72, %74 : vector<32x128xf32>
    %cst_73 = arith.constant 0.000000e+00 : f32
    %76 = vector.broadcast %cst_73 : f32 to vector<32x128xf32>
    %77 = arith.cmpf oge, %75, %76 : vector<32x128xf32>
    %cst_74 = arith.constant 2.000000e-01 : f32
    %78 = vector.broadcast %cst_74 : f32 to vector<32x128xf32>
    %79 = arith.mulf %78, %75 : vector<32x128xf32>
    %80 = arith.select %77, %75, %79 : vector<32x128xi1>, vector<32x128xf32>
    %cst_75 = arith.constant dense<0.000000e+00> : vector<128xf32>
    %81 = vector.multi_reduction <add>, %80, %cst_75 [0] : vector<32x128xf32> to vector<128xf32>
    %82 = vector.shape_cast %81 : vector<128xf32> to vector<1x128xf32>
    %83 = arith.mulf %80, %80 : vector<32x128xf32>
    %cst_76 = arith.constant dense<0.000000e+00> : vector<128xf32>
    %84 = vector.multi_reduction <add>, %83, %cst_76 [0] : vector<32x128xf32> to vector<128xf32>
    %85 = vector.shape_cast %84 : vector<128xf32> to vector<1x128xf32>
    %c0_77 = arith.constant 0 : index
    %c0_78 = arith.constant 0 : index
    %86 = vector.load %arg7[%c0_77, %c0_78] : memref<128x128xf32, #tpu.memory_space<vmem>>, vector<128x128xf32>
    %cst_79 = arith.constant dense<0.000000e+00> : vector<1x128xf32>
    %87 = tpu.matmul %82, %86, %cst_79 {dimension_numbers = #tpu.dot_dimension_numbers<[1], [0], [0], [1], [0, 0, 1, 1], [], []>} : vector<1x128xf32>, vector<128x128xf32>, vector<1x128xf32> -> vector<1x128xf32>
    %c0_80 = arith.constant 0 : index
    %c0_81 = arith.constant 0 : index
    %88 = vector.load %arg7[%c0_80, %c0_81] : memref<128x128xf32, #tpu.memory_space<vmem>>, vector<128x128xf32>
    %cst_82 = arith.constant dense<0.000000e+00> : vector<1x128xf32>
    %89 = tpu.matmul %85, %88, %cst_82 {dimension_numbers = #tpu.dot_dimension_numbers<[1], [0], [0], [1], [0, 0, 1, 1], [], []>} : vector<1x128xf32>, vector<128x128xf32>, vector<1x128xf32> -> vector<1x128xf32>
    %cst_83 = arith.constant 7.812500e-03 : f32
    %90 = vector.broadcast %cst_83 : f32 to vector<1x128xf32>
    %91 = arith.mulf %87, %90 : vector<1x128xf32>
    %cst_84 = arith.constant 7.812500e-03 : f32
    %92 = vector.broadcast %cst_84 : f32 to vector<1x128xf32>
    %93 = arith.mulf %89, %92 : vector<1x128xf32>
    %94 = arith.mulf %91, %91 : vector<1x128xf32>
    %95 = arith.subf %93, %94 : vector<1x128xf32>
    %c1_85 = arith.constant 1 : index
    %c0_86 = arith.constant 0 : index
    %96 = vector.load %arg6[%c1_85, %c0_86] : memref<3x128xf32, #tpu.memory_space<vmem>>, vector<1x128xf32>
    %cst_87 = arith.constant 8.000000e-01 : f32
    %97 = vector.broadcast %cst_87 : f32 to vector<1x128xf32>
    %98 = arith.addf %95, %97 : vector<1x128xf32>
    %99 = math.rsqrt %98 : vector<1x128xf32>
    %100 = arith.mulf %96, %99 : vector<1x128xf32>
    %c2_88 = arith.constant 2 : index
    %c0_89 = arith.constant 0 : index
    %101 = vector.load %arg6[%c2_88, %c0_89] : memref<3x128xf32, #tpu.memory_space<vmem>>, vector<1x128xf32>
    %102 = arith.mulf %91, %100 : vector<1x128xf32>
    %103 = arith.subf %101, %102 : vector<1x128xf32>
    %104 = vector.broadcast %100 : vector<1x128xf32> to vector<32x128xf32>
    %105 = arith.mulf %80, %104 : vector<32x128xf32>
    %106 = vector.broadcast %103 : vector<1x128xf32> to vector<32x128xf32>
    %107 = arith.addf %105, %106 : vector<32x128xf32>
    %c0_90 = arith.constant 0 : index
    %c0_91 = arith.constant 0 : index
    %c0_92 = arith.constant 0 : index
    %108 = vector.load %arg8[%c0_90, %c0_91, %c0_92] : memref<9x8x32xf32, #tpu.memory_space<vmem>>, vector<1x8x32xf32>
    %109 = vector.shape_cast %108 : vector<1x8x32xf32> to vector<8x32xf32>
    %cst_93 = arith.constant dense<0.000000e+00> : vector<8x128xf32>
    %110 = tpu.matmul %109, %107, %cst_93 {dimension_numbers = #tpu.dot_dimension_numbers<[1], [0], [0], [1], [0, 0, 1, 1], [], []>} : vector<8x32xf32>, vector<32x128xf32>, vector<8x128xf32> -> vector<8x128xf32>
    %c0_94 = arith.constant 0 : index
    %c0_95 = arith.constant 0 : index
    %c0_96 = arith.constant 0 : index
    %111 = vector.load %arg9[%c0_94, %c0_95, %c0_96] : memref<9x128x128xf32, #tpu.memory_space<vmem>>, vector<1x128x128xf32>
    %112 = vector.shape_cast %111 : vector<1x128x128xf32> to vector<128x128xf32>
    %cst_97 = arith.constant dense<0.000000e+00> : vector<8x128xf32>
    %113 = tpu.matmul %110, %112, %cst_97 {dimension_numbers = #tpu.dot_dimension_numbers<[1], [0], [0], [1], [0, 0, 1, 1], [], []>} : vector<8x128xf32>, vector<128x128xf32>, vector<8x128xf32> -> vector<8x128xf32>
    %c1_98 = arith.constant 1 : index
    %c0_99 = arith.constant 0 : index
    %c0_100 = arith.constant 0 : index
    %114 = vector.load %arg8[%c1_98, %c0_99, %c0_100] : memref<9x8x32xf32, #tpu.memory_space<vmem>>, vector<1x8x32xf32>
    %115 = vector.shape_cast %114 : vector<1x8x32xf32> to vector<8x32xf32>
    %cst_101 = arith.constant dense<0.000000e+00> : vector<8x128xf32>
    %116 = tpu.matmul %115, %107, %cst_101 {dimension_numbers = #tpu.dot_dimension_numbers<[1], [0], [0], [1], [0, 0, 1, 1], [], []>} : vector<8x32xf32>, vector<32x128xf32>, vector<8x128xf32> -> vector<8x128xf32>
    %c1_102 = arith.constant 1 : index
    %c0_103 = arith.constant 0 : index
    %c0_104 = arith.constant 0 : index
    %117 = vector.load %arg9[%c1_102, %c0_103, %c0_104] : memref<9x128x128xf32, #tpu.memory_space<vmem>>, vector<1x128x128xf32>
    %118 = vector.shape_cast %117 : vector<1x128x128xf32> to vector<128x128xf32>
    %cst_105 = arith.constant dense<0.000000e+00> : vector<8x128xf32>
    %119 = tpu.matmul %116, %118, %cst_105 {dimension_numbers = #tpu.dot_dimension_numbers<[1], [0], [0], [1], [0, 0, 1, 1], [], []>} : vector<8x128xf32>, vector<128x128xf32>, vector<8x128xf32> -> vector<8x128xf32>
    %120 = arith.addf %113, %119 : vector<8x128xf32>
    %c2_106 = arith.constant 2 : index
    %c0_107 = arith.constant 0 : index
    %c0_108 = arith.constant 0 : index
    %121 = vector.load %arg8[%c2_106, %c0_107, %c0_108] : memref<9x8x32xf32, #tpu.memory_space<vmem>>, vector<1x8x32xf32>
    %122 = vector.shape_cast %121 : vector<1x8x32xf32> to vector<8x32xf32>
    %cst_109 = arith.constant dense<0.000000e+00> : vector<8x128xf32>
    %123 = tpu.matmul %122, %107, %cst_109 {dimension_numbers = #tpu.dot_dimension_numbers<[1], [0], [0], [1], [0, 0, 1, 1], [], []>} : vector<8x32xf32>, vector<32x128xf32>, vector<8x128xf32> -> vector<8x128xf32>
    %c2_110 = arith.constant 2 : index
    %c0_111 = arith.constant 0 : index
    %c0_112 = arith.constant 0 : index
    %124 = vector.load %arg9[%c2_110, %c0_111, %c0_112] : memref<9x128x128xf32, #tpu.memory_space<vmem>>, vector<1x128x128xf32>
    %125 = vector.shape_cast %124 : vector<1x128x128xf32> to vector<128x128xf32>
    %cst_113 = arith.constant dense<0.000000e+00> : vector<8x128xf32>
    %126 = tpu.matmul %123, %125, %cst_113 {dimension_numbers = #tpu.dot_dimension_numbers<[1], [0], [0], [1], [0, 0, 1, 1], [], []>} : vector<8x128xf32>, vector<128x128xf32>, vector<8x128xf32> -> vector<8x128xf32>
    %127 = arith.addf %120, %126 : vector<8x128xf32>
    %c3_114 = arith.constant 3 : index
    %c0_115 = arith.constant 0 : index
    %c0_116 = arith.constant 0 : index
    %128 = vector.load %arg8[%c3_114, %c0_115, %c0_116] : memref<9x8x32xf32, #tpu.memory_space<vmem>>, vector<1x8x32xf32>
    %129 = vector.shape_cast %128 : vector<1x8x32xf32> to vector<8x32xf32>
    %cst_117 = arith.constant dense<0.000000e+00> : vector<8x128xf32>
    %130 = tpu.matmul %129, %107, %cst_117 {dimension_numbers = #tpu.dot_dimension_numbers<[1], [0], [0], [1], [0, 0, 1, 1], [], []>} : vector<8x32xf32>, vector<32x128xf32>, vector<8x128xf32> -> vector<8x128xf32>
    %c3_118 = arith.constant 3 : index
    %c0_119 = arith.constant 0 : index
    %c0_120 = arith.constant 0 : index
    %131 = vector.load %arg9[%c3_118, %c0_119, %c0_120] : memref<9x128x128xf32, #tpu.memory_space<vmem>>, vector<1x128x128xf32>
    %132 = vector.shape_cast %131 : vector<1x128x128xf32> to vector<128x128xf32>
    %cst_121 = arith.constant dense<0.000000e+00> : vector<8x128xf32>
    %133 = tpu.matmul %130, %132, %cst_121 {dimension_numbers = #tpu.dot_dimension_numbers<[1], [0], [0], [1], [0, 0, 1, 1], [], []>} : vector<8x128xf32>, vector<128x128xf32>, vector<8x128xf32> -> vector<8x128xf32>
    %134 = arith.addf %127, %133 : vector<8x128xf32>
    %c4_122 = arith.constant 4 : index
    %c0_123 = arith.constant 0 : index
    %c0_124 = arith.constant 0 : index
    %135 = vector.load %arg8[%c4_122, %c0_123, %c0_124] : memref<9x8x32xf32, #tpu.memory_space<vmem>>, vector<1x8x32xf32>
    %136 = vector.shape_cast %135 : vector<1x8x32xf32> to vector<8x32xf32>
    %cst_125 = arith.constant dense<0.000000e+00> : vector<8x128xf32>
    %137 = tpu.matmul %136, %107, %cst_125 {dimension_numbers = #tpu.dot_dimension_numbers<[1], [0], [0], [1], [0, 0, 1, 1], [], []>} : vector<8x32xf32>, vector<32x128xf32>, vector<8x128xf32> -> vector<8x128xf32>
    %c4_126 = arith.constant 4 : index
    %c0_127 = arith.constant 0 : index
    %c0_128 = arith.constant 0 : index
    %138 = vector.load %arg9[%c4_126, %c0_127, %c0_128] : memref<9x128x128xf32, #tpu.memory_space<vmem>>, vector<1x128x128xf32>
    %139 = vector.shape_cast %138 : vector<1x128x128xf32> to vector<128x128xf32>
    %cst_129 = arith.constant dense<0.000000e+00> : vector<8x128xf32>
    %140 = tpu.matmul %137, %139, %cst_129 {dimension_numbers = #tpu.dot_dimension_numbers<[1], [0], [0], [1], [0, 0, 1, 1], [], []>} : vector<8x128xf32>, vector<128x128xf32>, vector<8x128xf32> -> vector<8x128xf32>
    %141 = arith.addf %134, %140 : vector<8x128xf32>
    %c5_130 = arith.constant 5 : index
    %c0_131 = arith.constant 0 : index
    %c0_132 = arith.constant 0 : index
    %142 = vector.load %arg8[%c5_130, %c0_131, %c0_132] : memref<9x8x32xf32, #tpu.memory_space<vmem>>, vector<1x8x32xf32>
    %143 = vector.shape_cast %142 : vector<1x8x32xf32> to vector<8x32xf32>
    %cst_133 = arith.constant dense<0.000000e+00> : vector<8x128xf32>
    %144 = tpu.matmul %143, %107, %cst_133 {dimension_numbers = #tpu.dot_dimension_numbers<[1], [0], [0], [1], [0, 0, 1, 1], [], []>} : vector<8x32xf32>, vector<32x128xf32>, vector<8x128xf32> -> vector<8x128xf32>
    %c5_134 = arith.constant 5 : index
    %c0_135 = arith.constant 0 : index
    %c0_136 = arith.constant 0 : index
    %145 = vector.load %arg9[%c5_134, %c0_135, %c0_136] : memref<9x128x128xf32, #tpu.memory_space<vmem>>, vector<1x128x128xf32>
    %146 = vector.shape_cast %145 : vector<1x128x128xf32> to vector<128x128xf32>
    %cst_137 = arith.constant dense<0.000000e+00> : vector<8x128xf32>
    %147 = tpu.matmul %144, %146, %cst_137 {dimension_numbers = #tpu.dot_dimension_numbers<[1], [0], [0], [1], [0, 0, 1, 1], [], []>} : vector<8x128xf32>, vector<128x128xf32>, vector<8x128xf32> -> vector<8x128xf32>
    %148 = arith.addf %141, %147 : vector<8x128xf32>
    %c6_138 = arith.constant 6 : index
    %c0_139 = arith.constant 0 : index
    %c0_140 = arith.constant 0 : index
    %149 = vector.load %arg8[%c6_138, %c0_139, %c0_140] : memref<9x8x32xf32, #tpu.memory_space<vmem>>, vector<1x8x32xf32>
    %150 = vector.shape_cast %149 : vector<1x8x32xf32> to vector<8x32xf32>
    %cst_141 = arith.constant dense<0.000000e+00> : vector<8x128xf32>
    %151 = tpu.matmul %150, %107, %cst_141 {dimension_numbers = #tpu.dot_dimension_numbers<[1], [0], [0], [1], [0, 0, 1, 1], [], []>} : vector<8x32xf32>, vector<32x128xf32>, vector<8x128xf32> -> vector<8x128xf32>
    %c6_142 = arith.constant 6 : index
    %c0_143 = arith.constant 0 : index
    %c0_144 = arith.constant 0 : index
    %152 = vector.load %arg9[%c6_142, %c0_143, %c0_144] : memref<9x128x128xf32, #tpu.memory_space<vmem>>, vector<1x128x128xf32>
    %153 = vector.shape_cast %152 : vector<1x128x128xf32> to vector<128x128xf32>
    %cst_145 = arith.constant dense<0.000000e+00> : vector<8x128xf32>
    %154 = tpu.matmul %151, %153, %cst_145 {dimension_numbers = #tpu.dot_dimension_numbers<[1], [0], [0], [1], [0, 0, 1, 1], [], []>} : vector<8x128xf32>, vector<128x128xf32>, vector<8x128xf32> -> vector<8x128xf32>
    %155 = arith.addf %148, %154 : vector<8x128xf32>
    %c7_146 = arith.constant 7 : index
    %c0_147 = arith.constant 0 : index
    %c0_148 = arith.constant 0 : index
    %156 = vector.load %arg8[%c7_146, %c0_147, %c0_148] : memref<9x8x32xf32, #tpu.memory_space<vmem>>, vector<1x8x32xf32>
    %157 = vector.shape_cast %156 : vector<1x8x32xf32> to vector<8x32xf32>
    %cst_149 = arith.constant dense<0.000000e+00> : vector<8x128xf32>
    %158 = tpu.matmul %157, %107, %cst_149 {dimension_numbers = #tpu.dot_dimension_numbers<[1], [0], [0], [1], [0, 0, 1, 1], [], []>} : vector<8x32xf32>, vector<32x128xf32>, vector<8x128xf32> -> vector<8x128xf32>
    %c7_150 = arith.constant 7 : index
    %c0_151 = arith.constant 0 : index
    %c0_152 = arith.constant 0 : index
    %159 = vector.load %arg9[%c7_150, %c0_151, %c0_152] : memref<9x128x128xf32, #tpu.memory_space<vmem>>, vector<1x128x128xf32>
    %160 = vector.shape_cast %159 : vector<1x128x128xf32> to vector<128x128xf32>
    %cst_153 = arith.constant dense<0.000000e+00> : vector<8x128xf32>
    %161 = tpu.matmul %158, %160, %cst_153 {dimension_numbers = #tpu.dot_dimension_numbers<[1], [0], [0], [1], [0, 0, 1, 1], [], []>} : vector<8x128xf32>, vector<128x128xf32>, vector<8x128xf32> -> vector<8x128xf32>
    %162 = arith.addf %155, %161 : vector<8x128xf32>
    %c8_154 = arith.constant 8 : index
    %c0_155 = arith.constant 0 : index
    %c0_156 = arith.constant 0 : index
    %163 = vector.load %arg8[%c8_154, %c0_155, %c0_156] : memref<9x8x32xf32, #tpu.memory_space<vmem>>, vector<1x8x32xf32>
    %164 = vector.shape_cast %163 : vector<1x8x32xf32> to vector<8x32xf32>
    %cst_157 = arith.constant dense<0.000000e+00> : vector<8x128xf32>
    %165 = tpu.matmul %164, %107, %cst_157 {dimension_numbers = #tpu.dot_dimension_numbers<[1], [0], [0], [1], [0, 0, 1, 1], [], []>} : vector<8x32xf32>, vector<32x128xf32>, vector<8x128xf32> -> vector<8x128xf32>
    %c8_158 = arith.constant 8 : index
    %c0_159 = arith.constant 0 : index
    %c0_160 = arith.constant 0 : index
    %166 = vector.load %arg9[%c8_158, %c0_159, %c0_160] : memref<9x128x128xf32, #tpu.memory_space<vmem>>, vector<1x128x128xf32>
    %167 = vector.shape_cast %166 : vector<1x128x128xf32> to vector<128x128xf32>
    %cst_161 = arith.constant dense<0.000000e+00> : vector<8x128xf32>
    %168 = tpu.matmul %165, %167, %cst_161 {dimension_numbers = #tpu.dot_dimension_numbers<[1], [0], [0], [1], [0, 0, 1, 1], [], []>} : vector<8x128xf32>, vector<128x128xf32>, vector<8x128xf32> -> vector<8x128xf32>
    %169 = arith.addf %162, %168 : vector<8x128xf32>
    %c0_162 = arith.constant 0 : index
    %c0_163 = arith.constant 0 : index
    %170 = vector.load %arg10[%c0_162, %c0_163] : memref<3x128xf32, #tpu.memory_space<vmem>>, vector<1x128xf32>
    %171 = vector.broadcast %170 : vector<1x128xf32> to vector<8x128xf32>
    %172 = arith.addf %169, %171 : vector<8x128xf32>
    %cst_164 = arith.constant 0.000000e+00 : f32
    %173 = vector.broadcast %cst_164 : f32 to vector<8x128xf32>
    %174 = arith.cmpf oge, %172, %173 : vector<8x128xf32>
    %cst_165 = arith.constant 2.000000e-01 : f32
    %175 = vector.broadcast %cst_165 : f32 to vector<8x128xf32>
    %176 = arith.mulf %175, %172 : vector<8x128xf32>
    %177 = arith.select %174, %172, %176 : vector<8x128xi1>, vector<8x128xf32>
    %cst_166 = arith.constant dense<0.000000e+00> : vector<128xf32>
    %178 = vector.multi_reduction <add>, %177, %cst_166 [0] : vector<8x128xf32> to vector<128xf32>
    %179 = vector.shape_cast %178 : vector<128xf32> to vector<1x128xf32>
    %180 = arith.mulf %177, %177 : vector<8x128xf32>
    %cst_167 = arith.constant dense<0.000000e+00> : vector<128xf32>
    %181 = vector.multi_reduction <add>, %180, %cst_167 [0] : vector<8x128xf32> to vector<128xf32>
    %182 = vector.shape_cast %181 : vector<128xf32> to vector<1x128xf32>
    %c0_168 = arith.constant 0 : index
    %c0_169 = arith.constant 0 : index
    %183 = vector.load %arg11[%c0_168, %c0_169] : memref<128x128xf32, #tpu.memory_space<vmem>>, vector<128x128xf32>
    %cst_170 = arith.constant dense<0.000000e+00> : vector<1x128xf32>
    %184 = tpu.matmul %179, %183, %cst_170 {dimension_numbers = #tpu.dot_dimension_numbers<[1], [0], [0], [1], [0, 0, 1, 1], [], []>} : vector<1x128xf32>, vector<128x128xf32>, vector<1x128xf32> -> vector<1x128xf32>
    %c0_171 = arith.constant 0 : index
    %c0_172 = arith.constant 0 : index
    %185 = vector.load %arg11[%c0_171, %c0_172] : memref<128x128xf32, #tpu.memory_space<vmem>>, vector<128x128xf32>
    %cst_173 = arith.constant dense<0.000000e+00> : vector<1x128xf32>
    %186 = tpu.matmul %182, %185, %cst_173 {dimension_numbers = #tpu.dot_dimension_numbers<[1], [0], [0], [1], [0, 0, 1, 1], [], []>} : vector<1x128xf32>, vector<128x128xf32>, vector<1x128xf32> -> vector<1x128xf32>
    %cst_174 = arith.constant 6.250000e-02 : f32
    %187 = vector.broadcast %cst_174 : f32 to vector<1x128xf32>
    %188 = arith.mulf %184, %187 : vector<1x128xf32>
    %cst_175 = arith.constant 6.250000e-02 : f32
    %189 = vector.broadcast %cst_175 : f32 to vector<1x128xf32>
    %190 = arith.mulf %186, %189 : vector<1x128xf32>
    %191 = arith.mulf %188, %188 : vector<1x128xf32>
    %192 = arith.subf %190, %191 : vector<1x128xf32>
    %c1_176 = arith.constant 1 : index
    %c0_177 = arith.constant 0 : index
    %193 = vector.load %arg10[%c1_176, %c0_177] : memref<3x128xf32, #tpu.memory_space<vmem>>, vector<1x128xf32>
    %cst_178 = arith.constant 8.000000e-01 : f32
    %194 = vector.broadcast %cst_178 : f32 to vector<1x128xf32>
    %195 = arith.addf %192, %194 : vector<1x128xf32>
    %196 = math.rsqrt %195 : vector<1x128xf32>
    %197 = arith.mulf %193, %196 : vector<1x128xf32>
    %c2_179 = arith.constant 2 : index
    %c0_180 = arith.constant 0 : index
    %198 = vector.load %arg10[%c2_179, %c0_180] : memref<3x128xf32, #tpu.memory_space<vmem>>, vector<1x128xf32>
    %199 = arith.mulf %188, %197 : vector<1x128xf32>
    %200 = arith.subf %198, %199 : vector<1x128xf32>
    %201 = vector.broadcast %197 : vector<1x128xf32> to vector<8x128xf32>
    %202 = arith.mulf %177, %201 : vector<8x128xf32>
    %203 = vector.broadcast %200 : vector<1x128xf32> to vector<8x128xf32>
    %204 = arith.addf %202, %203 : vector<8x128xf32>
    %c0_181 = arith.constant 0 : index
    %c0_182 = arith.constant 0 : index
    %c0_183 = arith.constant 0 : index
    %205 = vector.load %arg12[%c0_181, %c0_182, %c0_183] : memref<9x2x8xf32, #tpu.memory_space<vmem>>, vector<1x2x8xf32>
    %206 = vector.shape_cast %205 : vector<1x2x8xf32> to vector<2x8xf32>
    %cst_184 = arith.constant dense<0.000000e+00> : vector<2x128xf32>
    %207 = tpu.matmul %206, %204, %cst_184 {dimension_numbers = #tpu.dot_dimension_numbers<[1], [0], [0], [1], [0, 0, 1, 1], [], []>} : vector<2x8xf32>, vector<8x128xf32>, vector<2x128xf32> -> vector<2x128xf32>
    %c0_185 = arith.constant 0 : index
    %c0_186 = arith.constant 0 : index
    %c0_187 = arith.constant 0 : index
    %208 = vector.load %arg13[%c0_185, %c0_186, %c0_187] : memref<9x128x128xf32, #tpu.memory_space<vmem>>, vector<1x128x128xf32>
    %209 = vector.shape_cast %208 : vector<1x128x128xf32> to vector<128x128xf32>
    %cst_188 = arith.constant dense<0.000000e+00> : vector<2x128xf32>
    %210 = tpu.matmul %207, %209, %cst_188 {dimension_numbers = #tpu.dot_dimension_numbers<[1], [0], [0], [1], [0, 0, 1, 1], [], []>} : vector<2x128xf32>, vector<128x128xf32>, vector<2x128xf32> -> vector<2x128xf32>
    %c1_189 = arith.constant 1 : index
    %c0_190 = arith.constant 0 : index
    %c0_191 = arith.constant 0 : index
    %211 = vector.load %arg12[%c1_189, %c0_190, %c0_191] : memref<9x2x8xf32, #tpu.memory_space<vmem>>, vector<1x2x8xf32>
    %212 = vector.shape_cast %211 : vector<1x2x8xf32> to vector<2x8xf32>
    %cst_192 = arith.constant dense<0.000000e+00> : vector<2x128xf32>
    %213 = tpu.matmul %212, %204, %cst_192 {dimension_numbers = #tpu.dot_dimension_numbers<[1], [0], [0], [1], [0, 0, 1, 1], [], []>} : vector<2x8xf32>, vector<8x128xf32>, vector<2x128xf32> -> vector<2x128xf32>
    %c1_193 = arith.constant 1 : index
    %c0_194 = arith.constant 0 : index
    %c0_195 = arith.constant 0 : index
    %214 = vector.load %arg13[%c1_193, %c0_194, %c0_195] : memref<9x128x128xf32, #tpu.memory_space<vmem>>, vector<1x128x128xf32>
    %215 = vector.shape_cast %214 : vector<1x128x128xf32> to vector<128x128xf32>
    %cst_196 = arith.constant dense<0.000000e+00> : vector<2x128xf32>
    %216 = tpu.matmul %213, %215, %cst_196 {dimension_numbers = #tpu.dot_dimension_numbers<[1], [0], [0], [1], [0, 0, 1, 1], [], []>} : vector<2x128xf32>, vector<128x128xf32>, vector<2x128xf32> -> vector<2x128xf32>
    %217 = arith.addf %210, %216 : vector<2x128xf32>
    %c2_197 = arith.constant 2 : index
    %c0_198 = arith.constant 0 : index
    %c0_199 = arith.constant 0 : index
    %218 = vector.load %arg12[%c2_197, %c0_198, %c0_199] : memref<9x2x8xf32, #tpu.memory_space<vmem>>, vector<1x2x8xf32>
    %219 = vector.shape_cast %218 : vector<1x2x8xf32> to vector<2x8xf32>
    %cst_200 = arith.constant dense<0.000000e+00> : vector<2x128xf32>
    %220 = tpu.matmul %219, %204, %cst_200 {dimension_numbers = #tpu.dot_dimension_numbers<[1], [0], [0], [1], [0, 0, 1, 1], [], []>} : vector<2x8xf32>, vector<8x128xf32>, vector<2x128xf32> -> vector<2x128xf32>
    %c2_201 = arith.constant 2 : index
    %c0_202 = arith.constant 0 : index
    %c0_203 = arith.constant 0 : index
    %221 = vector.load %arg13[%c2_201, %c0_202, %c0_203] : memref<9x128x128xf32, #tpu.memory_space<vmem>>, vector<1x128x128xf32>
    %222 = vector.shape_cast %221 : vector<1x128x128xf32> to vector<128x128xf32>
    %cst_204 = arith.constant dense<0.000000e+00> : vector<2x128xf32>
    %223 = tpu.matmul %220, %222, %cst_204 {dimension_numbers = #tpu.dot_dimension_numbers<[1], [0], [0], [1], [0, 0, 1, 1], [], []>} : vector<2x128xf32>, vector<128x128xf32>, vector<2x128xf32> -> vector<2x128xf32>
    %224 = arith.addf %217, %223 : vector<2x128xf32>
    %c3_205 = arith.constant 3 : index
    %c0_206 = arith.constant 0 : index
    %c0_207 = arith.constant 0 : index
    %225 = vector.load %arg12[%c3_205, %c0_206, %c0_207] : memref<9x2x8xf32, #tpu.memory_space<vmem>>, vector<1x2x8xf32>
    %226 = vector.shape_cast %225 : vector<1x2x8xf32> to vector<2x8xf32>
    %cst_208 = arith.constant dense<0.000000e+00> : vector<2x128xf32>
    %227 = tpu.matmul %226, %204, %cst_208 {dimension_numbers = #tpu.dot_dimension_numbers<[1], [0], [0], [1], [0, 0, 1, 1], [], []>} : vector<2x8xf32>, vector<8x128xf32>, vector<2x128xf32> -> vector<2x128xf32>
    %c3_209 = arith.constant 3 : index
    %c0_210 = arith.constant 0 : index
    %c0_211 = arith.constant 0 : index
    %228 = vector.load %arg13[%c3_209, %c0_210, %c0_211] : memref<9x128x128xf32, #tpu.memory_space<vmem>>, vector<1x128x128xf32>
    %229 = vector.shape_cast %228 : vector<1x128x128xf32> to vector<128x128xf32>
    %cst_212 = arith.constant dense<0.000000e+00> : vector<2x128xf32>
    %230 = tpu.matmul %227, %229, %cst_212 {dimension_numbers = #tpu.dot_dimension_numbers<[1], [0], [0], [1], [0, 0, 1, 1], [], []>} : vector<2x128xf32>, vector<128x128xf32>, vector<2x128xf32> -> vector<2x128xf32>
    %231 = arith.addf %224, %230 : vector<2x128xf32>
    %c4_213 = arith.constant 4 : index
    %c0_214 = arith.constant 0 : index
    %c0_215 = arith.constant 0 : index
    %232 = vector.load %arg12[%c4_213, %c0_214, %c0_215] : memref<9x2x8xf32, #tpu.memory_space<vmem>>, vector<1x2x8xf32>
    %233 = vector.shape_cast %232 : vector<1x2x8xf32> to vector<2x8xf32>
    %cst_216 = arith.constant dense<0.000000e+00> : vector<2x128xf32>
    %234 = tpu.matmul %233, %204, %cst_216 {dimension_numbers = #tpu.dot_dimension_numbers<[1], [0], [0], [1], [0, 0, 1, 1], [], []>} : vector<2x8xf32>, vector<8x128xf32>, vector<2x128xf32> -> vector<2x128xf32>
    %c4_217 = arith.constant 4 : index
    %c0_218 = arith.constant 0 : index
    %c0_219 = arith.constant 0 : index
    %235 = vector.load %arg13[%c4_217, %c0_218, %c0_219] : memref<9x128x128xf32, #tpu.memory_space<vmem>>, vector<1x128x128xf32>
    %236 = vector.shape_cast %235 : vector<1x128x128xf32> to vector<128x128xf32>
    %cst_220 = arith.constant dense<0.000000e+00> : vector<2x128xf32>
    %237 = tpu.matmul %234, %236, %cst_220 {dimension_numbers = #tpu.dot_dimension_numbers<[1], [0], [0], [1], [0, 0, 1, 1], [], []>} : vector<2x128xf32>, vector<128x128xf32>, vector<2x128xf32> -> vector<2x128xf32>
    %238 = arith.addf %231, %237 : vector<2x128xf32>
    %c5_221 = arith.constant 5 : index
    %c0_222 = arith.constant 0 : index
    %c0_223 = arith.constant 0 : index
    %239 = vector.load %arg12[%c5_221, %c0_222, %c0_223] : memref<9x2x8xf32, #tpu.memory_space<vmem>>, vector<1x2x8xf32>
    %240 = vector.shape_cast %239 : vector<1x2x8xf32> to vector<2x8xf32>
    %cst_224 = arith.constant dense<0.000000e+00> : vector<2x128xf32>
    %241 = tpu.matmul %240, %204, %cst_224 {dimension_numbers = #tpu.dot_dimension_numbers<[1], [0], [0], [1], [0, 0, 1, 1], [], []>} : vector<2x8xf32>, vector<8x128xf32>, vector<2x128xf32> -> vector<2x128xf32>
    %c5_225 = arith.constant 5 : index
    %c0_226 = arith.constant 0 : index
    %c0_227 = arith.constant 0 : index
    %242 = vector.load %arg13[%c5_225, %c0_226, %c0_227] : memref<9x128x128xf32, #tpu.memory_space<vmem>>, vector<1x128x128xf32>
    %243 = vector.shape_cast %242 : vector<1x128x128xf32> to vector<128x128xf32>
    %cst_228 = arith.constant dense<0.000000e+00> : vector<2x128xf32>
    %244 = tpu.matmul %241, %243, %cst_228 {dimension_numbers = #tpu.dot_dimension_numbers<[1], [0], [0], [1], [0, 0, 1, 1], [], []>} : vector<2x128xf32>, vector<128x128xf32>, vector<2x128xf32> -> vector<2x128xf32>
    %245 = arith.addf %238, %244 : vector<2x128xf32>
    %c6_229 = arith.constant 6 : index
    %c0_230 = arith.constant 0 : index
    %c0_231 = arith.constant 0 : index
    %246 = vector.load %arg12[%c6_229, %c0_230, %c0_231] : memref<9x2x8xf32, #tpu.memory_space<vmem>>, vector<1x2x8xf32>
    %247 = vector.shape_cast %246 : vector<1x2x8xf32> to vector<2x8xf32>
    %cst_232 = arith.constant dense<0.000000e+00> : vector<2x128xf32>
    %248 = tpu.matmul %247, %204, %cst_232 {dimension_numbers = #tpu.dot_dimension_numbers<[1], [0], [0], [1], [0, 0, 1, 1], [], []>} : vector<2x8xf32>, vector<8x128xf32>, vector<2x128xf32> -> vector<2x128xf32>
    %c6_233 = arith.constant 6 : index
    %c0_234 = arith.constant 0 : index
    %c0_235 = arith.constant 0 : index
    %249 = vector.load %arg13[%c6_233, %c0_234, %c0_235] : memref<9x128x128xf32, #tpu.memory_space<vmem>>, vector<1x128x128xf32>
    %250 = vector.shape_cast %249 : vector<1x128x128xf32> to vector<128x128xf32>
    %cst_236 = arith.constant dense<0.000000e+00> : vector<2x128xf32>
    %251 = tpu.matmul %248, %250, %cst_236 {dimension_numbers = #tpu.dot_dimension_numbers<[1], [0], [0], [1], [0, 0, 1, 1], [], []>} : vector<2x128xf32>, vector<128x128xf32>, vector<2x128xf32> -> vector<2x128xf32>
    %252 = arith.addf %245, %251 : vector<2x128xf32>
    %c7_237 = arith.constant 7 : index
    %c0_238 = arith.constant 0 : index
    %c0_239 = arith.constant 0 : index
    %253 = vector.load %arg12[%c7_237, %c0_238, %c0_239] : memref<9x2x8xf32, #tpu.memory_space<vmem>>, vector<1x2x8xf32>
    %254 = vector.shape_cast %253 : vector<1x2x8xf32> to vector<2x8xf32>
    %cst_240 = arith.constant dense<0.000000e+00> : vector<2x128xf32>
    %255 = tpu.matmul %254, %204, %cst_240 {dimension_numbers = #tpu.dot_dimension_numbers<[1], [0], [0], [1], [0, 0, 1, 1], [], []>} : vector<2x8xf32>, vector<8x128xf32>, vector<2x128xf32> -> vector<2x128xf32>
    %c7_241 = arith.constant 7 : index
    %c0_242 = arith.constant 0 : index
    %c0_243 = arith.constant 0 : index
    %256 = vector.load %arg13[%c7_241, %c0_242, %c0_243] : memref<9x128x128xf32, #tpu.memory_space<vmem>>, vector<1x128x128xf32>
    %257 = vector.shape_cast %256 : vector<1x128x128xf32> to vector<128x128xf32>
    %cst_244 = arith.constant dense<0.000000e+00> : vector<2x128xf32>
    %258 = tpu.matmul %255, %257, %cst_244 {dimension_numbers = #tpu.dot_dimension_numbers<[1], [0], [0], [1], [0, 0, 1, 1], [], []>} : vector<2x128xf32>, vector<128x128xf32>, vector<2x128xf32> -> vector<2x128xf32>
    %259 = arith.addf %252, %258 : vector<2x128xf32>
    %c8_245 = arith.constant 8 : index
    %c0_246 = arith.constant 0 : index
    %c0_247 = arith.constant 0 : index
    %260 = vector.load %arg12[%c8_245, %c0_246, %c0_247] : memref<9x2x8xf32, #tpu.memory_space<vmem>>, vector<1x2x8xf32>
    %261 = vector.shape_cast %260 : vector<1x2x8xf32> to vector<2x8xf32>
    %cst_248 = arith.constant dense<0.000000e+00> : vector<2x128xf32>
    %262 = tpu.matmul %261, %204, %cst_248 {dimension_numbers = #tpu.dot_dimension_numbers<[1], [0], [0], [1], [0, 0, 1, 1], [], []>} : vector<2x8xf32>, vector<8x128xf32>, vector<2x128xf32> -> vector<2x128xf32>
    %c8_249 = arith.constant 8 : index
    %c0_250 = arith.constant 0 : index
    %c0_251 = arith.constant 0 : index
    %263 = vector.load %arg13[%c8_249, %c0_250, %c0_251] : memref<9x128x128xf32, #tpu.memory_space<vmem>>, vector<1x128x128xf32>
    %264 = vector.shape_cast %263 : vector<1x128x128xf32> to vector<128x128xf32>
    %cst_252 = arith.constant dense<0.000000e+00> : vector<2x128xf32>
    %265 = tpu.matmul %262, %264, %cst_252 {dimension_numbers = #tpu.dot_dimension_numbers<[1], [0], [0], [1], [0, 0, 1, 1], [], []>} : vector<2x128xf32>, vector<128x128xf32>, vector<2x128xf32> -> vector<2x128xf32>
    %266 = arith.addf %259, %265 : vector<2x128xf32>
    %c0_253 = arith.constant 0 : index
    %c0_254 = arith.constant 0 : index
    %267 = vector.load %arg14[%c0_253, %c0_254] : memref<3x128xf32, #tpu.memory_space<vmem>>, vector<1x128xf32>
    %268 = vector.broadcast %267 : vector<1x128xf32> to vector<2x128xf32>
    %269 = arith.addf %266, %268 : vector<2x128xf32>
    %cst_255 = arith.constant 0.000000e+00 : f32
    %270 = vector.broadcast %cst_255 : f32 to vector<2x128xf32>
    %271 = arith.cmpf oge, %269, %270 : vector<2x128xf32>
    %cst_256 = arith.constant 2.000000e-01 : f32
    %272 = vector.broadcast %cst_256 : f32 to vector<2x128xf32>
    %273 = arith.mulf %272, %269 : vector<2x128xf32>
    %274 = arith.select %271, %269, %273 : vector<2x128xi1>, vector<2x128xf32>
    %cst_257 = arith.constant dense<0.000000e+00> : vector<128xf32>
    %275 = vector.multi_reduction <add>, %274, %cst_257 [0] : vector<2x128xf32> to vector<128xf32>
    %276 = vector.shape_cast %275 : vector<128xf32> to vector<1x128xf32>
    %277 = arith.mulf %274, %274 : vector<2x128xf32>
    %cst_258 = arith.constant dense<0.000000e+00> : vector<128xf32>
    %278 = vector.multi_reduction <add>, %277, %cst_258 [0] : vector<2x128xf32> to vector<128xf32>
    %279 = vector.shape_cast %278 : vector<128xf32> to vector<1x128xf32>
    %cst_259 = arith.constant 5.000000e-01 : f32
    %280 = vector.broadcast %cst_259 : f32 to vector<1x128xf32>
    %281 = arith.mulf %276, %280 : vector<1x128xf32>
    %cst_260 = arith.constant 5.000000e-01 : f32
    %282 = vector.broadcast %cst_260 : f32 to vector<1x128xf32>
    %283 = arith.mulf %279, %282 : vector<1x128xf32>
    %284 = arith.mulf %281, %281 : vector<1x128xf32>
    %285 = arith.subf %283, %284 : vector<1x128xf32>
    %c1_261 = arith.constant 1 : index
    %c0_262 = arith.constant 0 : index
    %286 = vector.load %arg14[%c1_261, %c0_262] : memref<3x128xf32, #tpu.memory_space<vmem>>, vector<1x128xf32>
    %cst_263 = arith.constant 8.000000e-01 : f32
    %287 = vector.broadcast %cst_263 : f32 to vector<1x128xf32>
    %288 = arith.addf %285, %287 : vector<1x128xf32>
    %289 = math.rsqrt %288 : vector<1x128xf32>
    %290 = arith.mulf %286, %289 : vector<1x128xf32>
    %c2_264 = arith.constant 2 : index
    %c0_265 = arith.constant 0 : index
    %291 = vector.load %arg14[%c2_264, %c0_265] : memref<3x128xf32, #tpu.memory_space<vmem>>, vector<1x128xf32>
    %292 = arith.mulf %281, %290 : vector<1x128xf32>
    %293 = arith.subf %291, %292 : vector<1x128xf32>
    %294 = vector.broadcast %290 : vector<1x128xf32> to vector<2x128xf32>
    %295 = arith.mulf %274, %294 : vector<2x128xf32>
    %296 = vector.broadcast %293 : vector<1x128xf32> to vector<2x128xf32>
    %297 = arith.addf %295, %296 : vector<2x128xf32>
    %c0_266 = arith.constant 0 : index
    %c0_267 = arith.constant 0 : index
    %298 = vector.load %arg15[%c0_266, %c0_267] : memref<128x1xf32, #tpu.memory_space<vmem>>, vector<128x1xf32>
    %cst_268 = arith.constant dense<0.000000e+00> : vector<2x1xf32>
    %299 = tpu.matmul %297, %298, %cst_268 {dimension_numbers = #tpu.dot_dimension_numbers<[1], [0], [0], [1], [0, 0, 1, 1], [], []>} : vector<2x128xf32>, vector<128x1xf32>, vector<2x1xf32> -> vector<2x1xf32>
    %c0_269 = arith.constant 0 : index
    %c0_270 = arith.constant 0 : index
    %300 = vector.load %arg16[%c0_269, %c0_270] : memref<1x1xf32, #tpu.memory_space<vmem>>, vector<1x1xf32>
    %301 = vector.broadcast %300 : vector<1x1xf32> to vector<2x1xf32>
    %302 = arith.addf %299, %301 : vector<2x1xf32>
    %c0_271 = arith.constant 0 : index
    %c0_272 = arith.constant 0 : index
    %303 = vector.load %arg21[%c0_271, %c0_272] : memref<2x1xf32, #tpu.memory_space<vmem>>, vector<2x1xf32>
    tpu.vector_store %arg21[%c0_271, %c0_272], %302 {strides = array<i32>} : memref<2x1xf32, #tpu.memory_space<vmem>>, vector<2x1xf32>,
    %c0_273 = arith.constant 0 : index
    %c0_274 = arith.constant 0 : index
    %304 = vector.load %arg17[%c0_273, %c0_274] : memref<128x10xf32, #tpu.memory_space<vmem>>, vector<128x10xf32>
    %cst_275 = arith.constant dense<0.000000e+00> : vector<2x10xf32>
    %305 = tpu.matmul %297, %304, %cst_275 {dimension_numbers = #tpu.dot_dimension_numbers<[1], [0], [0], [1], [0, 0, 1, 1], [], []>} : vector<2x128xf32>, vector<128x10xf32>, vector<2x10xf32> -> vector<2x10xf32>
    %c0_276 = arith.constant 0 : index
    %c0_277 = arith.constant 0 : index
    %306 = vector.load %arg18[%c0_276, %c0_277] : memref<1x10xf32, #tpu.memory_space<vmem>>, vector<1x10xf32>
    %307 = vector.broadcast %306 : vector<1x10xf32> to vector<2x10xf32>
    %308 = arith.addf %305, %307 : vector<2x10xf32>
    %cst_278 = arith.constant dense<0xFF800000> : vector<2xf32>
    %309 = vector.multi_reduction <maximumf>, %308, %cst_278 [1] : vector<2x10xf32> to vector<2xf32>
    %310 = vector.shape_cast %309 : vector<2xf32> to vector<2x1xf32>
    %311 = vector.broadcast %310 : vector<2x1xf32> to vector<2x10xf32>
    %312 = arith.subf %308, %311 : vector<2x10xf32>
    %313 = math.exp %312 : vector<2x10xf32>
    %cst_279 = arith.constant dense<0.000000e+00> : vector<2xf32>
    %314 = vector.multi_reduction <add>, %313, %cst_279 [1] : vector<2x10xf32> to vector<2xf32>
    %315 = vector.shape_cast %314 : vector<2xf32> to vector<2x1xf32>
    %316 = vector.broadcast %315 : vector<2x1xf32> to vector<2x10xf32>
    %317 = arith.divf %313, %316 : vector<2x10xf32>
    %c0_280 = arith.constant 0 : index
    %c0_281 = arith.constant 0 : index
    %318 = vector.load %arg22[%c0_280, %c0_281] : memref<2x10xf32, #tpu.memory_space<vmem>>, vector<2x10xf32>
    tpu.vector_store %arg22[%c0_280, %c0_281], %317 {strides = array<i32>} : memref<2x10xf32, #tpu.memory_space<vmem>>, vector<2x10xf32>,
    %c0_282 = arith.constant 0 : index
    %c0_283 = arith.constant 0 : index
    %319 = vector.load %arg19[%c0_282, %c0_283] : memref<128x2xf32, #tpu.memory_space<vmem>>, vector<128x2xf32>
    %cst_284 = arith.constant dense<0.000000e+00> : vector<2x2xf32>
    %320 = tpu.matmul %297, %319, %cst_284 {dimension_numbers = #tpu.dot_dimension_numbers<[1], [0], [0], [1], [0, 0, 1, 1], [], []>} : vector<2x128xf32>, vector<128x2xf32>, vector<2x2xf32> -> vector<2x2xf32>
    %c0_285 = arith.constant 0 : index
    %c0_286 = arith.constant 0 : index
    %321 = vector.load %arg20[%c0_285, %c0_286] : memref<1x2xf32, #tpu.memory_space<vmem>>, vector<1x2xf32>
    %322 = vector.broadcast %321 : vector<1x2xf32> to vector<2x2xf32>
    %323 = arith.addf %320, %322 : vector<2x2xf32>
    %c0_287 = arith.constant 0 : index
    %c0_288 = arith.constant 0 : index
    %324 = vector.load %arg23[%c0_287, %c0_288] : memref<2x2xf32, #tpu.memory_space<vmem>>, vector<2x2xf32>
    tpu.vector_store %arg23[%c0_287, %c0_288], %323 {strides = array<i32>} : memref<2x2xf32, #tpu.memory_space<vmem>>, vector<2x2xf32>,
    return
  }
  func.func @transform_0(%arg0: i32) -> (i32, i32) {
    %c0_i32 = arith.constant 0 : i32
    %c0_i32_0 = arith.constant 0 : i32
    %c0_i32_1 = arith.constant 0 : i32
    return %c0_i32, %c0_i32_0 : i32, i32
  }
  func.func @transform_1(%arg0: i32) -> (i32, i32) {
    %c0_i32 = arith.constant 0 : i32
    %c0_i32_0 = arith.constant 0 : i32
    %c0_i32_1 = arith.constant 0 : i32
    return %c0_i32, %c0_i32_0 : i32, i32
  }
  func.func @transform_2(%arg0: i32) -> (i32, i32) {
    %c0_i32 = arith.constant 0 : i32
    %c0_i32_0 = arith.constant 0 : i32
    %c0_i32_1 = arith.constant 0 : i32
    return %c0_i32, %c0_i32_0 : i32, i32
  }
  func.func @transform_3(%arg0: i32) -> (i32, i32, i32) {
    %c0_i32 = arith.constant 0 : i32
    %c0_i32_0 = arith.constant 0 : i32
    %c0_i32_1 = arith.constant 0 : i32
    %c0_i32_2 = arith.constant 0 : i32
    return %c0_i32, %c0_i32_0, %c0_i32_1 : i32, i32, i32
  }
  func.func @transform_4(%arg0: i32) -> (i32, i32, i32) {
    %c0_i32 = arith.constant 0 : i32
    %c0_i32_0 = arith.constant 0 : i32
    %c0_i32_1 = arith.constant 0 : i32
    %c0_i32_2 = arith.constant 0 : i32
    return %c0_i32, %c0_i32_0, %c0_i32_1 : i32, i32, i32
  }
  func.func @transform_5(%arg0: i32) -> (i32, i32) {
    %c0_i32 = arith.constant 0 : i32
    %c0_i32_0 = arith.constant 0 : i32
    %c0_i32_1 = arith.constant 0 : i32
    return %c0_i32, %c0_i32_0 : i32, i32
  }
  func.func @transform_6(%arg0: i32) -> (i32, i32) {
    %c0_i32 = arith.constant 0 : i32
    %c0_i32_0 = arith.constant 0 : i32
    %c0_i32_1 = arith.constant 0 : i32
    return %c0_i32, %c0_i32_0 : i32, i32
  }
  func.func @transform_7(%arg0: i32) -> (i32, i32, i32) {
    %c0_i32 = arith.constant 0 : i32
    %c0_i32_0 = arith.constant 0 : i32
    %c0_i32_1 = arith.constant 0 : i32
    %c0_i32_2 = arith.constant 0 : i32
    return %c0_i32, %c0_i32_0, %c0_i32_1 : i32, i32, i32
  }
  func.func @transform_8(%arg0: i32) -> (i32, i32, i32) {
    %c0_i32 = arith.constant 0 : i32
    %c0_i32_0 = arith.constant 0 : i32
    %c0_i32_1 = arith.constant 0 : i32
    %c0_i32_2 = arith.constant 0 : i32
    return %c0_i32, %c0_i32_0, %c0_i32_1 : i32, i32, i32
  }
  func.func @transform_9(%arg0: i32) -> (i32, i32) {
    %c0_i32 = arith.constant 0 : i32
    %c0_i32_0 = arith.constant 0 : i32
    %c0_i32_1 = arith.constant 0 : i32
    return %c0_i32, %c0_i32_0 : i32, i32
  }
  func.func @transform_10(%arg0: i32) -> (i32, i32) {
    %c0_i32 = arith.constant 0 : i32
    %c0_i32_0 = arith.constant 0 : i32
    %c0_i32_1 = arith.constant 0 : i32
    return %c0_i32, %c0_i32_0 : i32, i32
  }
  func.func @transform_11(%arg0: i32) -> (i32, i32, i32) {
    %c0_i32 = arith.constant 0 : i32
    %c0_i32_0 = arith.constant 0 : i32
    %c0_i32_1 = arith.constant 0 : i32
    %c0_i32_2 = arith.constant 0 : i32
    return %c0_i32, %c0_i32_0, %c0_i32_1 : i32, i32, i32
  }
  func.func @transform_12(%arg0: i32) -> (i32, i32, i32) {
    %c0_i32 = arith.constant 0 : i32
    %c0_i32_0 = arith.constant 0 : i32
    %c0_i32_1 = arith.constant 0 : i32
    %c0_i32_2 = arith.constant 0 : i32
    return %c0_i32, %c0_i32_0, %c0_i32_1 : i32, i32, i32
  }
  func.func @transform_13(%arg0: i32) -> (i32, i32) {
    %c0_i32 = arith.constant 0 : i32
    %c0_i32_0 = arith.constant 0 : i32
    %c0_i32_1 = arith.constant 0 : i32
    return %c0_i32, %c0_i32_0 : i32, i32
  }
  func.func @transform_14(%arg0: i32) -> (i32, i32) {
    %c0_i32 = arith.constant 0 : i32
    %c0_i32_0 = arith.constant 0 : i32
    %c0_i32_1 = arith.constant 0 : i32
    return %c0_i32, %c0_i32_0 : i32, i32
  }
  func.func @transform_15(%arg0: i32) -> (i32, i32) {
    %c0_i32 = arith.constant 0 : i32
    %c0_i32_0 = arith.constant 0 : i32
    %c0_i32_1 = arith.constant 0 : i32
    return %c0_i32, %c0_i32_0 : i32, i32
  }
  func.func @transform_16(%arg0: i32) -> (i32, i32) {
    %c0_i32 = arith.constant 0 : i32
    %c0_i32_0 = arith.constant 0 : i32
    %c0_i32_1 = arith.constant 0 : i32
    return %c0_i32, %c0_i32_0 : i32, i32
  }
  func.func @transform_17(%arg0: i32) -> (i32, i32) {
    %c0_i32 = arith.constant 0 : i32
    %c0_i32_0 = arith.constant 0 : i32
    %c0_i32_1 = arith.constant 0 : i32
    return %c0_i32, %c0_i32_0 : i32, i32
  }
  func.func @transform_18(%arg0: i32) -> (i32, i32) {
    %c0_i32 = arith.constant 0 : i32
    %c0_i32_0 = arith.constant 0 : i32
    %c0_i32_1 = arith.constant 0 : i32
    return %c0_i32, %c0_i32_0 : i32, i32
  }
  func.func @transform_19(%arg0: i32) -> (i32, i32) {
    %c0_i32 = arith.constant 0 : i32
    %c0_i32_0 = arith.constant 0 : i32
    %c0_i32_1 = arith.constant 0 : i32
    return %c0_i32, %c0_i32_0 : i32, i32
  }
  func.func @transform_20(%arg0: i32) -> (i32, i32) {
    %c0_i32 = arith.constant 0 : i32
    %c0_i32_0 = arith.constant 0 : i32
    %c0_i32_1 = arith.constant 0 : i32
    return %c0_i32, %c0_i32_0 : i32, i32
  }
  func.func @transform_21(%arg0: i32) -> (i32, i32) {
    %c0_i32 = arith.constant 0 : i32
    %c0_i32_0 = arith.constant 0 : i32
    %c0_i32_1 = arith.constant 0 : i32
    return %c0_i32, %c0_i32_0 : i32, i32
  }
  func.func @transform_22(%arg0: i32) -> (i32, i32) {
    %c0_i32 = arith.constant 0 : i32
    %c0_i32_0 = arith.constant 0 : i32
    %c0_i32_1 = arith.constant 0 : i32
    return %c0_i32, %c0_i32_0 : i32, i32
  }
}

</mosaic_0001>

<llo_original>
// kernel: discriminator_forward.1
$region0: #{discriminator_forward.1}
  #allocation0 [shape = 'u32[]', space=smem, size = 0x4, offset = 0x4, fixed_abs, tag = 'smem constant byte address 0x4 - core index']
  #allocation1 [shape = 'u32[144,128]{1,0:T(1,128)}', space=vmem, size = 0x12000, scoped, tag = 'internal scratch']
  #allocation2 [shape = 'f32[1,1]{1,0:T(1,128)S(1)}', space=vmem, size = 0x200, scoped, tag = 'scoped memory for discriminator_forward.1']
  %s0 = inlined_call_operand.vmem [shape: f32[128,144], index: 0, kind: input, shape index: {}]
  %s1 = inlined_call_operand.vmem [shape: f32[144,128], index: 1, kind: input, shape index: {}]
  %s2 = inlined_call_operand.vmem [shape: f32[1,128], index: 2, kind: input, shape index: {}]
  %s3 = inlined_call_operand.vmem [shape: f32[9,32,128], index: 3, kind: input, shape index: {}]
  %s4 = inlined_call_operand.vmem [shape: f32[9,128,128], index: 4, kind: input, shape index: {}]
  %s5 = inlined_call_operand.vmem [shape: f32[3,128], index: 5, kind: input, shape index: {}]
  %s6 = inlined_call_operand.vmem [shape: f32[128,128], index: 6, kind: input, shape index: {}]
  %s7 = inlined_call_operand.vmem [shape: f32[9,8,32], index: 7, kind: input, shape index: {}]
  %s8 = inlined_call_operand.vmem [shape: f32[9,128,128], index: 8, kind: input, shape index: {}]
  %s9 = inlined_call_operand.vmem [shape: f32[3,128], index: 9, kind: input, shape index: {}]
  %s10 = inlined_call_operand.vmem [shape: f32[128,128], index: 10, kind: input, shape index: {}]
  %s11 = inlined_call_operand.vmem [shape: f32[9,2,8], index: 11, kind: input, shape index: {}]
  %s12 = inlined_call_operand.vmem [shape: f32[9,128,128], index: 12, kind: input, shape index: {}]
  %s13 = inlined_call_operand.vmem [shape: f32[3,128], index: 13, kind: input, shape index: {}]
  %s14 = inlined_call_operand.vmem [shape: f32[128,1], index: 14, kind: input, shape index: {}]
  %s15 = inlined_call_operand.<no memory space> [shape: f32[1,1], index: 15, kind: input, shape index: {}]
  %s16 = inlined_call_operand.vmem [shape: f32[128,10], index: 16, kind: input, shape index: {}]
  %s17 = inlined_call_operand.vmem [shape: f32[1,10], index: 17, kind: input, shape index: {}]
  %s18 = inlined_call_operand.vmem [shape: f32[128,2], index: 18, kind: input, shape index: {}]
  %s19 = inlined_call_operand.vmem [shape: f32[1,2], index: 19, kind: input, shape index: {}]
  %s20 = inlined_call_operand.vmem [shape: f32[2,1], index: 20, kind: output, shape index: {0}]
  %s21 = inlined_call_operand.hbm [shape: f32[2,10], index: 21, kind: output, shape index: {1}]
  %s22 = inlined_call_operand.hbm [shape: f32[2,2], index: 22, kind: output, shape index: {2}]
  %23 = xla_tuple %s20, %s21, %s22
  %s24 = sld [smem:[#allocation0]]
  $region106: #{discriminator_forward.1} parent=0
    _
  %s26 = ssub.s32 1, %s24
  %s27 = scalar_select 0, %s26, %s24
  %v28 = vstv %s15
  %29 = vst [vmem:[#allocation2] sm:$0x1] %v28
  $region1: #{discriminator_forward.1} parent=0
    #allocation3 [shape = 'u8[1024]{0}', space=vmem, size = 0x400, scoped, tag = 'output window, operand 1, single buffered']
    #allocation4 [shape = 's32[1]{0}', space=sflag, size = 0x4, scoped, tag = 'scoped memory for discriminator_forward.1']
    #allocation5 [shape = 'u8[1024]{0}', space=vmem, size = 0x400, scoped, tag = 'output window, operand 2, single buffered']
    #allocation6 [shape = 's32[1]{0}', space=sflag, size = 0x4, scoped, tag = 'scoped memory for discriminator_forward.1']
    %30 = vsyncpa [#allocation4], 0
    %31 = vsyncpa [#allocation6], 0
    // Predicated region
    $region2: #{discriminator_forward.1} parent=1 // pred_check
      _
    $region3: #{discriminator_forward.1} parent=1 // pred_check_branch
      %33 = sbr.rel (0) target = $region5
    $region4: #{discriminator_forward.1} parent=1 // pred_region
      _
    $region5: #{discriminator_forward.1} parent=1 // pred_fallthru
      _
    // Predicated region
    $region6: #{discriminator_forward.1} parent=1 // pred_check
      _
    $region7: #{discriminator_forward.1} parent=1 // pred_check_branch
      %35 = sbr.rel (0) target = $region9
    $region8: #{discriminator_forward.1} parent=1 // pred_region
      _
    $region9: #{discriminator_forward.1} parent=1 // pred_fallthru
      _
    // Predicated region
    $region10: #{discriminator_forward.1} parent=1 // pred_check
      _
    $region11: #{discriminator_forward.1} parent=1 // pred_check_branch
      %37 = sbr.rel (0) target = $region13
    $region12: #{discriminator_forward.1} parent=1 // pred_region
      _
    $region13: #{discriminator_forward.1} parent=1 // pred_fallthru
      _
    // Predicated region
    $region14: #{discriminator_forward.1} parent=1 // pred_check
      _
    $region15: #{discriminator_forward.1} parent=1 // pred_check_branch
      %39 = sbr.rel (0) target = $region17
    $region16: #{discriminator_forward.1} parent=1 // pred_region
      _
    $region17: #{discriminator_forward.1} parent=1 // pred_fallthru
      _
    // Predicated region
    $region18: #{discriminator_forward.1} parent=1 // pred_check
      _
    $region19: #{discriminator_forward.1} parent=1 // pred_check_branch
      %41 = sbr.rel (0) target = $region21
    $region20: #{discriminator_forward.1} parent=1 // pred_region
      _
    $region21: #{discriminator_forward.1} parent=1 // pred_fallthru
      _
    // Predicated region
    $region22: #{discriminator_forward.1} parent=1 // pred_check
      _
    $region23: #{discriminator_forward.1} parent=1 // pred_check_branch
      %43 = sbr.rel (0) target = $region25
    $region24: #{discriminator_forward.1} parent=1 // pred_region
      _
    $region25: #{discriminator_forward.1} parent=1 // pred_fallthru
      _
    // Predicated region
    $region26: #{discriminator_forward.1} parent=1 // pred_check
      _
    $region27: #{discriminator_forward.1} parent=1 // pred_check_branch
      %45 = sbr.rel (0) target = $region29
    $region28: #{discriminator_forward.1} parent=1 // pred_region
      _
    $region29: #{discriminator_forward.1} parent=1 // pred_fallthru
      _
    // Predicated region
    $region30: #{discriminator_forward.1} parent=1 // pred_check
      _
    $region31: #{discriminator_forward.1} parent=1 // pred_check_branch
      %47 = sbr.rel (0) target = $region33
    $region32: #{discriminator_forward.1} parent=1 // pred_region
      _
    $region33: #{discriminator_forward.1} parent=1 // pred_fallthru
      _
    // Predicated region
    $region34: #{discriminator_forward.1} parent=1 // pred_check
      _
    $region35: #{discriminator_forward.1} parent=1 // pred_check_branch
      %49 = sbr.rel (0) target = $region37
    $region36: #{discriminator_forward.1} parent=1 // pred_region
      _
    $region37: #{discriminator_forward.1} parent=1 // pred_fallthru
      _
    // Predicated region
    $region38: #{discriminator_forward.1} parent=1 // pred_check
      _
    $region39: #{discriminator_forward.1} parent=1 // pred_check_branch
      %51 = sbr.rel (0) target = $region41
    $region40: #{discriminator_forward.1} parent=1 // pred_region
      _
    $region41: #{discriminator_forward.1} parent=1 // pred_fallthru
      _
    // Predicated region
    $region42: #{discriminator_forward.1} parent=1 // pred_check
      _
    $region43: #{discriminator_forward.1} parent=1 // pred_check_branch
      %53 = sbr.rel (0) target = $region45
    $region44: #{discriminator_forward.1} parent=1 // pred_region
      _
    $region45: #{discriminator_forward.1} parent=1 // pred_fallthru
      _
    // Predicated region
    $region46: #{discriminator_forward.1} parent=1 // pred_check
      _
    $region47: #{discriminator_forward.1} parent=1 // pred_check_branch
      %55 = sbr.rel (0) target = $region49
    $region48: #{discriminator_forward.1} parent=1 // pred_region
      _
    $region49: #{discriminator_forward.1} parent=1 // pred_fallthru
      _
    // Predicated region
    $region50: #{discriminator_forward.1} parent=1 // pred_check
      _
    $region51: #{discriminator_forward.1} parent=1 // pred_check_branch
      %57 = sbr.rel (0) target = $region53
    $region52: #{discriminator_forward.1} parent=1 // pred_region
      _
    $region53: #{discriminator_forward.1} parent=1 // pred_fallthru
      _
    // Predicated region
    $region54: #{discriminator_forward.1} parent=1 // pred_check
      _
    $region55: #{discriminator_forward.1} parent=1 // pred_check_branch
      %59 = sbr.rel (0) target = $region57
    $region56: #{discriminator_forward.1} parent=1 // pred_region
      _
    $region57: #{discriminator_forward.1} parent=1 // pred_fallthru
      _
    // Predicated region
    $region58: #{discriminator_forward.1} parent=1 // pred_check
      _
    $region59: #{discriminator_forward.1} parent=1 // pred_check_branch
      %61 = sbr.rel (0) target = $region61
    $region60: #{discriminator_forward.1} parent=1 // pred_region
      _
    $region61: #{discriminator_forward.1} parent=1 // pred_fallthru
      _
    // Predicated region
    $region62: #{discriminator_forward.1} parent=1 // pred_check
      _
    $region63: #{discriminator_forward.1} parent=1 // pred_check_branch
      %63 = sbr.rel (0) target = $region65
    $region64: #{discriminator_forward.1} parent=1 // pred_region
      _
    $region65: #{discriminator_forward.1} parent=1 // pred_fallthru
      _
    // Predicated region
    $region66: #{discriminator_forward.1} parent=1 // pred_check
      _
    $region67: #{discriminator_forward.1} parent=1 // pred_check_branch
      %65 = sbr.rel (0) target = $region69
    $region68: #{discriminator_forward.1} parent=1 // pred_region
      _
    $region69: #{discriminator_forward.1} parent=1 // pred_fallthru
      _
    // Predicated region
    $region70: #{discriminator_forward.1} parent=1 // pred_check
      _
    $region71: #{discriminator_forward.1} parent=1 // pred_check_branch
      %67 = sbr.rel (0) target = $region73
    $region72: #{discriminator_forward.1} parent=1 // pred_region
      _
    $region73: #{discriminator_forward.1} parent=1 // pred_fallthru
      _
    // Predicated region
    $region74: #{discriminator_forward.1} parent=1 // pred_check
      _
    $region75: #{discriminator_forward.1} parent=1 // pred_check_branch
      %69 = sbr.rel (0) target = $region77
    $region76: #{discriminator_forward.1} parent=1 // pred_region
      _
    $region77: #{discriminator_forward.1} parent=1 // pred_fallthru
      _
    // Predicated region
    $region78: #{discriminator_forward.1} parent=1 // pred_check
      _
    $region79: #{discriminator_forward.1} parent=1 // pred_check_branch
      %71 = sbr.rel (0) target = $region81
    $region80: #{discriminator_forward.1} parent=1 // pred_region
      _
    $region81: #{discriminator_forward.1} parent=1 // pred_fallthru
      _
    %v72 = vld [vmem:[%s0] sm:$0xff]
    %v73 = vld [vmem:[%s0 + $0x8] sm:$0xff]
    %v74 = vld [vmem:[%s0 + $0x10] sm:$0xff]
    %v75 = vld [vmem:[%s0 + $0x18] sm:$0xff]
    %v76 = vld [vmem:[%s0 + $0x20] sm:$0xff]
    %v77 = vld [vmem:[%s0 + $0x28] sm:$0xff]
    %v78 = vld [vmem:[%s0 + $0x30] sm:$0xff]
    %v79 = vld [vmem:[%s0 + $0x38] sm:$0xff]
    %v80 = vld [vmem:[%s0 + $0x40] sm:$0xff]
    %v81 = vld [vmem:[%s0 + $0x48] sm:$0xff]
    %v82 = vld [vmem:[%s0 + $0x50] sm:$0xff]
    %v83 = vld [vmem:[%s0 + $0x58] sm:$0xff]
    %v84 = vld [vmem:[%s0 + $0x60] sm:$0xff]
    %v85 = vld [vmem:[%s0 + $0x68] sm:$0xff]
    %v86 = vld [vmem:[%s0 + $0x70] sm:$0xff]
    %v87 = vld [vmem:[%s0 + $0x78] sm:$0xff]
    %v88 = vld [vmem:[%s0 + $0x80] sm:$0xff]
    %v89 = vld [vmem:[%s0 + $0x88] sm:$0xff]
    %v90 = vld [vmem:[%s0 + $0x90] sm:$0xff]
    %v91 = vld [vmem:[%s0 + $0x98] sm:$0xff]
    %v92 = vld [vmem:[%s0 + $0xa0] sm:$0xff]
    %v93 = vld [vmem:[%s0 + $0xa8] sm:$0xff]
    %v94 = vld [vmem:[%s0 + $0xb0] sm:$0xff]
    %v95 = vld [vmem:[%s0 + $0xb8] sm:$0xff]
    %v96 = vld [vmem:[%s0 + $0xc0] sm:$0xff]
    %v97 = vld [vmem:[%s0 + $0xc8] sm:$0xff]
    %v98 = vld [vmem:[%s0 + $0xd0] sm:$0xff]
    %v99 = vld [vmem:[%s0 + $0xd8] sm:$0xff]
    %v100 = vld [vmem:[%s0 + $0xe0] sm:$0xff]
    %v101 = vld [vmem:[%s0 + $0xe8] sm:$0xff]
    %v102 = vld [vmem:[%s0 + $0xf0] sm:$0xff]
    %v103 = vld [vmem:[%s0 + $0xf8] sm:$0xff]
    %v104 = vld [vmem:[%s1] sm:$0xff]
    %v105 = vld [vmem:[%s1 + $0x8] sm:$0xff]
    %v106 = vld [vmem:[%s1 + $0x10] sm:$0xff]
    %v107 = vld [vmem:[%s1 + $0x18] sm:$0xff]
    %v108 = vld [vmem:[%s1 + $0x20] sm:$0xff]
    %v109 = vld [vmem:[%s1 + $0x28] sm:$0xff]
    %v110 = vld [vmem:[%s1 + $0x30] sm:$0xff]
    %v111 = vld [vmem:[%s1 + $0x38] sm:$0xff]
    %v112 = vld [vmem:[%s1 + $0x40] sm:$0xff]
    %v113 = vld [vmem:[%s1 + $0x48] sm:$0xff]
    %v114 = vld [vmem:[%s1 + $0x50] sm:$0xff]
    %v115 = vld [vmem:[%s1 + $0x58] sm:$0xff]
    %v116 = vld [vmem:[%s1 + $0x60] sm:$0xff]
    %v117 = vld [vmem:[%s1 + $0x68] sm:$0xff]
    %v118 = vld [vmem:[%s1 + $0x70] sm:$0xff]
    %v119 = vld [vmem:[%s1 + $0x78] sm:$0xff]
    %v120 = vld [vmem:[%s1 + $0x80] sm:$0xff]
    %v121 = vld [vmem:[%s1 + $0x88] sm:$0xff]
    %v122 = vld [vmem:[%s2] sm:$0x1]
    %v124 = vlaneseq
    %v125 = vshrl.u32 %v124, 7
    %v126 = vsub.s32 0, %v125
    %v127 = vrot.slane %v122, %v126
    %vm129 = vcmask 130048
    %v131 = vsel %vm129, %v73, 0
    %v134 = vsel %vm129, %v75, 0
    %v137 = vsel %vm129, %v77, 0
    %v140 = vsel %vm129, %v79, 0
    %v143 = vsel %vm129, %v81, 0
    %v146 = vsel %vm129, %v83, 0
    %v149 = vsel %vm129, %v85, 0
    %v152 = vsel %vm129, %v87, 0
    %v155 = vsel %vm129, %v89, 0
    %v158 = vsel %vm129, %v91, 0
    %v161 = vsel %vm129, %v93, 0
    %v164 = vsel %vm129, %v95, 0
    %v167 = vsel %vm129, %v97, 0
    %v170 = vsel %vm129, %v99, 0
    %v173 = vsel %vm129, %v101, 0
    %v176 = vsel %vm129, %v103, 0
    %178 = vmatprep.subr.mxu0 0.0
    %179 = vmatpush1.msra.mxu0 %v104
    %180 = vmatprep.subr.mxu0 0.0
    %181 = vmatpush1.msra.mxu0 %v105
    %182 = vmatprep.subr.mxu0 0.0
    %183 = vmatpush1.msra.mxu0 %v106
    %184 = vmatprep.subr.mxu0 0.0
    %185 = vmatpush1.msra.mxu0 %v107
    %186 = vmatprep.subr.mxu0 0.0
    %187 = vmatpush1.msra.mxu0 %v108
    %188 = vmatprep.subr.mxu0 0.0
    %189 = vmatpush1.msra.mxu0 %v109
    %190 = vmatprep.subr.mxu0 0.0
    %191 = vmatpush1.msra.mxu0 %v110
    %192 = vmatprep.subr.mxu0 0.0
    %193 = vmatpush1.msra.mxu0 %v111
    %194 = vmatprep.subr.mxu0 0.0
    %195 = vmatpush1.msra.mxu0 %v112
    %196 = vmatprep.subr.mxu0 0.0
    %197 = vmatpush1.msra.mxu0 %v113
    %198 = vmatprep.subr.mxu0 0.0
    %199 = vmatpush1.msra.mxu0 %v114
    %200 = vmatprep.subr.mxu0 0.0
    %201 = vmatpush1.msra.mxu0 %v115
    %202 = vmatprep.subr.mxu0 0.0
    %203 = vmatpush1.msra.mxu0 %v116
    %204 = vmatprep.subr.mxu0 0.0
    %205 = vmatpush1.msra.mxu0 %v117
    %206 = vmatprep.subr.mxu0 0.0
    %207 = vmatpush1.msra.mxu0 %v118
    %208 = vmatprep.subr.mxu0 0.0
    %209 = vmatpush1.msra.mxu0 %v119
    %210 = vmatprep.subr.mxu0 0.0
    %211 = vmatpush1.msra.mxu0 %v120
    %212 = vmatprep.subr.mxu0 0.0
    %213 = vmatpush1.msra.mxu0 %v121
    %214 = vmatprep.subr.mxu0 0.0
    %215 = vmatpush1.msra.mxu0 0.0
    %216 = vmatprep.subr.mxu0 0.0
    %217 = vmatpush1.msra.mxu0 0.0
    %218 = vmatprep.subr.mxu0 0.0
    %219 = vmatpush1.msra.mxu0 0.0
    %220 = vmatprep.subr.mxu0 0.0
    %221 = vmatpush1.msra.mxu0 0.0
    %222 = vmatprep.subr.mxu0 0.0
    %223 = vmatpush1.msra.mxu0 0.0
    %224 = vmatprep.subr.mxu0 0.0
    %225 = vmatpush1.msra.mxu0 0.0
    %226 = vmatprep.subr.mxu0 0.0
    %227 = vmatpush1.msra.mxu0 0.0
    %228 = vmatprep.subr.mxu0 0.0
    %229 = vmatpush1.msra.mxu0 0.0
    %230 = vmatprep.subr.mxu0 0.0
    %231 = vmatpush1.msra.mxu0 0.0
    %232 = vmatprep.subr.mxu0 0.0
    %233 = vmatpush1.msra.mxu0 0.0
    %234 = vmatprep.subr.mxu0 0.0
    %235 = vmatpush1.msra.mxu0 0.0
    %236 = vmatprep.subr.mxu0 0.0
    %237 = vmatpush1.msra.mxu0 0.0
    %238 = vmatprep.subr.mxu0 0.0
    %239 = vmatpush1.msra.mxu0 0.0
    %240 = vmatprep.subr.mxu0 0.0
    %241 = vmatpush1.msra.mxu0 0.0
    %242 = vmatprep.mubr.f32.mxu0 %v131
    %243 = vmatmul.mubr.f32.gmra.mrb[0].mxu0 %v72
    %v244 = vpop.f32.mrb[0].mxu0
    %v245 = vadd.f32 %v127, %v244
    %v246 = vpop.f32.mrb[0].mxu0
    %247 = vmatprep.mubr.f32.mxu0 %v134
    %248 = vmatmul.mubr.f32.gmra.mrb[0].mxu0 %v74
    %v249 = vpop.f32.mrb[0].mxu0
    %v250 = vadd.f32 %v127, %v249
    %v251 = vpop.f32.mrb[0].mxu0
    %252 = vmatprep.mubr.f32.mxu0 %v137
    %253 = vmatmul.mubr.f32.gmra.mrb[0].mxu0 %v76
    %v254 = vpop.f32.mrb[0].mxu0
    %v255 = vadd.f32 %v127, %v254
    %v256 = vpop.f32.mrb[0].mxu0
    %257 = vmatprep.mubr.f32.mxu0 %v140
    %258 = vmatmul.mubr.f32.gmra.mrb[0].mxu0 %v78
    %v259 = vpop.f32.mrb[0].mxu0
    %v260 = vadd.f32 %v127, %v259
    %v261 = vpop.f32.mrb[0].mxu0
    %262 = vmatprep.mubr.f32.mxu0 %v143
    %263 = vmatmul.mubr.f32.gmra.mrb[0].mxu0 %v80
    %v264 = vpop.f32.mrb[0].mxu0
    %v265 = vadd.f32 %v127, %v264
    %v266 = vpop.f32.mrb[0].mxu0
    %267 = vmatprep.mubr.f32.mxu0 %v146
    %268 = vmatmul.mubr.f32.gmra.mrb[0].mxu0 %v82
    %v269 = vpop.f32.mrb[0].mxu0
    %v270 = vadd.f32 %v127, %v269
    %v271 = vpop.f32.mrb[0].mxu0
    %272 = vmatprep.mubr.f32.mxu0 %v149
    %273 = vmatmul.mubr.f32.gmra.mrb[0].mxu0 %v84
    %v274 = vpop.f32.mrb[0].mxu0
    %v275 = vadd.f32 %v127, %v274
    %v276 = vpop.f32.mrb[0].mxu0
    %277 = vmatprep.mubr.f32.mxu0 %v152
    %278 = vmatmul.mubr.f32.gmra.mrb[0].mxu0 %v86
    %v279 = vpop.f32.mrb[0].mxu0
    %v280 = vadd.f32 %v127, %v279
    %v281 = vpop.f32.mrb[0].mxu0
    %282 = vmatprep.mubr.f32.mxu0 %v155
    %283 = vmatmul.mubr.f32.gmra.mrb[0].mxu0 %v88
    %v284 = vpop.f32.mrb[0].mxu0
    %v285 = vadd.f32 %v127, %v284
    %v286 = vpop.f32.mrb[0].mxu0
    %287 = vmatprep.mubr.f32.mxu0 %v158
    %288 = vmatmul.mubr.f32.gmra.mrb[0].mxu0 %v90
    %v289 = vpop.f32.mrb[0].mxu0
    %v290 = vadd.f32 %v127, %v289
    %v291 = vpop.f32.mrb[0].mxu0
    %292 = vmatprep.mubr.f32.mxu0 %v161
    %293 = vmatmul.mubr.f32.gmra.mrb[0].mxu0 %v92
    %v294 = vpop.f32.mrb[0].mxu0
    %v295 = vadd.f32 %v127, %v294
    %v296 = vpop.f32.mrb[0].mxu0
    %297 = vmatprep.mubr.f32.mxu0 %v164
    %298 = vmatmul.mubr.f32.gmra.mrb[0].mxu0 %v94
    %v299 = vpop.f32.mrb[0].mxu0
    %v300 = vadd.f32 %v127, %v299
    %v301 = vpop.f32.mrb[0].mxu0
    %302 = vmatprep.mubr.f32.mxu0 %v167
    %303 = vmatmul.mubr.f32.gmra.mrb[0].mxu0 %v96
    %v304 = vpop.f32.mrb[0].mxu0
    %v305 = vadd.f32 %v127, %v304
    %v306 = vpop.f32.mrb[0].mxu0
    %307 = vmatprep.mubr.f32.mxu0 %v170
    %308 = vmatmul.mubr.f32.gmra.mrb[0].mxu0 %v98
    %v309 = vpop.f32.mrb[0].mxu0
    %v310 = vadd.f32 %v127, %v309
    %v311 = vpop.f32.mrb[0].mxu0
    %312 = vmatprep.mubr.f32.mxu0 %v173
    %313 = vmatmul.mubr.f32.gmra.mrb[0].mxu0 %v100
    %v314 = vpop.f32.mrb[0].mxu0
    %v315 = vadd.f32 %v127, %v314
    %v316 = vpop.f32.mrb[0].mxu0
    %317 = vmatprep.mubr.f32.mxu0 %v176
    %318 = vmatmul.mubr.f32.gmra.mrb[0].mxu0 %v102
    %v319 = vpop.f32.mrb[0].mxu0
    %v320 = vadd.f32 %v127, %v319
    %v321 = vpop.f32.mrb[0].mxu0
    %322 = vdwg.mxu0
    %vm323 = vcmp.ge.f32.partialorder %v245, 0.0
    %vm324 = vcmp.ge.f32.partialorder %v250, 0.0
    %vm325 = vcmp.ge.f32.partialorder %v255, 0.0
    %vm326 = vcmp.ge.f32.partialorder %v260, 0.0
    %vm327 = vcmp.ge.f32.partialorder %v265, 0.0
    %vm328 = vcmp.ge.f32.partialorder %v270, 0.0
    %vm329 = vcmp.ge.f32.partialorder %v275, 0.0
    %vm330 = vcmp.ge.f32.partialorder %v280, 0.0
    %vm331 = vcmp.ge.f32.partialorder %v285, 0.0
    %vm332 = vcmp.ge.f32.partialorder %v290, 0.0
    %vm333 = vcmp.ge.f32.partialorder %v295, 0.0
    %vm334 = vcmp.ge.f32.partialorder %v300, 0.0
    %vm335 = vcmp.ge.f32.partialorder %v305, 0.0
    %vm336 = vcmp.ge.f32.partialorder %v310, 0.0
    %vm337 = vcmp.ge.f32.partialorder %v315, 0.0
    %vm338 = vcmp.ge.f32.partialorder %v320, 0.0
    %v339 = vmul.f32 %v245, 0.2
    %v340 = vmul.f32 %v250, 0.2
    %v341 = vmul.f32 %v255, 0.2
    %v342 = vmul.f32 %v260, 0.2
    %v343 = vmul.f32 %v265, 0.2
    %v344 = vmul.f32 %v270, 0.2
    %v345 = vmul.f32 %v275, 0.2
    %v346 = vmul.f32 %v280, 0.2
    %v347 = vmul.f32 %v285, 0.2
    %v348 = vmul.f32 %v290, 0.2
    %v349 = vmul.f32 %v295, 0.2
    %v350 = vmul.f32 %v300, 0.2
    %v351 = vmul.f32 %v305, 0.2
    %v352 = vmul.f32 %v310, 0.2
    %v353 = vmul.f32 %v315, 0.2
    %v354 = vmul.f32 %v320, 0.2
    %v355 = vsel %vm323, %v245, %v339
    %v356 = vsel %vm324, %v250, %v340
    %v357 = vsel %vm325, %v255, %v341
    %v358 = vsel %vm326, %v260, %v342
    %v359 = vsel %vm327, %v265, %v343
    %v360 = vsel %vm328, %v270, %v344
    %v361 = vsel %vm329, %v275, %v345
    %v362 = vsel %vm330, %v280, %v346
    %v363 = vsel %vm331, %v285, %v347
    %v364 = vsel %vm332, %v290, %v348
    %v365 = vsel %vm333, %v295, %v349
    %v366 = vsel %vm334, %v300, %v350
    %v367 = vsel %vm335, %v305, %v351
    %v368 = vsel %vm336, %v310, %v352
    %v369 = vsel %vm337, %v315, %v353
    %v370 = vsel %vm338, %v320, %v354
    %v371 = vld [vmem:[%s3] sm:$0xff]
    %v372 = vld [vmem:[%s3 + $0x8] sm:$0xff]
    %v373 = vld [vmem:[%s3 + $0x10] sm:$0xff]
    %v374 = vld [vmem:[%s3 + $0x18] sm:$0xff]
    %375 = vmatprep.subr.mxu0 0.0
    %376 = vmatpush1.msra.mxu0 %v355
    %377 = vmatprep.subr.mxu0 0.0
    %378 = vmatpush1.msra.mxu0 %v356
    %379 = vmatprep.subr.mxu0 0.0
    %380 = vmatpush1.msra.mxu0 %v357
    %381 = vmatprep.subr.mxu0 0.0
    %382 = vmatpush1.msra.mxu0 %v358
    %383 = vmatprep.subr.mxu0 0.0
    %384 = vmatpush1.msra.mxu0 %v359
    %385 = vmatprep.subr.mxu0 0.0
    %386 = vmatpush1.msra.mxu0 %v360
    %387 = vmatprep.subr.mxu0 0.0
    %388 = vmatpush1.msra.mxu0 %v361
    %389 = vmatprep.subr.mxu0 0.0
    %390 = vmatpush1.msra.mxu0 %v362
    %391 = vmatprep.subr.mxu0 0.0
    %392 = vmatpush1.msra.mxu0 %v363
    %393 = vmatprep.subr.mxu0 0.0
    %394 = vmatpush1.msra.mxu0 %v364
    %395 = vmatprep.subr.mxu0 0.0
    %396 = vmatpush1.msra.mxu0 %v365
    %397 = vmatprep.subr.mxu0 0.0
    %398 = vmatpush1.msra.mxu0 %v366
    %399 = vmatprep.subr.mxu0 0.0
    %400 = vmatpush1.msra.mxu0 %v367
    %401 = vmatprep.subr.mxu0 0.0
    %402 = vmatpush1.msra.mxu0 %v368
    %403 = vmatprep.subr.mxu0 0.0
    %404 = vmatpush1.msra.mxu0 %v369
    %405 = vmatprep.subr.mxu0 0.0
    %406 = vmatpush1.msra.mxu0 %v370
    %407 = vmatprep.subr.mxu0 0.0
    %408 = vmatpush1.msra.mxu0 0.0
    %409 = vmatprep.subr.mxu0 0.0
    %410 = vmatpush1.msra.mxu0 0.0
    %411 = vmatprep.subr.mxu0 0.0
    %412 = vmatpush1.msra.mxu0 0.0
    %413 = vmatprep.subr.mxu0 0.0
    %414 = vmatpush1.msra.mxu0 0.0
    %415 = vmatprep.subr.mxu0 0.0
    %416 = vmatpush1.msra.mxu0 0.0
    %417 = vmatprep.subr.mxu0 0.0
    %418 = vmatpush1.msra.mxu0 0.0
    %419 = vmatprep.subr.mxu0 0.0
    %420 = vmatpush1.msra.mxu0 0.0
    %421 = vmatprep.subr.mxu0 0.0
    %422 = vmatpush1.msra.mxu0 0.0
    %423 = vmatprep.subr.mxu0 0.0
    %424 = vmatpush1.msra.mxu0 0.0
    %425 = vmatprep.subr.mxu0 0.0
    %426 = vmatpush1.msra.mxu0 0.0
    %427 = vmatprep.subr.mxu0 0.0
    %428 = vmatpush1.msra.mxu0 0.0
    %429 = vmatprep.subr.mxu0 0.0
    %430 = vmatpush1.msra.mxu0 0.0
    %431 = vmatprep.subr.mxu0 0.0
    %432 = vmatpush1.msra.mxu0 0.0
    %433 = vmatprep.subr.mxu0 0.0
    %434 = vmatpush1.msra.mxu0 0.0
    %435 = vmatprep.subr.mxu0 0.0
    %436 = vmatpush1.msra.mxu0 0.0
    %437 = vmatprep.subr.mxu0 0.0
    %438 = vmatpush1.msra.mxu0 0.0
    %439 = vmatprep.mubr.f32.mxu0 0.0
    %440 = vmatmul.mubr.f32.gmra.mrb[0].mxu0 %v371
    %v441 = vpop.f32.mrb[0].mxu0
    %v442 = vadd.f32 0.0, %v441
    %v443 = vpop.f32.mrb[0].mxu0
    %444 = vmatprep.mubr.f32.mxu0 0.0
    %445 = vmatmul.mubr.f32.gmra.mrb[0].mxu0 %v372
    %v446 = vpop.f32.mrb[0].mxu0
    %v447 = vadd.f32 0.0, %v446
    %v448 = vpop.f32.mrb[0].mxu0
    %449 = vmatprep.mubr.f32.mxu0 0.0
    %450 = vmatmul.mubr.f32.gmra.mrb[0].mxu0 %v373
    %v451 = vpop.f32.mrb[0].mxu0
    %v452 = vadd.f32 0.0, %v451
    %v453 = vpop.f32.mrb[0].mxu0
    %454 = vmatprep.mubr.f32.mxu0 0.0
    %455 = vmatmul.mubr.f32.gmra.mrb[0].mxu0 %v374
    %v456 = vpop.f32.mrb[0].mxu0
    %v457 = vadd.f32 0.0, %v456
    %v458 = vpop.f32.mrb[0].mxu0
    %459 = vdwg.mxu0
    %v460 = vld [vmem:[%s4] sm:$0xff]
    %v461 = vld [vmem:[%s4 + $0x8] sm:$0xff]
    %v462 = vld [vmem:[%s4 + $0x10] sm:$0xff]
    %v463 = vld [vmem:[%s4 + $0x18] sm:$0xff]
    %v464 = vld [vmem:[%s4 + $0x20] sm:$0xff]
    %v465 = vld [vmem:[%s4 + $0x28] sm:$0xff]
    %v466 = vld [vmem:[%s4 + $0x30] sm:$0xff]
    %v467 = vld [vmem:[%s4 + $0x38] sm:$0xff]
    %v468 = vld [vmem:[%s4 + $0x40] sm:$0xff]
    %v469 = vld [vmem:[%s4 + $0x48] sm:$0xff]
    %v470 = vld [vmem:[%s4 + $0x50] sm:$0xff]
    %v471 = vld [vmem:[%s4 + $0x58] sm:$0xff]
    %v472 = vld [vmem:[%s4 + $0x60] sm:$0xff]
    %v473 = vld [vmem:[%s4 + $0x68] sm:$0xff]
    %v474 = vld [vmem:[%s4 + $0x70] sm:$0xff]
    %v475 = vld [vmem:[%s4 + $0x78] sm:$0xff]
    %s476 = scalar_lea.vmem %s3, 32
    %v477 = vld [vmem:[%s476] sm:$0xff]
    %v478 = vld [vmem:[%s476 + $0x8] sm:$0xff]
    %v479 = vld [vmem:[%s476 + $0x10] sm:$0xff]
    %v480 = vld [vmem:[%s476 + $0x18] sm:$0xff]
    %481 = vmatprep.subr.mxu0 0.0
    %482 = vmatpush1.msra.mxu0 %v355
    %483 = vmatprep.subr.mxu0 0.0
    %484 = vmatpush1.msra.mxu0 %v356
    %485 = vmatprep.subr.mxu0 0.0
    %486 = vmatpush1.msra.mxu0 %v357
    %487 = vmatprep.subr.mxu0 0.0
    %488 = vmatpush1.msra.mxu0 %v358
    %489 = vmatprep.subr.mxu0 0.0
    %490 = vmatpush1.msra.mxu0 %v359
    %491 = vmatprep.subr.mxu0 0.0
    %492 = vmatpush1.msra.mxu0 %v360
    %493 = vmatprep.subr.mxu0 0.0
    %494 = vmatpush1.msra.mxu0 %v361
    %495 = vmatprep.subr.mxu0 0.0
    %496 = vmatpush1.msra.mxu0 %v362
    %497 = vmatprep.subr.mxu0 0.0
    %498 = vmatpush1.msra.mxu0 %v363
    %499 = vmatprep.subr.mxu0 0.0
    %500 = vmatpush1.msra.mxu0 %v364
    %501 = vmatprep.subr.mxu0 0.0
    %502 = vmatpush1.msra.mxu0 %v365
    %503 = vmatprep.subr.mxu0 0.0
    %504 = vmatpush1.msra.mxu0 %v366
    %505 = vmatprep.subr.mxu0 0.0
    %506 = vmatpush1.msra.mxu0 %v367
    %507 = vmatprep.subr.mxu0 0.0
    %508 = vmatpush1.msra.mxu0 %v368
    %509 = vmatprep.subr.mxu0 0.0
    %510 = vmatpush1.msra.mxu0 %v369
    %511 = vmatprep.subr.mxu0 0.0
    %512 = vmatpush1.msra.mxu0 %v370
    %513 = vmatprep.subr.mxu0 0.0
    %514 = vmatpush1.msra.mxu0 0.0
    %515 = vmatprep.subr.mxu0 0.0
    %516 = vmatpush1.msra.mxu0 0.0
    %517 = vmatprep.subr.mxu0 0.0
    %518 = vmatpush1.msra.mxu0 0.0
    %519 = vmatprep.subr.mxu0 0.0
    %520 = vmatpush1.msra.mxu0 0.0
    %521 = vmatprep.subr.mxu0 0.0
    %522 = vmatpush1.msra.mxu0 0.0
    %523 = vmatprep.subr.mxu0 0.0
    %524 = vmatpush1.msra.mxu0 0.0
    %525 = vmatprep.subr.mxu0 0.0
    %526 = vmatpush1.msra.mxu0 0.0
    %527 = vmatprep.subr.mxu0 0.0
    %528 = vmatpush1.msra.mxu0 0.0
    %529 = vmatprep.subr.mxu0 0.0
    %530 = vmatpush1.msra.mxu0 0.0
    %531 = vmatprep.subr.mxu0 0.0
    %532 = vmatpush1.msra.mxu0 0.0
    %533 = vmatprep.subr.mxu0 0.0
    %534 = vmatpush1.msra.mxu0 0.0
    %535 = vmatprep.subr.mxu0 0.0
    %536 = vmatpush1.msra.mxu0 0.0
    %537 = vmatprep.subr.mxu0 0.0
    %538 = vmatpush1.msra.mxu0 0.0
    %539 = vmatprep.subr.mxu0 0.0
    %540 = vmatpush1.msra.mxu0 0.0
    %541 = vmatprep.subr.mxu0 0.0
    %542 = vmatpush1.msra.mxu0 0.0
    %543 = vmatprep.subr.mxu0 0.0
    %544 = vmatpush1.msra.mxu0 0.0
    %545 = vmatprep.mubr.f32.mxu0 0.0
    %546 = vmatmul.mubr.f32.gmra.mrb[0].mxu0 %v477
    %v547 = vpop.f32.mrb[0].mxu0
    %v548 = vadd.f32 0.0, %v547
    %v549 = vpop.f32.mrb[0].mxu0
    %550 = vmatprep.mubr.f32.mxu0 0.0
    %551 = vmatmul.mubr.f32.gmra.mrb[0].mxu0 %v478
    %v552 = vpop.f32.mrb[0].mxu0
    %v553 = vadd.f32 0.0, %v552
    %v554 = vpop.f32.mrb[0].mxu0
    %555 = vmatprep.mubr.f32.mxu0 0.0
    %556 = vmatmul.mubr.f32.gmra.mrb[0].mxu0 %v479
    %v557 = vpop.f32.mrb[0].mxu0
    %v558 = vadd.f32 0.0, %v557
    %v559 = vpop.f32.mrb[0].mxu0
    %560 = vmatprep.mubr.f32.mxu0 0.0
    %561 = vmatmul.mubr.f32.gmra.mrb[0].mxu0 %v480
    %v562 = vpop.f32.mrb[0].mxu0
    %v563 = vadd.f32 0.0, %v562
    %v564 = vpop.f32.mrb[0].mxu0
    %565 = vdwg.mxu0
    %s566 = scalar_lea.vmem %s4, 128
    %v567 = vld [vmem:[%s566] sm:$0xff]
    %v568 = vld [vmem:[%s566 + $0x8] sm:$0xff]
    %v569 = vld [vmem:[%s566 + $0x10] sm:$0xff]
    %v570 = vld [vmem:[%s566 + $0x18] sm:$0xff]
    %v571 = vld [vmem:[%s566 + $0x20] sm:$0xff]
    %v572 = vld [vmem:[%s566 + $0x28] sm:$0xff]
    %v573 = vld [vmem:[%s566 + $0x30] sm:$0xff]
    %v574 = vld [vmem:[%s566 + $0x38] sm:$0xff]
    %v575 = vld [vmem:[%s566 + $0x40] sm:$0xff]
    %v576 = vld [vmem:[%s566 + $0x48] sm:$0xff]
    %v577 = vld [vmem:[%s566 + $0x50] sm:$0xff]
    %v578 = vld [vmem:[%s566 + $0x58] sm:$0xff]
    %v579 = vld [vmem:[%s566 + $0x60] sm:$0xff]
    %v580 = vld [vmem:[%s566 + $0x68] sm:$0xff]
    %v581 = vld [vmem:[%s566 + $0x70] sm:$0xff]
    %v582 = vld [vmem:[%s566 + $0x78] sm:$0xff]
    %583 = vmatprep.subr.mxu0 0.0
    %584 = vmatpush1.msra.mxu0 %v567
    %585 = vmatprep.subr.mxu0 0.0
    %586 = vmatpush1.msra.mxu0 %v568
    %587 = vmatprep.subr.mxu0 0.0
    %588 = vmatpush1.msra.mxu0 %v569
    %589 = vmatprep.subr.mxu0 0.0
    %590 = vmatpush1.msra.mxu0 %v570
    %591 = vmatprep.subr.mxu0 0.0
    %592 = vmatpush1.msra.mxu0 %v571
    %593 = vmatprep.subr.mxu0 0.0
    %594 = vmatpush1.msra.mxu0 %v572
    %595 = vmatprep.subr.mxu0 0.0
    %596 = vmatpush1.msra.mxu0 %v573
    %597 = vmatprep.subr.mxu0 0.0
    %598 = vmatpush1.msra.mxu0 %v574
    %599 = vmatprep.subr.mxu0 0.0
    %600 = vmatpush1.msra.mxu0 %v575
    %601 = vmatprep.subr.mxu0 0.0
    %602 = vmatpush1.msra.mxu0 %v576
    %603 = vmatprep.subr.mxu0 0.0
    %604 = vmatpush1.msra.mxu0 %v577
    %605 = vmatprep.subr.mxu0 0.0
    %606 = vmatpush1.msra.mxu0 %v578
    %607 = vmatprep.subr.mxu0 0.0
    %608 = vmatpush1.msra.mxu0 %v579
    %609 = vmatprep.subr.mxu0 0.0
    %610 = vmatpush1.msra.mxu0 %v580
    %611 = vmatprep.subr.mxu0 0.0
    %612 = vmatpush1.msra.mxu0 %v581
    %613 = vmatprep.subr.mxu0 0.0
    %614 = vmatpush1.msra.mxu0 %v582
    %615 = vmatprep.subr.mxu0 0.0
    %616 = vmatpush1.msra.mxu0 0.0
    %617 = vmatprep.subr.mxu0 0.0
    %618 = vmatpush1.msra.mxu0 0.0
    %619 = vmatprep.subr.mxu0 0.0
    %620 = vmatpush1.msra.mxu0 0.0
    %621 = vmatprep.subr.mxu0 0.0
    %622 = vmatpush1.msra.mxu0 0.0
    %623 = vmatprep.subr.mxu0 0.0
    %624 = vmatpush1.msra.mxu0 0.0
    %625 = vmatprep.subr.mxu0 0.0
    %626 = vmatpush1.msra.mxu0 0.0
    %627 = vmatprep.subr.mxu0 0.0
    %628 = vmatpush1.msra.mxu0 0.0
    %629 = vmatprep.subr.mxu0 0.0
    %630 = vmatpush1.msra.mxu0 0.0
    %631 = vmatprep.subr.mxu0 0.0
    %632 = vmatpush1.msra.mxu0 0.0
    %633 = vmatprep.subr.mxu0 0.0
    %634 = vmatpush1.msra.mxu0 0.0
    %635 = vmatprep.subr.mxu0 0.0
    %636 = vmatpush1.msra.mxu0 0.0
    %637 = vmatprep.subr.mxu0 0.0
    %638 = vmatpush1.msra.mxu0 0.0
    %639 = vmatprep.subr.mxu0 0.0
    %640 = vmatpush1.msra.mxu0 0.0
    %641 = vmatprep.subr.mxu0 0.0
    %642 = vmatpush1.msra.mxu0 0.0
    %643 = vmatprep.subr.mxu0 0.0
    %644 = vmatpush1.msra.mxu0 0.0
    %645 = vmatprep.subr.mxu0 0.0
    %646 = vmatpush1.msra.mxu0 0.0
    %647 = vmatprep.mubr.f32.mxu0 0.0
    %648 = vmatmul.mubr.f32.gmra.mrb[0].mxu0 %v548
    %v649 = vpop.f32.mrb[0].mxu0
    %v650 = vadd.f32 0.0, %v649
    %v651 = vpop.f32.mrb[0].mxu0
    %652 = vmatprep.mubr.f32.mxu0 0.0
    %653 = vmatmul.mubr.f32.gmra.mrb[0].mxu0 %v553
    %v654 = vpop.f32.mrb[0].mxu0
    %v655 = vadd.f32 0.0, %v654
    %v656 = vpop.f32.mrb[0].mxu0
    %657 = vmatprep.mubr.f32.mxu0 0.0
    %658 = vmatmul.mubr.f32.gmra.mrb[0].mxu0 %v558
    %v659 = vpop.f32.mrb[0].mxu0
    %v660 = vadd.f32 0.0, %v659
    %v661 = vpop.f32.mrb[0].mxu0
    %662 = vmatprep.mubr.f32.mxu0 0.0
    %663 = vmatmul.mubr.f32.gmra.mrb[0].mxu0 %v563
    %v664 = vpop.f32.mrb[0].mxu0
    %v665 = vadd.f32 0.0, %v664
    %v666 = vpop.f32.mrb[0].mxu0
    %667 = vdwg.mxu0
    %668 = vmatprep.subr.mxu0 0.0
    %669 = vmatpush1.msra.mxu0 %v460
    %670 = vmatprep.subr.mxu0 0.0
    %671 = vmatpush1.msra.mxu0 %v461
    %672 = vmatprep.subr.mxu0 0.0
    %673 = vmatpush1.msra.mxu0 %v462
    %674 = vmatprep.subr.mxu0 0.0
    %675 = vmatpush1.msra.mxu0 %v463
    %676 = vmatprep.subr.mxu0 0.0
    %677 = vmatpush1.msra.mxu0 %v464
    %678 = vmatprep.subr.mxu0 0.0
    %679 = vmatpush1.msra.mxu0 %v465
    %680 = vmatprep.subr.mxu0 0.0
    %681 = vmatpush1.msra.mxu0 %v466
    %682 = vmatprep.subr.mxu0 0.0
    %683 = vmatpush1.msra.mxu0 %v467
    %684 = vmatprep.subr.mxu0 0.0
    %685 = vmatpush1.msra.mxu0 %v468
    %686 = vmatprep.subr.mxu0 0.0
    %687 = vmatpush1.msra.mxu0 %v469
    %688 = vmatprep.subr.mxu0 0.0
    %689 = vmatpush1.msra.mxu0 %v470
    %690 = vmatprep.subr.mxu0 0.0
    %691 = vmatpush1.msra.mxu0 %v471
    %692 = vmatprep.subr.mxu0 0.0
    %693 = vmatpush1.msra.mxu0 %v472
    %694 = vmatprep.subr.mxu0 0.0
    %695 = vmatpush1.msra.mxu0 %v473
    %696 = vmatprep.subr.mxu0 0.0
    %697 = vmatpush1.msra.mxu0 %v474
    %698 = vmatprep.subr.mxu0 0.0
    %699 = vmatpush1.msra.mxu0 %v475
    %700 = vmatprep.subr.mxu0 0.0
    %701 = vmatpush1.msra.mxu0 0.0
    %702 = vmatprep.subr.mxu0 0.0
    %703 = vmatpush1.msra.mxu0 0.0
    %704 = vmatprep.subr.mxu0 0.0
    %705 = vmatpush1.msra.mxu0 0.0
    %706 = vmatprep.subr.mxu0 0.0
    %707 = vmatpush1.msra.mxu0 0.0
    %708 = vmatprep.subr.mxu0 0.0
    %709 = vmatpush1.msra.mxu0 0.0
    %710 = vmatprep.subr.mxu0 0.0
    %711 = vmatpush1.msra.mxu0 0.0
    %712 = vmatprep.subr.mxu0 0.0
    %713 = vmatpush1.msra.mxu0 0.0
    %714 = vmatprep.subr.mxu0 0.0
    %715 = vmatpush1.msra.mxu0 0.0
    %716 = vmatprep.subr.mxu0 0.0
    %717 = vmatpush1.msra.mxu0 0.0
    %718 = vmatprep.subr.mxu0 0.0
    %719 = vmatpush1.msra.mxu0 0.0
    %720 = vmatprep.subr.mxu0 0.0
    %721 = vmatpush1.msra.mxu0 0.0
    %722 = vmatprep.subr.mxu0 0.0
    %723 = vmatpush1.msra.mxu0 0.0
    %724 = vmatprep.subr.mxu0 0.0
    %725 = vmatpush1.msra.mxu0 0.0
    %726 = vmatprep.subr.mxu0 0.0
    %727 = vmatpush1.msra.mxu0 0.0
    %728 = vmatprep.subr.mxu0 0.0
    %729 = vmatpush1.msra.mxu0 0.0
    %730 = vmatprep.subr.mxu0 0.0
    %731 = vmatpush1.msra.mxu0 0.0
    %732 = vmatprep.mubr.f32.mxu0 0.0
    %733 = vmatmul.mubr.f32.gmra.mrb[0].mxu0 %v442
    %v734 = vpop.f32.mrb[0].mxu0
    %v735 = vadd.f32 %v650, %v734
    %v736 = vpop.f32.mrb[0].mxu0
    %737 = vmatprep.mubr.f32.mxu0 0.0
    %738 = vmatmul.mubr.f32.gmra.mrb[0].mxu0 %v447
    %v739 = vpop.f32.mrb[0].mxu0
    %v740 = vadd.f32 %v655, %v739
    %v741 = vpop.f32.mrb[0].mxu0
    %742 = vmatprep.mubr.f32.mxu0 0.0
    %743 = vmatmul.mubr.f32.gmra.mrb[0].mxu0 %v452
    %v744 = vpop.f32.mrb[0].mxu0
    %v745 = vadd.f32 %v660, %v744
    %v746 = vpop.f32.mrb[0].mxu0
    %747 = vmatprep.mubr.f32.mxu0 0.0
    %748 = vmatmul.mubr.f32.gmra.mrb[0].mxu0 %v457
    %v749 = vpop.f32.mrb[0].mxu0
    %v750 = vadd.f32 %v665, %v749
    %v751 = vpop.f32.mrb[0].mxu0
    %752 = vdwg.mxu0
    %s753 = scalar_lea.vmem %s3, 64
    %v754 = vld [vmem:[%s753] sm:$0xff]
    %v755 = vld [vmem:[%s753 + $0x8] sm:$0xff]
    %v756 = vld [vmem:[%s753 + $0x10] sm:$0xff]
    %v757 = vld [vmem:[%s753 + $0x18] sm:$0xff]
    %758 = vmatprep.subr.mxu0 0.0
    %759 = vmatpush1.msra.mxu0 %v355
    %760 = vmatprep.subr.mxu0 0.0
    %761 = vmatpush1.msra.mxu0 %v356
    %762 = vmatprep.subr.mxu0 0.0
    %763 = vmatpush1.msra.mxu0 %v357
    %764 = vmatprep.subr.mxu0 0.0
    %765 = vmatpush1.msra.mxu0 %v358
    %766 = vmatprep.subr.mxu0 0.0
    %767 = vmatpush1.msra.mxu0 %v359
    %768 = vmatprep.subr.mxu0 0.0
    %769 = vmatpush1.msra.mxu0 %v360
    %770 = vmatprep.subr.mxu0 0.0
    %771 = vmatpush1.msra.mxu0 %v361
    %772 = vmatprep.subr.mxu0 0.0
    %773 = vmatpush1.msra.mxu0 %v362
    %774 = vmatprep.subr.mxu0 0.0
    %775 = vmatpush1.msra.mxu0 %v363
    %776 = vmatprep.subr.mxu0 0.0
    %777 = vmatpush1.msra.mxu0 %v364
    %778 = vmatprep.subr.mxu0 0.0
    %779 = vmatpush1.msra.mxu0 %v365
    %780 = vmatprep.subr.mxu0 0.0
    %781 = vmatpush1.msra.mxu0 %v366
    %782 = vmatprep.subr.mxu0 0.0
    %783 = vmatpush1.msra.mxu0 %v367
    %784 = vmatprep.subr.mxu0 0.0
    %785 = vmatpush1.msra.mxu0 %v368
    %786 = vmatprep.subr.mxu0 0.0
    %787 = vmatpush1.msra.mxu0 %v369
    %788 = vmatprep.subr.mxu0 0.0
    %789 = vmatpush1.msra.mxu0 %v370
    %790 = vmatprep.subr.mxu0 0.0
    %791 = vmatpush1.msra.mxu0 0.0
    %792 = vmatprep.subr.mxu0 0.0
    %793 = vmatpush1.msra.mxu0 0.0
    %794 = vmatprep.subr.mxu0 0.0
    %795 = vmatpush1.msra.mxu0 0.0
    %796 = vmatprep.subr.mxu0 0.0
    %797 = vmatpush1.msra.mxu0 0.0
    %798 = vmatprep.subr.mxu0 0.0
    %799 = vmatpush1.msra.mxu0 0.0
    %800 = vmatprep.subr.mxu0 0.0
    %801 = vmatpush1.msra.mxu0 0.0
    %802 = vmatprep.subr.mxu0 0.0
    %803 = vmatpush1.msra.mxu0 0.0
    %804 = vmatprep.subr.mxu0 0.0
    %805 = vmatpush1.msra.mxu0 0.0
    %806 = vmatprep.subr.mxu0 0.0
    %807 = vmatpush1.msra.mxu0 0.0
    %808 = vmatprep.subr.mxu0 0.0
    %809 = vmatpush1.msra.mxu0 0.0
    %810 = vmatprep.subr.mxu0 0.0
    %811 = vmatpush1.msra.mxu0 0.0
    %812 = vmatprep.subr.mxu0 0.0
    %813 = vmatpush1.msra.mxu0 0.0
    %814 = vmatprep.subr.mxu0 0.0
    %815 = vmatpush1.msra.mxu0 0.0
    %816 = vmatprep.subr.mxu0 0.0
    %817 = vmatpush1.msra.mxu0 0.0
    %818 = vmatprep.subr.mxu0 0.0
    %819 = vmatpush1.msra.mxu0 0.0
    %820 = vmatprep.subr.mxu0 0.0
    %821 = vmatpush1.msra.mxu0 0.0
    %822 = vmatprep.mubr.f32.mxu0 0.0
    %823 = vmatmul.mubr.f32.gmra.mrb[0].mxu0 %v754
    %v824 = vpop.f32.mrb[0].mxu0
    %v825 = vadd.f32 0.0, %v824
    %v826 = vpop.f32.mrb[0].mxu0
    %827 = vmatprep.mubr.f32.mxu0 0.0
    %828 = vmatmul.mubr.f32.gmra.mrb[0].mxu0 %v755
    %v829 = vpop.f32.mrb[0].mxu0
    %v830 = vadd.f32 0.0, %v829
    %v831 = vpop.f32.mrb[0].mxu0
    %832 = vmatprep.mubr.f32.mxu0 0.0
    %833 = vmatmul.mubr.f32.gmra.mrb[0].mxu0 %v756
    %v834 = vpop.f32.mrb[0].mxu0
    %v835 = vadd.f32 0.0, %v834
    %v836 = vpop.f32.mrb[0].mxu0
    %837 = vmatprep.mubr.f32.mxu0 0.0
    %838 = vmatmul.mubr.f32.gmra.mrb[0].mxu0 %v757
    %v839 = vpop.f32.mrb[0].mxu0
    %v840 = vadd.f32 0.0, %v839
    %v841 = vpop.f32.mrb[0].mxu0
    %842 = vdwg.mxu0
    %s843 = scalar_lea.vmem %s4, 256
    %v844 = vld [vmem:[%s843] sm:$0xff]
    %v845 = vld [vmem:[%s843 + $0x8] sm:$0xff]
    %v846 = vld [vmem:[%s843 + $0x10] sm:$0xff]
    %v847 = vld [vmem:[%s843 + $0x18] sm:$0xff]
    %v848 = vld [vmem:[%s843 + $0x20] sm:$0xff]
    %v849 = vld [vmem:[%s843 + $0x28] sm:$0xff]
    %v850 = vld [vmem:[%s843 + $0x30] sm:$0xff]
    %v851 = vld [vmem:[%s843 + $0x38] sm:$0xff]
    %v852 = vld [vmem:[%s843 + $0x40] sm:$0xff]
    %v853 = vld [vmem:[%s843 + $0x48] sm:$0xff]
    %v854 = vld [vmem:[%s843 + $0x50] sm:$0xff]
    %v855 = vld [vmem:[%s843 + $0x58] sm:$0xff]
    %v856 = vld [vmem:[%s843 + $0x60] sm:$0xff]
    %v857 = vld [vmem:[%s843 + $0x68] sm:$0xff]
    %v858 = vld [vmem:[%s843 + $0x70] sm:$0xff]
    %v859 = vld [vmem:[%s843 + $0x78] sm:$0xff]
    %860 = vmatprep.subr.mxu0 0.0
    %861 = vmatpush1.msra.mxu0 %v844
    %862 = vmatprep.subr.mxu0 0.0
    %863 = vmatpush1.msra.mxu0 %v845
    %864 = vmatprep.subr.mxu0 0.0
    %865 = vmatpush1.msra.mxu0 %v846
    %866 = vmatprep.subr.mxu0 0.0
    %867 = vmatpush1.msra.mxu0 %v847
    %868 = vmatprep.subr.mxu0 0.0
    %869 = vmatpush1.msra.mxu0 %v848
    %870 = vmatprep.subr.mxu0 0.0
    %871 = vmatpush1.msra.mxu0 %v849
    %872 = vmatprep.subr.mxu0 0.0
    %873 = vmatpush1.msra.mxu0 %v850
    %874 = vmatprep.subr.mxu0 0.0
    %875 = vmatpush1.msra.mxu0 %v851
    %876 = vmatprep.subr.mxu0 0.0
    %877 = vmatpush1.msra.mxu0 %v852
    %878 = vmatprep.subr.mxu0 0.0
    %879 = vmatpush1.msra.mxu0 %v853
    %880 = vmatprep.subr.mxu0 0.0
    %881 = vmatpush1.msra.mxu0 %v854
    %882 = vmatprep.subr.mxu0 0.0
    %883 = vmatpush1.msra.mxu0 %v855
    %884 = vmatprep.subr.mxu0 0.0
    %885 = vmatpush1.msra.mxu0 %v856
    %886 = vmatprep.subr.mxu0 0.0
    %887 = vmatpush1.msra.mxu0 %v857
    %888 = vmatprep.subr.mxu0 0.0
    %889 = vmatpush1.msra.mxu0 %v858
    %890 = vmatprep.subr.mxu0 0.0
    %891 = vmatpush1.msra.mxu0 %v859
    %892 = vmatprep.subr.mxu0 0.0
    %893 = vmatpush1.msra.mxu0 0.0
    %894 = vmatprep.subr.mxu0 0.0
    %895 = vmatpush1.msra.mxu0 0.0
    %896 = vmatprep.subr.mxu0 0.0
    %897 = vmatpush1.msra.mxu0 0.0
    %898 = vmatprep.subr.mxu0 0.0
    %899 = vmatpush1.msra.mxu0 0.0
    %900 = vmatprep.subr.mxu0 0.0
    %901 = vmatpush1.msra.mxu0 0.0
    %902 = vmatprep.subr.mxu0 0.0
    %903 = vmatpush1.msra.mxu0 0.0
    %904 = vmatprep.subr.mxu0 0.0
    %905 = vmatpush1.msra.mxu0 0.0
    %906 = vmatprep.subr.mxu0 0.0
    %907 = vmatpush1.msra.mxu0 0.0
    %908 = vmatprep.subr.mxu0 0.0
    %909 = vmatpush1.msra.mxu0 0.0
    %910 = vmatprep.subr.mxu0 0.0
    %911 = vmatpush1.msra.mxu0 0.0
    %912 = vmatprep.subr.mxu0 0.0
    %913 = vmatpush1.msra.mxu0 0.0
    %914 = vmatprep.subr.mxu0 0.0
    %915 = vmatpush1.msra.mxu0 0.0
    %916 = vmatprep.subr.mxu0 0.0
    %917 = vmatpush1.msra.mxu0 0.0
    %918 = vmatprep.subr.mxu0 0.0
    %919 = vmatpush1.msra.mxu0 0.0
    %920 = vmatprep.subr.mxu0 0.0
    %921 = vmatpush1.msra.mxu0 0.0
    %922 = vmatprep.subr.mxu0 0.0
    %923 = vmatpush1.msra.mxu0 0.0
    %924 = vmatprep.mubr.f32.mxu0 0.0
    %925 = vmatmul.mubr.f32.gmra.mrb[0].mxu0 %v825
    %v926 = vpop.f32.mrb[0].mxu0
    %v927 = vadd.f32 0.0, %v926
    %v928 = vpop.f32.mrb[0].mxu0
    %929 = vmatprep.mubr.f32.mxu0 0.0
    %930 = vmatmul.mubr.f32.gmra.mrb[0].mxu0 %v830
    %v931 = vpop.f32.mrb[0].mxu0
    %v932 = vadd.f32 0.0, %v931
    %v933 = vpop.f32.mrb[0].mxu0
    %934 = vmatprep.mubr.f32.mxu0 0.0
    %935 = vmatmul.mubr.f32.gmra.mrb[0].mxu0 %v835
    %v936 = vpop.f32.mrb[0].mxu0
    %v937 = vadd.f32 0.0, %v936
    %v938 = vpop.f32.mrb[0].mxu0
    %939 = vmatprep.mubr.f32.mxu0 0.0
    %940 = vmatmul.mubr.f32.gmra.mrb[0].mxu0 %v840
    %v941 = vpop.f32.mrb[0].mxu0
    %v942 = vadd.f32 0.0, %v941
    %v943 = vpop.f32.mrb[0].mxu0
    %944 = vdwg.mxu0
    %v945 = vadd.f32 %v735, %v927
    %v946 = vadd.f32 %v740, %v932
    %v947 = vadd.f32 %v745, %v937
    %v948 = vadd.f32 %v750, %v942
    %s949 = scalar_lea.vmem %s3, 96
    %v950 = vld [vmem:[%s949] sm:$0xff]
    %v951 = vld [vmem:[%s949 + $0x8] sm:$0xff]
    %v952 = vld [vmem:[%s949 + $0x10] sm:$0xff]
    %v953 = vld [vmem:[%s949 + $0x18] sm:$0xff]
    %954 = vmatprep.subr.mxu0 0.0
    %955 = vmatpush1.msra.mxu0 %v355
    %956 = vmatprep.subr.mxu0 0.0
    %957 = vmatpush1.msra.mxu0 %v356
    %958 = vmatprep.subr.mxu0 0.0
    %959 = vmatpush1.msra.mxu0 %v357
    %960 = vmatprep.subr.mxu0 0.0
    %961 = vmatpush1.msra.mxu0 %v358
    %962 = vmatprep.subr.mxu0 0.0
    %963 = vmatpush1.msra.mxu0 %v359
    %964 = vmatprep.subr.mxu0 0.0
    %965 = vmatpush1.msra.mxu0 %v360
    %966 = vmatprep.subr.mxu0 0.0
    %967 = vmatpush1.msra.mxu0 %v361
    %968 = vmatprep.subr.mxu0 0.0
    %969 = vmatpush1.msra.mxu0 %v362
    %970 = vmatprep.subr.mxu0 0.0
    %971 = vmatpush1.msra.mxu0 %v363
    %972 = vmatprep.subr.mxu0 0.0
    %973 = vmatpush1.msra.mxu0 %v364
    %974 = vmatprep.subr.mxu0 0.0
    %975 = vmatpush1.msra.mxu0 %v365
    %976 = vmatprep.subr.mxu0 0.0
    %977 = vmatpush1.msra.mxu0 %v366
    %978 = vmatprep.subr.mxu0 0.0
    %979 = vmatpush1.msra.mxu0 %v367
    %980 = vmatprep.subr.mxu0 0.0
    %981 = vmatpush1.msra.mxu0 %v368
    %982 = vmatprep.subr.mxu0 0.0
    %983 = vmatpush1.msra.mxu0 %v369
    %984 = vmatprep.subr.mxu0 0.0
    %985 = vmatpush1.msra.mxu0 %v370
    %986 = vmatprep.subr.mxu0 0.0
    %987 = vmatpush1.msra.mxu0 0.0
    %988 = vmatprep.subr.mxu0 0.0
    %989 = vmatpush1.msra.mxu0 0.0
    %990 = vmatprep.subr.mxu0 0.0
    %991 = vmatpush1.msra.mxu0 0.0
    %992 = vmatprep.subr.mxu0 0.0
    %993 = vmatpush1.msra.mxu0 0.0
    %994 = vmatprep.subr.mxu0 0.0
    %995 = vmatpush1.msra.mxu0 0.0
    %996 = vmatprep.subr.mxu0 0.0
    %997 = vmatpush1.msra.mxu0 0.0
    %998 = vmatprep.subr.mxu0 0.0
    %999 = vmatpush1.msra.mxu0 0.0
    %1000 = vmatprep.subr.mxu0 0.0
    %1001 = vmatpush1.msra.mxu0 0.0
    %1002 = vmatprep.subr.mxu0 0.0
    %1003 = vmatpush1.msra.mxu0 0.0
    %1004 = vmatprep.subr.mxu0 0.0
    %1005 = vmatpush1.msra.mxu0 0.0
    %1006 = vmatprep.subr.mxu0 0.0
    %1007 = vmatpush1.msra.mxu0 0.0
    %1008 = vmatprep.subr.mxu0 0.0
    %1009 = vmatpush1.msra.mxu0 0.0
    %1010 = vmatprep.subr.mxu0 0.0
    %1011 = vmatpush1.msra.mxu0 0.0
    %1012 = vmatprep.subr.mxu0 0.0
    %1013 = vmatpush1.msra.mxu0 0.0
    %1014 = vmatprep.subr.mxu0 0.0
    %1015 = vmatpush1.msra.mxu0 0.0
    %1016 = vmatprep.subr.mxu0 0.0
    %1017 = vmatpush1.msra.mxu0 0.0
    %1018 = vmatprep.mubr.f32.mxu0 0.0
    %1019 = vmatmul.mubr.f32.gmra.mrb[0].mxu0 %v950
    %v1020 = vpop.f32.mrb[0].mxu0
    %v1021 = vadd.f32 0.0, %v1020
    %v1022 = vpop.f32.mrb[0].mxu0
    %1023 = vmatprep.mubr.f32.mxu0 0.0
    %1024 = vmatmul.mubr.f32.gmra.mrb[0].mxu0 %v951
    %v1025 = vpop.f32.mrb[0].mxu0
    %v1026 = vadd.f32 0.0, %v1025
    %v1027 = vpop.f32.mrb[0].mxu0
    %1028 = vmatprep.mubr.f32.mxu0 0.0
    %1029 = vmatmul.mubr.f32.gmra.mrb[0].mxu0 %v952
    %v1030 = vpop.f32.mrb[0].mxu0
    %v1031 = vadd.f32 0.0, %v1030
    %v1032 = vpop.f32.mrb[0].mxu0
    %1033 = vmatprep.mubr.f32.mxu0 0.0
    %1034 = vmatmul.mubr.f32.gmra.mrb[0].mxu0 %v953
    %v1035 = vpop.f32.mrb[0].mxu0
    %v1036 = vadd.f32 0.0, %v1035
    %v1037 = vpop.f32.mrb[0].mxu0
    %1038 = vdwg.mxu0
    %s1039 = scalar_lea.vmem %s4, 384
    %v1040 = vld [vmem:[%s1039] sm:$0xff]
    %v1041 = vld [vmem:[%s1039 + $0x8] sm:$0xff]
    %v1042 = vld [vmem:[%s1039 + $0x10] sm:$0xff]
    %v1043 = vld [vmem:[%s1039 + $0x18] sm:$0xff]
    %v1044 = vld [vmem:[%s1039 + $0x20] sm:$0xff]
    %v1045 = vld [vmem:[%s1039 + $0x28] sm:$0xff]
    %v1046 = vld [vmem:[%s1039 + $0x30] sm:$0xff]
    %v1047 = vld [vmem:[%s1039 + $0x38] sm:$0xff]
    %v1048 = vld [vmem:[%s1039 + $0x40] sm:$0xff]
    %v1049 = vld [vmem:[%s1039 + $0x48] sm:$0xff]
    %v1050 = vld [vmem:[%s1039 + $0x50] sm:$0xff]
    %v1051 = vld [vmem:[%s1039 + $0x58] sm:$0xff]
    %v1052 = vld [vmem:[%s1039 + $0x60] sm:$0xff]
    %v1053 = vld [vmem:[%s1039 + $0x68] sm:$0xff]
    %v1054 = vld [vmem:[%s1039 + $0x70] sm:$0xff]
    %v1055 = vld [vmem:[%s1039 + $0x78] sm:$0xff]
    %1056 = vmatprep.subr.mxu0 0.0
    %1057 = vmatpush1.msra.mxu0 %v1040
    %1058 = vmatprep.subr.mxu0 0.0
    %1059 = vmatpush1.msra.mxu0 %v1041
    %1060 = vmatprep.subr.mxu0 0.0
    %1061 = vmatpush1.msra.mxu0 %v1042
    %1062 = vmatprep.subr.mxu0 0.0
    %1063 = vmatpush1.msra.mxu0 %v1043
    %1064 = vmatprep.subr.mxu0 0.0
    %1065 = vmatpush1.msra.mxu0 %v1044
    %1066 = vmatprep.subr.mxu0 0.0
    %1067 = vmatpush1.msra.mxu0 %v1045
    %1068 = vmatprep.subr.mxu0 0.0
    %1069 = vmatpush1.msra.mxu0 %v1046
    %1070 = vmatprep.subr.mxu0 0.0
    %1071 = vmatpush1.msra.mxu0 %v1047
    %1072 = vmatprep.subr.mxu0 0.0
    %1073 = vmatpush1.msra.mxu0 %v1048
    %1074 = vmatprep.subr.mxu0 0.0
    %1075 = vmatpush1.msra.mxu0 %v1049
    %1076 = vmatprep.subr.mxu0 0.0
    %1077 = vmatpush1.msra.mxu0 %v1050
    %1078 = vmatprep.subr.mxu0 0.0
    %1079 = vmatpush1.msra.mxu0 %v1051
    %1080 = vmatprep.subr.mxu0 0.0
    %1081 = vmatpush1.msra.mxu0 %v1052
    %1082 = vmatprep.subr.mxu0 0.0
    %1083 = vmatpush1.msra.mxu0 %v1053
    %1084 = vmatprep.subr.mxu0 0.0
    %1085 = vmatpush1.msra.mxu0 %v1054
    %1086 = vmatprep.subr.mxu0 0.0
    %1087 = vmatpush1.msra.mxu0 %v1055
    %1088 = vmatprep.subr.mxu0 0.0
    %1089 = vmatpush1.msra.mxu0 0.0
    %1090 = vmatprep.subr.mxu0 0.0
    %1091 = vmatpush1.msra.mxu0 0.0
    %1092 = vmatprep.subr.mxu0 0.0
    %1093 = vmatpush1.msra.mxu0 0.0
    %1094 = vmatprep.subr.mxu0 0.0
    %1095 = vmatpush1.msra.mxu0 0.0
    %1096 = vmatprep.subr.mxu0 0.0
    %1097 = vmatpush1.msra.mxu0 0.0
    %1098 = vmatprep.subr.mxu0 0.0
    %1099 = vmatpush1.msra.mxu0 0.0
    %1100 = vmatprep.subr.mxu0 0.0
    %1101 = vmatpush1.msra.mxu0 0.0
    %1102 = vmatprep.subr.mxu0 0.0
    %1103 = vmatpush1.msra.mxu0 0.0
    %1104 = vmatprep.subr.mxu0 0.0
    %1105 = vmatpush1.msra.mxu0 0.0
    %1106 = vmatprep.subr.mxu0 0.0
    %1107 = vmatpush1.msra.mxu0 0.0
    %1108 = vmatprep.subr.mxu0 0.0
    %1109 = vmatpush1.msra.mxu0 0.0
    %1110 = vmatprep.subr.mxu0 0.0
    %1111 = vmatpush1.msra.mxu0 0.0
    %1112 = vmatprep.subr.mxu0 0.0
    %1113 = vmatpush1.msra.mxu0 0.0
    %1114 = vmatprep.subr.mxu0 0.0
    %1115 = vmatpush1.msra.mxu0 0.0
    %1116 = vmatprep.subr.mxu0 0.0
    %1117 = vmatpush1.msra.mxu0 0.0
    %1118 = vmatprep.subr.mxu0 0.0
    %1119 = vmatpush1.msra.mxu0 0.0
    %1120 = vmatprep.mubr.f32.mxu0 0.0
    %1121 = vmatmul.mubr.f32.gmra.mrb[0].mxu0 %v1021
    %v1122 = vpop.f32.mrb[0].mxu0
    %v1123 = vadd.f32 0.0, %v1122
    %v1124 = vpop.f32.mrb[0].mxu0
    %1125 = vmatprep.mubr.f32.mxu0 0.0
    %1126 = vmatmul.mubr.f32.gmra.mrb[0].mxu0 %v1026
    %v1127 = vpop.f32.mrb[0].mxu0
    %v1128 = vadd.f32 0.0, %v1127
    %v1129 = vpop.f32.mrb[0].mxu0
    %1130 = vmatprep.mubr.f32.mxu0 0.0
    %1131 = vmatmul.mubr.f32.gmra.mrb[0].mxu0 %v1031
    %v1132 = vpop.f32.mrb[0].mxu0
    %v1133 = vadd.f32 0.0, %v1132
    %v1134 = vpop.f32.mrb[0].mxu0
    %1135 = vmatprep.mubr.f32.mxu0 0.0
    %1136 = vmatmul.mubr.f32.gmra.mrb[0].mxu0 %v1036
    %v1137 = vpop.f32.mrb[0].mxu0
    %v1138 = vadd.f32 0.0, %v1137
    %v1139 = vpop.f32.mrb[0].mxu0
    %1140 = vdwg.mxu0
    %v1141 = vadd.f32 %v945, %v1123
    %v1142 = vadd.f32 %v946, %v1128
    %v1143 = vadd.f32 %v947, %v1133
    %v1144 = vadd.f32 %v948, %v1138
    %s1145 = scalar_lea.vmem %s3, 128
    %v1146 = vld [vmem:[%s1145] sm:$0xff]
    %v1147 = vld [vmem:[%s1145 + $0x8] sm:$0xff]
    %v1148 = vld [vmem:[%s1145 + $0x10] sm:$0xff]
    %v1149 = vld [vmem:[%s1145 + $0x18] sm:$0xff]
    %1150 = vmatprep.subr.mxu0 0.0
    %1151 = vmatpush1.msra.mxu0 %v355
    %1152 = vmatprep.subr.mxu0 0.0
    %1153 = vmatpush1.msra.mxu0 %v356
    %1154 = vmatprep.subr.mxu0 0.0
    %1155 = vmatpush1.msra.mxu0 %v357
    %1156 = vmatprep.subr.mxu0 0.0
    %1157 = vmatpush1.msra.mxu0 %v358
    %1158 = vmatprep.subr.mxu0 0.0
    %1159 = vmatpush1.msra.mxu0 %v359
    %1160 = vmatprep.subr.mxu0 0.0
    %1161 = vmatpush1.msra.mxu0 %v360
    %1162 = vmatprep.subr.mxu0 0.0
    %1163 = vmatpush1.msra.mxu0 %v361
    %1164 = vmatprep.subr.mxu0 0.0
    %1165 = vmatpush1.msra.mxu0 %v362
    %1166 = vmatprep.subr.mxu0 0.0
    %1167 = vmatpush1.msra.mxu0 %v363
    %1168 = vmatprep.subr.mxu0 0.0
    %1169 = vmatpush1.msra.mxu0 %v364
    %1170 = vmatprep.subr.mxu0 0.0
    %1171 = vmatpush1.msra.mxu0 %v365
    %1172 = vmatprep.subr.mxu0 0.0
    %1173 = vmatpush1.msra.mxu0 %v366
    %1174 = vmatprep.subr.mxu0 0.0
    %1175 = vmatpush1.msra.mxu0 %v367
    %1176 = vmatprep.subr.mxu0 0.0
    %1177 = vmatpush1.msra.mxu0 %v368
    %1178 = vmatprep.subr.mxu0 0.0
    %1179 = vmatpush1.msra.mxu0 %v369
    %1180 = vmatprep.subr.mxu0 0.0
    %1181 = vmatpush1.msra.mxu0 %v370
    %1182 = vmatprep.subr.mxu0 0.0
    %1183 = vmatpush1.msra.mxu0 0.0
    %1184 = vmatprep.subr.mxu0 0.0
    %1185 = vmatpush1.msra.mxu0 0.0
    %1186 = vmatprep.subr.mxu0 0.0
    %1187 = vmatpush1.msra.mxu0 0.0
    %1188 = vmatprep.subr.mxu0 0.0
    %1189 = vmatpush1.msra.mxu0 0.0
    %1190 = vmatprep.subr.mxu0 0.0
    %1191 = vmatpush1.msra.mxu0 0.0
    %1192 = vmatprep.subr.mxu0 0.0
    %1193 = vmatpush1.msra.mxu0 0.0
    %1194 = vmatprep.subr.mxu0 0.0
    %1195 = vmatpush1.msra.mxu0 0.0
    %1196 = vmatprep.subr.mxu0 0.0
    %1197 = vmatpush1.msra.mxu0 0.0
    %1198 = vmatprep.subr.mxu0 0.0
    %1199 = vmatpush1.msra.mxu0 0.0
    %1200 = vmatprep.subr.mxu0 0.0
    %1201 = vmatpush1.msra.mxu0 0.0
    %1202 = vmatprep.subr.mxu0 0.0
    %1203 = vmatpush1.msra.mxu0 0.0
    %1204 = vmatprep.subr.mxu0 0.0
    %1205 = vmatpush1.msra.mxu0 0.0
    %1206 = vmatprep.subr.mxu0 0.0
    %1207 = vmatpush1.msra.mxu0 0.0
    %1208 = vmatprep.subr.mxu0 0.0
    %1209 = vmatpush1.msra.mxu0 0.0
    %1210 = vmatprep.subr.mxu0 0.0
    %1211 = vmatpush1.msra.mxu0 0.0
    %1212 = vmatprep.subr.mxu0 0.0
    %1213 = vmatpush1.msra.mxu0 0.0
    %1214 = vmatprep.mubr.f32.mxu0 0.0
    %1215 = vmatmul.mubr.f32.gmra.mrb[0].mxu0 %v1146
    %v1216 = vpop.f32.mrb[0].mxu0
    %v1217 = vadd.f32 0.0, %v1216
    %v1218 = vpop.f32.mrb[0].mxu0
    %1219 = vmatprep.mubr.f32.mxu0 0.0
    %1220 = vmatmul.mubr.f32.gmra.mrb[0].mxu0 %v1147
    %v1221 = vpop.f32.mrb[0].mxu0
    %v1222 = vadd.f32 0.0, %v1221
    %v1223 = vpop.f32.mrb[0].mxu0
    %1224 = vmatprep.mubr.f32.mxu0 0.0
    %1225 = vmatmul.mubr.f32.gmra.mrb[0].mxu0 %v1148
    %v1226 = vpop.f32.mrb[0].mxu0
    %v1227 = vadd.f32 0.0, %v1226
    %v1228 = vpop.f32.mrb[0].mxu0
    %1229 = vmatprep.mubr.f32.mxu0 0.0
    %1230 = vmatmul.mubr.f32.gmra.mrb[0].mxu0 %v1149
    %v1231 = vpop.f32.mrb[0].mxu0
    %v1232 = vadd.f32 0.0, %v1231
    %v1233 = vpop.f32.mrb[0].mxu0
    %1234 = vdwg.mxu0
    %s1235 = scalar_lea.vmem %s4, 512
    %v1236 = vld [vmem:[%s1235] sm:$0xff]
    %v1237 = vld [vmem:[%s1235 + $0x8] sm:$0xff]
    %v1238 = vld [vmem:[%s1235 + $0x10] sm:$0xff]
    %v1239 = vld [vmem:[%s1235 + $0x18] sm:$0xff]
    %v1240 = vld [vmem:[%s1235 + $0x20] sm:$0xff]
    %v1241 = vld [vmem:[%s1235 + $0x28] sm:$0xff]
    %v1242 = vld [vmem:[%s1235 + $0x30] sm:$0xff]
    %v1243 = vld [vmem:[%s1235 + $0x38] sm:$0xff]
    %v1244 = vld [vmem:[%s1235 + $0x40] sm:$0xff]
    %v1245 = vld [vmem:[%s1235 + $0x48] sm:$0xff]
    %v1246 = vld [vmem:[%s1235 + $0x50] sm:$0xff]
    %v1247 = vld [vmem:[%s1235 + $0x58] sm:$0xff]
    %v1248 = vld [vmem:[%s1235 + $0x60] sm:$0xff]
    %v1249 = vld [vmem:[%s1235 + $0x68] sm:$0xff]
    %v1250 = vld [vmem:[%s1235 + $0x70] sm:$0xff]
    %v1251 = vld [vmem:[%s1235 + $0x78] sm:$0xff]
    %1252 = vmatprep.subr.mxu0 0.0
    %1253 = vmatpush1.msra.mxu0 %v1236
    %1254 = vmatprep.subr.mxu0 0.0
    %1255 = vmatpush1.msra.mxu0 %v1237
    %1256 = vmatprep.subr.mxu0 0.0
    %1257 = vmatpush1.msra.mxu0 %v1238
    %1258 = vmatprep.subr.mxu0 0.0
    %1259 = vmatpush1.msra.mxu0 %v1239
    %1260 = vmatprep.subr.mxu0 0.0
    %1261 = vmatpush1.msra.mxu0 %v1240
    %1262 = vmatprep.subr.mxu0 0.0
    %1263 = vmatpush1.msra.mxu0 %v1241
    %1264 = vmatprep.subr.mxu0 0.0
    %1265 = vmatpush1.msra.mxu0 %v1242
    %1266 = vmatprep.subr.mxu0 0.0
    %1267 = vmatpush1.msra.mxu0 %v1243
    %1268 = vmatprep.subr.mxu0 0.0
    %1269 = vmatpush1.msra.mxu0 %v1244
    %1270 = vmatprep.subr.mxu0 0.0
    %1271 = vmatpush1.msra.mxu0 %v1245
    %1272 = vmatprep.subr.mxu0 0.0
    %1273 = vmatpush1.msra.mxu0 %v1246
    %1274 = vmatprep.subr.mxu0 0.0
    %1275 = vmatpush1.msra.mxu0 %v1247
    %1276 = vmatprep.subr.mxu0 0.0
    %1277 = vmatpush1.msra.mxu0 %v1248
    %1278 = vmatprep.subr.mxu0 0.0
    %1279 = vmatpush1.msra.mxu0 %v1249
    %1280 = vmatprep.subr.mxu0 0.0
    %1281 = vmatpush1.msra.mxu0 %v1250
    %1282 = vmatprep.subr.mxu0 0.0
    %1283 = vmatpush1.msra.mxu0 %v1251
    %1284 = vmatprep.subr.mxu0 0.0
    %1285 = vmatpush1.msra.mxu0 0.0
    %1286 = vmatprep.subr.mxu0 0.0
    %1287 = vmatpush1.msra.mxu0 0.0
    %1288 = vmatprep.subr.mxu0 0.0
    %1289 = vmatpush1.msra.mxu0 0.0
    %1290 = vmatprep.subr.mxu0 0.0
    %1291 = vmatpush1.msra.mxu0 0.0
    %1292 = vmatprep.subr.mxu0 0.0
    %1293 = vmatpush1.msra.mxu0 0.0
    %1294 = vmatprep.subr.mxu0 0.0
    %1295 = vmatpush1.msra.mxu0 0.0
    %1296 = vmatprep.subr.mxu0 0.0
    %1297 = vmatpush1.msra.mxu0 0.0
    %1298 = vmatprep.subr.mxu0 0.0
    %1299 = vmatpush1.msra.mxu0 0.0
    %1300 = vmatprep.subr.mxu0 0.0
    %1301 = vmatpush1.msra.mxu0 0.0
    %1302 = vmatprep.subr.mxu0 0.0
    %1303 = vmatpush1.msra.mxu0 0.0
    %1304 = vmatprep.subr.mxu0 0.0
    %1305 = vmatpush1.msra.mxu0 0.0
    %1306 = vmatprep.subr.mxu0 0.0
    %1307 = vmatpush1.msra.mxu0 0.0
    %1308 = vmatprep.subr.mxu0 0.0
    %1309 = vmatpush1.msra.mxu0 0.0
    %1310 = vmatprep.subr.mxu0 0.0
    %1311 = vmatpush1.msra.mxu0 0.0
    %1312 = vmatprep.subr.mxu0 0.0
    %1313 = vmatpush1.msra.mxu0 0.0
    %1314 = vmatprep.subr.mxu0 0.0
    %1315 = vmatpush1.msra.mxu0 0.0
    %1316 = vmatprep.mubr.f32.mxu0 0.0
    %1317 = vmatmul.mubr.f32.gmra.mrb[0].mxu0 %v1217
    %v1318 = vpop.f32.mrb[0].mxu0
    %v1319 = vadd.f32 0.0, %v1318
    %v1320 = vpop.f32.mrb[0].mxu0
    %1321 = vmatprep.mubr.f32.mxu0 0.0
    %1322 = vmatmul.mubr.f32.gmra.mrb[0].mxu0 %v1222
    %v1323 = vpop.f32.mrb[0].mxu0
    %v1324 = vadd.f32 0.0, %v1323
    %v1325 = vpop.f32.mrb[0].mxu0
    %1326 = vmatprep.mubr.f32.mxu0 0.0
    %1327 = vmatmul.mubr.f32.gmra.mrb[0].mxu0 %v1227
    %v1328 = vpop.f32.mrb[0].mxu0
    %v1329 = vadd.f32 0.0, %v1328
    %v1330 = vpop.f32.mrb[0].mxu0
    %1331 = vmatprep.mubr.f32.mxu0 0.0
    %1332 = vmatmul.mubr.f32.gmra.mrb[0].mxu0 %v1232
    %v1333 = vpop.f32.mrb[0].mxu0
    %v1334 = vadd.f32 0.0, %v1333
    %v1335 = vpop.f32.mrb[0].mxu0
    %1336 = vdwg.mxu0
    %v1337 = vadd.f32 %v1141, %v1319
    %v1338 = vadd.f32 %v1142, %v1324
    %v1339 = vadd.f32 %v1143, %v1329
    %v1340 = vadd.f32 %v1144, %v1334
    %s1341 = scalar_lea.vmem %s3, 160
    %v1342 = vld [vmem:[%s1341] sm:$0xff]
    %v1343 = vld [vmem:[%s1341 + $0x8] sm:$0xff]
    %v1344 = vld [vmem:[%s1341 + $0x10] sm:$0xff]
    %v1345 = vld [vmem:[%s1341 + $0x18] sm:$0xff]
    %1346 = vmatprep.subr.mxu0 0.0
    %1347 = vmatpush1.msra.mxu0 %v355
    %1348 = vmatprep.subr.mxu0 0.0
    %1349 = vmatpush1.msra.mxu0 %v356
    %1350 = vmatprep.subr.mxu0 0.0
    %1351 = vmatpush1.msra.mxu0 %v357
    %1352 = vmatprep.subr.mxu0 0.0
    %1353 = vmatpush1.msra.mxu0 %v358
    %1354 = vmatprep.subr.mxu0 0.0
    %1355 = vmatpush1.msra.mxu0 %v359
    %1356 = vmatprep.subr.mxu0 0.0
    %1357 = vmatpush1.msra.mxu0 %v360
    %1358 = vmatprep.subr.mxu0 0.0
    %1359 = vmatpush1.msra.mxu0 %v361
    %1360 = vmatprep.subr.mxu0 0.0
    %1361 = vmatpush1.msra.mxu0 %v362
    %1362 = vmatprep.subr.mxu0 0.0
    %1363 = vmatpush1.msra.mxu0 %v363
    %1364 = vmatprep.subr.mxu0 0.0
    %1365 = vmatpush1.msra.mxu0 %v364
    %1366 = vmatprep.subr.mxu0 0.0
    %1367 = vmatpush1.msra.mxu0 %v365
    %1368 = vmatprep.subr.mxu0 0.0
    %1369 = vmatpush1.msra.mxu0 %v366
    %1370 = vmatprep.subr.mxu0 0.0
    %1371 = vmatpush1.msra.mxu0 %v367
    %1372 = vmatprep.subr.mxu0 0.0
    %1373 = vmatpush1.msra.mxu0 %v368
    %1374 = vmatprep.subr.mxu0 0.0
    %1375 = vmatpush1.msra.mxu0 %v369
    %1376 = vmatprep.subr.mxu0 0.0
    %1377 = vmatpush1.msra.mxu0 %v370
    %1378 = vmatprep.subr.mxu0 0.0
    %1379 = vmatpush1.msra.mxu0 0.0
    %1380 = vmatprep.subr.mxu0 0.0
    %1381 = vmatpush1.msra.mxu0 0.0
    %1382 = vmatprep.subr.mxu0 0.0
    %1383 = vmatpush1.msra.mxu0 0.0
    %1384 = vmatprep.subr.mxu0 0.0
    %1385 = vmatpush1.msra.mxu0 0.0
    %1386 = vmatprep.subr.mxu0 0.0
    %1387 = vmatpush1.msra.mxu0 0.0
    %1388 = vmatprep.subr.mxu0 0.0
    %1389 = vmatpush1.msra.mxu0 0.0
    %1390 = vmatprep.subr.mxu0 0.0
    %1391 = vmatpush1.msra.mxu0 0.0
    %1392 = vmatprep.subr.mxu0 0.0
    %1393 = vmatpush1.msra.mxu0 0.0
    %1394 = vmatprep.subr.mxu0 0.0
    %1395 = vmatpush1.msra.mxu0 0.0
    %1396 = vmatprep.subr.mxu0 0.0
    %1397 = vmatpush1.msra.mxu0 0.0
    %1398 = vmatprep.subr.mxu0 0.0
    %1399 = vmatpush1.msra.mxu0 0.0
    %1400 = vmatprep.subr.mxu0 0.0
    %1401 = vmatpush1.msra.mxu0 0.0
    %1402 = vmatprep.subr.mxu0 0.0
    %1403 = vmatpush1.msra.mxu0 0.0
    %1404 = vmatprep.subr.mxu0 0.0
    %1405 = vmatpush1.msra.mxu0 0.0
    %1406 = vmatprep.subr.mxu0 0.0
    %1407 = vmatpush1.msra.mxu0 0.0
    %1408 = vmatprep.subr.mxu0 0.0
    %1409 = vmatpush1.msra.mxu0 0.0
    %1410 = vmatprep.mubr.f32.mxu0 0.0
    %1411 = vmatmul.mubr.f32.gmra.mrb[0].mxu0 %v1342
    %v1412 = vpop.f32.mrb[0].mxu0
    %v1413 = vadd.f32 0.0, %v1412
    %v1414 = vpop.f32.mrb[0].mxu0
    %1415 = vmatprep.mubr.f32.mxu0 0.0
    %1416 = vmatmul.mubr.f32.gmra.mrb[0].mxu0 %v1343
    %v1417 = vpop.f32.mrb[0].mxu0
    %v1418 = vadd.f32 0.0, %v1417
    %v1419 = vpop.f32.mrb[0].mxu0
    %1420 = vmatprep.mubr.f32.mxu0 0.0
    %1421 = vmatmul.mubr.f32.gmra.mrb[0].mxu0 %v1344
    %v1422 = vpop.f32.mrb[0].mxu0
    %v1423 = vadd.f32 0.0, %v1422
    %v1424 = vpop.f32.mrb[0].mxu0
    %1425 = vmatprep.mubr.f32.mxu0 0.0
    %1426 = vmatmul.mubr.f32.gmra.mrb[0].mxu0 %v1345
    %v1427 = vpop.f32.mrb[0].mxu0
    %v1428 = vadd.f32 0.0, %v1427
    %v1429 = vpop.f32.mrb[0].mxu0
    %1430 = vdwg.mxu0
    %s1431 = scalar_lea.vmem %s4, 640
    %v1432 = vld [vmem:[%s1431] sm:$0xff]
    %v1433 = vld [vmem:[%s1431 + $0x8] sm:$0xff]
    %v1434 = vld [vmem:[%s1431 + $0x10] sm:$0xff]
    %v1435 = vld [vmem:[%s1431 + $0x18] sm:$0xff]
    %v1436 = vld [vmem:[%s1431 + $0x20] sm:$0xff]
    %v1437 = vld [vmem:[%s1431 + $0x28] sm:$0xff]
    %v1438 = vld [vmem:[%s1431 + $0x30] sm:$0xff]
    %v1439 = vld [vmem:[%s1431 + $0x38] sm:$0xff]
    %v1440 = vld [vmem:[%s1431 + $0x40] sm:$0xff]
    %v1441 = vld [vmem:[%s1431 + $0x48] sm:$0xff]
    %v1442 = vld [vmem:[%s1431 + $0x50] sm:$0xff]
    %v1443 = vld [vmem:[%s1431 + $0x58] sm:$0xff]
    %v1444 = vld [vmem:[%s1431 + $0x60] sm:$0xff]
    %v1445 = vld [vmem:[%s1431 + $0x68] sm:$0xff]
    %v1446 = vld [vmem:[%s1431 + $0x70] sm:$0xff]
    %v1447 = vld [vmem:[%s1431 + $0x78] sm:$0xff]
    %1448 = vmatprep.subr.mxu0 0.0
    %1449 = vmatpush1.msra.mxu0 %v1432
    %1450 = vmatprep.subr.mxu0 0.0
    %1451 = vmatpush1.msra.mxu0 %v1433
    %1452 = vmatprep.subr.mxu0 0.0
    %1453 = vmatpush1.msra.mxu0 %v1434
    %1454 = vmatprep.subr.mxu0 0.0
    %1455 = vmatpush1.msra.mxu0 %v1435
    %1456 = vmatprep.subr.mxu0 0.0
    %1457 = vmatpush1.msra.mxu0 %v1436
    %1458 = vmatprep.subr.mxu0 0.0
    %1459 = vmatpush1.msra.mxu0 %v1437
    %1460 = vmatprep.subr.mxu0 0.0
    %1461 = vmatpush1.msra.mxu0 %v1438
    %1462 = vmatprep.subr.mxu0 0.0
    %1463 = vmatpush1.msra.mxu0 %v1439
    %1464 = vmatprep.subr.mxu0 0.0
    %1465 = vmatpush1.msra.mxu0 %v1440
    %1466 = vmatprep.subr.mxu0 0.0
    %1467 = vmatpush1.msra.mxu0 %v1441
    %1468 = vmatprep.subr.mxu0 0.0
    %1469 = vmatpush1.msra.mxu0 %v1442
    %1470 = vmatprep.subr.mxu0 0.0
    %1471 = vmatpush1.msra.mxu0 %v1443
    %1472 = vmatprep.subr.mxu0 0.0
    %1473 = vmatpush1.msra.mxu0 %v1444
    %1474 = vmatprep.subr.mxu0 0.0
    %1475 = vmatpush1.msra.mxu0 %v1445
    %1476 = vmatprep.subr.mxu0 0.0
    %1477 = vmatpush1.msra.mxu0 %v1446
    %1478 = vmatprep.subr.mxu0 0.0
    %1479 = vmatpush1.msra.mxu0 %v1447
    %1480 = vmatprep.subr.mxu0 0.0
    %1481 = vmatpush1.msra.mxu0 0.0
    %1482 = vmatprep.subr.mxu0 0.0
    %1483 = vmatpush1.msra.mxu0 0.0
    %1484 = vmatprep.subr.mxu0 0.0
    %1485 = vmatpush1.msra.mxu0 0.0
    %1486 = vmatprep.subr.mxu0 0.0
    %1487 = vmatpush1.msra.mxu0 0.0
    %1488 = vmatprep.subr.mxu0 0.0
    %1489 = vmatpush1.msra.mxu0 0.0
    %1490 = vmatprep.subr.mxu0 0.0
    %1491 = vmatpush1.msra.mxu0 0.0
    %1492 = vmatprep.subr.mxu0 0.0
    %1493 = vmatpush1.msra.mxu0 0.0
    %1494 = vmatprep.subr.mxu0 0.0
    %1495 = vmatpush1.msra.mxu0 0.0
    %1496 = vmatprep.subr.mxu0 0.0
    %1497 = vmatpush1.msra.mxu0 0.0
    %1498 = vmatprep.subr.mxu0 0.0
    %1499 = vmatpush1.msra.mxu0 0.0
    %1500 = vmatprep.subr.mxu0 0.0
    %1501 = vmatpush1.msra.mxu0 0.0
    %1502 = vmatprep.subr.mxu0 0.0
    %1503 = vmatpush1.msra.mxu0 0.0
    %1504 = vmatprep.subr.mxu0 0.0
    %1505 = vmatpush1.msra.mxu0 0.0
    %1506 = vmatprep.subr.mxu0 0.0
    %1507 = vmatpush1.msra.mxu0 0.0
    %1508 = vmatprep.subr.mxu0 0.0
    %1509 = vmatpush1.msra.mxu0 0.0
    %1510 = vmatprep.subr.mxu0 0.0
    %1511 = vmatpush1.msra.mxu0 0.0
    %1512 = vmatprep.mubr.f32.mxu0 0.0
    %1513 = vmatmul.mubr.f32.gmra.mrb[0].mxu0 %v1413
    %v1514 = vpop.f32.mrb[0].mxu0
    %v1515 = vadd.f32 0.0, %v1514
    %v1516 = vpop.f32.mrb[0].mxu0
    %1517 = vmatprep.mubr.f32.mxu0 0.0
    %1518 = vmatmul.mubr.f32.gmra.mrb[0].mxu0 %v1418
    %v1519 = vpop.f32.mrb[0].mxu0
    %v1520 = vadd.f32 0.0, %v1519
    %v1521 = vpop.f32.mrb[0].mxu0
    %1522 = vmatprep.mubr.f32.mxu0 0.0
    %1523 = vmatmul.mubr.f32.gmra.mrb[0].mxu0 %v1423
    %v1524 = vpop.f32.mrb[0].mxu0
    %v1525 = vadd.f32 0.0, %v1524
    %v1526 = vpop.f32.mrb[0].mxu0
    %1527 = vmatprep.mubr.f32.mxu0 0.0
    %1528 = vmatmul.mubr.f32.gmra.mrb[0].mxu0 %v1428
    %v1529 = vpop.f32.mrb[0].mxu0
    %v1530 = vadd.f32 0.0, %v1529
    %v1531 = vpop.f32.mrb[0].mxu0
    %1532 = vdwg.mxu0
    %v1533 = vadd.f32 %v1337, %v1515
    %v1534 = vadd.f32 %v1338, %v1520
    %v1535 = vadd.f32 %v1339, %v1525
    %v1536 = vadd.f32 %v1340, %v1530
    %s1537 = scalar_lea.vmem %s3, 192
    %v1538 = vld [vmem:[%s1537] sm:$0xff]
    %v1539 = vld [vmem:[%s1537 + $0x8] sm:$0xff]
    %v1540 = vld [vmem:[%s1537 + $0x10] sm:$0xff]
    %v1541 = vld [vmem:[%s1537 + $0x18] sm:$0xff]
    %1542 = vmatprep.subr.mxu0 0.0
    %1543 = vmatpush1.msra.mxu0 %v355
    %1544 = vmatprep.subr.mxu0 0.0
    %1545 = vmatpush1.msra.mxu0 %v356
    %1546 = vmatprep.subr.mxu0 0.0
    %1547 = vmatpush1.msra.mxu0 %v357
    %1548 = vmatprep.subr.mxu0 0.0
    %1549 = vmatpush1.msra.mxu0 %v358
    %1550 = vmatprep.subr.mxu0 0.0
    %1551 = vmatpush1.msra.mxu0 %v359
    %1552 = vmatprep.subr.mxu0 0.0
    %1553 = vmatpush1.msra.mxu0 %v360
    %1554 = vmatprep.subr.mxu0 0.0
    %1555 = vmatpush1.msra.mxu0 %v361
    %1556 = vmatprep.subr.mxu0 0.0
    %1557 = vmatpush1.msra.mxu0 %v362
    %1558 = vmatprep.subr.mxu0 0.0
    %1559 = vmatpush1.msra.mxu0 %v363
    %1560 = vmatprep.subr.mxu0 0.0
    %1561 = vmatpush1.msra.mxu0 %v364
    %1562 = vmatprep.subr.mxu0 0.0
    %1563 = vmatpush1.msra.mxu0 %v365
    %1564 = vmatprep.subr.mxu0 0.0
    %1565 = vmatpush1.msra.mxu0 %v366
    %1566 = vmatprep.subr.mxu0 0.0
    %1567 = vmatpush1.msra.mxu0 %v367
    %1568 = vmatprep.subr.mxu0 0.0
    %1569 = vmatpush1.msra.mxu0 %v368
    %1570 = vmatprep.subr.mxu0 0.0
    %1571 = vmatpush1.msra.mxu0 %v369
    %1572 = vmatprep.subr.mxu0 0.0
    %1573 = vmatpush1.msra.mxu0 %v370
    %1574 = vmatprep.subr.mxu0 0.0
    %1575 = vmatpush1.msra.mxu0 0.0
    %1576 = vmatprep.subr.mxu0 0.0
    %1577 = vmatpush1.msra.mxu0 0.0
    %1578 = vmatprep.subr.mxu0 0.0
    %1579 = vmatpush1.msra.mxu0 0.0
    %1580 = vmatprep.subr.mxu0 0.0
    %1581 = vmatpush1.msra.mxu0 0.0
    %1582 = vmatprep.subr.mxu0 0.0
    %1583 = vmatpush1.msra.mxu0 0.0
    %1584 = vmatprep.subr.mxu0 0.0
    %1585 = vmatpush1.msra.mxu0 0.0
    %1586 = vmatprep.subr.mxu0 0.0
    %1587 = vmatpush1.msra.mxu0 0.0
    %1588 = vmatprep.subr.mxu0 0.0
    %1589 = vmatpush1.msra.mxu0 0.0
    %1590 = vmatprep.subr.mxu0 0.0
    %1591 = vmatpush1.msra.mxu0 0.0
    %1592 = vmatprep.subr.mxu0 0.0
    %1593 = vmatpush1.msra.mxu0 0.0
    %1594 = vmatprep.subr.mxu0 0.0
    %1595 = vmatpush1.msra.mxu0 0.0
    %1596 = vmatprep.subr.mxu0 0.0
    %1597 = vmatpush1.msra.mxu0 0.0
    %1598 = vmatprep.subr.mxu0 0.0
    %1599 = vmatpush1.msra.mxu0 0.0
    %1600 = vmatprep.subr.mxu0 0.0
    %1601 = vmatpush1.msra.mxu0 0.0
    %1602 = vmatprep.subr.mxu0 0.0
    %1603 = vmatpush1.msra.mxu0 0.0
    %1604 = vmatprep.subr.mxu0 0.0
    %1605 = vmatpush1.msra.mxu0 0.0
    %1606 = vmatprep.mubr.f32.mxu0 0.0
    %1607 = vmatmul.mubr.f32.gmra.mrb[0].mxu0 %v1538
    %v1608 = vpop.f32.mrb[0].mxu0
    %v1609 = vadd.f32 0.0, %v1608
    %v1610 = vpop.f32.mrb[0].mxu0
    %1611 = vmatprep.mubr.f32.mxu0 0.0
    %1612 = vmatmul.mubr.f32.gmra.mrb[0].mxu0 %v1539
    %v1613 = vpop.f32.mrb[0].mxu0
    %v1614 = vadd.f32 0.0, %v1613
    %v1615 = vpop.f32.mrb[0].mxu0
    %1616 = vmatprep.mubr.f32.mxu0 0.0
    %1617 = vmatmul.mubr.f32.gmra.mrb[0].mxu0 %v1540
    %v1618 = vpop.f32.mrb[0].mxu0
    %v1619 = vadd.f32 0.0, %v1618
    %v1620 = vpop.f32.mrb[0].mxu0
    %1621 = vmatprep.mubr.f32.mxu0 0.0
    %1622 = vmatmul.mubr.f32.gmra.mrb[0].mxu0 %v1541
    %v1623 = vpop.f32.mrb[0].mxu0
    %v1624 = vadd.f32 0.0, %v1623
    %v1625 = vpop.f32.mrb[0].mxu0
    %1626 = vdwg.mxu0
    %s1627 = scalar_lea.vmem %s4, 768
    %v1628 = vld [vmem:[%s1627] sm:$0xff]
    %v1629 = vld [vmem:[%s1627 + $0x8] sm:$0xff]
    %v1630 = vld [vmem:[%s1627 + $0x10] sm:$0xff]
    %v1631 = vld [vmem:[%s1627 + $0x18] sm:$0xff]
    %v1632 = vld [vmem:[%s1627 + $0x20] sm:$0xff]
    %v1633 = vld [vmem:[%s1627 + $0x28] sm:$0xff]
    %v1634 = vld [vmem:[%s1627 + $0x30] sm:$0xff]
    %v1635 = vld [vmem:[%s1627 + $0x38] sm:$0xff]
    %v1636 = vld [vmem:[%s1627 + $0x40] sm:$0xff]
    %v1637 = vld [vmem:[%s1627 + $0x48] sm:$0xff]
    %v1638 = vld [vmem:[%s1627 + $0x50] sm:$0xff]
    %v1639 = vld [vmem:[%s1627 + $0x58] sm:$0xff]
    %v1640 = vld [vmem:[%s1627 + $0x60] sm:$0xff]
    %v1641 = vld [vmem:[%s1627 + $0x68] sm:$0xff]
    %v1642 = vld [vmem:[%s1627 + $0x70] sm:$0xff]
    %v1643 = vld [vmem:[%s1627 + $0x78] sm:$0xff]
    %1644 = vmatprep.subr.mxu0 0.0
    %1645 = vmatpush1.msra.mxu0 %v1628
    %1646 = vmatprep.subr.mxu0 0.0
    %1647 = vmatpush1.msra.mxu0 %v1629
    %1648 = vmatprep.subr.mxu0 0.0
    %1649 = vmatpush1.msra.mxu0 %v1630
    %1650 = vmatprep.subr.mxu0 0.0
    %1651 = vmatpush1.msra.mxu0 %v1631
    %1652 = vmatprep.subr.mxu0 0.0
    %1653 = vmatpush1.msra.mxu0 %v1632
    %1654 = vmatprep.subr.mxu0 0.0
    %1655 = vmatpush1.msra.mxu0 %v1633
    %1656 = vmatprep.subr.mxu0 0.0
    %1657 = vmatpush1.msra.mxu0 %v1634
    %1658 = vmatprep.subr.mxu0 0.0
    %1659 = vmatpush1.msra.mxu0 %v1635
    %1660 = vmatprep.subr.mxu0 0.0
    %1661 = vmatpush1.msra.mxu0 %v1636
    %1662 = vmatprep.subr.mxu0 0.0
    %1663 = vmatpush1.msra.mxu0 %v1637
    %1664 = vmatprep.subr.mxu0 0.0
    %1665 = vmatpush1.msra.mxu0 %v1638
    %1666 = vmatprep.subr.mxu0 0.0
    %1667 = vmatpush1.msra.mxu0 %v1639
    %1668 = vmatprep.subr.mxu0 0.0
    %1669 = vmatpush1.msra.mxu0 %v1640
    %1670 = vmatprep.subr.mxu0 0.0
    %1671 = vmatpush1.msra.mxu0 %v1641
    %1672 = vmatprep.subr.mxu0 0.0
    %1673 = vmatpush1.msra.mxu0 %v1642
    %1674 = vmatprep.subr.mxu0 0.0
    %1675 = vmatpush1.msra.mxu0 %v1643
    %1676 = vmatprep.subr.mxu0 0.0
    %1677 = vmatpush1.msra.mxu0 0.0
    %1678 = vmatprep.subr.mxu0 0.0
    %1679 = vmatpush1.msra.mxu0 0.0
    %1680 = vmatprep.subr.mxu0 0.0
    %1681 = vmatpush1.msra.mxu0 0.0
    %1682 = vmatprep.subr.mxu0 0.0
    %1683 = vmatpush1.msra.mxu0 0.0
    %1684 = vmatprep.subr.mxu0 0.0
    %1685 = vmatpush1.msra.mxu0 0.0
    %1686 = vmatprep.subr.mxu0 0.0
    %1687 = vmatpush1.msra.mxu0 0.0
    %1688 = vmatprep.subr.mxu0 0.0
    %1689 = vmatpush1.msra.mxu0 0.0
    %1690 = vmatprep.subr.mxu0 0.0
    %1691 = vmatpush1.msra.mxu0 0.0
    %1692 = vmatprep.subr.mxu0 0.0
    %1693 = vmatpush1.msra.mxu0 0.0
    %1694 = vmatprep.subr.mxu0 0.0
    %1695 = vmatpush1.msra.mxu0 0.0
    %1696 = vmatprep.subr.mxu0 0.0
    %1697 = vmatpush1.msra.mxu0 0.0
    %1698 = vmatprep.subr.mxu0 0.0
    %1699 = vmatpush1.msra.mxu0 0.0
    %1700 = vmatprep.subr.mxu0 0.0
    %1701 = vmatpush1.msra.mxu0 0.0
    %1702 = vmatprep.subr.mxu0 0.0
    %1703 = vmatpush1.msra.mxu0 0.0
    %1704 = vmatprep.subr.mxu0 0.0
    %1705 = vmatpush1.msra.mxu0 0.0
    %1706 = vmatprep.subr.mxu0 0.0
    %1707 = vmatpush1.msra.mxu0 0.0
    %1708 = vmatprep.mubr.f32.mxu0 0.0
    %1709 = vmatmul.mubr.f32.gmra.mrb[0].mxu0 %v1609
    %v1710 = vpop.f32.mrb[0].mxu0
    %v1711 = vadd.f32 0.0, %v1710
    %v1712 = vpop.f32.mrb[0].mxu0
    %1713 = vmatprep.mubr.f32.mxu0 0.0
    %1714 = vmatmul.mubr.f32.gmra.mrb[0].mxu0 %v1614
    %v1715 = vpop.f32.mrb[0].mxu0
    %v1716 = vadd.f32 0.0, %v1715
    %v1717 = vpop.f32.mrb[0].mxu0
    %1718 = vmatprep.mubr.f32.mxu0 0.0
    %1719 = vmatmul.mubr.f32.gmra.mrb[0].mxu0 %v1619
    %v1720 = vpop.f32.mrb[0].mxu0
    %v1721 = vadd.f32 0.0, %v1720
    %v1722 = vpop.f32.mrb[0].mxu0
    %1723 = vmatprep.mubr.f32.mxu0 0.0
    %1724 = vmatmul.mubr.f32.gmra.mrb[0].mxu0 %v1624
    %v1725 = vpop.f32.mrb[0].mxu0
    %v1726 = vadd.f32 0.0, %v1725
    %v1727 = vpop.f32.mrb[0].mxu0
    %1728 = vdwg.mxu0
    %v1729 = vadd.f32 %v1533, %v1711
    %v1730 = vadd.f32 %v1534, %v1716
    %v1731 = vadd.f32 %v1535, %v1721
    %v1732 = vadd.f32 %v1536, %v1726
    %s1733 = scalar_lea.vmem %s3, 224
    %v1734 = vld [vmem:[%s1733] sm:$0xff]
    %v1735 = vld [vmem:[%s1733 + $0x8] sm:$0xff]
    %v1736 = vld [vmem:[%s1733 + $0x10] sm:$0xff]
    %v1737 = vld [vmem:[%s1733 + $0x18] sm:$0xff]
    %1738 = vmatprep.subr.mxu0 0.0
    %1739 = vmatpush1.msra.mxu0 %v355
    %1740 = vmatprep.subr.mxu0 0.0
    %1741 = vmatpush1.msra.mxu0 %v356
    %1742 = vmatprep.subr.mxu0 0.0
    %1743 = vmatpush1.msra.mxu0 %v357
    %1744 = vmatprep.subr.mxu0 0.0
    %1745 = vmatpush1.msra.mxu0 %v358
    %1746 = vmatprep.subr.mxu0 0.0
    %1747 = vmatpush1.msra.mxu0 %v359
    %1748 = vmatprep.subr.mxu0 0.0
    %1749 = vmatpush1.msra.mxu0 %v360
    %1750 = vmatprep.subr.mxu0 0.0
    %1751 = vmatpush1.msra.mxu0 %v361
    %1752 = vmatprep.subr.mxu0 0.0
    %1753 = vmatpush1.msra.mxu0 %v362
    %1754 = vmatprep.subr.mxu0 0.0
    %1755 = vmatpush1.msra.mxu0 %v363
    %1756 = vmatprep.subr.mxu0 0.0
    %1757 = vmatpush1.msra.mxu0 %v364
    %1758 = vmatprep.subr.mxu0 0.0
    %1759 = vmatpush1.msra.mxu0 %v365
    %1760 = vmatprep.subr.mxu0 0.0
    %1761 = vmatpush1.msra.mxu0 %v366
    %1762 = vmatprep.subr.mxu0 0.0
    %1763 = vmatpush1.msra.mxu0 %v367
    %1764 = vmatprep.subr.mxu0 0.0
    %1765 = vmatpush1.msra.mxu0 %v368
    %1766 = vmatprep.subr.mxu0 0.0
    %1767 = vmatpush1.msra.mxu0 %v369
    %1768 = vmatprep.subr.mxu0 0.0
    %1769 = vmatpush1.msra.mxu0 %v370
    %1770 = vmatprep.subr.mxu0 0.0
    %1771 = vmatpush1.msra.mxu0 0.0
    %1772 = vmatprep.subr.mxu0 0.0
    %1773 = vmatpush1.msra.mxu0 0.0
    %1774 = vmatprep.subr.mxu0 0.0
    %1775 = vmatpush1.msra.mxu0 0.0
    %1776 = vmatprep.subr.mxu0 0.0
    %1777 = vmatpush1.msra.mxu0 0.0
    %1778 = vmatprep.subr.mxu0 0.0
    %1779 = vmatpush1.msra.mxu0 0.0
    %1780 = vmatprep.subr.mxu0 0.0
    %1781 = vmatpush1.msra.mxu0 0.0
    %1782 = vmatprep.subr.mxu0 0.0
    %1783 = vmatpush1.msra.mxu0 0.0
    %1784 = vmatprep.subr.mxu0 0.0
    %1785 = vmatpush1.msra.mxu0 0.0
    %1786 = vmatprep.subr.mxu0 0.0
    %1787 = vmatpush1.msra.mxu0 0.0
    %1788 = vmatprep.subr.mxu0 0.0
    %1789 = vmatpush1.msra.mxu0 0.0
    %1790 = vmatprep.subr.mxu0 0.0
    %1791 = vmatpush1.msra.mxu0 0.0
    %1792 = vmatprep.subr.mxu0 0.0
    %1793 = vmatpush1.msra.mxu0 0.0
    %1794 = vmatprep.subr.mxu0 0.0
    %1795 = vmatpush1.msra.mxu0 0.0
    %1796 = vmatprep.subr.mxu0 0.0
    %1797 = vmatpush1.msra.mxu0 0.0
    %1798 = vmatprep.subr.mxu0 0.0
    %1799 = vmatpush1.msra.mxu0 0.0
    %1800 = vmatprep.subr.mxu0 0.0
    %1801 = vmatpush1.msra.mxu0 0.0
    %1802 = vmatprep.mubr.f32.mxu0 0.0
    %1803 = vmatmul.mubr.f32.gmra.mrb[0].mxu0 %v1734
    %v1804 = vpop.f32.mrb[0].mxu0
    %v1805 = vadd.f32 0.0, %v1804
    %v1806 = vpop.f32.mrb[0].mxu0
    %1807 = vmatprep.mubr.f32.mxu0 0.0
    %1808 = vmatmul.mubr.f32.gmra.mrb[0].mxu0 %v1735
    %v1809 = vpop.f32.mrb[0].mxu0
    %v1810 = vadd.f32 0.0, %v1809
    %v1811 = vpop.f32.mrb[0].mxu0
    %1812 = vmatprep.mubr.f32.mxu0 0.0
    %1813 = vmatmul.mubr.f32.gmra.mrb[0].mxu0 %v1736
    %v1814 = vpop.f32.mrb[0].mxu0
    %v1815 = vadd.f32 0.0, %v1814
    %v1816 = vpop.f32.mrb[0].mxu0
    %1817 = vmatprep.mubr.f32.mxu0 0.0
    %1818 = vmatmul.mubr.f32.gmra.mrb[0].mxu0 %v1737
    %v1819 = vpop.f32.mrb[0].mxu0
    %v1820 = vadd.f32 0.0, %v1819
    %v1821 = vpop.f32.mrb[0].mxu0
    %1822 = vdwg.mxu0
    %s1823 = scalar_lea.vmem %s4, 896
    %v1824 = vld [vmem:[%s1823] sm:$0xff]
    %v1825 = vld [vmem:[%s1823 + $0x8] sm:$0xff]
    %v1826 = vld [vmem:[%s1823 + $0x10] sm:$0xff]
    %v1827 = vld [vmem:[%s1823 + $0x18] sm:$0xff]
    %v1828 = vld [vmem:[%s1823 + $0x20] sm:$0xff]
    %v1829 = vld [vmem:[%s1823 + $0x28] sm:$0xff]
    %v1830 = vld [vmem:[%s1823 + $0x30] sm:$0xff]
    %v1831 = vld [vmem:[%s1823 + $0x38] sm:$0xff]
    %v1832 = vld [vmem:[%s1823 + $0x40] sm:$0xff]
    %v1833 = vld [vmem:[%s1823 + $0x48] sm:$0xff]
    %v1834 = vld [vmem:[%s1823 + $0x50] sm:$0xff]
    %v1835 = vld [vmem:[%s1823 + $0x58] sm:$0xff]
    %v1836 = vld [vmem:[%s1823 + $0x60] sm:$0xff]
    %v1837 = vld [vmem:[%s1823 + $0x68] sm:$0xff]
    %v1838 = vld [vmem:[%s1823 + $0x70] sm:$0xff]
    %v1839 = vld [vmem:[%s1823 + $0x78] sm:$0xff]
    %1840 = vmatprep.subr.mxu0 0.0
    %1841 = vmatpush1.msra.mxu0 %v1824
    %1842 = vmatprep.subr.mxu0 0.0
    %1843 = vmatpush1.msra.mxu0 %v1825
    %1844 = vmatprep.subr.mxu0 0.0
    %1845 = vmatpush1.msra.mxu0 %v1826
    %1846 = vmatprep.subr.mxu0 0.0
    %1847 = vmatpush1.msra.mxu0 %v1827
    %1848 = vmatprep.subr.mxu0 0.0
    %1849 = vmatpush1.msra.mxu0 %v1828
    %1850 = vmatprep.subr.mxu0 0.0
    %1851 = vmatpush1.msra.mxu0 %v1829
    %1852 = vmatprep.subr.mxu0 0.0
    %1853 = vmatpush1.msra.mxu0 %v1830
    %1854 = vmatprep.subr.mxu0 0.0
    %1855 = vmatpush1.msra.mxu0 %v1831
    %1856 = vmatprep.subr.mxu0 0.0
    %1857 = vmatpush1.msra.mxu0 %v1832
    %1858 = vmatprep.subr.mxu0 0.0
    %1859 = vmatpush1.msra.mxu0 %v1833
    %1860 = vmatprep.subr.mxu0 0.0
    %1861 = vmatpush1.msra.mxu0 %v1834
    %1862 = vmatprep.subr.mxu0 0.0
    %1863 = vmatpush1.msra.mxu0 %v1835
    %1864 = vmatprep.subr.mxu0 0.0
    %1865 = vmatpush1.msra.mxu0 %v1836
    %1866 = vmatprep.subr.mxu0 0.0
    %1867 = vmatpush1.msra.mxu0 %v1837
    %1868 = vmatprep.subr.mxu0 0.0
    %1869 = vmatpush1.msra.mxu0 %v1838
    %1870 = vmatprep.subr.mxu0 0.0
    %1871 = vmatpush1.msra.mxu0 %v1839
    %1872 = vmatprep.subr.mxu0 0.0
    %1873 = vmatpush1.msra.mxu0 0.0
    %1874 = vmatprep.subr.mxu0 0.0
    %1875 = vmatpush1.msra.mxu0 0.0
    %1876 = vmatprep.subr.mxu0 0.0
    %1877 = vmatpush1.msra.mxu0 0.0
    %1878 = vmatprep.subr.mxu0 0.0
    %1879 = vmatpush1.msra.mxu0 0.0
    %1880 = vmatprep.subr.mxu0 0.0
    %1881 = vmatpush1.msra.mxu0 0.0
    %1882 = vmatprep.subr.mxu0 0.0
    %1883 = vmatpush1.msra.mxu0 0.0
    %1884 = vmatprep.subr.mxu0 0.0
    %1885 = vmatpush1.msra.mxu0 0.0
    %1886 = vmatprep.subr.mxu0 0.0
    %1887 = vmatpush1.msra.mxu0 0.0
    %1888 = vmatprep.subr.mxu0 0.0
    %1889 = vmatpush1.msra.mxu0 0.0
    %1890 = vmatprep.subr.mxu0 0.0
    %1891 = vmatpush1.msra.mxu0 0.0
    %1892 = vmatprep.subr.mxu0 0.0
    %1893 = vmatpush1.msra.mxu0 0.0
    %1894 = vmatprep.subr.mxu0 0.0
    %1895 = vmatpush1.msra.mxu0 0.0
    %1896 = vmatprep.subr.mxu0 0.0
    %1897 = vmatpush1.msra.mxu0 0.0
    %1898 = vmatprep.subr.mxu0 0.0
    %1899 = vmatpush1.msra.mxu0 0.0
    %1900 = vmatprep.subr.mxu0 0.0
    %1901 = vmatpush1.msra.mxu0 0.0
    %1902 = vmatprep.subr.mxu0 0.0
    %1903 = vmatpush1.msra.mxu0 0.0
    %1904 = vmatprep.mubr.f32.mxu0 0.0
    %1905 = vmatmul.mubr.f32.gmra.mrb[0].mxu0 %v1805
    %v1906 = vpop.f32.mrb[0].mxu0
    %v1907 = vadd.f32 0.0, %v1906
    %v1908 = vpop.f32.mrb[0].mxu0
    %1909 = vmatprep.mubr.f32.mxu0 0.0
    %1910 = vmatmul.mubr.f32.gmra.mrb[0].mxu0 %v1810
    %v1911 = vpop.f32.mrb[0].mxu0
    %v1912 = vadd.f32 0.0, %v1911
    %v1913 = vpop.f32.mrb[0].mxu0
    %1914 = vmatprep.mubr.f32.mxu0 0.0
    %1915 = vmatmul.mubr.f32.gmra.mrb[0].mxu0 %v1815
    %v1916 = vpop.f32.mrb[0].mxu0
    %v1917 = vadd.f32 0.0, %v1916
    %v1918 = vpop.f32.mrb[0].mxu0
    %1919 = vmatprep.mubr.f32.mxu0 0.0
    %1920 = vmatmul.mubr.f32.gmra.mrb[0].mxu0 %v1820
    %v1921 = vpop.f32.mrb[0].mxu0
    %v1922 = vadd.f32 0.0, %v1921
    %v1923 = vpop.f32.mrb[0].mxu0
    %1924 = vdwg.mxu0
    %v1925 = vadd.f32 %v1729, %v1907
    %v1926 = vadd.f32 %v1730, %v1912
    %v1927 = vadd.f32 %v1731, %v1917
    %v1928 = vadd.f32 %v1732, %v1922
    %s1929 = scalar_lea.vmem %s3, 256
    %v1930 = vld [vmem:[%s1929] sm:$0xff]
    %v1931 = vld [vmem:[%s1929 + $0x8] sm:$0xff]
    %v1932 = vld [vmem:[%s1929 + $0x10] sm:$0xff]
    %v1933 = vld [vmem:[%s1929 + $0x18] sm:$0xff]
    %1934 = vmatprep.subr.mxu0 0.0
    %1935 = vmatpush1.msra.mxu0 %v355
    %1936 = vmatprep.subr.mxu0 0.0
    %1937 = vmatpush1.msra.mxu0 %v356
    %1938 = vmatprep.subr.mxu0 0.0
    %1939 = vmatpush1.msra.mxu0 %v357
    %1940 = vmatprep.subr.mxu0 0.0
    %1941 = vmatpush1.msra.mxu0 %v358
    %1942 = vmatprep.subr.mxu0 0.0
    %1943 = vmatpush1.msra.mxu0 %v359
    %1944 = vmatprep.subr.mxu0 0.0
    %1945 = vmatpush1.msra.mxu0 %v360
    %1946 = vmatprep.subr.mxu0 0.0
    %1947 = vmatpush1.msra.mxu0 %v361
    %1948 = vmatprep.subr.mxu0 0.0
    %1949 = vmatpush1.msra.mxu0 %v362
    %1950 = vmatprep.subr.mxu0 0.0
    %1951 = vmatpush1.msra.mxu0 %v363
    %1952 = vmatprep.subr.mxu0 0.0
    %1953 = vmatpush1.msra.mxu0 %v364
    %1954 = vmatprep.subr.mxu0 0.0
    %1955 = vmatpush1.msra.mxu0 %v365
    %1956 = vmatprep.subr.mxu0 0.0
    %1957 = vmatpush1.msra.mxu0 %v366
    %1958 = vmatprep.subr.mxu0 0.0
    %1959 = vmatpush1.msra.mxu0 %v367
    %1960 = vmatprep.subr.mxu0 0.0
    %1961 = vmatpush1.msra.mxu0 %v368
    %1962 = vmatprep.subr.mxu0 0.0
    %1963 = vmatpush1.msra.mxu0 %v369
    %1964 = vmatprep.subr.mxu0 0.0
    %1965 = vmatpush1.msra.mxu0 %v370
    %1966 = vmatprep.subr.mxu0 0.0
    %1967 = vmatpush1.msra.mxu0 0.0
    %1968 = vmatprep.subr.mxu0 0.0
    %1969 = vmatpush1.msra.mxu0 0.0
    %1970 = vmatprep.subr.mxu0 0.0
    %1971 = vmatpush1.msra.mxu0 0.0
    %1972 = vmatprep.subr.mxu0 0.0
    %1973 = vmatpush1.msra.mxu0 0.0
    %1974 = vmatprep.subr.mxu0 0.0
    %1975 = vmatpush1.msra.mxu0 0.0
    %1976 = vmatprep.subr.mxu0 0.0
    %1977 = vmatpush1.msra.mxu0 0.0
    %1978 = vmatprep.subr.mxu0 0.0
    %1979 = vmatpush1.msra.mxu0 0.0
    %1980 = vmatprep.subr.mxu0 0.0
    %1981 = vmatpush1.msra.mxu0 0.0
    %1982 = vmatprep.subr.mxu0 0.0
    %1983 = vmatpush1.msra.mxu0 0.0
    %1984 = vmatprep.subr.mxu0 0.0
    %1985 = vmatpush1.msra.mxu0 0.0
    %1986 = vmatprep.subr.mxu0 0.0
    %1987 = vmatpush1.msra.mxu0 0.0
    %1988 = vmatprep.subr.mxu0 0.0
    %1989 = vmatpush1.msra.mxu0 0.0
    %1990 = vmatprep.subr.mxu0 0.0
    %1991 = vmatpush1.msra.mxu0 0.0
    %1992 = vmatprep.subr.mxu0 0.0
    %1993 = vmatpush1.msra.mxu0 0.0
    %1994 = vmatprep.subr.mxu0 0.0
    %1995 = vmatpush1.msra.mxu0 0.0
    %1996 = vmatprep.subr.mxu0 0.0
    %1997 = vmatpush1.msra.mxu0 0.0
    %1998 = vmatprep.mubr.f32.mxu0 0.0
    %1999 = vmatmul.mubr.f32.gmra.mrb[0].mxu0 %v1930
    %v2000 = vpop.f32.mrb[0].mxu0
    %v2001 = vadd.f32 0.0, %v2000
    %v2002 = vpop.f32.mrb[0].mxu0
    %2003 = vmatprep.mubr.f32.mxu0 0.0
    %2004 = vmatmul.mubr.f32.gmra.mrb[0].mxu0 %v1931
    %v2005 = vpop.f32.mrb[0].mxu0
    %v2006 = vadd.f32 0.0, %v2005
    %v2007 = vpop.f32.mrb[0].mxu0
    %2008 = vmatprep.mubr.f32.mxu0 0.0
    %2009 = vmatmul.mubr.f32.gmra.mrb[0].mxu0 %v1932
    %v2010 = vpop.f32.mrb[0].mxu0
    %v2011 = vadd.f32 0.0, %v2010
    %v2012 = vpop.f32.mrb[0].mxu0
    %2013 = vmatprep.mubr.f32.mxu0 0.0
    %2014 = vmatmul.mubr.f32.gmra.mrb[0].mxu0 %v1933
    %v2015 = vpop.f32.mrb[0].mxu0
    %v2016 = vadd.f32 0.0, %v2015
    %v2017 = vpop.f32.mrb[0].mxu0
    %2018 = vdwg.mxu0
    %s2019 = scalar_lea.vmem %s4, 1024
    %v2020 = vld [vmem:[%s2019] sm:$0xff]
    %v2021 = vld [vmem:[%s2019 + $0x8] sm:$0xff]
    %v2022 = vld [vmem:[%s2019 + $0x10] sm:$0xff]
    %v2023 = vld [vmem:[%s2019 + $0x18] sm:$0xff]
    %v2024 = vld [vmem:[%s2019 + $0x20] sm:$0xff]
    %v2025 = vld [vmem:[%s2019 + $0x28] sm:$0xff]
    %v2026 = vld [vmem:[%s2019 + $0x30] sm:$0xff]
    %v2027 = vld [vmem:[%s2019 + $0x38] sm:$0xff]
    %v2028 = vld [vmem:[%s2019 + $0x40] sm:$0xff]
    %v2029 = vld [vmem:[%s2019 + $0x48] sm:$0xff]
    %v2030 = vld [vmem:[%s2019 + $0x50] sm:$0xff]
    %v2031 = vld [vmem:[%s2019 + $0x58] sm:$0xff]
    %v2032 = vld [vmem:[%s2019 + $0x60] sm:$0xff]
    %v2033 = vld [vmem:[%s2019 + $0x68] sm:$0xff]
    %v2034 = vld [vmem:[%s2019 + $0x70] sm:$0xff]
    %v2035 = vld [vmem:[%s2019 + $0x78] sm:$0xff]
    %2036 = vmatprep.subr.mxu0 0.0
    %2037 = vmatpush1.msra.mxu0 %v2020
    %2038 = vmatprep.subr.mxu0 0.0
    %2039 = vmatpush1.msra.mxu0 %v2021
    %2040 = vmatprep.subr.mxu0 0.0
    %2041 = vmatpush1.msra.mxu0 %v2022
    %2042 = vmatprep.subr.mxu0 0.0
    %2043 = vmatpush1.msra.mxu0 %v2023
    %2044 = vmatprep.subr.mxu0 0.0
    %2045 = vmatpush1.msra.mxu0 %v2024
    %2046 = vmatprep.subr.mxu0 0.0
    %2047 = vmatpush1.msra.mxu0 %v2025
    %2048 = vmatprep.subr.mxu0 0.0
    %2049 = vmatpush1.msra.mxu0 %v2026
    %2050 = vmatprep.subr.mxu0 0.0
    %2051 = vmatpush1.msra.mxu0 %v2027
    %2052 = vmatprep.subr.mxu0 0.0
    %2053 = vmatpush1.msra.mxu0 %v2028
    %2054 = vmatprep.subr.mxu0 0.0
    %2055 = vmatpush1.msra.mxu0 %v2029
    %2056 = vmatprep.subr.mxu0 0.0
    %2057 = vmatpush1.msra.mxu0 %v2030
    %2058 = vmatprep.subr.mxu0 0.0
    %2059 = vmatpush1.msra.mxu0 %v2031
    %2060 = vmatprep.subr.mxu0 0.0
    %2061 = vmatpush1.msra.mxu0 %v2032
    %2062 = vmatprep.subr.mxu0 0.0
    %2063 = vmatpush1.msra.mxu0 %v2033
    %2064 = vmatprep.subr.mxu0 0.0
    %2065 = vmatpush1.msra.mxu0 %v2034
    %2066 = vmatprep.subr.mxu0 0.0
    %2067 = vmatpush1.msra.mxu0 %v2035
    %2068 = vmatprep.subr.mxu0 0.0
    %2069 = vmatpush1.msra.mxu0 0.0
    %2070 = vmatprep.subr.mxu0 0.0
    %2071 = vmatpush1.msra.mxu0 0.0
    %2072 = vmatprep.subr.mxu0 0.0
    %2073 = vmatpush1.msra.mxu0 0.0
    %2074 = vmatprep.subr.mxu0 0.0
    %2075 = vmatpush1.msra.mxu0 0.0
    %2076 = vmatprep.subr.mxu0 0.0
    %2077 = vmatpush1.msra.mxu0 0.0
    %2078 = vmatprep.subr.mxu0 0.0
    %2079 = vmatpush1.msra.mxu0 0.0
    %2080 = vmatprep.subr.mxu0 0.0
    %2081 = vmatpush1.msra.mxu0 0.0
    %2082 = vmatprep.subr.mxu0 0.0
    %2083 = vmatpush1.msra.mxu0 0.0
    %2084 = vmatprep.subr.mxu0 0.0
    %2085 = vmatpush1.msra.mxu0 0.0
    %2086 = vmatprep.subr.mxu0 0.0
    %2087 = vmatpush1.msra.mxu0 0.0
    %2088 = vmatprep.subr.mxu0 0.0
    %2089 = vmatpush1.msra.mxu0 0.0
    %2090 = vmatprep.subr.mxu0 0.0
    %2091 = vmatpush1.msra.mxu0 0.0
    %2092 = vmatprep.subr.mxu0 0.0
    %2093 = vmatpush1.msra.mxu0 0.0
    %2094 = vmatprep.subr.mxu0 0.0
    %2095 = vmatpush1.msra.mxu0 0.0
    %2096 = vmatprep.subr.mxu0 0.0
    %2097 = vmatpush1.msra.mxu0 0.0
    %2098 = vmatprep.subr.mxu0 0.0
    %2099 = vmatpush1.msra.mxu0 0.0
    %2100 = vmatprep.mubr.f32.mxu0 0.0
    %2101 = vmatmul.mubr.f32.gmra.mrb[0].mxu0 %v2001
    %v2102 = vpop.f32.mrb[0].mxu0
    %v2103 = vadd.f32 0.0, %v2102
    %v2104 = vpop.f32.mrb[0].mxu0
    %2105 = vmatprep.mubr.f32.mxu0 0.0
    %2106 = vmatmul.mubr.f32.gmra.mrb[0].mxu0 %v2006
    %v2107 = vpop.f32.mrb[0].mxu0
    %v2108 = vadd.f32 0.0, %v2107
    %v2109 = vpop.f32.mrb[0].mxu0
    %2110 = vmatprep.mubr.f32.mxu0 0.0
    %2111 = vmatmul.mubr.f32.gmra.mrb[0].mxu0 %v2011
    %v2112 = vpop.f32.mrb[0].mxu0
    %v2113 = vadd.f32 0.0, %v2112
    %v2114 = vpop.f32.mrb[0].mxu0
    %2115 = vmatprep.mubr.f32.mxu0 0.0
    %2116 = vmatmul.mubr.f32.gmra.mrb[0].mxu0 %v2016
    %v2117 = vpop.f32.mrb[0].mxu0
    %v2118 = vadd.f32 0.0, %v2117
    %v2119 = vpop.f32.mrb[0].mxu0
    %2120 = vdwg.mxu0
    %v2121 = vadd.f32 %v1925, %v2103
    %v2122 = vadd.f32 %v1926, %v2108
    %v2123 = vadd.f32 %v1927, %v2113
    %v2124 = vadd.f32 %v1928, %v2118
    %v2125 = vld [vmem:[%s5] sm:$0x1]
    %v2126 = vlaneseq
    %v2127 = vshrl.u32 %v2126, 7
    %v2128 = vsub.s32 0, %v2127
    %v2129 = vrot.slane %v2125, %v2128
    %v2130 = vadd.f32 %v2121, %v2129
    %v2131 = vadd.f32 %v2122, %v2129
    %v2132 = vadd.f32 %v2123, %v2129
    %v2133 = vadd.f32 %v2124, %v2129
    %vm2134 = vcmp.ge.f32.partialorder %v2130, 0.0
    %vm2135 = vcmp.ge.f32.partialorder %v2131, 0.0
    %vm2136 = vcmp.ge.f32.partialorder %v2132, 0.0
    %vm2137 = vcmp.ge.f32.partialorder %v2133, 0.0
    %v2138 = vmul.f32 %v2130, 0.2
    %v2139 = vmul.f32 %v2131, 0.2
    %v2140 = vmul.f32 %v2132, 0.2
    %v2141 = vmul.f32 %v2133, 0.2
    %v2142 = vsel %vm2134, %v2130, %v2138
    %v2143 = vsel %vm2135, %v2131, %v2139
    %v2144 = vsel %vm2136, %v2132, %v2140
    %v2145 = vsel %vm2137, %v2133, %v2141
    %v2146 = vadd.f32 %v2142, %v2143
    %v2147 = vadd.f32 %v2146, %v2144
    %v2148 = vadd.f32 %v2147, %v2145
    %v2149 = vrot.slane %v2148, 4
    %v2150 = vadd.f32 %v2148, %v2149
    %v2151 = vrot.slane %v2150, 2
    %v2152 = vadd.f32 %v2150, %v2151
    %v2153 = vrot.slane %v2152, 1
    %v2154 = vadd.f32 %v2152, %v2153
    %v2155 = vmul.f32 %v2142, %v2142
    %v2156 = vmul.f32 %v2143, %v2143
    %v2157 = vmul.f32 %v2144, %v2144
    %v2158 = vmul.f32 %v2145, %v2145
    %v2159 = vadd.f32 %v2155, %v2156
    %v2160 = vadd.f32 %v2159, %v2157
    %v2161 = vadd.f32 %v2160, %v2158
    %v2162 = vrot.slane %v2161, 4
    %v2163 = vadd.f32 %v2161, %v2162
    %v2164 = vrot.slane %v2163, 2
    %v2165 = vadd.f32 %v2163, %v2164
    %v2166 = vrot.slane %v2165, 1
    %v2167 = vadd.f32 %v2165, %v2166
    %v2168 = vld [vmem:[%s6] sm:$0xff]
    %v2169 = vld [vmem:[%s6 + $0x8] sm:$0xff]
    %v2170 = vld [vmem:[%s6 + $0x10] sm:$0xff]
    %v2171 = vld [vmem:[%s6 + $0x18] sm:$0xff]
    %v2172 = vld [vmem:[%s6 + $0x20] sm:$0xff]
    %v2173 = vld [vmem:[%s6 + $0x28] sm:$0xff]
    %v2174 = vld [vmem:[%s6 + $0x30] sm:$0xff]
    %v2175 = vld [vmem:[%s6 + $0x38] sm:$0xff]
    %v2176 = vld [vmem:[%s6 + $0x40] sm:$0xff]
    %v2177 = vld [vmem:[%s6 + $0x48] sm:$0xff]
    %v2178 = vld [vmem:[%s6 + $0x50] sm:$0xff]
    %v2179 = vld [vmem:[%s6 + $0x58] sm:$0xff]
    %v2180 = vld [vmem:[%s6 + $0x60] sm:$0xff]
    %v2181 = vld [vmem:[%s6 + $0x68] sm:$0xff]
    %v2182 = vld [vmem:[%s6 + $0x70] sm:$0xff]
    %v2183 = vld [vmem:[%s6 + $0x78] sm:$0xff]
    %2184 = vmatprep.subr.mxu0 0.0
    %2185 = vmatpush1.msra.mxu0 %v2168
    %2186 = vmatprep.subr.mxu0 0.0
    %2187 = vmatpush1.msra.mxu0 %v2169
    %2188 = vmatprep.subr.mxu0 0.0
    %2189 = vmatpush1.msra.mxu0 %v2170
    %2190 = vmatprep.subr.mxu0 0.0
    %2191 = vmatpush1.msra.mxu0 %v2171
    %2192 = vmatprep.subr.mxu0 0.0
    %2193 = vmatpush1.msra.mxu0 %v2172
    %2194 = vmatprep.subr.mxu0 0.0
    %2195 = vmatpush1.msra.mxu0 %v2173
    %2196 = vmatprep.subr.mxu0 0.0
    %2197 = vmatpush1.msra.mxu0 %v2174
    %2198 = vmatprep.subr.mxu0 0.0
    %2199 = vmatpush1.msra.mxu0 %v2175
    %2200 = vmatprep.subr.mxu0 0.0
    %2201 = vmatpush1.msra.mxu0 %v2176
    %2202 = vmatprep.subr.mxu0 0.0
    %2203 = vmatpush1.msra.mxu0 %v2177
    %2204 = vmatprep.subr.mxu0 0.0
    %2205 = vmatpush1.msra.mxu0 %v2178
    %2206 = vmatprep.subr.mxu0 0.0
    %2207 = vmatpush1.msra.mxu0 %v2179
    %2208 = vmatprep.subr.mxu0 0.0
    %2209 = vmatpush1.msra.mxu0 %v2180
    %2210 = vmatprep.subr.mxu0 0.0
    %2211 = vmatpush1.msra.mxu0 %v2181
    %2212 = vmatprep.subr.mxu0 0.0
    %2213 = vmatpush1.msra.mxu0 %v2182
    %2214 = vmatprep.subr.mxu0 0.0
    %2215 = vmatpush1.msra.mxu0 %v2183
    %2216 = vmatprep.subr.mxu0 0.0
    %2217 = vmatpush1.msra.mxu0 0.0
    %2218 = vmatprep.subr.mxu0 0.0
    %2219 = vmatpush1.msra.mxu0 0.0
    %2220 = vmatprep.subr.mxu0 0.0
    %2221 = vmatpush1.msra.mxu0 0.0
    %2222 = vmatprep.subr.mxu0 0.0
    %2223 = vmatpush1.msra.mxu0 0.0
    %2224 = vmatprep.subr.mxu0 0.0
    %2225 = vmatpush1.msra.mxu0 0.0
    %2226 = vmatprep.subr.mxu0 0.0
    %2227 = vmatpush1.msra.mxu0 0.0
    %2228 = vmatprep.subr.mxu0 0.0
    %2229 = vmatpush1.msra.mxu0 0.0
    %2230 = vmatprep.subr.mxu0 0.0
    %2231 = vmatpush1.msra.mxu0 0.0
    %2232 = vmatprep.subr.mxu0 0.0
    %2233 = vmatpush1.msra.mxu0 0.0
    %2234 = vmatprep.subr.mxu0 0.0
    %2235 = vmatpush1.msra.mxu0 0.0
    %2236 = vmatprep.subr.mxu0 0.0
    %2237 = vmatpush1.msra.mxu0 0.0
    %2238 = vmatprep.subr.mxu0 0.0
    %2239 = vmatpush1.msra.mxu0 0.0
    %2240 = vmatprep.subr.mxu0 0.0
    %2241 = vmatpush1.msra.mxu0 0.0
    %2242 = vmatprep.subr.mxu0 0.0
    %2243 = vmatpush1.msra.mxu0 0.0
    %2244 = vmatprep.subr.mxu0 0.0
    %2245 = vmatpush1.msra.mxu0 0.0
    %2246 = vmatprep.subr.mxu0 0.0
    %2247 = vmatpush1.msra.mxu0 0.0
    %2248 = vmatprep.mubr.f32.mxu0 0.0
    %2249 = vmatmul.mubr.f32.gmra.mrb[0].mxu0 %v2154
    %v2250 = vpop.f32.mrb[0].mxu0
    %v2251 = vadd.f32 0.0, %v2250
    %v2252 = vpop.f32.mrb[0].mxu0
    %2253 = vdwg.mxu0
    %2254 = vmatprep.subr.mxu0 0.0
    %2255 = vmatpush1.msra.mxu0 %v2168
    %2256 = vmatprep.subr.mxu0 0.0
    %2257 = vmatpush1.msra.mxu0 %v2169
    %2258 = vmatprep.subr.mxu0 0.0
    %2259 = vmatpush1.msra.mxu0 %v2170
    %2260 = vmatprep.subr.mxu0 0.0
    %2261 = vmatpush1.msra.mxu0 %v2171
    %2262 = vmatprep.subr.mxu0 0.0
    %2263 = vmatpush1.msra.mxu0 %v2172
    %2264 = vmatprep.subr.mxu0 0.0
    %2265 = vmatpush1.msra.mxu0 %v2173
    %2266 = vmatprep.subr.mxu0 0.0
    %2267 = vmatpush1.msra.mxu0 %v2174
    %2268 = vmatprep.subr.mxu0 0.0
    %2269 = vmatpush1.msra.mxu0 %v2175
    %2270 = vmatprep.subr.mxu0 0.0
    %2271 = vmatpush1.msra.mxu0 %v2176
    %2272 = vmatprep.subr.mxu0 0.0
    %2273 = vmatpush1.msra.mxu0 %v2177
    %2274 = vmatprep.subr.mxu0 0.0
    %2275 = vmatpush1.msra.mxu0 %v2178
    %2276 = vmatprep.subr.mxu0 0.0
    %2277 = vmatpush1.msra.mxu0 %v2179
    %2278 = vmatprep.subr.mxu0 0.0
    %2279 = vmatpush1.msra.mxu0 %v2180
    %2280 = vmatprep.subr.mxu0 0.0
    %2281 = vmatpush1.msra.mxu0 %v2181
    %2282 = vmatprep.subr.mxu0 0.0
    %2283 = vmatpush1.msra.mxu0 %v2182
    %2284 = vmatprep.subr.mxu0 0.0
    %2285 = vmatpush1.msra.mxu0 %v2183
    %2286 = vmatprep.subr.mxu0 0.0
    %2287 = vmatpush1.msra.mxu0 0.0
    %2288 = vmatprep.subr.mxu0 0.0
    %2289 = vmatpush1.msra.mxu0 0.0
    %2290 = vmatprep.subr.mxu0 0.0
    %2291 = vmatpush1.msra.mxu0 0.0
    %2292 = vmatprep.subr.mxu0 0.0
    %2293 = vmatpush1.msra.mxu0 0.0
    %2294 = vmatprep.subr.mxu0 0.0
    %2295 = vmatpush1.msra.mxu0 0.0
    %2296 = vmatprep.subr.mxu0 0.0
    %2297 = vmatpush1.msra.mxu0 0.0
    %2298 = vmatprep.subr.mxu0 0.0
    %2299 = vmatpush1.msra.mxu0 0.0
    %2300 = vmatprep.subr.mxu0 0.0
    %2301 = vmatpush1.msra.mxu0 0.0
    %2302 = vmatprep.subr.mxu0 0.0
    %2303 = vmatpush1.msra.mxu0 0.0
    %2304 = vmatprep.subr.mxu0 0.0
    %2305 = vmatpush1.msra.mxu0 0.0
    %2306 = vmatprep.subr.mxu0 0.0
    %2307 = vmatpush1.msra.mxu0 0.0
    %2308 = vmatprep.subr.mxu0 0.0
    %2309 = vmatpush1.msra.mxu0 0.0
    %2310 = vmatprep.subr.mxu0 0.0
    %2311 = vmatpush1.msra.mxu0 0.0
    %2312 = vmatprep.subr.mxu0 0.0
    %2313 = vmatpush1.msra.mxu0 0.0
    %2314 = vmatprep.subr.mxu0 0.0
    %2315 = vmatpush1.msra.mxu0 0.0
    %2316 = vmatprep.subr.mxu0 0.0
    %2317 = vmatpush1.msra.mxu0 0.0
    %2318 = vmatprep.mubr.f32.mxu0 0.0
    %2319 = vmatmul.mubr.f32.gmra.mrb[0].mxu0 %v2167
    %v2320 = vpop.f32.mrb[0].mxu0
    %v2321 = vadd.f32 0.0, %v2320
    %v2322 = vpop.f32.mrb[0].mxu0
    %2323 = vdwg.mxu0
    %v2324 = vmul.f32 %v2251, 0.0078125
    %v2325 = vmul.f32 %v2321, 0.0078125
    %v2326 = vmul.f32 %v2324, %v2324
    %v2327 = vsub.f32 %v2325, %v2326
    %v2328 = vld [vmem:[%s5 + $0x1] sm:$0x1]
    %v2329 = vadd.f32 %v2327, 0.8
    %v2330 = vrsqrt.pop %v2329
    %v2331 = vmul.f32 %v2328, %v2330
    %v2332 = vld [vmem:[%s5 + $0x2] sm:$0x1]
    %v2333 = vmul.f32 %v2324, %v2331
    %v2334 = vsub.f32 %v2332, %v2333
    %v2335 = vlaneseq
    %v2336 = vshrl.u32 %v2335, 7
    %v2337 = vsub.s32 0, %v2336
    %v2338 = vrot.slane %v2331, %v2337
    %v2339 = vmul.f32 %v2142, %v2338
    %v2340 = vmul.f32 %v2143, %v2338
    %v2341 = vmul.f32 %v2144, %v2338
    %v2342 = vmul.f32 %v2145, %v2338
    %v2343 = vlaneseq
    %v2344 = vshrl.u32 %v2343, 7
    %v2345 = vsub.s32 0, %v2344
    %v2346 = vrot.slane %v2334, %v2345
    %v2347 = vadd.f32 %v2339, %v2346
    %v2348 = vadd.f32 %v2340, %v2346
    %v2349 = vadd.f32 %v2341, %v2346
    %v2350 = vadd.f32 %v2342, %v2346
    %v2351 = vld [vmem:[%s7] sm:$0xff]
    %vm2352 = vcmask 261120
    %v2354 = vsel %vm2352, %v2351, 0
    %2356 = vmatprep.subr.mxu0 0.0
    %2357 = vmatpush1.msra.mxu0 %v2347
    %2358 = vmatprep.subr.mxu0 0.0
    %2359 = vmatpush1.msra.mxu0 %v2348
    %2360 = vmatprep.subr.mxu0 0.0
    %2361 = vmatpush1.msra.mxu0 %v2349
    %2362 = vmatprep.subr.mxu0 0.0
    %2363 = vmatpush1.msra.mxu0 %v2350
    %2364 = vmatprep.subr.mxu0 0.0
    %2365 = vmatpush1.msra.mxu0 0.0
    %2366 = vmatprep.subr.mxu0 0.0
    %2367 = vmatpush1.msra.mxu0 0.0
    %2368 = vmatprep.subr.mxu0 0.0
    %2369 = vmatpush1.msra.mxu0 0.0
    %2370 = vmatprep.subr.mxu0 0.0
    %2371 = vmatpush1.msra.mxu0 0.0
    %2372 = vmatprep.subr.mxu0 0.0
    %2373 = vmatpush1.msra.mxu0 0.0
    %2374 = vmatprep.subr.mxu0 0.0
    %2375 = vmatpush1.msra.mxu0 0.0
    %2376 = vmatprep.subr.mxu0 0.0
    %2377 = vmatpush1.msra.mxu0 0.0
    %2378 = vmatprep.subr.mxu0 0.0
    %2379 = vmatpush1.msra.mxu0 0.0
    %2380 = vmatprep.subr.mxu0 0.0
    %2381 = vmatpush1.msra.mxu0 0.0
    %2382 = vmatprep.subr.mxu0 0.0
    %2383 = vmatpush1.msra.mxu0 0.0
    %2384 = vmatprep.subr.mxu0 0.0
    %2385 = vmatpush1.msra.mxu0 0.0
    %2386 = vmatprep.subr.mxu0 0.0
    %2387 = vmatpush1.msra.mxu0 0.0
    %2388 = vmatprep.subr.mxu0 0.0
    %2389 = vmatpush1.msra.mxu0 0.0
    %2390 = vmatprep.subr.mxu0 0.0
    %2391 = vmatpush1.msra.mxu0 0.0
    %2392 = vmatprep.subr.mxu0 0.0
    %2393 = vmatpush1.msra.mxu0 0.0
    %2394 = vmatprep.subr.mxu0 0.0
    %2395 = vmatpush1.msra.mxu0 0.0
    %2396 = vmatprep.subr.mxu0 0.0
    %2397 = vmatpush1.msra.mxu0 0.0
    %2398 = vmatprep.subr.mxu0 0.0
    %2399 = vmatpush1.msra.mxu0 0.0
    %2400 = vmatprep.subr.mxu0 0.0
    %2401 = vmatpush1.msra.mxu0 0.0
    %2402 = vmatprep.subr.mxu0 0.0
    %2403 = vmatpush1.msra.mxu0 0.0
    %2404 = vmatprep.subr.mxu0 0.0
    %2405 = vmatpush1.msra.mxu0 0.0
    %2406 = vmatprep.subr.mxu0 0.0
    %2407 = vmatpush1.msra.mxu0 0.0
    %2408 = vmatprep.subr.mxu0 0.0
    %2409 = vmatpush1.msra.mxu0 0.0
    %2410 = vmatprep.subr.mxu0 0.0
    %2411 = vmatpush1.msra.mxu0 0.0
    %2412 = vmatprep.subr.mxu0 0.0
    %2413 = vmatpush1.msra.mxu0 0.0
    %2414 = vmatprep.subr.mxu0 0.0
    %2415 = vmatpush1.msra.mxu0 0.0
    %2416 = vmatprep.subr.mxu0 0.0
    %2417 = vmatpush1.msra.mxu0 0.0
    %2418 = vmatprep.subr.mxu0 0.0
    %2419 = vmatpush1.msra.mxu0 0.0
    %2420 = vmatprep.mubr.f32.mxu0 0.0
    %2421 = vmatmul.mubr.f32.gmra.mrb[0].mxu0 %v2354
    %v2422 = vpop.f32.mrb[0].mxu0
    %v2423 = vadd.f32 0.0, %v2422
    %v2424 = vpop.f32.mrb[0].mxu0
    %2425 = vdwg.mxu0
    %v2426 = vld [vmem:[%s8] sm:$0xff]
    %v2427 = vld [vmem:[%s8 + $0x8] sm:$0xff]
    %v2428 = vld [vmem:[%s8 + $0x10] sm:$0xff]
    %v2429 = vld [vmem:[%s8 + $0x18] sm:$0xff]
    %v2430 = vld [vmem:[%s8 + $0x20] sm:$0xff]
    %v2431 = vld [vmem:[%s8 + $0x28] sm:$0xff]
    %v2432 = vld [vmem:[%s8 + $0x30] sm:$0xff]
    %v2433 = vld [vmem:[%s8 + $0x38] sm:$0xff]
    %v2434 = vld [vmem:[%s8 + $0x40] sm:$0xff]
    %v2435 = vld [vmem:[%s8 + $0x48] sm:$0xff]
    %v2436 = vld [vmem:[%s8 + $0x50] sm:$0xff]
    %v2437 = vld [vmem:[%s8 + $0x58] sm:$0xff]
    %v2438 = vld [vmem:[%s8 + $0x60] sm:$0xff]
    %v2439 = vld [vmem:[%s8 + $0x68] sm:$0xff]
    %v2440 = vld [vmem:[%s8 + $0x70] sm:$0xff]
    %v2441 = vld [vmem:[%s8 + $0x78] sm:$0xff]
    %s2442 = scalar_lea.vmem %s7, 8
    %v2443 = vld [vmem:[%s2442] sm:$0xff]
    %v2445 = vsel %vm2352, %v2443, 0
    %2447 = vmatprep.subr.mxu0 0.0
    %2448 = vmatpush1.msra.mxu0 %v2347
    %2449 = vmatprep.subr.mxu0 0.0
    %2450 = vmatpush1.msra.mxu0 %v2348
    %2451 = vmatprep.subr.mxu0 0.0
    %2452 = vmatpush1.msra.mxu0 %v2349
    %2453 = vmatprep.subr.mxu0 0.0
    %2454 = vmatpush1.msra.mxu0 %v2350
    %2455 = vmatprep.subr.mxu0 0.0
    %2456 = vmatpush1.msra.mxu0 0.0
    %2457 = vmatprep.subr.mxu0 0.0
    %2458 = vmatpush1.msra.mxu0 0.0
    %2459 = vmatprep.subr.mxu0 0.0
    %2460 = vmatpush1.msra.mxu0 0.0
    %2461 = vmatprep.subr.mxu0 0.0
    %2462 = vmatpush1.msra.mxu0 0.0
    %2463 = vmatprep.subr.mxu0 0.0
    %2464 = vmatpush1.msra.mxu0 0.0
    %2465 = vmatprep.subr.mxu0 0.0
    %2466 = vmatpush1.msra.mxu0 0.0
    %2467 = vmatprep.subr.mxu0 0.0
    %2468 = vmatpush1.msra.mxu0 0.0
    %2469 = vmatprep.subr.mxu0 0.0
    %2470 = vmatpush1.msra.mxu0 0.0
    %2471 = vmatprep.subr.mxu0 0.0
    %2472 = vmatpush1.msra.mxu0 0.0
    %2473 = vmatprep.subr.mxu0 0.0
    %2474 = vmatpush1.msra.mxu0 0.0
    %2475 = vmatprep.subr.mxu0 0.0
    %2476 = vmatpush1.msra.mxu0 0.0
    %2477 = vmatprep.subr.mxu0 0.0
    %2478 = vmatpush1.msra.mxu0 0.0
    %2479 = vmatprep.subr.mxu0 0.0
    %2480 = vmatpush1.msra.mxu0 0.0
    %2481 = vmatprep.subr.mxu0 0.0
    %2482 = vmatpush1.msra.mxu0 0.0
    %2483 = vmatprep.subr.mxu0 0.0
    %2484 = vmatpush1.msra.mxu0 0.0
    %2485 = vmatprep.subr.mxu0 0.0
    %2486 = vmatpush1.msra.mxu0 0.0
    %2487 = vmatprep.subr.mxu0 0.0
    %2488 = vmatpush1.msra.mxu0 0.0
    %2489 = vmatprep.subr.mxu0 0.0
    %2490 = vmatpush1.msra.mxu0 0.0
    %2491 = vmatprep.subr.mxu0 0.0
    %2492 = vmatpush1.msra.mxu0 0.0
    %2493 = vmatprep.subr.mxu0 0.0
    %2494 = vmatpush1.msra.mxu0 0.0
    %2495 = vmatprep.subr.mxu0 0.0
    %2496 = vmatpush1.msra.mxu0 0.0
    %2497 = vmatprep.subr.mxu0 0.0
    %2498 = vmatpush1.msra.mxu0 0.0
    %2499 = vmatprep.subr.mxu0 0.0
    %2500 = vmatpush1.msra.mxu0 0.0
    %2501 = vmatprep.subr.mxu0 0.0
    %2502 = vmatpush1.msra.mxu0 0.0
    %2503 = vmatprep.subr.mxu0 0.0
    %2504 = vmatpush1.msra.mxu0 0.0
    %2505 = vmatprep.subr.mxu0 0.0
    %2506 = vmatpush1.msra.mxu0 0.0
    %2507 = vmatprep.subr.mxu0 0.0
    %2508 = vmatpush1.msra.mxu0 0.0
    %2509 = vmatprep.subr.mxu0 0.0
    %2510 = vmatpush1.msra.mxu0 0.0
    %2511 = vmatprep.mubr.f32.mxu0 0.0
    %2512 = vmatmul.mubr.f32.gmra.mrb[0].mxu0 %v2445
    %v2513 = vpop.f32.mrb[0].mxu0
    %v2514 = vadd.f32 0.0, %v2513
    %v2515 = vpop.f32.mrb[0].mxu0
    %2516 = vdwg.mxu0
    %s2517 = scalar_lea.vmem %s8, 128
    %v2518 = vld [vmem:[%s2517] sm:$0xff]
    %v2519 = vld [vmem:[%s2517 + $0x8] sm:$0xff]
    %v2520 = vld [vmem:[%s2517 + $0x10] sm:$0xff]
    %v2521 = vld [vmem:[%s2517 + $0x18] sm:$0xff]
    %v2522 = vld [vmem:[%s2517 + $0x20] sm:$0xff]
    %v2523 = vld [vmem:[%s2517 + $0x28] sm:$0xff]
    %v2524 = vld [vmem:[%s2517 + $0x30] sm:$0xff]
    %v2525 = vld [vmem:[%s2517 + $0x38] sm:$0xff]
    %v2526 = vld [vmem:[%s2517 + $0x40] sm:$0xff]
    %v2527 = vld [vmem:[%s2517 + $0x48] sm:$0xff]
    %v2528 = vld [vmem:[%s2517 + $0x50] sm:$0xff]
    %v2529 = vld [vmem:[%s2517 + $0x58] sm:$0xff]
    %v2530 = vld [vmem:[%s2517 + $0x60] sm:$0xff]
    %v2531 = vld [vmem:[%s2517 + $0x68] sm:$0xff]
    %v2532 = vld [vmem:[%s2517 + $0x70] sm:$0xff]
    %v2533 = vld [vmem:[%s2517 + $0x78] sm:$0xff]
    %2534 = vmatprep.subr.mxu0 0.0
    %2535 = vmatpush1.msra.mxu0 %v2518
    %2536 = vmatprep.subr.mxu0 0.0
    %2537 = vmatpush1.msra.mxu0 %v2519
    %2538 = vmatprep.subr.mxu0 0.0
    %2539 = vmatpush1.msra.mxu0 %v2520
    %2540 = vmatprep.subr.mxu0 0.0
    %2541 = vmatpush1.msra.mxu0 %v2521
    %2542 = vmatprep.subr.mxu0 0.0
    %2543 = vmatpush1.msra.mxu0 %v2522
    %2544 = vmatprep.subr.mxu0 0.0
    %2545 = vmatpush1.msra.mxu0 %v2523
    %2546 = vmatprep.subr.mxu0 0.0
    %2547 = vmatpush1.msra.mxu0 %v2524
    %2548 = vmatprep.subr.mxu0 0.0
    %2549 = vmatpush1.msra.mxu0 %v2525
    %2550 = vmatprep.subr.mxu0 0.0
    %2551 = vmatpush1.msra.mxu0 %v2526
    %2552 = vmatprep.subr.mxu0 0.0
    %2553 = vmatpush1.msra.mxu0 %v2527
    %2554 = vmatprep.subr.mxu0 0.0
    %2555 = vmatpush1.msra.mxu0 %v2528
    %2556 = vmatprep.subr.mxu0 0.0
    %2557 = vmatpush1.msra.mxu0 %v2529
    %2558 = vmatprep.subr.mxu0 0.0
    %2559 = vmatpush1.msra.mxu0 %v2530
    %2560 = vmatprep.subr.mxu0 0.0
    %2561 = vmatpush1.msra.mxu0 %v2531
    %2562 = vmatprep.subr.mxu0 0.0
    %2563 = vmatpush1.msra.mxu0 %v2532
    %2564 = vmatprep.subr.mxu0 0.0
    %2565 = vmatpush1.msra.mxu0 %v2533
    %2566 = vmatprep.subr.mxu0 0.0
    %2567 = vmatpush1.msra.mxu0 0.0
    %2568 = vmatprep.subr.mxu0 0.0
    %2569 = vmatpush1.msra.mxu0 0.0
    %2570 = vmatprep.subr.mxu0 0.0
    %2571 = vmatpush1.msra.mxu0 0.0
    %2572 = vmatprep.subr.mxu0 0.0
    %2573 = vmatpush1.msra.mxu0 0.0
    %2574 = vmatprep.subr.mxu0 0.0
    %2575 = vmatpush1.msra.mxu0 0.0
    %2576 = vmatprep.subr.mxu0 0.0
    %2577 = vmatpush1.msra.mxu0 0.0
    %2578 = vmatprep.subr.mxu0 0.0
    %2579 = vmatpush1.msra.mxu0 0.0
    %2580 = vmatprep.subr.mxu0 0.0
    %2581 = vmatpush1.msra.mxu0 0.0
    %2582 = vmatprep.subr.mxu0 0.0
    %2583 = vmatpush1.msra.mxu0 0.0
    %2584 = vmatprep.subr.mxu0 0.0
    %2585 = vmatpush1.msra.mxu0 0.0
    %2586 = vmatprep.subr.mxu0 0.0
    %2587 = vmatpush1.msra.mxu0 0.0
    %2588 = vmatprep.subr.mxu0 0.0
    %2589 = vmatpush1.msra.mxu0 0.0
    %2590 = vmatprep.subr.mxu0 0.0
    %2591 = vmatpush1.msra.mxu0 0.0
    %2592 = vmatprep.subr.mxu0 0.0
    %2593 = vmatpush1.msra.mxu0 0.0
    %2594 = vmatprep.subr.mxu0 0.0
    %2595 = vmatpush1.msra.mxu0 0.0
    %2596 = vmatprep.subr.mxu0 0.0
    %2597 = vmatpush1.msra.mxu0 0.0
    %2598 = vmatprep.mubr.f32.mxu0 0.0
    %2599 = vmatmul.mubr.f32.gmra.mrb[0].mxu0 %v2514
    %v2600 = vpop.f32.mrb[0].mxu0
    %v2601 = vadd.f32 0.0, %v2600
    %v2602 = vpop.f32.mrb[0].mxu0
    %2603 = vdwg.mxu0
    %2604 = vmatprep.subr.mxu0 0.0
    %2605 = vmatpush1.msra.mxu0 %v2426
    %2606 = vmatprep.subr.mxu0 0.0
    %2607 = vmatpush1.msra.mxu0 %v2427
    %2608 = vmatprep.subr.mxu0 0.0
    %2609 = vmatpush1.msra.mxu0 %v2428
    %2610 = vmatprep.subr.mxu0 0.0
    %2611 = vmatpush1.msra.mxu0 %v2429
    %2612 = vmatprep.subr.mxu0 0.0
    %2613 = vmatpush1.msra.mxu0 %v2430
    %2614 = vmatprep.subr.mxu0 0.0
    %2615 = vmatpush1.msra.mxu0 %v2431
    %2616 = vmatprep.subr.mxu0 0.0
    %2617 = vmatpush1.msra.mxu0 %v2432
    %2618 = vmatprep.subr.mxu0 0.0
    %2619 = vmatpush1.msra.mxu0 %v2433
    %2620 = vmatprep.subr.mxu0 0.0
    %2621 = vmatpush1.msra.mxu0 %v2434
    %2622 = vmatprep.subr.mxu0 0.0
    %2623 = vmatpush1.msra.mxu0 %v2435
    %2624 = vmatprep.subr.mxu0 0.0
    %2625 = vmatpush1.msra.mxu0 %v2436
    %2626 = vmatprep.subr.mxu0 0.0
    %2627 = vmatpush1.msra.mxu0 %v2437
    %2628 = vmatprep.subr.mxu0 0.0
    %2629 = vmatpush1.msra.mxu0 %v2438
    %2630 = vmatprep.subr.mxu0 0.0
    %2631 = vmatpush1.msra.mxu0 %v2439
    %2632 = vmatprep.subr.mxu0 0.0
    %2633 = vmatpush1.msra.mxu0 %v2440
    %2634 = vmatprep.subr.mxu0 0.0
    %2635 = vmatpush1.msra.mxu0 %v2441
    %2636 = vmatprep.subr.mxu0 0.0
    %2637 = vmatpush1.msra.mxu0 0.0
    %2638 = vmatprep.subr.mxu0 0.0
    %2639 = vmatpush1.msra.mxu0 0.0
    %2640 = vmatprep.subr.mxu0 0.0
    %2641 = vmatpush1.msra.mxu0 0.0
    %2642 = vmatprep.subr.mxu0 0.0
    %2643 = vmatpush1.msra.mxu0 0.0
    %2644 = vmatprep.subr.mxu0 0.0
    %2645 = vmatpush1.msra.mxu0 0.0
    %2646 = vmatprep.subr.mxu0 0.0
    %2647 = vmatpush1.msra.mxu0 0.0
    %2648 = vmatprep.subr.mxu0 0.0
    %2649 = vmatpush1.msra.mxu0 0.0
    %2650 = vmatprep.subr.mxu0 0.0
    %2651 = vmatpush1.msra.mxu0 0.0
    %2652 = vmatprep.subr.mxu0 0.0
    %2653 = vmatpush1.msra.mxu0 0.0
    %2654 = vmatprep.subr.mxu0 0.0
    %2655 = vmatpush1.msra.mxu0 0.0
    %2656 = vmatprep.subr.mxu0 0.0
    %2657 = vmatpush1.msra.mxu0 0.0
    %2658 = vmatprep.subr.mxu0 0.0
    %2659 = vmatpush1.msra.mxu0 0.0
    %2660 = vmatprep.subr.mxu0 0.0
    %2661 = vmatpush1.msra.mxu0 0.0
    %2662 = vmatprep.subr.mxu0 0.0
    %2663 = vmatpush1.msra.mxu0 0.0
    %2664 = vmatprep.subr.mxu0 0.0
    %2665 = vmatpush1.msra.mxu0 0.0
    %2666 = vmatprep.subr.mxu0 0.0
    %2667 = vmatpush1.msra.mxu0 0.0
    %2668 = vmatprep.mubr.f32.mxu0 0.0
    %2669 = vmatmul.mubr.f32.gmra.mrb[0].mxu0 %v2423
    %v2670 = vpop.f32.mrb[0].mxu0
    %v2671 = vadd.f32 %v2601, %v2670
    %v2672 = vpop.f32.mrb[0].mxu0
    %2673 = vdwg.mxu0
    %s2674 = scalar_lea.vmem %s7, 16
    %v2675 = vld [vmem:[%s2674] sm:$0xff]
    %v2677 = vsel %vm2352, %v2675, 0
    %2679 = vmatprep.subr.mxu0 0.0
    %2680 = vmatpush1.msra.mxu0 %v2347
    %2681 = vmatprep.subr.mxu0 0.0
    %2682 = vmatpush1.msra.mxu0 %v2348
    %2683 = vmatprep.subr.mxu0 0.0
    %2684 = vmatpush1.msra.mxu0 %v2349
    %2685 = vmatprep.subr.mxu0 0.0
    %2686 = vmatpush1.msra.mxu0 %v2350
    %2687 = vmatprep.subr.mxu0 0.0
    %2688 = vmatpush1.msra.mxu0 0.0
    %2689 = vmatprep.subr.mxu0 0.0
    %2690 = vmatpush1.msra.mxu0 0.0
    %2691 = vmatprep.subr.mxu0 0.0
    %2692 = vmatpush1.msra.mxu0 0.0
    %2693 = vmatprep.subr.mxu0 0.0
    %2694 = vmatpush1.msra.mxu0 0.0
    %2695 = vmatprep.subr.mxu0 0.0
    %2696 = vmatpush1.msra.mxu0 0.0
    %2697 = vmatprep.subr.mxu0 0.0
    %2698 = vmatpush1.msra.mxu0 0.0
    %2699 = vmatprep.subr.mxu0 0.0
    %2700 = vmatpush1.msra.mxu0 0.0
    %2701 = vmatprep.subr.mxu0 0.0
    %2702 = vmatpush1.msra.mxu0 0.0
    %2703 = vmatprep.subr.mxu0 0.0
    %2704 = vmatpush1.msra.mxu0 0.0
    %2705 = vmatprep.subr.mxu0 0.0
    %2706 = vmatpush1.msra.mxu0 0.0
    %2707 = vmatprep.subr.mxu0 0.0
    %2708 = vmatpush1.msra.mxu0 0.0
    %2709 = vmatprep.subr.mxu0 0.0
    %2710 = vmatpush1.msra.mxu0 0.0
    %2711 = vmatprep.subr.mxu0 0.0
    %2712 = vmatpush1.msra.mxu0 0.0
    %2713 = vmatprep.subr.mxu0 0.0
    %2714 = vmatpush1.msra.mxu0 0.0
    %2715 = vmatprep.subr.mxu0 0.0
    %2716 = vmatpush1.msra.mxu0 0.0
    %2717 = vmatprep.subr.mxu0 0.0
    %2718 = vmatpush1.msra.mxu0 0.0
    %2719 = vmatprep.subr.mxu0 0.0
    %2720 = vmatpush1.msra.mxu0 0.0
    %2721 = vmatprep.subr.mxu0 0.0
    %2722 = vmatpush1.msra.mxu0 0.0
    %2723 = vmatprep.subr.mxu0 0.0
    %2724 = vmatpush1.msra.mxu0 0.0
    %2725 = vmatprep.subr.mxu0 0.0
    %2726 = vmatpush1.msra.mxu0 0.0
    %2727 = vmatprep.subr.mxu0 0.0
    %2728 = vmatpush1.msra.mxu0 0.0
    %2729 = vmatprep.subr.mxu0 0.0
    %2730 = vmatpush1.msra.mxu0 0.0
    %2731 = vmatprep.subr.mxu0 0.0
    %2732 = vmatpush1.msra.mxu0 0.0
    %2733 = vmatprep.subr.mxu0 0.0
    %2734 = vmatpush1.msra.mxu0 0.0
    %2735 = vmatprep.subr.mxu0 0.0
    %2736 = vmatpush1.msra.mxu0 0.0
    %2737 = vmatprep.subr.mxu0 0.0
    %2738 = vmatpush1.msra.mxu0 0.0
    %2739 = vmatprep.subr.mxu0 0.0
    %2740 = vmatpush1.msra.mxu0 0.0
    %2741 = vmatprep.subr.mxu0 0.0
    %2742 = vmatpush1.msra.mxu0 0.0
    %2743 = vmatprep.mubr.f32.mxu0 0.0
    %2744 = vmatmul.mubr.f32.gmra.mrb[0].mxu0 %v2677
    %v2745 = vpop.f32.mrb[0].mxu0
    %v2746 = vadd.f32 0.0, %v2745
    %v2747 = vpop.f32.mrb[0].mxu0
    %2748 = vdwg.mxu0
    %s2749 = scalar_lea.vmem %s8, 256
    %v2750 = vld [vmem:[%s2749] sm:$0xff]
    %v2751 = vld [vmem:[%s2749 + $0x8] sm:$0xff]
    %v2752 = vld [vmem:[%s2749 + $0x10] sm:$0xff]
    %v2753 = vld [vmem:[%s2749 + $0x18] sm:$0xff]
    %v2754 = vld [vmem:[%s2749 + $0x20] sm:$0xff]
    %v2755 = vld [vmem:[%s2749 + $0x28] sm:$0xff]
    %v2756 = vld [vmem:[%s2749 + $0x30] sm:$0xff]
    %v2757 = vld [vmem:[%s2749 + $0x38] sm:$0xff]
    %v2758 = vld [vmem:[%s2749 + $0x40] sm:$0xff]
    %v2759 = vld [vmem:[%s2749 + $0x48] sm:$0xff]
    %v2760 = vld [vmem:[%s2749 + $0x50] sm:$0xff]
    %v2761 = vld [vmem:[%s2749 + $0x58] sm:$0xff]
    %v2762 = vld [vmem:[%s2749 + $0x60] sm:$0xff]
    %v2763 = vld [vmem:[%s2749 + $0x68] sm:$0xff]
    %v2764 = vld [vmem:[%s2749 + $0x70] sm:$0xff]
    %v2765 = vld [vmem:[%s2749 + $0x78] sm:$0xff]
    %2766 = vmatprep.subr.mxu0 0.0
    %2767 = vmatpush1.msra.mxu0 %v2750
    %2768 = vmatprep.subr.mxu0 0.0
    %2769 = vmatpush1.msra.mxu0 %v2751
    %2770 = vmatprep.subr.mxu0 0.0
    %2771 = vmatpush1.msra.mxu0 %v2752
    %2772 = vmatprep.subr.mxu0 0.0
    %2773 = vmatpush1.msra.mxu0 %v2753
    %2774 = vmatprep.subr.mxu0 0.0
    %2775 = vmatpush1.msra.mxu0 %v2754
    %2776 = vmatprep.subr.mxu0 0.0
    %2777 = vmatpush1.msra.mxu0 %v2755
    %2778 = vmatprep.subr.mxu0 0.0
    %2779 = vmatpush1.msra.mxu0 %v2756
    %2780 = vmatprep.subr.mxu0 0.0
    %2781 = vmatpush1.msra.mxu0 %v2757
    %2782 = vmatprep.subr.mxu0 0.0
    %2783 = vmatpush1.msra.mxu0 %v2758
    %2784 = vmatprep.subr.mxu0 0.0
    %2785 = vmatpush1.msra.mxu0 %v2759
    %2786 = vmatprep.subr.mxu0 0.0
    %2787 = vmatpush1.msra.mxu0 %v2760
    %2788 = vmatprep.subr.mxu0 0.0
    %2789 = vmatpush1.msra.mxu0 %v2761
    %2790 = vmatprep.subr.mxu0 0.0
    %2791 = vmatpush1.msra.mxu0 %v2762
    %2792 = vmatprep.subr.mxu0 0.0
    %2793 = vmatpush1.msra.mxu0 %v2763
    %2794 = vmatprep.subr.mxu0 0.0
    %2795 = vmatpush1.msra.mxu0 %v2764
    %2796 = vmatprep.subr.mxu0 0.0
    %2797 = vmatpush1.msra.mxu0 %v2765
    %2798 = vmatprep.subr.mxu0 0.0
    %2799 = vmatpush1.msra.mxu0 0.0
    %2800 = vmatprep.subr.mxu0 0.0
    %2801 = vmatpush1.msra.mxu0 0.0
    %2802 = vmatprep.subr.mxu0 0.0
    %2803 = vmatpush1.msra.mxu0 0.0
    %2804 = vmatprep.subr.mxu0 0.0
    %2805 = vmatpush1.msra.mxu0 0.0
    %2806 = vmatprep.subr.mxu0 0.0
    %2807 = vmatpush1.msra.mxu0 0.0
    %2808 = vmatprep.subr.mxu0 0.0
    %2809 = vmatpush1.msra.mxu0 0.0
    %2810 = vmatprep.subr.mxu0 0.0
    %2811 = vmatpush1.msra.mxu0 0.0
    %2812 = vmatprep.subr.mxu0 0.0
    %2813 = vmatpush1.msra.mxu0 0.0
    %2814 = vmatprep.subr.mxu0 0.0
    %2815 = vmatpush1.msra.mxu0 0.0
    %2816 = vmatprep.subr.mxu0 0.0
    %2817 = vmatpush1.msra.mxu0 0.0
    %2818 = vmatprep.subr.mxu0 0.0
    %2819 = vmatpush1.msra.mxu0 0.0
    %2820 = vmatprep.subr.mxu0 0.0
    %2821 = vmatpush1.msra.mxu0 0.0
    %2822 = vmatprep.subr.mxu0 0.0
    %2823 = vmatpush1.msra.mxu0 0.0
    %2824 = vmatprep.subr.mxu0 0.0
    %2825 = vmatpush1.msra.mxu0 0.0
    %2826 = vmatprep.subr.mxu0 0.0
    %2827 = vmatpush1.msra.mxu0 0.0
    %2828 = vmatprep.subr.mxu0 0.0
    %2829 = vmatpush1.msra.mxu0 0.0
    %2830 = vmatprep.mubr.f32.mxu0 0.0
    %2831 = vmatmul.mubr.f32.gmra.mrb[0].mxu0 %v2746
    %v2832 = vpop.f32.mrb[0].mxu0
    %v2833 = vadd.f32 0.0, %v2832
    %v2834 = vpop.f32.mrb[0].mxu0
    %2835 = vdwg.mxu0
    %v2836 = vadd.f32 %v2671, %v2833
    %s2837 = scalar_lea.vmem %s7, 24
    %v2838 = vld [vmem:[%s2837] sm:$0xff]
    %v2840 = vsel %vm2352, %v2838, 0
    %2842 = vmatprep.subr.mxu0 0.0
    %2843 = vmatpush1.msra.mxu0 %v2347
    %2844 = vmatprep.subr.mxu0 0.0
    %2845 = vmatpush1.msra.mxu0 %v2348
    %2846 = vmatprep.subr.mxu0 0.0
    %2847 = vmatpush1.msra.mxu0 %v2349
    %2848 = vmatprep.subr.mxu0 0.0
    %2849 = vmatpush1.msra.mxu0 %v2350
    %2850 = vmatprep.subr.mxu0 0.0
    %2851 = vmatpush1.msra.mxu0 0.0
    %2852 = vmatprep.subr.mxu0 0.0
    %2853 = vmatpush1.msra.mxu0 0.0
    %2854 = vmatprep.subr.mxu0 0.0
    %2855 = vmatpush1.msra.mxu0 0.0
    %2856 = vmatprep.subr.mxu0 0.0
    %2857 = vmatpush1.msra.mxu0 0.0
    %2858 = vmatprep.subr.mxu0 0.0
    %2859 = vmatpush1.msra.mxu0 0.0
    %2860 = vmatprep.subr.mxu0 0.0
    %2861 = vmatpush1.msra.mxu0 0.0
    %2862 = vmatprep.subr.mxu0 0.0
    %2863 = vmatpush1.msra.mxu0 0.0
    %2864 = vmatprep.subr.mxu0 0.0
    %2865 = vmatpush1.msra.mxu0 0.0
    %2866 = vmatprep.subr.mxu0 0.0
    %2867 = vmatpush1.msra.mxu0 0.0
    %2868 = vmatprep.subr.mxu0 0.0
    %2869 = vmatpush1.msra.mxu0 0.0
    %2870 = vmatprep.subr.mxu0 0.0
    %2871 = vmatpush1.msra.mxu0 0.0
    %2872 = vmatprep.subr.mxu0 0.0
    %2873 = vmatpush1.msra.mxu0 0.0
    %2874 = vmatprep.subr.mxu0 0.0
    %2875 = vmatpush1.msra.mxu0 0.0
    %2876 = vmatprep.subr.mxu0 0.0
    %2877 = vmatpush1.msra.mxu0 0.0
    %2878 = vmatprep.subr.mxu0 0.0
    %2879 = vmatpush1.msra.mxu0 0.0
    %2880 = vmatprep.subr.mxu0 0.0
    %2881 = vmatpush1.msra.mxu0 0.0
    %2882 = vmatprep.subr.mxu0 0.0
    %2883 = vmatpush1.msra.mxu0 0.0
    %2884 = vmatprep.subr.mxu0 0.0
    %2885 = vmatpush1.msra.mxu0 0.0
    %2886 = vmatprep.subr.mxu0 0.0
    %2887 = vmatpush1.msra.mxu0 0.0
    %2888 = vmatprep.subr.mxu0 0.0
    %2889 = vmatpush1.msra.mxu0 0.0
    %2890 = vmatprep.subr.mxu0 0.0
    %2891 = vmatpush1.msra.mxu0 0.0
    %2892 = vmatprep.subr.mxu0 0.0
    %2893 = vmatpush1.msra.mxu0 0.0
    %2894 = vmatprep.subr.mxu0 0.0
    %2895 = vmatpush1.msra.mxu0 0.0
    %2896 = vmatprep.subr.mxu0 0.0
    %2897 = vmatpush1.msra.mxu0 0.0
    %2898 = vmatprep.subr.mxu0 0.0
    %2899 = vmatpush1.msra.mxu0 0.0
    %2900 = vmatprep.subr.mxu0 0.0
    %2901 = vmatpush1.msra.mxu0 0.0
    %2902 = vmatprep.subr.mxu0 0.0
    %2903 = vmatpush1.msra.mxu0 0.0
    %2904 = vmatprep.subr.mxu0 0.0
    %2905 = vmatpush1.msra.mxu0 0.0
    %2906 = vmatprep.mubr.f32.mxu0 0.0
    %2907 = vmatmul.mubr.f32.gmra.mrb[0].mxu0 %v2840
    %v2908 = vpop.f32.mrb[0].mxu0
    %v2909 = vadd.f32 0.0, %v2908
    %v2910 = vpop.f32.mrb[0].mxu0
    %2911 = vdwg.mxu0
    %s2912 = scalar_lea.vmem %s8, 384
    %v2913 = vld [vmem:[%s2912] sm:$0xff]
    %v2914 = vld [vmem:[%s2912 + $0x8] sm:$0xff]
    %v2915 = vld [vmem:[%s2912 + $0x10] sm:$0xff]
    %v2916 = vld [vmem:[%s2912 + $0x18] sm:$0xff]
    %v2917 = vld [vmem:[%s2912 + $0x20] sm:$0xff]
    %v2918 = vld [vmem:[%s2912 + $0x28] sm:$0xff]
    %v2919 = vld [vmem:[%s2912 + $0x30] sm:$0xff]
    %v2920 = vld [vmem:[%s2912 + $0x38] sm:$0xff]
    %v2921 = vld [vmem:[%s2912 + $0x40] sm:$0xff]
    %v2922 = vld [vmem:[%s2912 + $0x48] sm:$0xff]
    %v2923 = vld [vmem:[%s2912 + $0x50] sm:$0xff]
    %v2924 = vld [vmem:[%s2912 + $0x58] sm:$0xff]
    %v2925 = vld [vmem:[%s2912 + $0x60] sm:$0xff]
    %v2926 = vld [vmem:[%s2912 + $0x68] sm:$0xff]
    %v2927 = vld [vmem:[%s2912 + $0x70] sm:$0xff]
    %v2928 = vld [vmem:[%s2912 + $0x78] sm:$0xff]
    %2929 = vmatprep.subr.mxu0 0.0
    %2930 = vmatpush1.msra.mxu0 %v2913
    %2931 = vmatprep.subr.mxu0 0.0
    %2932 = vmatpush1.msra.mxu0 %v2914
    %2933 = vmatprep.subr.mxu0 0.0
    %2934 = vmatpush1.msra.mxu0 %v2915
    %2935 = vmatprep.subr.mxu0 0.0
    %2936 = vmatpush1.msra.mxu0 %v2916
    %2937 = vmatprep.subr.mxu0 0.0
    %2938 = vmatpush1.msra.mxu0 %v2917
    %2939 = vmatprep.subr.mxu0 0.0
    %2940 = vmatpush1.msra.mxu0 %v2918
    %2941 = vmatprep.subr.mxu0 0.0
    %2942 = vmatpush1.msra.mxu0 %v2919
    %2943 = vmatprep.subr.mxu0 0.0
    %2944 = vmatpush1.msra.mxu0 %v2920
    %2945 = vmatprep.subr.mxu0 0.0
    %2946 = vmatpush1.msra.mxu0 %v2921
    %2947 = vmatprep.subr.mxu0 0.0
    %2948 = vmatpush1.msra.mxu0 %v2922
    %2949 = vmatprep.subr.mxu0 0.0
    %2950 = vmatpush1.msra.mxu0 %v2923
    %2951 = vmatprep.subr.mxu0 0.0
    %2952 = vmatpush1.msra.mxu0 %v2924
    %2953 = vmatprep.subr.mxu0 0.0
    %2954 = vmatpush1.msra.mxu0 %v2925
    %2955 = vmatprep.subr.mxu0 0.0
    %2956 = vmatpush1.msra.mxu0 %v2926
    %2957 = vmatprep.subr.mxu0 0.0
    %2958 = vmatpush1.msra.mxu0 %v2927
    %2959 = vmatprep.subr.mxu0 0.0
    %2960 = vmatpush1.msra.mxu0 %v2928
    %2961 = vmatprep.subr.mxu0 0.0
    %2962 = vmatpush1.msra.mxu0 0.0
    %2963 = vmatprep.subr.mxu0 0.0
    %2964 = vmatpush1.msra.mxu0 0.0
    %2965 = vmatprep.subr.mxu0 0.0
    %2966 = vmatpush1.msra.mxu0 0.0
    %2967 = vmatprep.subr.mxu0 0.0
    %2968 = vmatpush1.msra.mxu0 0.0
    %2969 = vmatprep.subr.mxu0 0.0
    %2970 = vmatpush1.msra.mxu0 0.0
    %2971 = vmatprep.subr.mxu0 0.0
    %2972 = vmatpush1.msra.mxu0 0.0
    %2973 = vmatprep.subr.mxu0 0.0
    %2974 = vmatpush1.msra.mxu0 0.0
    %2975 = vmatprep.subr.mxu0 0.0
    %2976 = vmatpush1.msra.mxu0 0.0
    %2977 = vmatprep.subr.mxu0 0.0
    %2978 = vmatpush1.msra.mxu0 0.0
    %2979 = vmatprep.subr.mxu0 0.0
    %2980 = vmatpush1.msra.mxu0 0.0
    %2981 = vmatprep.subr.mxu0 0.0
    %2982 = vmatpush1.msra.mxu0 0.0
    %2983 = vmatprep.subr.mxu0 0.0
    %2984 = vmatpush1.msra.mxu0 0.0
    %2985 = vmatprep.subr.mxu0 0.0
    %2986 = vmatpush1.msra.mxu0 0.0
    %2987 = vmatprep.subr.mxu0 0.0
    %2988 = vmatpush1.msra.mxu0 0.0
    %2989 = vmatprep.subr.mxu0 0.0
    %2990 = vmatpush1.msra.mxu0 0.0
    %2991 = vmatprep.subr.mxu0 0.0
    %2992 = vmatpush1.msra.mxu0 0.0
    %2993 = vmatprep.mubr.f32.mxu0 0.0
    %2994 = vmatmul.mubr.f32.gmra.mrb[0].mxu0 %v2909
    %v2995 = vpop.f32.mrb[0].mxu0
    %v2996 = vadd.f32 0.0, %v2995
    %v2997 = vpop.f32.mrb[0].mxu0
    %2998 = vdwg.mxu0
    %v2999 = vadd.f32 %v2836, %v2996
    %s3000 = scalar_lea.vmem %s7, 32
    %v3001 = vld [vmem:[%s3000] sm:$0xff]
    %v3003 = vsel %vm2352, %v3001, 0
    %3005 = vmatprep.subr.mxu0 0.0
    %3006 = vmatpush1.msra.mxu0 %v2347
    %3007 = vmatprep.subr.mxu0 0.0
    %3008 = vmatpush1.msra.mxu0 %v2348
    %3009 = vmatprep.subr.mxu0 0.0
    %3010 = vmatpush1.msra.mxu0 %v2349
    %3011 = vmatprep.subr.mxu0 0.0
    %3012 = vmatpush1.msra.mxu0 %v2350
    %3013 = vmatprep.subr.mxu0 0.0
    %3014 = vmatpush1.msra.mxu0 0.0
    %3015 = vmatprep.subr.mxu0 0.0
    %3016 = vmatpush1.msra.mxu0 0.0
    %3017 = vmatprep.subr.mxu0 0.0
    %3018 = vmatpush1.msra.mxu0 0.0
    %3019 = vmatprep.subr.mxu0 0.0
    %3020 = vmatpush1.msra.mxu0 0.0
    %3021 = vmatprep.subr.mxu0 0.0
    %3022 = vmatpush1.msra.mxu0 0.0
    %3023 = vmatprep.subr.mxu0 0.0
    %3024 = vmatpush1.msra.mxu0 0.0
    %3025 = vmatprep.subr.mxu0 0.0
    %3026 = vmatpush1.msra.mxu0 0.0
    %3027 = vmatprep.subr.mxu0 0.0
    %3028 = vmatpush1.msra.mxu0 0.0
    %3029 = vmatprep.subr.mxu0 0.0
    %3030 = vmatpush1.msra.mxu0 0.0
    %3031 = vmatprep.subr.mxu0 0.0
    %3032 = vmatpush1.msra.mxu0 0.0
    %3033 = vmatprep.subr.mxu0 0.0
    %3034 = vmatpush1.msra.mxu0 0.0
    %3035 = vmatprep.subr.mxu0 0.0
    %3036 = vmatpush1.msra.mxu0 0.0
    %3037 = vmatprep.subr.mxu0 0.0
    %3038 = vmatpush1.msra.mxu0 0.0
    %3039 = vmatprep.subr.mxu0 0.0
    %3040 = vmatpush1.msra.mxu0 0.0
    %3041 = vmatprep.subr.mxu0 0.0
    %3042 = vmatpush1.msra.mxu0 0.0
    %3043 = vmatprep.subr.mxu0 0.0
    %3044 = vmatpush1.msra.mxu0 0.0
    %3045 = vmatprep.subr.mxu0 0.0
    %3046 = vmatpush1.msra.mxu0 0.0
    %3047 = vmatprep.subr.mxu0 0.0
    %3048 = vmatpush1.msra.mxu0 0.0
    %3049 = vmatprep.subr.mxu0 0.0
    %3050 = vmatpush1.msra.mxu0 0.0
    %3051 = vmatprep.subr.mxu0 0.0
    %3052 = vmatpush1.msra.mxu0 0.0
    %3053 = vmatprep.subr.mxu0 0.0
    %3054 = vmatpush1.msra.mxu0 0.0
    %3055 = vmatprep.subr.mxu0 0.0
    %3056 = vmatpush1.msra.mxu0 0.0
    %3057 = vmatprep.subr.mxu0 0.0
    %3058 = vmatpush1.msra.mxu0 0.0
    %3059 = vmatprep.subr.mxu0 0.0
    %3060 = vmatpush1.msra.mxu0 0.0
    %3061 = vmatprep.subr.mxu0 0.0
    %3062 = vmatpush1.msra.mxu0 0.0
    %3063 = vmatprep.subr.mxu0 0.0
    %3064 = vmatpush1.msra.mxu0 0.0
    %3065 = vmatprep.subr.mxu0 0.0
    %3066 = vmatpush1.msra.mxu0 0.0
    %3067 = vmatprep.subr.mxu0 0.0
    %3068 = vmatpush1.msra.mxu0 0.0
    %3069 = vmatprep.mubr.f32.mxu0 0.0
    %3070 = vmatmul.mubr.f32.gmra.mrb[0].mxu0 %v3003
    %v3071 = vpop.f32.mrb[0].mxu0
    %v3072 = vadd.f32 0.0, %v3071
    %v3073 = vpop.f32.mrb[0].mxu0
    %3074 = vdwg.mxu0
    %s3075 = scalar_lea.vmem %s8, 512
    %v3076 = vld [vmem:[%s3075] sm:$0xff]
    %v3077 = vld [vmem:[%s3075 + $0x8] sm:$0xff]
    %v3078 = vld [vmem:[%s3075 + $0x10] sm:$0xff]
    %v3079 = vld [vmem:[%s3075 + $0x18] sm:$0xff]
    %v3080 = vld [vmem:[%s3075 + $0x20] sm:$0xff]
    %v3081 = vld [vmem:[%s3075 + $0x28] sm:$0xff]
    %v3082 = vld [vmem:[%s3075 + $0x30] sm:$0xff]
    %v3083 = vld [vmem:[%s3075 + $0x38] sm:$0xff]
    %v3084 = vld [vmem:[%s3075 + $0x40] sm:$0xff]
    %v3085 = vld [vmem:[%s3075 + $0x48] sm:$0xff]
    %v3086 = vld [vmem:[%s3075 + $0x50] sm:$0xff]
    %v3087 = vld [vmem:[%s3075 + $0x58] sm:$0xff]
    %v3088 = vld [vmem:[%s3075 + $0x60] sm:$0xff]
    %v3089 = vld [vmem:[%s3075 + $0x68] sm:$0xff]
    %v3090 = vld [vmem:[%s3075 + $0x70] sm:$0xff]
    %v3091 = vld [vmem:[%s3075 + $0x78] sm:$0xff]
    %3092 = vmatprep.subr.mxu0 0.0
    %3093 = vmatpush1.msra.mxu0 %v3076
    %3094 = vmatprep.subr.mxu0 0.0
    %3095 = vmatpush1.msra.mxu0 %v3077
    %3096 = vmatprep.subr.mxu0 0.0
    %3097 = vmatpush1.msra.mxu0 %v3078
    %3098 = vmatprep.subr.mxu0 0.0
    %3099 = vmatpush1.msra.mxu0 %v3079
    %3100 = vmatprep.subr.mxu0 0.0
    %3101 = vmatpush1.msra.mxu0 %v3080
    %3102 = vmatprep.subr.mxu0 0.0
    %3103 = vmatpush1.msra.mxu0 %v3081
    %3104 = vmatprep.subr.mxu0 0.0
    %3105 = vmatpush1.msra.mxu0 %v3082
    %3106 = vmatprep.subr.mxu0 0.0
    %3107 = vmatpush1.msra.mxu0 %v3083
    %3108 = vmatprep.subr.mxu0 0.0
    %3109 = vmatpush1.msra.mxu0 %v3084
    %3110 = vmatprep.subr.mxu0 0.0
    %3111 = vmatpush1.msra.mxu0 %v3085
    %3112 = vmatprep.subr.mxu0 0.0
    %3113 = vmatpush1.msra.mxu0 %v3086
    %3114 = vmatprep.subr.mxu0 0.0
    %3115 = vmatpush1.msra.mxu0 %v3087
    %3116 = vmatprep.subr.mxu0 0.0
    %3117 = vmatpush1.msra.mxu0 %v3088
    %3118 = vmatprep.subr.mxu0 0.0
    %3119 = vmatpush1.msra.mxu0 %v3089
    %3120 = vmatprep.subr.mxu0 0.0
    %3121 = vmatpush1.msra.mxu0 %v3090
    %3122 = vmatprep.subr.mxu0 0.0
    %3123 = vmatpush1.msra.mxu0 %v3091
    %3124 = vmatprep.subr.mxu0 0.0
    %3125 = vmatpush1.msra.mxu0 0.0
    %3126 = vmatprep.subr.mxu0 0.0
    %3127 = vmatpush1.msra.mxu0 0.0
    %3128 = vmatprep.subr.mxu0 0.0
    %3129 = vmatpush1.msra.mxu0 0.0
    %3130 = vmatprep.subr.mxu0 0.0
    %3131 = vmatpush1.msra.mxu0 0.0
    %3132 = vmatprep.subr.mxu0 0.0
    %3133 = vmatpush1.msra.mxu0 0.0
    %3134 = vmatprep.subr.mxu0 0.0
    %3135 = vmatpush1.msra.mxu0 0.0
    %3136 = vmatprep.subr.mxu0 0.0
    %3137 = vmatpush1.msra.mxu0 0.0
    %3138 = vmatprep.subr.mxu0 0.0
    %3139 = vmatpush1.msra.mxu0 0.0
    %3140 = vmatprep.subr.mxu0 0.0
    %3141 = vmatpush1.msra.mxu0 0.0
    %3142 = vmatprep.subr.mxu0 0.0
    %3143 = vmatpush1.msra.mxu0 0.0
    %3144 = vmatprep.subr.mxu0 0.0
    %3145 = vmatpush1.msra.mxu0 0.0
    %3146 = vmatprep.subr.mxu0 0.0
    %3147 = vmatpush1.msra.mxu0 0.0
    %3148 = vmatprep.subr.mxu0 0.0
    %3149 = vmatpush1.msra.mxu0 0.0
    %3150 = vmatprep.subr.mxu0 0.0
    %3151 = vmatpush1.msra.mxu0 0.0
    %3152 = vmatprep.subr.mxu0 0.0
    %3153 = vmatpush1.msra.mxu0 0.0
    %3154 = vmatprep.subr.mxu0 0.0
    %3155 = vmatpush1.msra.mxu0 0.0
    %3156 = vmatprep.mubr.f32.mxu0 0.0
    %3157 = vmatmul.mubr.f32.gmra.mrb[0].mxu0 %v3072
    %v3158 = vpop.f32.mrb[0].mxu0
    %v3159 = vadd.f32 0.0, %v3158
    %v3160 = vpop.f32.mrb[0].mxu0
    %3161 = vdwg.mxu0
    %v3162 = vadd.f32 %v2999, %v3159
    %s3163 = scalar_lea.vmem %s7, 40
    %v3164 = vld [vmem:[%s3163] sm:$0xff]
    %v3166 = vsel %vm2352, %v3164, 0
    %3168 = vmatprep.subr.mxu0 0.0
    %3169 = vmatpush1.msra.mxu0 %v2347
    %3170 = vmatprep.subr.mxu0 0.0
    %3171 = vmatpush1.msra.mxu0 %v2348
    %3172 = vmatprep.subr.mxu0 0.0
    %3173 = vmatpush1.msra.mxu0 %v2349
    %3174 = vmatprep.subr.mxu0 0.0
    %3175 = vmatpush1.msra.mxu0 %v2350
    %3176 = vmatprep.subr.mxu0 0.0
    %3177 = vmatpush1.msra.mxu0 0.0
    %3178 = vmatprep.subr.mxu0 0.0
    %3179 = vmatpush1.msra.mxu0 0.0
    %3180 = vmatprep.subr.mxu0 0.0
    %3181 = vmatpush1.msra.mxu0 0.0
    %3182 = vmatprep.subr.mxu0 0.0
    %3183 = vmatpush1.msra.mxu0 0.0
    %3184 = vmatprep.subr.mxu0 0.0
    %3185 = vmatpush1.msra.mxu0 0.0
    %3186 = vmatprep.subr.mxu0 0.0
    %3187 = vmatpush1.msra.mxu0 0.0
    %3188 = vmatprep.subr.mxu0 0.0
    %3189 = vmatpush1.msra.mxu0 0.0
    %3190 = vmatprep.subr.mxu0 0.0
    %3191 = vmatpush1.msra.mxu0 0.0
    %3192 = vmatprep.subr.mxu0 0.0
    %3193 = vmatpush1.msra.mxu0 0.0
    %3194 = vmatprep.subr.mxu0 0.0
    %3195 = vmatpush1.msra.mxu0 0.0
    %3196 = vmatprep.subr.mxu0 0.0
    %3197 = vmatpush1.msra.mxu0 0.0
    %3198 = vmatprep.subr.mxu0 0.0
    %3199 = vmatpush1.msra.mxu0 0.0
    %3200 = vmatprep.subr.mxu0 0.0
    %3201 = vmatpush1.msra.mxu0 0.0
    %3202 = vmatprep.subr.mxu0 0.0
    %3203 = vmatpush1.msra.mxu0 0.0
    %3204 = vmatprep.subr.mxu0 0.0
    %3205 = vmatpush1.msra.mxu0 0.0
    %3206 = vmatprep.subr.mxu0 0.0
    %3207 = vmatpush1.msra.mxu0 0.0
    %3208 = vmatprep.subr.mxu0 0.0
    %3209 = vmatpush1.msra.mxu0 0.0
    %3210 = vmatprep.subr.mxu0 0.0
    %3211 = vmatpush1.msra.mxu0 0.0
    %3212 = vmatprep.subr.mxu0 0.0
    %3213 = vmatpush1.msra.mxu0 0.0
    %3214 = vmatprep.subr.mxu0 0.0
    %3215 = vmatpush1.msra.mxu0 0.0
    %3216 = vmatprep.subr.mxu0 0.0
    %3217 = vmatpush1.msra.mxu0 0.0
    %3218 = vmatprep.subr.mxu0 0.0
    %3219 = vmatpush1.msra.mxu0 0.0
    %3220 = vmatprep.subr.mxu0 0.0
    %3221 = vmatpush1.msra.mxu0 0.0
    %3222 = vmatprep.subr.mxu0 0.0
    %3223 = vmatpush1.msra.mxu0 0.0
    %3224 = vmatprep.subr.mxu0 0.0
    %3225 = vmatpush1.msra.mxu0 0.0
    %3226 = vmatprep.subr.mxu0 0.0
    %3227 = vmatpush1.msra.mxu0 0.0
    %3228 = vmatprep.subr.mxu0 0.0
    %3229 = vmatpush1.msra.mxu0 0.0
    %3230 = vmatprep.subr.mxu0 0.0
    %3231 = vmatpush1.msra.mxu0 0.0
    %3232 = vmatprep.mubr.f32.mxu0 0.0
    %3233 = vmatmul.mubr.f32.gmra.mrb[0].mxu0 %v3166
    %v3234 = vpop.f32.mrb[0].mxu0
    %v3235 = vadd.f32 0.0, %v3234
    %v3236 = vpop.f32.mrb[0].mxu0
    %3237 = vdwg.mxu0
    %s3238 = scalar_lea.vmem %s8, 640
    %v3239 = vld [vmem:[%s3238] sm:$0xff]
    %v3240 = vld [vmem:[%s3238 + $0x8] sm:$0xff]
    %v3241 = vld [vmem:[%s3238 + $0x10] sm:$0xff]
    %v3242 = vld [vmem:[%s3238 + $0x18] sm:$0xff]
    %v3243 = vld [vmem:[%s3238 + $0x20] sm:$0xff]
    %v3244 = vld [vmem:[%s3238 + $0x28] sm:$0xff]
    %v3245 = vld [vmem:[%s3238 + $0x30] sm:$0xff]
    %v3246 = vld [vmem:[%s3238 + $0x38] sm:$0xff]
    %v3247 = vld [vmem:[%s3238 + $0x40] sm:$0xff]
    %v3248 = vld [vmem:[%s3238 + $0x48] sm:$0xff]
    %v3249 = vld [vmem:[%s3238 + $0x50] sm:$0xff]
    %v3250 = vld [vmem:[%s3238 + $0x58] sm:$0xff]
    %v3251 = vld [vmem:[%s3238 + $0x60] sm:$0xff]
    %v3252 = vld [vmem:[%s3238 + $0x68] sm:$0xff]
    %v3253 = vld [vmem:[%s3238 + $0x70] sm:$0xff]
    %v3254 = vld [vmem:[%s3238 + $0x78] sm:$0xff]
    %3255 = vmatprep.subr.mxu0 0.0
    %3256 = vmatpush1.msra.mxu0 %v3239
    %3257 = vmatprep.subr.mxu0 0.0
    %3258 = vmatpush1.msra.mxu0 %v3240
    %3259 = vmatprep.subr.mxu0 0.0
    %3260 = vmatpush1.msra.mxu0 %v3241
    %3261 = vmatprep.subr.mxu0 0.0
    %3262 = vmatpush1.msra.mxu0 %v3242
    %3263 = vmatprep.subr.mxu0 0.0
    %3264 = vmatpush1.msra.mxu0 %v3243
    %3265 = vmatprep.subr.mxu0 0.0
    %3266 = vmatpush1.msra.mxu0 %v3244
    %3267 = vmatprep.subr.mxu0 0.0
    %3268 = vmatpush1.msra.mxu0 %v3245
    %3269 = vmatprep.subr.mxu0 0.0
    %3270 = vmatpush1.msra.mxu0 %v3246
    %3271 = vmatprep.subr.mxu0 0.0
    %3272 = vmatpush1.msra.mxu0 %v3247
    %3273 = vmatprep.subr.mxu0 0.0
    %3274 = vmatpush1.msra.mxu0 %v3248
    %3275 = vmatprep.subr.mxu0 0.0
    %3276 = vmatpush1.msra.mxu0 %v3249
    %3277 = vmatprep.subr.mxu0 0.0
    %3278 = vmatpush1.msra.mxu0 %v3250
    %3279 = vmatprep.subr.mxu0 0.0
    %3280 = vmatpush1.msra.mxu0 %v3251
    %3281 = vmatprep.subr.mxu0 0.0
    %3282 = vmatpush1.msra.mxu0 %v3252
    %3283 = vmatprep.subr.mxu0 0.0
    %3284 = vmatpush1.msra.mxu0 %v3253
    %3285 = vmatprep.subr.mxu0 0.0
    %3286 = vmatpush1.msra.mxu0 %v3254
    %3287 = vmatprep.subr.mxu0 0.0
    %3288 = vmatpush1.msra.mxu0 0.0
    %3289 = vmatprep.subr.mxu0 0.0
    %3290 = vmatpush1.msra.mxu0 0.0
    %3291 = vmatprep.subr.mxu0 0.0
    %3292 = vmatpush1.msra.mxu0 0.0
    %3293 = vmatprep.subr.mxu0 0.0
    %3294 = vmatpush1.msra.mxu0 0.0
    %3295 = vmatprep.subr.mxu0 0.0
    %3296 = vmatpush1.msra.mxu0 0.0
    %3297 = vmatprep.subr.mxu0 0.0
    %3298 = vmatpush1.msra.mxu0 0.0
    %3299 = vmatprep.subr.mxu0 0.0
    %3300 = vmatpush1.msra.mxu0 0.0
    %3301 = vmatprep.subr.mxu0 0.0
    %3302 = vmatpush1.msra.mxu0 0.0
    %3303 = vmatprep.subr.mxu0 0.0
    %3304 = vmatpush1.msra.mxu0 0.0
    %3305 = vmatprep.subr.mxu0 0.0
    %3306 = vmatpush1.msra.mxu0 0.0
    %3307 = vmatprep.subr.mxu0 0.0
    %3308 = vmatpush1.msra.mxu0 0.0
    %3309 = vmatprep.subr.mxu0 0.0
    %3310 = vmatpush1.msra.mxu0 0.0
    %3311 = vmatprep.subr.mxu0 0.0
    %3312 = vmatpush1.msra.mxu0 0.0
    %3313 = vmatprep.subr.mxu0 0.0
    %3314 = vmatpush1.msra.mxu0 0.0
    %3315 = vmatprep.subr.mxu0 0.0
    %3316 = vmatpush1.msra.mxu0 0.0
    %3317 = vmatprep.subr.mxu0 0.0
    %3318 = vmatpush1.msra.mxu0 0.0
    %3319 = vmatprep.mubr.f32.mxu0 0.0
    %3320 = vmatmul.mubr.f32.gmra.mrb[0].mxu0 %v3235
    %v3321 = vpop.f32.mrb[0].mxu0
    %v3322 = vadd.f32 0.0, %v3321
    %v3323 = vpop.f32.mrb[0].mxu0
    %3324 = vdwg.mxu0
    %v3325 = vadd.f32 %v3162, %v3322
    %s3326 = scalar_lea.vmem %s7, 48
    %v3327 = vld [vmem:[%s3326] sm:$0xff]
    %v3329 = vsel %vm2352, %v3327, 0
    %3331 = vmatprep.subr.mxu0 0.0
    %3332 = vmatpush1.msra.mxu0 %v2347
    %3333 = vmatprep.subr.mxu0 0.0
    %3334 = vmatpush1.msra.mxu0 %v2348
    %3335 = vmatprep.subr.mxu0 0.0
    %3336 = vmatpush1.msra.mxu0 %v2349
    %3337 = vmatprep.subr.mxu0 0.0
    %3338 = vmatpush1.msra.mxu0 %v2350
    %3339 = vmatprep.subr.mxu0 0.0
    %3340 = vmatpush1.msra.mxu0 0.0
    %3341 = vmatprep.subr.mxu0 0.0
    %3342 = vmatpush1.msra.mxu0 0.0
    %3343 = vmatprep.subr.mxu0 0.0
    %3344 = vmatpush1.msra.mxu0 0.0
    %3345 = vmatprep.subr.mxu0 0.0
    %3346 = vmatpush1.msra.mxu0 0.0
    %3347 = vmatprep.subr.mxu0 0.0
    %3348 = vmatpush1.msra.mxu0 0.0
    %3349 = vmatprep.subr.mxu0 0.0
    %3350 = vmatpush1.msra.mxu0 0.0
    %3351 = vmatprep.subr.mxu0 0.0
    %3352 = vmatpush1.msra.mxu0 0.0
    %3353 = vmatprep.subr.mxu0 0.0
    %3354 = vmatpush1.msra.mxu0 0.0
    %3355 = vmatprep.subr.mxu0 0.0
    %3356 = vmatpush1.msra.mxu0 0.0
    %3357 = vmatprep.subr.mxu0 0.0
    %3358 = vmatpush1.msra.mxu0 0.0
    %3359 = vmatprep.subr.mxu0 0.0
    %3360 = vmatpush1.msra.mxu0 0.0
    %3361 = vmatprep.subr.mxu0 0.0
    %3362 = vmatpush1.msra.mxu0 0.0
    %3363 = vmatprep.subr.mxu0 0.0
    %3364 = vmatpush1.msra.mxu0 0.0
    %3365 = vmatprep.subr.mxu0 0.0
    %3366 = vmatpush1.msra.mxu0 0.0
    %3367 = vmatprep.subr.mxu0 0.0
    %3368 = vmatpush1.msra.mxu0 0.0
    %3369 = vmatprep.subr.mxu0 0.0
    %3370 = vmatpush1.msra.mxu0 0.0
    %3371 = vmatprep.subr.mxu0 0.0
    %3372 = vmatpush1.msra.mxu0 0.0
    %3373 = vmatprep.subr.mxu0 0.0
    %3374 = vmatpush1.msra.mxu0 0.0
    %3375 = vmatprep.subr.mxu0 0.0
    %3376 = vmatpush1.msra.mxu0 0.0
    %3377 = vmatprep.subr.mxu0 0.0
    %3378 = vmatpush1.msra.mxu0 0.0
    %3379 = vmatprep.subr.mxu0 0.0
    %3380 = vmatpush1.msra.mxu0 0.0
    %3381 = vmatprep.subr.mxu0 0.0
    %3382 = vmatpush1.msra.mxu0 0.0
    %3383 = vmatprep.subr.mxu0 0.0
    %3384 = vmatpush1.msra.mxu0 0.0
    %3385 = vmatprep.subr.mxu0 0.0
    %3386 = vmatpush1.msra.mxu0 0.0
    %3387 = vmatprep.subr.mxu0 0.0
    %3388 = vmatpush1.msra.mxu0 0.0
    %3389 = vmatprep.subr.mxu0 0.0
    %3390 = vmatpush1.msra.mxu0 0.0
    %3391 = vmatprep.subr.mxu0 0.0
    %3392 = vmatpush1.msra.mxu0 0.0
    %3393 = vmatprep.subr.mxu0 0.0
    %3394 = vmatpush1.msra.mxu0 0.0
    %3395 = vmatprep.mubr.f32.mxu0 0.0
    %3396 = vmatmul.mubr.f32.gmra.mrb[0].mxu0 %v3329
    %v3397 = vpop.f32.mrb[0].mxu0
    %v3398 = vadd.f32 0.0, %v3397
    %v3399 = vpop.f32.mrb[0].mxu0
    %3400 = vdwg.mxu0
    %s3401 = scalar_lea.vmem %s8, 768
    %v3402 = vld [vmem:[%s3401] sm:$0xff]
    %v3403 = vld [vmem:[%s3401 + $0x8] sm:$0xff]
    %v3404 = vld [vmem:[%s3401 + $0x10] sm:$0xff]
    %v3405 = vld [vmem:[%s3401 + $0x18] sm:$0xff]
    %v3406 = vld [vmem:[%s3401 + $0x20] sm:$0xff]
    %v3407 = vld [vmem:[%s3401 + $0x28] sm:$0xff]
    %v3408 = vld [vmem:[%s3401 + $0x30] sm:$0xff]
    %v3409 = vld [vmem:[%s3401 + $0x38] sm:$0xff]
    %v3410 = vld [vmem:[%s3401 + $0x40] sm:$0xff]
    %v3411 = vld [vmem:[%s3401 + $0x48] sm:$0xff]
    %v3412 = vld [vmem:[%s3401 + $0x50] sm:$0xff]
    %v3413 = vld [vmem:[%s3401 + $0x58] sm:$0xff]
    %v3414 = vld [vmem:[%s3401 + $0x60] sm:$0xff]
    %v3415 = vld [vmem:[%s3401 + $0x68] sm:$0xff]
    %v3416 = vld [vmem:[%s3401 + $0x70] sm:$0xff]
    %v3417 = vld [vmem:[%s3401 + $0x78] sm:$0xff]
    %3418 = vmatprep.subr.mxu0 0.0
    %3419 = vmatpush1.msra.mxu0 %v3402
    %3420 = vmatprep.subr.mxu0 0.0
    %3421 = vmatpush1.msra.mxu0 %v3403
    %3422 = vmatprep.subr.mxu0 0.0
    %3423 = vmatpush1.msra.mxu0 %v3404
    %3424 = vmatprep.subr.mxu0 0.0
    %3425 = vmatpush1.msra.mxu0 %v3405
    %3426 = vmatprep.subr.mxu0 0.0
    %3427 = vmatpush1.msra.mxu0 %v3406
    %3428 = vmatprep.subr.mxu0 0.0
    %3429 = vmatpush1.msra.mxu0 %v3407
    %3430 = vmatprep.subr.mxu0 0.0
    %3431 = vmatpush1.msra.mxu0 %v3408
    %3432 = vmatprep.subr.mxu0 0.0
    %3433 = vmatpush1.msra.mxu0 %v3409
    %3434 = vmatprep.subr.mxu0 0.0
    %3435 = vmatpush1.msra.mxu0 %v3410
    %3436 = vmatprep.subr.mxu0 0.0
    %3437 = vmatpush1.msra.mxu0 %v3411
    %3438 = vmatprep.subr.mxu0 0.0
    %3439 = vmatpush1.msra.mxu0 %v3412
    %3440 = vmatprep.subr.mxu0 0.0
    %3441 = vmatpush1.msra.mxu0 %v3413
    %3442 = vmatprep.subr.mxu0 0.0
    %3443 = vmatpush1.msra.mxu0 %v3414
    %3444 = vmatprep.subr.mxu0 0.0
    %3445 = vmatpush1.msra.mxu0 %v3415
    %3446 = vmatprep.subr.mxu0 0.0
    %3447 = vmatpush1.msra.mxu0 %v3416
    %3448 = vmatprep.subr.mxu0 0.0
    %3449 = vmatpush1.msra.mxu0 %v3417
    %3450 = vmatprep.subr.mxu0 0.0
    %3451 = vmatpush1.msra.mxu0 0.0
    %3452 = vmatprep.subr.mxu0 0.0
    %3453 = vmatpush1.msra.mxu0 0.0
    %3454 = vmatprep.subr.mxu0 0.0
    %3455 = vmatpush1.msra.mxu0 0.0
    %3456 = vmatprep.subr.mxu0 0.0
    %3457 = vmatpush1.msra.mxu0 0.0
    %3458 = vmatprep.subr.mxu0 0.0
    %3459 = vmatpush1.msra.mxu0 0.0
    %3460 = vmatprep.subr.mxu0 0.0
    %3461 = vmatpush1.msra.mxu0 0.0
    %3462 = vmatprep.subr.mxu0 0.0
    %3463 = vmatpush1.msra.mxu0 0.0
    %3464 = vmatprep.subr.mxu0 0.0
    %3465 = vmatpush1.msra.mxu0 0.0
    %3466 = vmatprep.subr.mxu0 0.0
    %3467 = vmatpush1.msra.mxu0 0.0
    %3468 = vmatprep.subr.mxu0 0.0
    %3469 = vmatpush1.msra.mxu0 0.0
    %3470 = vmatprep.subr.mxu0 0.0
    %3471 = vmatpush1.msra.mxu0 0.0
    %3472 = vmatprep.subr.mxu0 0.0
    %3473 = vmatpush1.msra.mxu0 0.0
    %3474 = vmatprep.subr.mxu0 0.0
    %3475 = vmatpush1.msra.mxu0 0.0
    %3476 = vmatprep.subr.mxu0 0.0
    %3477 = vmatpush1.msra.mxu0 0.0
    %3478 = vmatprep.subr.mxu0 0.0
    %3479 = vmatpush1.msra.mxu0 0.0
    %3480 = vmatprep.subr.mxu0 0.0
    %3481 = vmatpush1.msra.mxu0 0.0
    %3482 = vmatprep.mubr.f32.mxu0 0.0
    %3483 = vmatmul.mubr.f32.gmra.mrb[0].mxu0 %v3398
    %v3484 = vpop.f32.mrb[0].mxu0
    %v3485 = vadd.f32 0.0, %v3484
    %v3486 = vpop.f32.mrb[0].mxu0
    %3487 = vdwg.mxu0
    %v3488 = vadd.f32 %v3325, %v3485
    %s3489 = scalar_lea.vmem %s7, 56
    %v3490 = vld [vmem:[%s3489] sm:$0xff]
    %v3492 = vsel %vm2352, %v3490, 0
    %3494 = vmatprep.subr.mxu0 0.0
    %3495 = vmatpush1.msra.mxu0 %v2347
    %3496 = vmatprep.subr.mxu0 0.0
    %3497 = vmatpush1.msra.mxu0 %v2348
    %3498 = vmatprep.subr.mxu0 0.0
    %3499 = vmatpush1.msra.mxu0 %v2349
    %3500 = vmatprep.subr.mxu0 0.0
    %3501 = vmatpush1.msra.mxu0 %v2350
    %3502 = vmatprep.subr.mxu0 0.0
    %3503 = vmatpush1.msra.mxu0 0.0
    %3504 = vmatprep.subr.mxu0 0.0
    %3505 = vmatpush1.msra.mxu0 0.0
    %3506 = vmatprep.subr.mxu0 0.0
    %3507 = vmatpush1.msra.mxu0 0.0
    %3508 = vmatprep.subr.mxu0 0.0
    %3509 = vmatpush1.msra.mxu0 0.0
    %3510 = vmatprep.subr.mxu0 0.0
    %3511 = vmatpush1.msra.mxu0 0.0
    %3512 = vmatprep.subr.mxu0 0.0
    %3513 = vmatpush1.msra.mxu0 0.0
    %3514 = vmatprep.subr.mxu0 0.0
    %3515 = vmatpush1.msra.mxu0 0.0
    %3516 = vmatprep.subr.mxu0 0.0
    %3517 = vmatpush1.msra.mxu0 0.0
    %3518 = vmatprep.subr.mxu0 0.0
    %3519 = vmatpush1.msra.mxu0 0.0
    %3520 = vmatprep.subr.mxu0 0.0
    %3521 = vmatpush1.msra.mxu0 0.0
    %3522 = vmatprep.subr.mxu0 0.0
    %3523 = vmatpush1.msra.mxu0 0.0
    %3524 = vmatprep.subr.mxu0 0.0
    %3525 = vmatpush1.msra.mxu0 0.0
    %3526 = vmatprep.subr.mxu0 0.0
    %3527 = vmatpush1.msra.mxu0 0.0
    %3528 = vmatprep.subr.mxu0 0.0
    %3529 = vmatpush1.msra.mxu0 0.0
    %3530 = vmatprep.subr.mxu0 0.0
    %3531 = vmatpush1.msra.mxu0 0.0
    %3532 = vmatprep.subr.mxu0 0.0
    %3533 = vmatpush1.msra.mxu0 0.0
    %3534 = vmatprep.subr.mxu0 0.0
    %3535 = vmatpush1.msra.mxu0 0.0
    %3536 = vmatprep.subr.mxu0 0.0
    %3537 = vmatpush1.msra.mxu0 0.0
    %3538 = vmatprep.subr.mxu0 0.0
    %3539 = vmatpush1.msra.mxu0 0.0
    %3540 = vmatprep.subr.mxu0 0.0
    %3541 = vmatpush1.msra.mxu0 0.0
    %3542 = vmatprep.subr.mxu0 0.0
    %3543 = vmatpush1.msra.mxu0 0.0
    %3544 = vmatprep.subr.mxu0 0.0
    %3545 = vmatpush1.msra.mxu0 0.0
    %3546 = vmatprep.subr.mxu0 0.0
    %3547 = vmatpush1.msra.mxu0 0.0
    %3548 = vmatprep.subr.mxu0 0.0
    %3549 = vmatpush1.msra.mxu0 0.0
    %3550 = vmatprep.subr.mxu0 0.0
    %3551 = vmatpush1.msra.mxu0 0.0
    %3552 = vmatprep.subr.mxu0 0.0
    %3553 = vmatpush1.msra.mxu0 0.0
    %3554 = vmatprep.subr.mxu0 0.0
    %3555 = vmatpush1.msra.mxu0 0.0
    %3556 = vmatprep.subr.mxu0 0.0
    %3557 = vmatpush1.msra.mxu0 0.0
    %3558 = vmatprep.mubr.f32.mxu0 0.0
    %3559 = vmatmul.mubr.f32.gmra.mrb[0].mxu0 %v3492
    %v3560 = vpop.f32.mrb[0].mxu0
    %v3561 = vadd.f32 0.0, %v3560
    %v3562 = vpop.f32.mrb[0].mxu0
    %3563 = vdwg.mxu0
    %s3564 = scalar_lea.vmem %s8, 896
    %v3565 = vld [vmem:[%s3564] sm:$0xff]
    %v3566 = vld [vmem:[%s3564 + $0x8] sm:$0xff]
    %v3567 = vld [vmem:[%s3564 + $0x10] sm:$0xff]
    %v3568 = vld [vmem:[%s3564 + $0x18] sm:$0xff]
    %v3569 = vld [vmem:[%s3564 + $0x20] sm:$0xff]
    %v3570 = vld [vmem:[%s3564 + $0x28] sm:$0xff]
    %v3571 = vld [vmem:[%s3564 + $0x30] sm:$0xff]
    %v3572 = vld [vmem:[%s3564 + $0x38] sm:$0xff]
    %v3573 = vld [vmem:[%s3564 + $0x40] sm:$0xff]
    %v3574 = vld [vmem:[%s3564 + $0x48] sm:$0xff]
    %v3575 = vld [vmem:[%s3564 + $0x50] sm:$0xff]
    %v3576 = vld [vmem:[%s3564 + $0x58] sm:$0xff]
    %v3577 = vld [vmem:[%s3564 + $0x60] sm:$0xff]
    %v3578 = vld [vmem:[%s3564 + $0x68] sm:$0xff]
    %v3579 = vld [vmem:[%s3564 + $0x70] sm:$0xff]
    %v3580 = vld [vmem:[%s3564 + $0x78] sm:$0xff]
    %3581 = vmatprep.subr.mxu0 0.0
    %3582 = vmatpush1.msra.mxu0 %v3565
    %3583 = vmatprep.subr.mxu0 0.0
    %3584 = vmatpush1.msra.mxu0 %v3566
    %3585 = vmatprep.subr.mxu0 0.0
    %3586 = vmatpush1.msra.mxu0 %v3567
    %3587 = vmatprep.subr.mxu0 0.0
    %3588 = vmatpush1.msra.mxu0 %v3568
    %3589 = vmatprep.subr.mxu0 0.0
    %3590 = vmatpush1.msra.mxu0 %v3569
    %3591 = vmatprep.subr.mxu0 0.0
    %3592 = vmatpush1.msra.mxu0 %v3570
    %3593 = vmatprep.subr.mxu0 0.0
    %3594 = vmatpush1.msra.mxu0 %v3571
    %3595 = vmatprep.subr.mxu0 0.0
    %3596 = vmatpush1.msra.mxu0 %v3572
    %3597 = vmatprep.subr.mxu0 0.0
    %3598 = vmatpush1.msra.mxu0 %v3573
    %3599 = vmatprep.subr.mxu0 0.0
    %3600 = vmatpush1.msra.mxu0 %v3574
    %3601 = vmatprep.subr.mxu0 0.0
    %3602 = vmatpush1.msra.mxu0 %v3575
    %3603 = vmatprep.subr.mxu0 0.0
    %3604 = vmatpush1.msra.mxu0 %v3576
    %3605 = vmatprep.subr.mxu0 0.0
    %3606 = vmatpush1.msra.mxu0 %v3577
    %3607 = vmatprep.subr.mxu0 0.0
    %3608 = vmatpush1.msra.mxu0 %v3578
    %3609 = vmatprep.subr.mxu0 0.0
    %3610 = vmatpush1.msra.mxu0 %v3579
    %3611 = vmatprep.subr.mxu0 0.0
    %3612 = vmatpush1.msra.mxu0 %v3580
    %3613 = vmatprep.subr.mxu0 0.0
    %3614 = vmatpush1.msra.mxu0 0.0
    %3615 = vmatprep.subr.mxu0 0.0
    %3616 = vmatpush1.msra.mxu0 0.0
    %3617 = vmatprep.subr.mxu0 0.0
    %3618 = vmatpush1.msra.mxu0 0.0
    %3619 = vmatprep.subr.mxu0 0.0
    %3620 = vmatpush1.msra.mxu0 0.0
    %3621 = vmatprep.subr.mxu0 0.0
    %3622 = vmatpush1.msra.mxu0 0.0
    %3623 = vmatprep.subr.mxu0 0.0
    %3624 = vmatpush1.msra.mxu0 0.0
    %3625 = vmatprep.subr.mxu0 0.0
    %3626 = vmatpush1.msra.mxu0 0.0
    %3627 = vmatprep.subr.mxu0 0.0
    %3628 = vmatpush1.msra.mxu0 0.0
    %3629 = vmatprep.subr.mxu0 0.0
    %3630 = vmatpush1.msra.mxu0 0.0
    %3631 = vmatprep.subr.mxu0 0.0
    %3632 = vmatpush1.msra.mxu0 0.0
    %3633 = vmatprep.subr.mxu0 0.0
    %3634 = vmatpush1.msra.mxu0 0.0
    %3635 = vmatprep.subr.mxu0 0.0
    %3636 = vmatpush1.msra.mxu0 0.0
    %3637 = vmatprep.subr.mxu0 0.0
    %3638 = vmatpush1.msra.mxu0 0.0
    %3639 = vmatprep.subr.mxu0 0.0
    %3640 = vmatpush1.msra.mxu0 0.0
    %3641 = vmatprep.subr.mxu0 0.0
    %3642 = vmatpush1.msra.mxu0 0.0
    %3643 = vmatprep.subr.mxu0 0.0
    %3644 = vmatpush1.msra.mxu0 0.0
    %3645 = vmatprep.mubr.f32.mxu0 0.0
    %3646 = vmatmul.mubr.f32.gmra.mrb[0].mxu0 %v3561
    %v3647 = vpop.f32.mrb[0].mxu0
    %v3648 = vadd.f32 0.0, %v3647
    %v3649 = vpop.f32.mrb[0].mxu0
    %3650 = vdwg.mxu0
    %v3651 = vadd.f32 %v3488, %v3648
    %s3652 = scalar_lea.vmem %s7, 64
    %v3653 = vld [vmem:[%s3652] sm:$0xff]
    %v3655 = vsel %vm2352, %v3653, 0
    %3657 = vmatprep.subr.mxu0 0.0
    %3658 = vmatpush1.msra.mxu0 %v2347
    %3659 = vmatprep.subr.mxu0 0.0
    %3660 = vmatpush1.msra.mxu0 %v2348
    %3661 = vmatprep.subr.mxu0 0.0
    %3662 = vmatpush1.msra.mxu0 %v2349
    %3663 = vmatprep.subr.mxu0 0.0
    %3664 = vmatpush1.msra.mxu0 %v2350
    %3665 = vmatprep.subr.mxu0 0.0
    %3666 = vmatpush1.msra.mxu0 0.0
    %3667 = vmatprep.subr.mxu0 0.0
    %3668 = vmatpush1.msra.mxu0 0.0
    %3669 = vmatprep.subr.mxu0 0.0
    %3670 = vmatpush1.msra.mxu0 0.0
    %3671 = vmatprep.subr.mxu0 0.0
    %3672 = vmatpush1.msra.mxu0 0.0
    %3673 = vmatprep.subr.mxu0 0.0
    %3674 = vmatpush1.msra.mxu0 0.0
    %3675 = vmatprep.subr.mxu0 0.0
    %3676 = vmatpush1.msra.mxu0 0.0
    %3677 = vmatprep.subr.mxu0 0.0
    %3678 = vmatpush1.msra.mxu0 0.0
    %3679 = vmatprep.subr.mxu0 0.0
    %3680 = vmatpush1.msra.mxu0 0.0
    %3681 = vmatprep.subr.mxu0 0.0
    %3682 = vmatpush1.msra.mxu0 0.0
    %3683 = vmatprep.subr.mxu0 0.0
    %3684 = vmatpush1.msra.mxu0 0.0
    %3685 = vmatprep.subr.mxu0 0.0
    %3686 = vmatpush1.msra.mxu0 0.0
    %3687 = vmatprep.subr.mxu0 0.0
    %3688 = vmatpush1.msra.mxu0 0.0
    %3689 = vmatprep.subr.mxu0 0.0
    %3690 = vmatpush1.msra.mxu0 0.0
    %3691 = vmatprep.subr.mxu0 0.0
    %3692 = vmatpush1.msra.mxu0 0.0
    %3693 = vmatprep.subr.mxu0 0.0
    %3694 = vmatpush1.msra.mxu0 0.0
    %3695 = vmatprep.subr.mxu0 0.0
    %3696 = vmatpush1.msra.mxu0 0.0
    %3697 = vmatprep.subr.mxu0 0.0
    %3698 = vmatpush1.msra.mxu0 0.0
    %3699 = vmatprep.subr.mxu0 0.0
    %3700 = vmatpush1.msra.mxu0 0.0
    %3701 = vmatprep.subr.mxu0 0.0
    %3702 = vmatpush1.msra.mxu0 0.0
    %3703 = vmatprep.subr.mxu0 0.0
    %3704 = vmatpush1.msra.mxu0 0.0
    %3705 = vmatprep.subr.mxu0 0.0
    %3706 = vmatpush1.msra.mxu0 0.0
    %3707 = vmatprep.subr.mxu0 0.0
    %3708 = vmatpush1.msra.mxu0 0.0
    %3709 = vmatprep.subr.mxu0 0.0
    %3710 = vmatpush1.msra.mxu0 0.0
    %3711 = vmatprep.subr.mxu0 0.0
    %3712 = vmatpush1.msra.mxu0 0.0
    %3713 = vmatprep.subr.mxu0 0.0
    %3714 = vmatpush1.msra.mxu0 0.0
    %3715 = vmatprep.subr.mxu0 0.0
    %3716 = vmatpush1.msra.mxu0 0.0
    %3717 = vmatprep.subr.mxu0 0.0
    %3718 = vmatpush1.msra.mxu0 0.0
    %3719 = vmatprep.subr.mxu0 0.0
    %3720 = vmatpush1.msra.mxu0 0.0
    %3721 = vmatprep.mubr.f32.mxu0 0.0
    %3722 = vmatmul.mubr.f32.gmra.mrb[0].mxu0 %v3655
    %v3723 = vpop.f32.mrb[0].mxu0
    %v3724 = vadd.f32 0.0, %v3723
    %v3725 = vpop.f32.mrb[0].mxu0
    %3726 = vdwg.mxu0
    %s3727 = scalar_lea.vmem %s8, 1024
    %v3728 = vld [vmem:[%s3727] sm:$0xff]
    %v3729 = vld [vmem:[%s3727 + $0x8] sm:$0xff]
    %v3730 = vld [vmem:[%s3727 + $0x10] sm:$0xff]
    %v3731 = vld [vmem:[%s3727 + $0x18] sm:$0xff]
    %v3732 = vld [vmem:[%s3727 + $0x20] sm:$0xff]
    %v3733 = vld [vmem:[%s3727 + $0x28] sm:$0xff]
    %v3734 = vld [vmem:[%s3727 + $0x30] sm:$0xff]
    %v3735 = vld [vmem:[%s3727 + $0x38] sm:$0xff]
    %v3736 = vld [vmem:[%s3727 + $0x40] sm:$0xff]
    %v3737 = vld [vmem:[%s3727 + $0x48] sm:$0xff]
    %v3738 = vld [vmem:[%s3727 + $0x50] sm:$0xff]
    %v3739 = vld [vmem:[%s3727 + $0x58] sm:$0xff]
    %v3740 = vld [vmem:[%s3727 + $0x60] sm:$0xff]
    %v3741 = vld [vmem:[%s3727 + $0x68] sm:$0xff]
    %v3742 = vld [vmem:[%s3727 + $0x70] sm:$0xff]
    %v3743 = vld [vmem:[%s3727 + $0x78] sm:$0xff]
    %3744 = vmatprep.subr.mxu0 0.0
    %3745 = vmatpush1.msra.mxu0 %v3728
    %3746 = vmatprep.subr.mxu0 0.0
    %3747 = vmatpush1.msra.mxu0 %v3729
    %3748 = vmatprep.subr.mxu0 0.0
    %3749 = vmatpush1.msra.mxu0 %v3730
    %3750 = vmatprep.subr.mxu0 0.0
    %3751 = vmatpush1.msra.mxu0 %v3731
    %3752 = vmatprep.subr.mxu0 0.0
    %3753 = vmatpush1.msra.mxu0 %v3732
    %3754 = vmatprep.subr.mxu0 0.0
    %3755 = vmatpush1.msra.mxu0 %v3733
    %3756 = vmatprep.subr.mxu0 0.0
    %3757 = vmatpush1.msra.mxu0 %v3734
    %3758 = vmatprep.subr.mxu0 0.0
    %3759 = vmatpush1.msra.mxu0 %v3735
    %3760 = vmatprep.subr.mxu0 0.0
    %3761 = vmatpush1.msra.mxu0 %v3736
    %3762 = vmatprep.subr.mxu0 0.0
    %3763 = vmatpush1.msra.mxu0 %v3737
    %3764 = vmatprep.subr.mxu0 0.0
    %3765 = vmatpush1.msra.mxu0 %v3738
    %3766 = vmatprep.subr.mxu0 0.0
    %3767 = vmatpush1.msra.mxu0 %v3739
    %3768 = vmatprep.subr.mxu0 0.0
    %3769 = vmatpush1.msra.mxu0 %v3740
    %3770 = vmatprep.subr.mxu0 0.0
    %3771 = vmatpush1.msra.mxu0 %v3741
    %3772 = vmatprep.subr.mxu0 0.0
    %3773 = vmatpush1.msra.mxu0 %v3742
    %3774 = vmatprep.subr.mxu0 0.0
    %3775 = vmatpush1.msra.mxu0 %v3743
    %3776 = vmatprep.subr.mxu0 0.0
    %3777 = vmatpush1.msra.mxu0 0.0
    %3778 = vmatprep.subr.mxu0 0.0
    %3779 = vmatpush1.msra.mxu0 0.0
    %3780 = vmatprep.subr.mxu0 0.0
    %3781 = vmatpush1.msra.mxu0 0.0
    %3782 = vmatprep.subr.mxu0 0.0
    %3783 = vmatpush1.msra.mxu0 0.0
    %3784 = vmatprep.subr.mxu0 0.0
    %3785 = vmatpush1.msra.mxu0 0.0
    %3786 = vmatprep.subr.mxu0 0.0
    %3787 = vmatpush1.msra.mxu0 0.0
    %3788 = vmatprep.subr.mxu0 0.0
    %3789 = vmatpush1.msra.mxu0 0.0
    %3790 = vmatprep.subr.mxu0 0.0
    %3791 = vmatpush1.msra.mxu0 0.0
    %3792 = vmatprep.subr.mxu0 0.0
    %3793 = vmatpush1.msra.mxu0 0.0
    %3794 = vmatprep.subr.mxu0 0.0
    %3795 = vmatpush1.msra.mxu0 0.0
    %3796 = vmatprep.subr.mxu0 0.0
    %3797 = vmatpush1.msra.mxu0 0.0
    %3798 = vmatprep.subr.mxu0 0.0
    %3799 = vmatpush1.msra.mxu0 0.0
    %3800 = vmatprep.subr.mxu0 0.0
    %3801 = vmatpush1.msra.mxu0 0.0
    %3802 = vmatprep.subr.mxu0 0.0
    %3803 = vmatpush1.msra.mxu0 0.0
    %3804 = vmatprep.subr.mxu0 0.0
    %3805 = vmatpush1.msra.mxu0 0.0
    %3806 = vmatprep.subr.mxu0 0.0
    %3807 = vmatpush1.msra.mxu0 0.0
    %3808 = vmatprep.mubr.f32.mxu0 0.0
    %3809 = vmatmul.mubr.f32.gmra.mrb[0].mxu0 %v3724
    %v3810 = vpop.f32.mrb[0].mxu0
    %v3811 = vadd.f32 0.0, %v3810
    %v3812 = vpop.f32.mrb[0].mxu0
    %3813 = vdwg.mxu0
    %v3814 = vadd.f32 %v3651, %v3811
    %v3815 = vld [vmem:[%s9] sm:$0x1]
    %v3816 = vlaneseq
    %v3817 = vshrl.u32 %v3816, 7
    %v3818 = vsub.s32 0, %v3817
    %v3819 = vrot.slane %v3815, %v3818
    %v3820 = vadd.f32 %v3814, %v3819
    %vm3821 = vcmp.ge.f32.partialorder %v3820, 0.0
    %v3822 = vmul.f32 %v3820, 0.2
    %v3823 = vsel %vm3821, %v3820, %v3822
    %v3824 = vrot.slane %v3823, 4
    %v3825 = vadd.f32 %v3823, %v3824
    %v3826 = vrot.slane %v3825, 2
    %v3827 = vadd.f32 %v3825, %v3826
    %v3828 = vrot.slane %v3827, 1
    %v3829 = vadd.f32 %v3827, %v3828
    %v3830 = vmul.f32 %v3823, %v3823
    %v3831 = vrot.slane %v3830, 4
    %v3832 = vadd.f32 %v3830, %v3831
    %v3833 = vrot.slane %v3832, 2
    %v3834 = vadd.f32 %v3832, %v3833
    %v3835 = vrot.slane %v3834, 1
    %v3836 = vadd.f32 %v3834, %v3835
    %v3837 = vld [vmem:[%s10] sm:$0xff]
    %v3838 = vld [vmem:[%s10 + $0x8] sm:$0xff]
    %v3839 = vld [vmem:[%s10 + $0x10] sm:$0xff]
    %v3840 = vld [vmem:[%s10 + $0x18] sm:$0xff]
    %v3841 = vld [vmem:[%s10 + $0x20] sm:$0xff]
    %v3842 = vld [vmem:[%s10 + $0x28] sm:$0xff]
    %v3843 = vld [vmem:[%s10 + $0x30] sm:$0xff]
    %v3844 = vld [vmem:[%s10 + $0x38] sm:$0xff]
    %v3845 = vld [vmem:[%s10 + $0x40] sm:$0xff]
    %v3846 = vld [vmem:[%s10 + $0x48] sm:$0xff]
    %v3847 = vld [vmem:[%s10 + $0x50] sm:$0xff]
    %v3848 = vld [vmem:[%s10 + $0x58] sm:$0xff]
    %v3849 = vld [vmem:[%s10 + $0x60] sm:$0xff]
    %v3850 = vld [vmem:[%s10 + $0x68] sm:$0xff]
    %v3851 = vld [vmem:[%s10 + $0x70] sm:$0xff]
    %v3852 = vld [vmem:[%s10 + $0x78] sm:$0xff]
    %3853 = vmatprep.subr.mxu0 0.0
    %3854 = vmatpush1.msra.mxu0 %v3837
    %3855 = vmatprep.subr.mxu0 0.0
    %3856 = vmatpush1.msra.mxu0 %v3838
    %3857 = vmatprep.subr.mxu0 0.0
    %3858 = vmatpush1.msra.mxu0 %v3839
    %3859 = vmatprep.subr.mxu0 0.0
    %3860 = vmatpush1.msra.mxu0 %v3840
    %3861 = vmatprep.subr.mxu0 0.0
    %3862 = vmatpush1.msra.mxu0 %v3841
    %3863 = vmatprep.subr.mxu0 0.0
    %3864 = vmatpush1.msra.mxu0 %v3842
    %3865 = vmatprep.subr.mxu0 0.0
    %3866 = vmatpush1.msra.mxu0 %v3843
    %3867 = vmatprep.subr.mxu0 0.0
    %3868 = vmatpush1.msra.mxu0 %v3844
    %3869 = vmatprep.subr.mxu0 0.0
    %3870 = vmatpush1.msra.mxu0 %v3845
    %3871 = vmatprep.subr.mxu0 0.0
    %3872 = vmatpush1.msra.mxu0 %v3846
    %3873 = vmatprep.subr.mxu0 0.0
    %3874 = vmatpush1.msra.mxu0 %v3847
    %3875 = vmatprep.subr.mxu0 0.0
    %3876 = vmatpush1.msra.mxu0 %v3848
    %3877 = vmatprep.subr.mxu0 0.0
    %3878 = vmatpush1.msra.mxu0 %v3849
    %3879 = vmatprep.subr.mxu0 0.0
    %3880 = vmatpush1.msra.mxu0 %v3850
    %3881 = vmatprep.subr.mxu0 0.0
    %3882 = vmatpush1.msra.mxu0 %v3851
    %3883 = vmatprep.subr.mxu0 0.0
    %3884 = vmatpush1.msra.mxu0 %v3852
    %3885 = vmatprep.subr.mxu0 0.0
    %3886 = vmatpush1.msra.mxu0 0.0
    %3887 = vmatprep.subr.mxu0 0.0
    %3888 = vmatpush1.msra.mxu0 0.0
    %3889 = vmatprep.subr.mxu0 0.0
    %3890 = vmatpush1.msra.mxu0 0.0
    %3891 = vmatprep.subr.mxu0 0.0
    %3892 = vmatpush1.msra.mxu0 0.0
    %3893 = vmatprep.subr.mxu0 0.0
    %3894 = vmatpush1.msra.mxu0 0.0
    %3895 = vmatprep.subr.mxu0 0.0
    %3896 = vmatpush1.msra.mxu0 0.0
    %3897 = vmatprep.subr.mxu0 0.0
    %3898 = vmatpush1.msra.mxu0 0.0
    %3899 = vmatprep.subr.mxu0 0.0
    %3900 = vmatpush1.msra.mxu0 0.0
    %3901 = vmatprep.subr.mxu0 0.0
    %3902 = vmatpush1.msra.mxu0 0.0
    %3903 = vmatprep.subr.mxu0 0.0
    %3904 = vmatpush1.msra.mxu0 0.0
    %3905 = vmatprep.subr.mxu0 0.0
    %3906 = vmatpush1.msra.mxu0 0.0
    %3907 = vmatprep.subr.mxu0 0.0
    %3908 = vmatpush1.msra.mxu0 0.0
    %3909 = vmatprep.subr.mxu0 0.0
    %3910 = vmatpush1.msra.mxu0 0.0
    %3911 = vmatprep.subr.mxu0 0.0
    %3912 = vmatpush1.msra.mxu0 0.0
    %3913 = vmatprep.subr.mxu0 0.0
    %3914 = vmatpush1.msra.mxu0 0.0
    %3915 = vmatprep.subr.mxu0 0.0
    %3916 = vmatpush1.msra.mxu0 0.0
    %3917 = vmatprep.mubr.f32.mxu0 0.0
    %3918 = vmatmul.mubr.f32.gmra.mrb[0].mxu0 %v3829
    %v3919 = vpop.f32.mrb[0].mxu0
    %v3920 = vadd.f32 0.0, %v3919
    %v3921 = vpop.f32.mrb[0].mxu0
    %3922 = vdwg.mxu0
    %3923 = vmatprep.subr.mxu0 0.0
    %3924 = vmatpush1.msra.mxu0 %v3837
    %3925 = vmatprep.subr.mxu0 0.0
    %3926 = vmatpush1.msra.mxu0 %v3838
    %3927 = vmatprep.subr.mxu0 0.0
    %3928 = vmatpush1.msra.mxu0 %v3839
    %3929 = vmatprep.subr.mxu0 0.0
    %3930 = vmatpush1.msra.mxu0 %v3840
    %3931 = vmatprep.subr.mxu0 0.0
    %3932 = vmatpush1.msra.mxu0 %v3841
    %3933 = vmatprep.subr.mxu0 0.0
    %3934 = vmatpush1.msra.mxu0 %v3842
    %3935 = vmatprep.subr.mxu0 0.0
    %3936 = vmatpush1.msra.mxu0 %v3843
    %3937 = vmatprep.subr.mxu0 0.0
    %3938 = vmatpush1.msra.mxu0 %v3844
    %3939 = vmatprep.subr.mxu0 0.0
    %3940 = vmatpush1.msra.mxu0 %v3845
    %3941 = vmatprep.subr.mxu0 0.0
    %3942 = vmatpush1.msra.mxu0 %v3846
    %3943 = vmatprep.subr.mxu0 0.0
    %3944 = vmatpush1.msra.mxu0 %v3847
    %3945 = vmatprep.subr.mxu0 0.0
    %3946 = vmatpush1.msra.mxu0 %v3848
    %3947 = vmatprep.subr.mxu0 0.0
    %3948 = vmatpush1.msra.mxu0 %v3849
    %3949 = vmatprep.subr.mxu0 0.0
    %3950 = vmatpush1.msra.mxu0 %v3850
    %3951 = vmatprep.subr.mxu0 0.0
    %3952 = vmatpush1.msra.mxu0 %v3851
    %3953 = vmatprep.subr.mxu0 0.0
    %3954 = vmatpush1.msra.mxu0 %v3852
    %3955 = vmatprep.subr.mxu0 0.0
    %3956 = vmatpush1.msra.mxu0 0.0
    %3957 = vmatprep.subr.mxu0 0.0
    %3958 = vmatpush1.msra.mxu0 0.0
    %3959 = vmatprep.subr.mxu0 0.0
    %3960 = vmatpush1.msra.mxu0 0.0
    %3961 = vmatprep.subr.mxu0 0.0
    %3962 = vmatpush1.msra.mxu0 0.0
    %3963 = vmatprep.subr.mxu0 0.0
    %3964 = vmatpush1.msra.mxu0 0.0
    %3965 = vmatprep.subr.mxu0 0.0
    %3966 = vmatpush1.msra.mxu0 0.0
    %3967 = vmatprep.subr.mxu0 0.0
    %3968 = vmatpush1.msra.mxu0 0.0
    %3969 = vmatprep.subr.mxu0 0.0
    %3970 = vmatpush1.msra.mxu0 0.0
    %3971 = vmatprep.subr.mxu0 0.0
    %3972 = vmatpush1.msra.mxu0 0.0
    %3973 = vmatprep.subr.mxu0 0.0
    %3974 = vmatpush1.msra.mxu0 0.0
    %3975 = vmatprep.subr.mxu0 0.0
    %3976 = vmatpush1.msra.mxu0 0.0
    %3977 = vmatprep.subr.mxu0 0.0
    %3978 = vmatpush1.msra.mxu0 0.0
    %3979 = vmatprep.subr.mxu0 0.0
    %3980 = vmatpush1.msra.mxu0 0.0
    %3981 = vmatprep.subr.mxu0 0.0
    %3982 = vmatpush1.msra.mxu0 0.0
    %3983 = vmatprep.subr.mxu0 0.0
    %3984 = vmatpush1.msra.mxu0 0.0
    %3985 = vmatprep.subr.mxu0 0.0
    %3986 = vmatpush1.msra.mxu0 0.0
    %3987 = vmatprep.mubr.f32.mxu0 0.0
    %3988 = vmatmul.mubr.f32.gmra.mrb[0].mxu0 %v3836
    %v3989 = vpop.f32.mrb[0].mxu0
    %v3990 = vadd.f32 0.0, %v3989
    %v3991 = vpop.f32.mrb[0].mxu0
    %3992 = vdwg.mxu0
    %v3993 = vmul.f32 %v3920, 0.0625
    %v3994 = vmul.f32 %v3990, 0.0625
    %v3995 = vmul.f32 %v3993, %v3993
    %v3996 = vsub.f32 %v3994, %v3995
    %v3997 = vld [vmem:[%s9 + $0x1] sm:$0x1]
    %v3998 = vadd.f32 %v3996, 0.8
    %v3999 = vrsqrt.pop %v3998
    %v4000 = vmul.f32 %v3997, %v3999
    %v4001 = vld [vmem:[%s9 + $0x2] sm:$0x1]
    %v4002 = vmul.f32 %v3993, %v4000
    %v4003 = vsub.f32 %v4001, %v4002
    %v4004 = vlaneseq
    %v4005 = vshrl.u32 %v4004, 7
    %v4006 = vsub.s32 0, %v4005
    %v4007 = vrot.slane %v4000, %v4006
    %v4008 = vmul.f32 %v3823, %v4007
    %v4009 = vlaneseq
    %v4010 = vshrl.u32 %v4009, 7
    %v4011 = vsub.s32 0, %v4010
    %v4012 = vrot.slane %v4003, %v4011
    %v4013 = vadd.f32 %v4008, %v4012
    %v4014 = vld [vmem:[%s11] sm:$0x3]
    %vm4015 = vcmask 64512
    %v4017 = vsel %vm4015, %v4014, 0
    %4019 = vmatprep.subr.mxu0 0.0
    %4020 = vmatpush1.msra.mxu0 %v4013
    %4021 = vmatprep.subr.mxu0 0.0
    %4022 = vmatpush1.msra.mxu0 0.0
    %4023 = vmatprep.subr.mxu0 0.0
    %4024 = vmatpush1.msra.mxu0 0.0
    %4025 = vmatprep.subr.mxu0 0.0
    %4026 = vmatpush1.msra.mxu0 0.0
    %4027 = vmatprep.subr.mxu0 0.0
    %4028 = vmatpush1.msra.mxu0 0.0
    %4029 = vmatprep.subr.mxu0 0.0
    %4030 = vmatpush1.msra.mxu0 0.0
    %4031 = vmatprep.subr.mxu0 0.0
    %4032 = vmatpush1.msra.mxu0 0.0
    %4033 = vmatprep.subr.mxu0 0.0
    %4034 = vmatpush1.msra.mxu0 0.0
    %4035 = vmatprep.subr.mxu0 0.0
    %4036 = vmatpush1.msra.mxu0 0.0
    %4037 = vmatprep.subr.mxu0 0.0
    %4038 = vmatpush1.msra.mxu0 0.0
    %4039 = vmatprep.subr.mxu0 0.0
    %4040 = vmatpush1.msra.mxu0 0.0
    %4041 = vmatprep.subr.mxu0 0.0
    %4042 = vmatpush1.msra.mxu0 0.0
    %4043 = vmatprep.subr.mxu0 0.0
    %4044 = vmatpush1.msra.mxu0 0.0
    %4045 = vmatprep.subr.mxu0 0.0
    %4046 = vmatpush1.msra.mxu0 0.0
    %4047 = vmatprep.subr.mxu0 0.0
    %4048 = vmatpush1.msra.mxu0 0.0
    %4049 = vmatprep.subr.mxu0 0.0
    %4050 = vmatpush1.msra.mxu0 0.0
    %4051 = vmatprep.subr.mxu0 0.0
    %4052 = vmatpush1.msra.mxu0 0.0
    %4053 = vmatprep.subr.mxu0 0.0
    %4054 = vmatpush1.msra.mxu0 0.0
    %4055 = vmatprep.subr.mxu0 0.0
    %4056 = vmatpush1.msra.mxu0 0.0
    %4057 = vmatprep.subr.mxu0 0.0
    %4058 = vmatpush1.msra.mxu0 0.0
    %4059 = vmatprep.subr.mxu0 0.0
    %4060 = vmatpush1.msra.mxu0 0.0
    %4061 = vmatprep.subr.mxu0 0.0
    %4062 = vmatpush1.msra.mxu0 0.0
    %4063 = vmatprep.subr.mxu0 0.0
    %4064 = vmatpush1.msra.mxu0 0.0
    %4065 = vmatprep.subr.mxu0 0.0
    %4066 = vmatpush1.msra.mxu0 0.0
    %4067 = vmatprep.subr.mxu0 0.0
    %4068 = vmatpush1.msra.mxu0 0.0
    %4069 = vmatprep.subr.mxu0 0.0
    %4070 = vmatpush1.msra.mxu0 0.0
    %4071 = vmatprep.subr.mxu0 0.0
    %4072 = vmatpush1.msra.mxu0 0.0
    %4073 = vmatprep.subr.mxu0 0.0
    %4074 = vmatpush1.msra.mxu0 0.0
    %4075 = vmatprep.subr.mxu0 0.0
    %4076 = vmatpush1.msra.mxu0 0.0
    %4077 = vmatprep.subr.mxu0 0.0
    %4078 = vmatpush1.msra.mxu0 0.0
    %4079 = vmatprep.subr.mxu0 0.0
    %4080 = vmatpush1.msra.mxu0 0.0
    %4081 = vmatprep.subr.mxu0 0.0
    %4082 = vmatpush1.msra.mxu0 0.0
    %4083 = vmatprep.mubr.f32.mxu0 0.0
    %4084 = vmatmul.mubr.f32.gmra.mrb[0].mxu0 %v4017
    %v4085 = vpop.f32.mrb[0].mxu0
    %v4086 = vadd.f32 0.0, %v4085
    %v4087 = vpop.f32.mrb[0].mxu0
    %4088 = vdwg.mxu0
    %v4089 = vld [vmem:[%s12] sm:$0xff]
    %v4090 = vld [vmem:[%s12 + $0x8] sm:$0xff]
    %v4091 = vld [vmem:[%s12 + $0x10] sm:$0xff]
    %v4092 = vld [vmem:[%s12 + $0x18] sm:$0xff]
    %v4093 = vld [vmem:[%s12 + $0x20] sm:$0xff]
    %v4094 = vld [vmem:[%s12 + $0x28] sm:$0xff]
    %v4095 = vld [vmem:[%s12 + $0x30] sm:$0xff]
    %v4096 = vld [vmem:[%s12 + $0x38] sm:$0xff]
    %v4097 = vld [vmem:[%s12 + $0x40] sm:$0xff]
    %v4098 = vld [vmem:[%s12 + $0x48] sm:$0xff]
    %v4099 = vld [vmem:[%s12 + $0x50] sm:$0xff]
    %v4100 = vld [vmem:[%s12 + $0x58] sm:$0xff]
    %v4101 = vld [vmem:[%s12 + $0x60] sm:$0xff]
    %v4102 = vld [vmem:[%s12 + $0x68] sm:$0xff]
    %v4103 = vld [vmem:[%s12 + $0x70] sm:$0xff]
    %v4104 = vld [vmem:[%s12 + $0x78] sm:$0xff]
    %s4105 = scalar_lea.vmem %s11, 2
    %v4106 = vld [vmem:[%s4105] sm:$0x3]
    %v4108 = vsel %vm4015, %v4106, 0
    %4110 = vmatprep.subr.mxu0 0.0
    %4111 = vmatpush1.msra.mxu0 %v4013
    %4112 = vmatprep.subr.mxu0 0.0
    %4113 = vmatpush1.msra.mxu0 0.0
    %4114 = vmatprep.subr.mxu0 0.0
    %4115 = vmatpush1.msra.mxu0 0.0
    %4116 = vmatprep.subr.mxu0 0.0
    %4117 = vmatpush1.msra.mxu0 0.0
    %4118 = vmatprep.subr.mxu0 0.0
    %4119 = vmatpush1.msra.mxu0 0.0
    %4120 = vmatprep.subr.mxu0 0.0
    %4121 = vmatpush1.msra.mxu0 0.0
    %4122 = vmatprep.subr.mxu0 0.0
    %4123 = vmatpush1.msra.mxu0 0.0
    %4124 = vmatprep.subr.mxu0 0.0
    %4125 = vmatpush1.msra.mxu0 0.0
    %4126 = vmatprep.subr.mxu0 0.0
    %4127 = vmatpush1.msra.mxu0 0.0
    %4128 = vmatprep.subr.mxu0 0.0
    %4129 = vmatpush1.msra.mxu0 0.0
    %4130 = vmatprep.subr.mxu0 0.0
    %4131 = vmatpush1.msra.mxu0 0.0
    %4132 = vmatprep.subr.mxu0 0.0
    %4133 = vmatpush1.msra.mxu0 0.0
    %4134 = vmatprep.subr.mxu0 0.0
    %4135 = vmatpush1.msra.mxu0 0.0
    %4136 = vmatprep.subr.mxu0 0.0
    %4137 = vmatpush1.msra.mxu0 0.0
    %4138 = vmatprep.subr.mxu0 0.0
    %4139 = vmatpush1.msra.mxu0 0.0
    %4140 = vmatprep.subr.mxu0 0.0
    %4141 = vmatpush1.msra.mxu0 0.0
    %4142 = vmatprep.subr.mxu0 0.0
    %4143 = vmatpush1.msra.mxu0 0.0
    %4144 = vmatprep.subr.mxu0 0.0
    %4145 = vmatpush1.msra.mxu0 0.0
    %4146 = vmatprep.subr.mxu0 0.0
    %4147 = vmatpush1.msra.mxu0 0.0
    %4148 = vmatprep.subr.mxu0 0.0
    %4149 = vmatpush1.msra.mxu0 0.0
    %4150 = vmatprep.subr.mxu0 0.0
    %4151 = vmatpush1.msra.mxu0 0.0
    %4152 = vmatprep.subr.mxu0 0.0
    %4153 = vmatpush1.msra.mxu0 0.0
    %4154 = vmatprep.subr.mxu0 0.0
    %4155 = vmatpush1.msra.mxu0 0.0
    %4156 = vmatprep.subr.mxu0 0.0
    %4157 = vmatpush1.msra.mxu0 0.0
    %4158 = vmatprep.subr.mxu0 0.0
    %4159 = vmatpush1.msra.mxu0 0.0
    %4160 = vmatprep.subr.mxu0 0.0
    %4161 = vmatpush1.msra.mxu0 0.0
    %4162 = vmatprep.subr.mxu0 0.0
    %4163 = vmatpush1.msra.mxu0 0.0
    %4164 = vmatprep.subr.mxu0 0.0
    %4165 = vmatpush1.msra.mxu0 0.0
    %4166 = vmatprep.subr.mxu0 0.0
    %4167 = vmatpush1.msra.mxu0 0.0
    %4168 = vmatprep.subr.mxu0 0.0
    %4169 = vmatpush1.msra.mxu0 0.0
    %4170 = vmatprep.subr.mxu0 0.0
    %4171 = vmatpush1.msra.mxu0 0.0
    %4172 = vmatprep.subr.mxu0 0.0
    %4173 = vmatpush1.msra.mxu0 0.0
    %4174 = vmatprep.mubr.f32.mxu0 0.0
    %4175 = vmatmul.mubr.f32.gmra.mrb[0].mxu0 %v4108
    %v4176 = vpop.f32.mrb[0].mxu0
    %v4177 = vadd.f32 0.0, %v4176
    %v4178 = vpop.f32.mrb[0].mxu0
    %4179 = vdwg.mxu0
    %s4180 = scalar_lea.vmem %s12, 128
    %v4181 = vld [vmem:[%s4180] sm:$0xff]
    %v4182 = vld [vmem:[%s4180 + $0x8] sm:$0xff]
    %v4183 = vld [vmem:[%s4180 + $0x10] sm:$0xff]
    %v4184 = vld [vmem:[%s4180 + $0x18] sm:$0xff]
    %v4185 = vld [vmem:[%s4180 + $0x20] sm:$0xff]
    %v4186 = vld [vmem:[%s4180 + $0x28] sm:$0xff]
    %v4187 = vld [vmem:[%s4180 + $0x30] sm:$0xff]
    %v4188 = vld [vmem:[%s4180 + $0x38] sm:$0xff]
    %v4189 = vld [vmem:[%s4180 + $0x40] sm:$0xff]
    %v4190 = vld [vmem:[%s4180 + $0x48] sm:$0xff]
    %v4191 = vld [vmem:[%s4180 + $0x50] sm:$0xff]
    %v4192 = vld [vmem:[%s4180 + $0x58] sm:$0xff]
    %v4193 = vld [vmem:[%s4180 + $0x60] sm:$0xff]
    %v4194 = vld [vmem:[%s4180 + $0x68] sm:$0xff]
    %v4195 = vld [vmem:[%s4180 + $0x70] sm:$0xff]
    %v4196 = vld [vmem:[%s4180 + $0x78] sm:$0xff]
    %4197 = vmatprep.subr.mxu0 0.0
    %4198 = vmatpush1.msra.mxu0 %v4181
    %4199 = vmatprep.subr.mxu0 0.0
    %4200 = vmatpush1.msra.mxu0 %v4182
    %4201 = vmatprep.subr.mxu0 0.0
    %4202 = vmatpush1.msra.mxu0 %v4183
    %4203 = vmatprep.subr.mxu0 0.0
    %4204 = vmatpush1.msra.mxu0 %v4184
    %4205 = vmatprep.subr.mxu0 0.0
    %4206 = vmatpush1.msra.mxu0 %v4185
    %4207 = vmatprep.subr.mxu0 0.0
    %4208 = vmatpush1.msra.mxu0 %v4186
    %4209 = vmatprep.subr.mxu0 0.0
    %4210 = vmatpush1.msra.mxu0 %v4187
    %4211 = vmatprep.subr.mxu0 0.0
    %4212 = vmatpush1.msra.mxu0 %v4188
    %4213 = vmatprep.subr.mxu0 0.0
    %4214 = vmatpush1.msra.mxu0 %v4189
    %4215 = vmatprep.subr.mxu0 0.0
    %4216 = vmatpush1.msra.mxu0 %v4190
    %4217 = vmatprep.subr.mxu0 0.0
    %4218 = vmatpush1.msra.mxu0 %v4191
    %4219 = vmatprep.subr.mxu0 0.0
    %4220 = vmatpush1.msra.mxu0 %v4192
    %4221 = vmatprep.subr.mxu0 0.0
    %4222 = vmatpush1.msra.mxu0 %v4193
    %4223 = vmatprep.subr.mxu0 0.0
    %4224 = vmatpush1.msra.mxu0 %v4194
    %4225 = vmatprep.subr.mxu0 0.0
    %4226 = vmatpush1.msra.mxu0 %v4195
    %4227 = vmatprep.subr.mxu0 0.0
    %4228 = vmatpush1.msra.mxu0 %v4196
    %4229 = vmatprep.subr.mxu0 0.0
    %4230 = vmatpush1.msra.mxu0 0.0
    %4231 = vmatprep.subr.mxu0 0.0
    %4232 = vmatpush1.msra.mxu0 0.0
    %4233 = vmatprep.subr.mxu0 0.0
    %4234 = vmatpush1.msra.mxu0 0.0
    %4235 = vmatprep.subr.mxu0 0.0
    %4236 = vmatpush1.msra.mxu0 0.0
    %4237 = vmatprep.subr.mxu0 0.0
    %4238 = vmatpush1.msra.mxu0 0.0
    %4239 = vmatprep.subr.mxu0 0.0
    %4240 = vmatpush1.msra.mxu0 0.0
    %4241 = vmatprep.subr.mxu0 0.0
    %4242 = vmatpush1.msra.mxu0 0.0
    %4243 = vmatprep.subr.mxu0 0.0
    %4244 = vmatpush1.msra.mxu0 0.0
    %4245 = vmatprep.subr.mxu0 0.0
    %4246 = vmatpush1.msra.mxu0 0.0
    %4247 = vmatprep.subr.mxu0 0.0
    %4248 = vmatpush1.msra.mxu0 0.0
    %4249 = vmatprep.subr.mxu0 0.0
    %4250 = vmatpush1.msra.mxu0 0.0
    %4251 = vmatprep.subr.mxu0 0.0
    %4252 = vmatpush1.msra.mxu0 0.0
    %4253 = vmatprep.subr.mxu0 0.0
    %4254 = vmatpush1.msra.mxu0 0.0
    %4255 = vmatprep.subr.mxu0 0.0
    %4256 = vmatpush1.msra.mxu0 0.0
    %4257 = vmatprep.subr.mxu0 0.0
    %4258 = vmatpush1.msra.mxu0 0.0
    %4259 = vmatprep.subr.mxu0 0.0
    %4260 = vmatpush1.msra.mxu0 0.0
    %4261 = vmatprep.mubr.f32.mxu0 0.0
    %4262 = vmatmul.mubr.f32.gmra.mrb[0].mxu0 %v4177
    %v4263 = vpop.f32.mrb[0].mxu0
    %v4264 = vadd.f32 0.0, %v4263
    %v4265 = vpop.f32.mrb[0].mxu0
    %4266 = vdwg.mxu0
    %4267 = vmatprep.subr.mxu0 0.0
    %4268 = vmatpush1.msra.mxu0 %v4089
    %4269 = vmatprep.subr.mxu0 0.0
    %4270 = vmatpush1.msra.mxu0 %v4090
    %4271 = vmatprep.subr.mxu0 0.0
    %4272 = vmatpush1.msra.mxu0 %v4091
    %4273 = vmatprep.subr.mxu0 0.0
    %4274 = vmatpush1.msra.mxu0 %v4092
    %4275 = vmatprep.subr.mxu0 0.0
    %4276 = vmatpush1.msra.mxu0 %v4093
    %4277 = vmatprep.subr.mxu0 0.0
    %4278 = vmatpush1.msra.mxu0 %v4094
    %4279 = vmatprep.subr.mxu0 0.0
    %4280 = vmatpush1.msra.mxu0 %v4095
    %4281 = vmatprep.subr.mxu0 0.0
    %4282 = vmatpush1.msra.mxu0 %v4096
    %4283 = vmatprep.subr.mxu0 0.0
    %4284 = vmatpush1.msra.mxu0 %v4097
    %4285 = vmatprep.subr.mxu0 0.0
    %4286 = vmatpush1.msra.mxu0 %v4098
    %4287 = vmatprep.subr.mxu0 0.0
    %4288 = vmatpush1.msra.mxu0 %v4099
    %4289 = vmatprep.subr.mxu0 0.0
    %4290 = vmatpush1.msra.mxu0 %v4100
    %4291 = vmatprep.subr.mxu0 0.0
    %4292 = vmatpush1.msra.mxu0 %v4101
    %4293 = vmatprep.subr.mxu0 0.0
    %4294 = vmatpush1.msra.mxu0 %v4102
    %4295 = vmatprep.subr.mxu0 0.0
    %4296 = vmatpush1.msra.mxu0 %v4103
    %4297 = vmatprep.subr.mxu0 0.0
    %4298 = vmatpush1.msra.mxu0 %v4104
    %4299 = vmatprep.subr.mxu0 0.0
    %4300 = vmatpush1.msra.mxu0 0.0
    %4301 = vmatprep.subr.mxu0 0.0
    %4302 = vmatpush1.msra.mxu0 0.0
    %4303 = vmatprep.subr.mxu0 0.0
    %4304 = vmatpush1.msra.mxu0 0.0
    %4305 = vmatprep.subr.mxu0 0.0
    %4306 = vmatpush1.msra.mxu0 0.0
    %4307 = vmatprep.subr.mxu0 0.0
    %4308 = vmatpush1.msra.mxu0 0.0
    %4309 = vmatprep.subr.mxu0 0.0
    %4310 = vmatpush1.msra.mxu0 0.0
    %4311 = vmatprep.subr.mxu0 0.0
    %4312 = vmatpush1.msra.mxu0 0.0
    %4313 = vmatprep.subr.mxu0 0.0
    %4314 = vmatpush1.msra.mxu0 0.0
    %4315 = vmatprep.subr.mxu0 0.0
    %4316 = vmatpush1.msra.mxu0 0.0
    %4317 = vmatprep.subr.mxu0 0.0
    %4318 = vmatpush1.msra.mxu0 0.0
    %4319 = vmatprep.subr.mxu0 0.0
    %4320 = vmatpush1.msra.mxu0 0.0
    %4321 = vmatprep.subr.mxu0 0.0
    %4322 = vmatpush1.msra.mxu0 0.0
    %4323 = vmatprep.subr.mxu0 0.0
    %4324 = vmatpush1.msra.mxu0 0.0
    %4325 = vmatprep.subr.mxu0 0.0
    %4326 = vmatpush1.msra.mxu0 0.0
    %4327 = vmatprep.subr.mxu0 0.0
    %4328 = vmatpush1.msra.mxu0 0.0
    %4329 = vmatprep.subr.mxu0 0.0
    %4330 = vmatpush1.msra.mxu0 0.0
    %4331 = vmatprep.mubr.f32.mxu0 0.0
    %4332 = vmatmul.mubr.f32.gmra.mrb[0].mxu0 %v4086
    %v4333 = vpop.f32.mrb[0].mxu0
    %v4334 = vadd.f32 %v4264, %v4333
    %v4335 = vpop.f32.mrb[0].mxu0
    %4336 = vdwg.mxu0
    %s4337 = scalar_lea.vmem %s11, 4
    %v4338 = vld [vmem:[%s4337] sm:$0x3]
    %v4340 = vsel %vm4015, %v4338, 0
    %4342 = vmatprep.subr.mxu0 0.0
    %4343 = vmatpush1.msra.mxu0 %v4013
    %4344 = vmatprep.subr.mxu0 0.0
    %4345 = vmatpush1.msra.mxu0 0.0
    %4346 = vmatprep.subr.mxu0 0.0
    %4347 = vmatpush1.msra.mxu0 0.0
    %4348 = vmatprep.subr.mxu0 0.0
    %4349 = vmatpush1.msra.mxu0 0.0
    %4350 = vmatprep.subr.mxu0 0.0
    %4351 = vmatpush1.msra.mxu0 0.0
    %4352 = vmatprep.subr.mxu0 0.0
    %4353 = vmatpush1.msra.mxu0 0.0
    %4354 = vmatprep.subr.mxu0 0.0
    %4355 = vmatpush1.msra.mxu0 0.0
    %4356 = vmatprep.subr.mxu0 0.0
    %4357 = vmatpush1.msra.mxu0 0.0
    %4358 = vmatprep.subr.mxu0 0.0
    %4359 = vmatpush1.msra.mxu0 0.0
    %4360 = vmatprep.subr.mxu0 0.0
    %4361 = vmatpush1.msra.mxu0 0.0
    %4362 = vmatprep.subr.mxu0 0.0
    %4363 = vmatpush1.msra.mxu0 0.0
    %4364 = vmatprep.subr.mxu0 0.0
    %4365 = vmatpush1.msra.mxu0 0.0
    %4366 = vmatprep.subr.mxu0 0.0
    %4367 = vmatpush1.msra.mxu0 0.0
    %4368 = vmatprep.subr.mxu0 0.0
    %4369 = vmatpush1.msra.mxu0 0.0
    %4370 = vmatprep.subr.mxu0 0.0
    %4371 = vmatpush1.msra.mxu0 0.0
    %4372 = vmatprep.subr.mxu0 0.0
    %4373 = vmatpush1.msra.mxu0 0.0
    %4374 = vmatprep.subr.mxu0 0.0
    %4375 = vmatpush1.msra.mxu0 0.0
    %4376 = vmatprep.subr.mxu0 0.0
    %4377 = vmatpush1.msra.mxu0 0.0
    %4378 = vmatprep.subr.mxu0 0.0
    %4379 = vmatpush1.msra.mxu0 0.0
    %4380 = vmatprep.subr.mxu0 0.0
    %4381 = vmatpush1.msra.mxu0 0.0
    %4382 = vmatprep.subr.mxu0 0.0
    %4383 = vmatpush1.msra.mxu0 0.0
    %4384 = vmatprep.subr.mxu0 0.0
    %4385 = vmatpush1.msra.mxu0 0.0
    %4386 = vmatprep.subr.mxu0 0.0
    %4387 = vmatpush1.msra.mxu0 0.0
    %4388 = vmatprep.subr.mxu0 0.0
    %4389 = vmatpush1.msra.mxu0 0.0
    %4390 = vmatprep.subr.mxu0 0.0
    %4391 = vmatpush1.msra.mxu0 0.0
    %4392 = vmatprep.subr.mxu0 0.0
    %4393 = vmatpush1.msra.mxu0 0.0
    %4394 = vmatprep.subr.mxu0 0.0
    %4395 = vmatpush1.msra.mxu0 0.0
    %4396 = vmatprep.subr.mxu0 0.0
    %4397 = vmatpush1.msra.mxu0 0.0
    %4398 = vmatprep.subr.mxu0 0.0
    %4399 = vmatpush1.msra.mxu0 0.0
    %4400 = vmatprep.subr.mxu0 0.0
    %4401 = vmatpush1.msra.mxu0 0.0
    %4402 = vmatprep.subr.mxu0 0.0
    %4403 = vmatpush1.msra.mxu0 0.0
    %4404 = vmatprep.subr.mxu0 0.0
    %4405 = vmatpush1.msra.mxu0 0.0
    %4406 = vmatprep.mubr.f32.mxu0 0.0
    %4407 = vmatmul.mubr.f32.gmra.mrb[0].mxu0 %v4340
    %v4408 = vpop.f32.mrb[0].mxu0
    %v4409 = vadd.f32 0.0, %v4408
    %v4410 = vpop.f32.mrb[0].mxu0
    %4411 = vdwg.mxu0
    %s4412 = scalar_lea.vmem %s12, 256
    %v4413 = vld [vmem:[%s4412] sm:$0xff]
    %v4414 = vld [vmem:[%s4412 + $0x8] sm:$0xff]
    %v4415 = vld [vmem:[%s4412 + $0x10] sm:$0xff]
    %v4416 = vld [vmem:[%s4412 + $0x18] sm:$0xff]
    %v4417 = vld [vmem:[%s4412 + $0x20] sm:$0xff]
    %v4418 = vld [vmem:[%s4412 + $0x28] sm:$0xff]
    %v4419 = vld [vmem:[%s4412 + $0x30] sm:$0xff]
    %v4420 = vld [vmem:[%s4412 + $0x38] sm:$0xff]
    %v4421 = vld [vmem:[%s4412 + $0x40] sm:$0xff]
    %v4422 = vld [vmem:[%s4412 + $0x48] sm:$0xff]
    %v4423 = vld [vmem:[%s4412 + $0x50] sm:$0xff]
    %v4424 = vld [vmem:[%s4412 + $0x58] sm:$0xff]
    %v4425 = vld [vmem:[%s4412 + $0x60] sm:$0xff]
    %v4426 = vld [vmem:[%s4412 + $0x68] sm:$0xff]
    %v4427 = vld [vmem:[%s4412 + $0x70] sm:$0xff]
    %v4428 = vld [vmem:[%s4412 + $0x78] sm:$0xff]
    %4429 = vmatprep.subr.mxu0 0.0
    %4430 = vmatpush1.msra.mxu0 %v4413
    %4431 = vmatprep.subr.mxu0 0.0
    %4432 = vmatpush1.msra.mxu0 %v4414
    %4433 = vmatprep.subr.mxu0 0.0
    %4434 = vmatpush1.msra.mxu0 %v4415
    %4435 = vmatprep.subr.mxu0 0.0
    %4436 = vmatpush1.msra.mxu0 %v4416
    %4437 = vmatprep.subr.mxu0 0.0
    %4438 = vmatpush1.msra.mxu0 %v4417
    %4439 = vmatprep.subr.mxu0 0.0
    %4440 = vmatpush1.msra.mxu0 %v4418
    %4441 = vmatprep.subr.mxu0 0.0
    %4442 = vmatpush1.msra.mxu0 %v4419
    %4443 = vmatprep.subr.mxu0 0.0
    %4444 = vmatpush1.msra.mxu0 %v4420
    %4445 = vmatprep.subr.mxu0 0.0
    %4446 = vmatpush1.msra.mxu0 %v4421
    %4447 = vmatprep.subr.mxu0 0.0
    %4448 = vmatpush1.msra.mxu0 %v4422
    %4449 = vmatprep.subr.mxu0 0.0
    %4450 = vmatpush1.msra.mxu0 %v4423
    %4451 = vmatprep.subr.mxu0 0.0
    %4452 = vmatpush1.msra.mxu0 %v4424
    %4453 = vmatprep.subr.mxu0 0.0
    %4454 = vmatpush1.msra.mxu0 %v4425
    %4455 = vmatprep.subr.mxu0 0.0
    %4456 = vmatpush1.msra.mxu0 %v4426
    %4457 = vmatprep.subr.mxu0 0.0
    %4458 = vmatpush1.msra.mxu0 %v4427
    %4459 = vmatprep.subr.mxu0 0.0
    %4460 = vmatpush1.msra.mxu0 %v4428
    %4461 = vmatprep.subr.mxu0 0.0
    %4462 = vmatpush1.msra.mxu0 0.0
    %4463 = vmatprep.subr.mxu0 0.0
    %4464 = vmatpush1.msra.mxu0 0.0
    %4465 = vmatprep.subr.mxu0 0.0
    %4466 = vmatpush1.msra.mxu0 0.0
    %4467 = vmatprep.subr.mxu0 0.0
    %4468 = vmatpush1.msra.mxu0 0.0
    %4469 = vmatprep.subr.mxu0 0.0
    %4470 = vmatpush1.msra.mxu0 0.0
    %4471 = vmatprep.subr.mxu0 0.0
    %4472 = vmatpush1.msra.mxu0 0.0
    %4473 = vmatprep.subr.mxu0 0.0
    %4474 = vmatpush1.msra.mxu0 0.0
    %4475 = vmatprep.subr.mxu0 0.0
    %4476 = vmatpush1.msra.mxu0 0.0
    %4477 = vmatprep.subr.mxu0 0.0
    %4478 = vmatpush1.msra.mxu0 0.0
    %4479 = vmatprep.subr.mxu0 0.0
    %4480 = vmatpush1.msra.mxu0 0.0
    %4481 = vmatprep.subr.mxu0 0.0
    %4482 = vmatpush1.msra.mxu0 0.0
    %4483 = vmatprep.subr.mxu0 0.0
    %4484 = vmatpush1.msra.mxu0 0.0
    %4485 = vmatprep.subr.mxu0 0.0
    %4486 = vmatpush1.msra.mxu0 0.0
    %4487 = vmatprep.subr.mxu0 0.0
    %4488 = vmatpush1.msra.mxu0 0.0
    %4489 = vmatprep.subr.mxu0 0.0
    %4490 = vmatpush1.msra.mxu0 0.0
    %4491 = vmatprep.subr.mxu0 0.0
    %4492 = vmatpush1.msra.mxu0 0.0
    %4493 = vmatprep.mubr.f32.mxu0 0.0
    %4494 = vmatmul.mubr.f32.gmra.mrb[0].mxu0 %v4409
    %v4495 = vpop.f32.mrb[0].mxu0
    %v4496 = vadd.f32 0.0, %v4495
    %v4497 = vpop.f32.mrb[0].mxu0
    %4498 = vdwg.mxu0
    %v4499 = vadd.f32 %v4334, %v4496
    %s4500 = scalar_lea.vmem %s11, 6
    %v4501 = vld [vmem:[%s4500] sm:$0x3]
    %v4503 = vsel %vm4015, %v4501, 0
    %4505 = vmatprep.subr.mxu0 0.0
    %4506 = vmatpush1.msra.mxu0 %v4013
    %4507 = vmatprep.subr.mxu0 0.0
    %4508 = vmatpush1.msra.mxu0 0.0
    %4509 = vmatprep.subr.mxu0 0.0
    %4510 = vmatpush1.msra.mxu0 0.0
    %4511 = vmatprep.subr.mxu0 0.0
    %4512 = vmatpush1.msra.mxu0 0.0
    %4513 = vmatprep.subr.mxu0 0.0
    %4514 = vmatpush1.msra.mxu0 0.0
    %4515 = vmatprep.subr.mxu0 0.0
    %4516 = vmatpush1.msra.mxu0 0.0
    %4517 = vmatprep.subr.mxu0 0.0
    %4518 = vmatpush1.msra.mxu0 0.0
    %4519 = vmatprep.subr.mxu0 0.0
    %4520 = vmatpush1.msra.mxu0 0.0
    %4521 = vmatprep.subr.mxu0 0.0
    %4522 = vmatpush1.msra.mxu0 0.0
    %4523 = vmatprep.subr.mxu0 0.0
    %4524 = vmatpush1.msra.mxu0 0.0
    %4525 = vmatprep.subr.mxu0 0.0
    %4526 = vmatpush1.msra.mxu0 0.0
    %4527 = vmatprep.subr.mxu0 0.0
    %4528 = vmatpush1.msra.mxu0 0.0
    %4529 = vmatprep.subr.mxu0 0.0
    %4530 = vmatpush1.msra.mxu0 0.0
    %4531 = vmatprep.subr.mxu0 0.0
    %4532 = vmatpush1.msra.mxu0 0.0
    %4533 = vmatprep.subr.mxu0 0.0
    %4534 = vmatpush1.msra.mxu0 0.0
    %4535 = vmatprep.subr.mxu0 0.0
    %4536 = vmatpush1.msra.mxu0 0.0
    %4537 = vmatprep.subr.mxu0 0.0
    %4538 = vmatpush1.msra.mxu0 0.0
    %4539 = vmatprep.subr.mxu0 0.0
    %4540 = vmatpush1.msra.mxu0 0.0
    %4541 = vmatprep.subr.mxu0 0.0
    %4542 = vmatpush1.msra.mxu0 0.0
    %4543 = vmatprep.subr.mxu0 0.0
    %4544 = vmatpush1.msra.mxu0 0.0
    %4545 = vmatprep.subr.mxu0 0.0
    %4546 = vmatpush1.msra.mxu0 0.0
    %4547 = vmatprep.subr.mxu0 0.0
    %4548 = vmatpush1.msra.mxu0 0.0
    %4549 = vmatprep.subr.mxu0 0.0
    %4550 = vmatpush1.msra.mxu0 0.0
    %4551 = vmatprep.subr.mxu0 0.0
    %4552 = vmatpush1.msra.mxu0 0.0
    %4553 = vmatprep.subr.mxu0 0.0
    %4554 = vmatpush1.msra.mxu0 0.0
    %4555 = vmatprep.subr.mxu0 0.0
    %4556 = vmatpush1.msra.mxu0 0.0
    %4557 = vmatprep.subr.mxu0 0.0
    %4558 = vmatpush1.msra.mxu0 0.0
    %4559 = vmatprep.subr.mxu0 0.0
    %4560 = vmatpush1.msra.mxu0 0.0
    %4561 = vmatprep.subr.mxu0 0.0
    %4562 = vmatpush1.msra.mxu0 0.0
    %4563 = vmatprep.subr.mxu0 0.0
    %4564 = vmatpush1.msra.mxu0 0.0
    %4565 = vmatprep.subr.mxu0 0.0
    %4566 = vmatpush1.msra.mxu0 0.0
    %4567 = vmatprep.subr.mxu0 0.0
    %4568 = vmatpush1.msra.mxu0 0.0
    %4569 = vmatprep.mubr.f32.mxu0 0.0
    %4570 = vmatmul.mubr.f32.gmra.mrb[0].mxu0 %v4503
    %v4571 = vpop.f32.mrb[0].mxu0
    %v4572 = vadd.f32 0.0, %v4571
    %v4573 = vpop.f32.mrb[0].mxu0
    %4574 = vdwg.mxu0
    %s4575 = scalar_lea.vmem %s12, 384
    %v4576 = vld [vmem:[%s4575] sm:$0xff]
    %v4577 = vld [vmem:[%s4575 + $0x8] sm:$0xff]
    %v4578 = vld [vmem:[%s4575 + $0x10] sm:$0xff]
    %v4579 = vld [vmem:[%s4575 + $0x18] sm:$0xff]
    %v4580 = vld [vmem:[%s4575 + $0x20] sm:$0xff]
    %v4581 = vld [vmem:[%s4575 + $0x28] sm:$0xff]
    %v4582 = vld [vmem:[%s4575 + $0x30] sm:$0xff]
    %v4583 = vld [vmem:[%s4575 + $0x38] sm:$0xff]
    %v4584 = vld [vmem:[%s4575 + $0x40] sm:$0xff]
    %v4585 = vld [vmem:[%s4575 + $0x48] sm:$0xff]
    %v4586 = vld [vmem:[%s4575 + $0x50] sm:$0xff]
    %v4587 = vld [vmem:[%s4575 + $0x58] sm:$0xff]
    %v4588 = vld [vmem:[%s4575 + $0x60] sm:$0xff]
    %v4589 = vld [vmem:[%s4575 + $0x68] sm:$0xff]
    %v4590 = vld [vmem:[%s4575 + $0x70] sm:$0xff]
    %v4591 = vld [vmem:[%s4575 + $0x78] sm:$0xff]
    %4592 = vmatprep.subr.mxu0 0.0
    %4593 = vmatpush1.msra.mxu0 %v4576
    %4594 = vmatprep.subr.mxu0 0.0
    %4595 = vmatpush1.msra.mxu0 %v4577
    %4596 = vmatprep.subr.mxu0 0.0
    %4597 = vmatpush1.msra.mxu0 %v4578
    %4598 = vmatprep.subr.mxu0 0.0
    %4599 = vmatpush1.msra.mxu0 %v4579
    %4600 = vmatprep.subr.mxu0 0.0
    %4601 = vmatpush1.msra.mxu0 %v4580
    %4602 = vmatprep.subr.mxu0 0.0
    %4603 = vmatpush1.msra.mxu0 %v4581
    %4604 = vmatprep.subr.mxu0 0.0
    %4605 = vmatpush1.msra.mxu0 %v4582
    %4606 = vmatprep.subr.mxu0 0.0
    %4607 = vmatpush1.msra.mxu0 %v4583
    %4608 = vmatprep.subr.mxu0 0.0
    %4609 = vmatpush1.msra.mxu0 %v4584
    %4610 = vmatprep.subr.mxu0 0.0
    %4611 = vmatpush1.msra.mxu0 %v4585
    %4612 = vmatprep.subr.mxu0 0.0
    %4613 = vmatpush1.msra.mxu0 %v4586
    %4614 = vmatprep.subr.mxu0 0.0
    %4615 = vmatpush1.msra.mxu0 %v4587
    %4616 = vmatprep.subr.mxu0 0.0
    %4617 = vmatpush1.msra.mxu0 %v4588
    %4618 = vmatprep.subr.mxu0 0.0
    %4619 = vmatpush1.msra.mxu0 %v4589
    %4620 = vmatprep.subr.mxu0 0.0
    %4621 = vmatpush1.msra.mxu0 %v4590
    %4622 = vmatprep.subr.mxu0 0.0
    %4623 = vmatpush1.msra.mxu0 %v4591
    %4624 = vmatprep.subr.mxu0 0.0
    %4625 = vmatpush1.msra.mxu0 0.0
    %4626 = vmatprep.subr.mxu0 0.0
    %4627 = vmatpush1.msra.mxu0 0.0
    %4628 = vmatprep.subr.mxu0 0.0
    %4629 = vmatpush1.msra.mxu0 0.0
    %4630 = vmatprep.subr.mxu0 0.0
    %4631 = vmatpush1.msra.mxu0 0.0
    %4632 = vmatprep.subr.mxu0 0.0
    %4633 = vmatpush1.msra.mxu0 0.0
    %4634 = vmatprep.subr.mxu0 0.0
    %4635 = vmatpush1.msra.mxu0 0.0
    %4636 = vmatprep.subr.mxu0 0.0
    %4637 = vmatpush1.msra.mxu0 0.0
    %4638 = vmatprep.subr.mxu0 0.0
    %4639 = vmatpush1.msra.mxu0 0.0
    %4640 = vmatprep.subr.mxu0 0.0
    %4641 = vmatpush1.msra.mxu0 0.0
    %4642 = vmatprep.subr.mxu0 0.0
    %4643 = vmatpush1.msra.mxu0 0.0
    %4644 = vmatprep.subr.mxu0 0.0
    %4645 = vmatpush1.msra.mxu0 0.0
    %4646 = vmatprep.subr.mxu0 0.0
    %4647 = vmatpush1.msra.mxu0 0.0
    %4648 = vmatprep.subr.mxu0 0.0
    %4649 = vmatpush1.msra.mxu0 0.0
    %4650 = vmatprep.subr.mxu0 0.0
    %4651 = vmatpush1.msra.mxu0 0.0
    %4652 = vmatprep.subr.mxu0 0.0
    %4653 = vmatpush1.msra.mxu0 0.0
    %4654 = vmatprep.subr.mxu0 0.0
    %4655 = vmatpush1.msra.mxu0 0.0
    %4656 = vmatprep.mubr.f32.mxu0 0.0
    %4657 = vmatmul.mubr.f32.gmra.mrb[0].mxu0 %v4572
    %v4658 = vpop.f32.mrb[0].mxu0
    %v4659 = vadd.f32 0.0, %v4658
    %v4660 = vpop.f32.mrb[0].mxu0
    %4661 = vdwg.mxu0
    %v4662 = vadd.f32 %v4499, %v4659
    %s4663 = scalar_lea.vmem %s11, 8
    %v4664 = vld [vmem:[%s4663] sm:$0x3]
    %v4666 = vsel %vm4015, %v4664, 0
    %4668 = vmatprep.subr.mxu0 0.0
    %4669 = vmatpush1.msra.mxu0 %v4013
    %4670 = vmatprep.subr.mxu0 0.0
    %4671 = vmatpush1.msra.mxu0 0.0
    %4672 = vmatprep.subr.mxu0 0.0
    %4673 = vmatpush1.msra.mxu0 0.0
    %4674 = vmatprep.subr.mxu0 0.0
    %4675 = vmatpush1.msra.mxu0 0.0
    %4676 = vmatprep.subr.mxu0 0.0
    %4677 = vmatpush1.msra.mxu0 0.0
    %4678 = vmatprep.subr.mxu0 0.0
    %4679 = vmatpush1.msra.mxu0 0.0
    %4680 = vmatprep.subr.mxu0 0.0
    %4681 = vmatpush1.msra.mxu0 0.0
    %4682 = vmatprep.subr.mxu0 0.0
    %4683 = vmatpush1.msra.mxu0 0.0
    %4684 = vmatprep.subr.mxu0 0.0
    %4685 = vmatpush1.msra.mxu0 0.0
    %4686 = vmatprep.subr.mxu0 0.0
    %4687 = vmatpush1.msra.mxu0 0.0
    %4688 = vmatprep.subr.mxu0 0.0
    %4689 = vmatpush1.msra.mxu0 0.0
    %4690 = vmatprep.subr.mxu0 0.0
    %4691 = vmatpush1.msra.mxu0 0.0
    %4692 = vmatprep.subr.mxu0 0.0
    %4693 = vmatpush1.msra.mxu0 0.0
    %4694 = vmatprep.subr.mxu0 0.0
    %4695 = vmatpush1.msra.mxu0 0.0
    %4696 = vmatprep.subr.mxu0 0.0
    %4697 = vmatpush1.msra.mxu0 0.0
    %4698 = vmatprep.subr.mxu0 0.0
    %4699 = vmatpush1.msra.mxu0 0.0
    %4700 = vmatprep.subr.mxu0 0.0
    %4701 = vmatpush1.msra.mxu0 0.0
    %4702 = vmatprep.subr.mxu0 0.0
    %4703 = vmatpush1.msra.mxu0 0.0
    %4704 = vmatprep.subr.mxu0 0.0
    %4705 = vmatpush1.msra.mxu0 0.0
    %4706 = vmatprep.subr.mxu0 0.0
    %4707 = vmatpush1.msra.mxu0 0.0
    %4708 = vmatprep.subr.mxu0 0.0
    %4709 = vmatpush1.msra.mxu0 0.0
    %4710 = vmatprep.subr.mxu0 0.0
    %4711 = vmatpush1.msra.mxu0 0.0
    %4712 = vmatprep.subr.mxu0 0.0
    %4713 = vmatpush1.msra.mxu0 0.0
    %4714 = vmatprep.subr.mxu0 0.0
    %4715 = vmatpush1.msra.mxu0 0.0
    %4716 = vmatprep.subr.mxu0 0.0
    %4717 = vmatpush1.msra.mxu0 0.0
    %4718 = vmatprep.subr.mxu0 0.0
    %4719 = vmatpush1.msra.mxu0 0.0
    %4720 = vmatprep.subr.mxu0 0.0
    %4721 = vmatpush1.msra.mxu0 0.0
    %4722 = vmatprep.subr.mxu0 0.0
    %4723 = vmatpush1.msra.mxu0 0.0
    %4724 = vmatprep.subr.mxu0 0.0
    %4725 = vmatpush1.msra.mxu0 0.0
    %4726 = vmatprep.subr.mxu0 0.0
    %4727 = vmatpush1.msra.mxu0 0.0
    %4728 = vmatprep.subr.mxu0 0.0
    %4729 = vmatpush1.msra.mxu0 0.0
    %4730 = vmatprep.subr.mxu0 0.0
    %4731 = vmatpush1.msra.mxu0 0.0
    %4732 = vmatprep.mubr.f32.mxu0 0.0
    %4733 = vmatmul.mubr.f32.gmra.mrb[0].mxu0 %v4666
    %v4734 = vpop.f32.mrb[0].mxu0
    %v4735 = vadd.f32 0.0, %v4734
    %v4736 = vpop.f32.mrb[0].mxu0
    %4737 = vdwg.mxu0
    %s4738 = scalar_lea.vmem %s12, 512
    %v4739 = vld [vmem:[%s4738] sm:$0xff]
    %v4740 = vld [vmem:[%s4738 + $0x8] sm:$0xff]
    %v4741 = vld [vmem:[%s4738 + $0x10] sm:$0xff]
    %v4742 = vld [vmem:[%s4738 + $0x18] sm:$0xff]
    %v4743 = vld [vmem:[%s4738 + $0x20] sm:$0xff]
    %v4744 = vld [vmem:[%s4738 + $0x28] sm:$0xff]
    %v4745 = vld [vmem:[%s4738 + $0x30] sm:$0xff]
    %v4746 = vld [vmem:[%s4738 + $0x38] sm:$0xff]
    %v4747 = vld [vmem:[%s4738 + $0x40] sm:$0xff]
    %v4748 = vld [vmem:[%s4738 + $0x48] sm:$0xff]
    %v4749 = vld [vmem:[%s4738 + $0x50] sm:$0xff]
    %v4750 = vld [vmem:[%s4738 + $0x58] sm:$0xff]
    %v4751 = vld [vmem:[%s4738 + $0x60] sm:$0xff]
    %v4752 = vld [vmem:[%s4738 + $0x68] sm:$0xff]
    %v4753 = vld [vmem:[%s4738 + $0x70] sm:$0xff]
    %v4754 = vld [vmem:[%s4738 + $0x78] sm:$0xff]
    %4755 = vmatprep.subr.mxu0 0.0
    %4756 = vmatpush1.msra.mxu0 %v4739
    %4757 = vmatprep.subr.mxu0 0.0
    %4758 = vmatpush1.msra.mxu0 %v4740
    %4759 = vmatprep.subr.mxu0 0.0
    %4760 = vmatpush1.msra.mxu0 %v4741
    %4761 = vmatprep.subr.mxu0 0.0
    %4762 = vmatpush1.msra.mxu0 %v4742
    %4763 = vmatprep.subr.mxu0 0.0
    %4764 = vmatpush1.msra.mxu0 %v4743
    %4765 = vmatprep.subr.mxu0 0.0
    %4766 = vmatpush1.msra.mxu0 %v4744
    %4767 = vmatprep.subr.mxu0 0.0
    %4768 = vmatpush1.msra.mxu0 %v4745
    %4769 = vmatprep.subr.mxu0 0.0
    %4770 = vmatpush1.msra.mxu0 %v4746
    %4771 = vmatprep.subr.mxu0 0.0
    %4772 = vmatpush1.msra.mxu0 %v4747
    %4773 = vmatprep.subr.mxu0 0.0
    %4774 = vmatpush1.msra.mxu0 %v4748
    %4775 = vmatprep.subr.mxu0 0.0
    %4776 = vmatpush1.msra.mxu0 %v4749
    %4777 = vmatprep.subr.mxu0 0.0
    %4778 = vmatpush1.msra.mxu0 %v4750
    %4779 = vmatprep.subr.mxu0 0.0
    %4780 = vmatpush1.msra.mxu0 %v4751
    %4781 = vmatprep.subr.mxu0 0.0
    %4782 = vmatpush1.msra.mxu0 %v4752
    %4783 = vmatprep.subr.mxu0 0.0
    %4784 = vmatpush1.msra.mxu0 %v4753
    %4785 = vmatprep.subr.mxu0 0.0
    %4786 = vmatpush1.msra.mxu0 %v4754
    %4787 = vmatprep.subr.mxu0 0.0
    %4788 = vmatpush1.msra.mxu0 0.0
    %4789 = vmatprep.subr.mxu0 0.0
    %4790 = vmatpush1.msra.mxu0 0.0
    %4791 = vmatprep.subr.mxu0 0.0
    %4792 = vmatpush1.msra.mxu0 0.0
    %4793 = vmatprep.subr.mxu0 0.0
    %4794 = vmatpush1.msra.mxu0 0.0
    %4795 = vmatprep.subr.mxu0 0.0
    %4796 = vmatpush1.msra.mxu0 0.0
    %4797 = vmatprep.subr.mxu0 0.0
    %4798 = vmatpush1.msra.mxu0 0.0
    %4799 = vmatprep.subr.mxu0 0.0
    %4800 = vmatpush1.msra.mxu0 0.0
    %4801 = vmatprep.subr.mxu0 0.0
    %4802 = vmatpush1.msra.mxu0 0.0
    %4803 = vmatprep.subr.mxu0 0.0
    %4804 = vmatpush1.msra.mxu0 0.0
    %4805 = vmatprep.subr.mxu0 0.0
    %4806 = vmatpush1.msra.mxu0 0.0
    %4807 = vmatprep.subr.mxu0 0.0
    %4808 = vmatpush1.msra.mxu0 0.0
    %4809 = vmatprep.subr.mxu0 0.0
    %4810 = vmatpush1.msra.mxu0 0.0
    %4811 = vmatprep.subr.mxu0 0.0
    %4812 = vmatpush1.msra.mxu0 0.0
    %4813 = vmatprep.subr.mxu0 0.0
    %4814 = vmatpush1.msra.mxu0 0.0
    %4815 = vmatprep.subr.mxu0 0.0
    %4816 = vmatpush1.msra.mxu0 0.0
    %4817 = vmatprep.subr.mxu0 0.0
    %4818 = vmatpush1.msra.mxu0 0.0
    %4819 = vmatprep.mubr.f32.mxu0 0.0
    %4820 = vmatmul.mubr.f32.gmra.mrb[0].mxu0 %v4735
    %v4821 = vpop.f32.mrb[0].mxu0
    %v4822 = vadd.f32 0.0, %v4821
    %v4823 = vpop.f32.mrb[0].mxu0
    %4824 = vdwg.mxu0
    %v4825 = vadd.f32 %v4662, %v4822
    %s4826 = scalar_lea.vmem %s11, 10
    %v4827 = vld [vmem:[%s4826] sm:$0x3]
    %v4829 = vsel %vm4015, %v4827, 0
    %4831 = vmatprep.subr.mxu0 0.0
    %4832 = vmatpush1.msra.mxu0 %v4013
    %4833 = vmatprep.subr.mxu0 0.0
    %4834 = vmatpush1.msra.mxu0 0.0
    %4835 = vmatprep.subr.mxu0 0.0
    %4836 = vmatpush1.msra.mxu0 0.0
    %4837 = vmatprep.subr.mxu0 0.0
    %4838 = vmatpush1.msra.mxu0 0.0
    %4839 = vmatprep.subr.mxu0 0.0
    %4840 = vmatpush1.msra.mxu0 0.0
    %4841 = vmatprep.subr.mxu0 0.0
    %4842 = vmatpush1.msra.mxu0 0.0
    %4843 = vmatprep.subr.mxu0 0.0
    %4844 = vmatpush1.msra.mxu0 0.0
    %4845 = vmatprep.subr.mxu0 0.0
    %4846 = vmatpush1.msra.mxu0 0.0
    %4847 = vmatprep.subr.mxu0 0.0
    %4848 = vmatpush1.msra.mxu0 0.0
    %4849 = vmatprep.subr.mxu0 0.0
    %4850 = vmatpush1.msra.mxu0 0.0
    %4851 = vmatprep.subr.mxu0 0.0
    %4852 = vmatpush1.msra.mxu0 0.0
    %4853 = vmatprep.subr.mxu0 0.0
    %4854 = vmatpush1.msra.mxu0 0.0
    %4855 = vmatprep.subr.mxu0 0.0
    %4856 = vmatpush1.msra.mxu0 0.0
    %4857 = vmatprep.subr.mxu0 0.0
    %4858 = vmatpush1.msra.mxu0 0.0
    %4859 = vmatprep.subr.mxu0 0.0
    %4860 = vmatpush1.msra.mxu0 0.0
    %4861 = vmatprep.subr.mxu0 0.0
    %4862 = vmatpush1.msra.mxu0 0.0
    %4863 = vmatprep.subr.mxu0 0.0
    %4864 = vmatpush1.msra.mxu0 0.0
    %4865 = vmatprep.subr.mxu0 0.0
    %4866 = vmatpush1.msra.mxu0 0.0
    %4867 = vmatprep.subr.mxu0 0.0
    %4868 = vmatpush1.msra.mxu0 0.0
    %4869 = vmatprep.subr.mxu0 0.0
    %4870 = vmatpush1.msra.mxu0 0.0
    %4871 = vmatprep.subr.mxu0 0.0
    %4872 = vmatpush1.msra.mxu0 0.0
    %4873 = vmatprep.subr.mxu0 0.0
    %4874 = vmatpush1.msra.mxu0 0.0
    %4875 = vmatprep.subr.mxu0 0.0
    %4876 = vmatpush1.msra.mxu0 0.0
    %4877 = vmatprep.subr.mxu0 0.0
    %4878 = vmatpush1.msra.mxu0 0.0
    %4879 = vmatprep.subr.mxu0 0.0
    %4880 = vmatpush1.msra.mxu0 0.0
    %4881 = vmatprep.subr.mxu0 0.0
    %4882 = vmatpush1.msra.mxu0 0.0
    %4883 = vmatprep.subr.mxu0 0.0
    %4884 = vmatpush1.msra.mxu0 0.0
    %4885 = vmatprep.subr.mxu0 0.0
    %4886 = vmatpush1.msra.mxu0 0.0
    %4887 = vmatprep.subr.mxu0 0.0
    %4888 = vmatpush1.msra.mxu0 0.0
    %4889 = vmatprep.subr.mxu0 0.0
    %4890 = vmatpush1.msra.mxu0 0.0
    %4891 = vmatprep.subr.mxu0 0.0
    %4892 = vmatpush1.msra.mxu0 0.0
    %4893 = vmatprep.subr.mxu0 0.0
    %4894 = vmatpush1.msra.mxu0 0.0
    %4895 = vmatprep.mubr.f32.mxu0 0.0
    %4896 = vmatmul.mubr.f32.gmra.mrb[0].mxu0 %v4829
    %v4897 = vpop.f32.mrb[0].mxu0
    %v4898 = vadd.f32 0.0, %v4897
    %v4899 = vpop.f32.mrb[0].mxu0
    %4900 = vdwg.mxu0
    %s4901 = scalar_lea.vmem %s12, 640
    %v4902 = vld [vmem:[%s4901] sm:$0xff]
    %v4903 = vld [vmem:[%s4901 + $0x8] sm:$0xff]
    %v4904 = vld [vmem:[%s4901 + $0x10] sm:$0xff]
    %v4905 = vld [vmem:[%s4901 + $0x18] sm:$0xff]
    %v4906 = vld [vmem:[%s4901 + $0x20] sm:$0xff]
    %v4907 = vld [vmem:[%s4901 + $0x28] sm:$0xff]
    %v4908 = vld [vmem:[%s4901 + $0x30] sm:$0xff]
    %v4909 = vld [vmem:[%s4901 + $0x38] sm:$0xff]
    %v4910 = vld [vmem:[%s4901 + $0x40] sm:$0xff]
    %v4911 = vld [vmem:[%s4901 + $0x48] sm:$0xff]
    %v4912 = vld [vmem:[%s4901 + $0x50] sm:$0xff]
    %v4913 = vld [vmem:[%s4901 + $0x58] sm:$0xff]
    %v4914 = vld [vmem:[%s4901 + $0x60] sm:$0xff]
    %v4915 = vld [vmem:[%s4901 + $0x68] sm:$0xff]
    %v4916 = vld [vmem:[%s4901 + $0x70] sm:$0xff]
    %v4917 = vld [vmem:[%s4901 + $0x78] sm:$0xff]
    %4918 = vmatprep.subr.mxu0 0.0
    %4919 = vmatpush1.msra.mxu0 %v4902
    %4920 = vmatprep.subr.mxu0 0.0
    %4921 = vmatpush1.msra.mxu0 %v4903
    %4922 = vmatprep.subr.mxu0 0.0
    %4923 = vmatpush1.msra.mxu0 %v4904
    %4924 = vmatprep.subr.mxu0 0.0
    %4925 = vmatpush1.msra.mxu0 %v4905
    %4926 = vmatprep.subr.mxu0 0.0
    %4927 = vmatpush1.msra.mxu0 %v4906
    %4928 = vmatprep.subr.mxu0 0.0
    %4929 = vmatpush1.msra.mxu0 %v4907
    %4930 = vmatprep.subr.mxu0 0.0
    %4931 = vmatpush1.msra.mxu0 %v4908
    %4932 = vmatprep.subr.mxu0 0.0
    %4933 = vmatpush1.msra.mxu0 %v4909
    %4934 = vmatprep.subr.mxu0 0.0
    %4935 = vmatpush1.msra.mxu0 %v4910
    %4936 = vmatprep.subr.mxu0 0.0
    %4937 = vmatpush1.msra.mxu0 %v4911
    %4938 = vmatprep.subr.mxu0 0.0
    %4939 = vmatpush1.msra.mxu0 %v4912
    %4940 = vmatprep.subr.mxu0 0.0
    %4941 = vmatpush1.msra.mxu0 %v4913
    %4942 = vmatprep.subr.mxu0 0.0
    %4943 = vmatpush1.msra.mxu0 %v4914
    %4944 = vmatprep.subr.mxu0 0.0
    %4945 = vmatpush1.msra.mxu0 %v4915
    %4946 = vmatprep.subr.mxu0 0.0
    %4947 = vmatpush1.msra.mxu0 %v4916
    %4948 = vmatprep.subr.mxu0 0.0
    %4949 = vmatpush1.msra.mxu0 %v4917
    %4950 = vmatprep.subr.mxu0 0.0
    %4951 = vmatpush1.msra.mxu0 0.0
    %4952 = vmatprep.subr.mxu0 0.0
    %4953 = vmatpush1.msra.mxu0 0.0
    %4954 = vmatprep.subr.mxu0 0.0
    %4955 = vmatpush1.msra.mxu0 0.0
    %4956 = vmatprep.subr.mxu0 0.0
    %4957 = vmatpush1.msra.mxu0 0.0
    %4958 = vmatprep.subr.mxu0 0.0
    %4959 = vmatpush1.msra.mxu0 0.0
    %4960 = vmatprep.subr.mxu0 0.0
    %4961 = vmatpush1.msra.mxu0 0.0
    %4962 = vmatprep.subr.mxu0 0.0
    %4963 = vmatpush1.msra.mxu0 0.0
    %4964 = vmatprep.subr.mxu0 0.0
    %4965 = vmatpush1.msra.mxu0 0.0
    %4966 = vmatprep.subr.mxu0 0.0
    %4967 = vmatpush1.msra.mxu0 0.0
    %4968 = vmatprep.subr.mxu0 0.0
    %4969 = vmatpush1.msra.mxu0 0.0
    %4970 = vmatprep.subr.mxu0 0.0
    %4971 = vmatpush1.msra.mxu0 0.0
    %4972 = vmatprep.subr.mxu0 0.0
    %4973 = vmatpush1.msra.mxu0 0.0
    %4974 = vmatprep.subr.mxu0 0.0
    %4975 = vmatpush1.msra.mxu0 0.0
    %4976 = vmatprep.subr.mxu0 0.0
    %4977 = vmatpush1.msra.mxu0 0.0
    %4978 = vmatprep.subr.mxu0 0.0
    %4979 = vmatpush1.msra.mxu0 0.0
    %4980 = vmatprep.subr.mxu0 0.0
    %4981 = vmatpush1.msra.mxu0 0.0
    %4982 = vmatprep.mubr.f32.mxu0 0.0
    %4983 = vmatmul.mubr.f32.gmra.mrb[0].mxu0 %v4898
    %v4984 = vpop.f32.mrb[0].mxu0
    %v4985 = vadd.f32 0.0, %v4984
    %v4986 = vpop.f32.mrb[0].mxu0
    %4987 = vdwg.mxu0
    %v4988 = vadd.f32 %v4825, %v4985
    %s4989 = scalar_lea.vmem %s11, 12
    %v4990 = vld [vmem:[%s4989] sm:$0x3]
    %v4992 = vsel %vm4015, %v4990, 0
    %4994 = vmatprep.subr.mxu0 0.0
    %4995 = vmatpush1.msra.mxu0 %v4013
    %4996 = vmatprep.subr.mxu0 0.0
    %4997 = vmatpush1.msra.mxu0 0.0
    %4998 = vmatprep.subr.mxu0 0.0
    %4999 = vmatpush1.msra.mxu0 0.0
    %5000 = vmatprep.subr.mxu0 0.0
    %5001 = vmatpush1.msra.mxu0 0.0
    %5002 = vmatprep.subr.mxu0 0.0
    %5003 = vmatpush1.msra.mxu0 0.0
    %5004 = vmatprep.subr.mxu0 0.0
    %5005 = vmatpush1.msra.mxu0 0.0
    %5006 = vmatprep.subr.mxu0 0.0
    %5007 = vmatpush1.msra.mxu0 0.0
    %5008 = vmatprep.subr.mxu0 0.0
    %5009 = vmatpush1.msra.mxu0 0.0
    %5010 = vmatprep.subr.mxu0 0.0
    %5011 = vmatpush1.msra.mxu0 0.0
    %5012 = vmatprep.subr.mxu0 0.0
    %5013 = vmatpush1.msra.mxu0 0.0
    %5014 = vmatprep.subr.mxu0 0.0
    %5015 = vmatpush1.msra.mxu0 0.0
    %5016 = vmatprep.subr.mxu0 0.0
    %5017 = vmatpush1.msra.mxu0 0.0
    %5018 = vmatprep.subr.mxu0 0.0
    %5019 = vmatpush1.msra.mxu0 0.0
    %5020 = vmatprep.subr.mxu0 0.0
    %5021 = vmatpush1.msra.mxu0 0.0
    %5022 = vmatprep.subr.mxu0 0.0
    %5023 = vmatpush1.msra.mxu0 0.0
    %5024 = vmatprep.subr.mxu0 0.0
    %5025 = vmatpush1.msra.mxu0 0.0
    %5026 = vmatprep.subr.mxu0 0.0
    %5027 = vmatpush1.msra.mxu0 0.0
    %5028 = vmatprep.subr.mxu0 0.0
    %5029 = vmatpush1.msra.mxu0 0.0
    %5030 = vmatprep.subr.mxu0 0.0
    %5031 = vmatpush1.msra.mxu0 0.0
    %5032 = vmatprep.subr.mxu0 0.0
    %5033 = vmatpush1.msra.mxu0 0.0
    %5034 = vmatprep.subr.mxu0 0.0
    %5035 = vmatpush1.msra.mxu0 0.0
    %5036 = vmatprep.subr.mxu0 0.0
    %5037 = vmatpush1.msra.mxu0 0.0
    %5038 = vmatprep.subr.mxu0 0.0
    %5039 = vmatpush1.msra.mxu0 0.0
    %5040 = vmatprep.subr.mxu0 0.0
    %5041 = vmatpush1.msra.mxu0 0.0
    %5042 = vmatprep.subr.mxu0 0.0
    %5043 = vmatpush1.msra.mxu0 0.0
    %5044 = vmatprep.subr.mxu0 0.0
    %5045 = vmatpush1.msra.mxu0 0.0
    %5046 = vmatprep.subr.mxu0 0.0
    %5047 = vmatpush1.msra.mxu0 0.0
    %5048 = vmatprep.subr.mxu0 0.0
    %5049 = vmatpush1.msra.mxu0 0.0
    %5050 = vmatprep.subr.mxu0 0.0
    %5051 = vmatpush1.msra.mxu0 0.0
    %5052 = vmatprep.subr.mxu0 0.0
    %5053 = vmatpush1.msra.mxu0 0.0
    %5054 = vmatprep.subr.mxu0 0.0
    %5055 = vmatpush1.msra.mxu0 0.0
    %5056 = vmatprep.subr.mxu0 0.0
    %5057 = vmatpush1.msra.mxu0 0.0
    %5058 = vmatprep.mubr.f32.mxu0 0.0
    %5059 = vmatmul.mubr.f32.gmra.mrb[0].mxu0 %v4992
    %v5060 = vpop.f32.mrb[0].mxu0
    %v5061 = vadd.f32 0.0, %v5060
    %v5062 = vpop.f32.mrb[0].mxu0
    %5063 = vdwg.mxu0
    %s5064 = scalar_lea.vmem %s12, 768
    %v5065 = vld [vmem:[%s5064] sm:$0xff]
    %v5066 = vld [vmem:[%s5064 + $0x8] sm:$0xff]
    %v5067 = vld [vmem:[%s5064 + $0x10] sm:$0xff]
    %v5068 = vld [vmem:[%s5064 + $0x18] sm:$0xff]
    %v5069 = vld [vmem:[%s5064 + $0x20] sm:$0xff]
    %v5070 = vld [vmem:[%s5064 + $0x28] sm:$0xff]
    %v5071 = vld [vmem:[%s5064 + $0x30] sm:$0xff]
    %v5072 = vld [vmem:[%s5064 + $0x38] sm:$0xff]
    %v5073 = vld [vmem:[%s5064 + $0x40] sm:$0xff]
    %v5074 = vld [vmem:[%s5064 + $0x48] sm:$0xff]
    %v5075 = vld [vmem:[%s5064 + $0x50] sm:$0xff]
    %v5076 = vld [vmem:[%s5064 + $0x58] sm:$0xff]
    %v5077 = vld [vmem:[%s5064 + $0x60] sm:$0xff]
    %v5078 = vld [vmem:[%s5064 + $0x68] sm:$0xff]
    %v5079 = vld [vmem:[%s5064 + $0x70] sm:$0xff]
    %v5080 = vld [vmem:[%s5064 + $0x78] sm:$0xff]
    %5081 = vmatprep.subr.mxu0 0.0
    %5082 = vmatpush1.msra.mxu0 %v5065
    %5083 = vmatprep.subr.mxu0 0.0
    %5084 = vmatpush1.msra.mxu0 %v5066
    %5085 = vmatprep.subr.mxu0 0.0
    %5086 = vmatpush1.msra.mxu0 %v5067
    %5087 = vmatprep.subr.mxu0 0.0
    %5088 = vmatpush1.msra.mxu0 %v5068
    %5089 = vmatprep.subr.mxu0 0.0
    %5090 = vmatpush1.msra.mxu0 %v5069
    %5091 = vmatprep.subr.mxu0 0.0
    %5092 = vmatpush1.msra.mxu0 %v5070
    %5093 = vmatprep.subr.mxu0 0.0
    %5094 = vmatpush1.msra.mxu0 %v5071
    %5095 = vmatprep.subr.mxu0 0.0
    %5096 = vmatpush1.msra.mxu0 %v5072
    %5097 = vmatprep.subr.mxu0 0.0
    %5098 = vmatpush1.msra.mxu0 %v5073
    %5099 = vmatprep.subr.mxu0 0.0
    %5100 = vmatpush1.msra.mxu0 %v5074
    %5101 = vmatprep.subr.mxu0 0.0
    %5102 = vmatpush1.msra.mxu0 %v5075
    %5103 = vmatprep.subr.mxu0 0.0
    %5104 = vmatpush1.msra.mxu0 %v5076
    %5105 = vmatprep.subr.mxu0 0.0
    %5106 = vmatpush1.msra.mxu0 %v5077
    %5107 = vmatprep.subr.mxu0 0.0
    %5108 = vmatpush1.msra.mxu0 %v5078
    %5109 = vmatprep.subr.mxu0 0.0
    %5110 = vmatpush1.msra.mxu0 %v5079
    %5111 = vmatprep.subr.mxu0 0.0
    %5112 = vmatpush1.msra.mxu0 %v5080
    %5113 = vmatprep.subr.mxu0 0.0
    %5114 = vmatpush1.msra.mxu0 0.0
    %5115 = vmatprep.subr.mxu0 0.0
    %5116 = vmatpush1.msra.mxu0 0.0
    %5117 = vmatprep.subr.mxu0 0.0
    %5118 = vmatpush1.msra.mxu0 0.0
    %5119 = vmatprep.subr.mxu0 0.0
    %5120 = vmatpush1.msra.mxu0 0.0
    %5121 = vmatprep.subr.mxu0 0.0
    %5122 = vmatpush1.msra.mxu0 0.0
    %5123 = vmatprep.subr.mxu0 0.0
    %5124 = vmatpush1.msra.mxu0 0.0
    %5125 = vmatprep.subr.mxu0 0.0
    %5126 = vmatpush1.msra.mxu0 0.0
    %5127 = vmatprep.subr.mxu0 0.0
    %5128 = vmatpush1.msra.mxu0 0.0
    %5129 = vmatprep.subr.mxu0 0.0
    %5130 = vmatpush1.msra.mxu0 0.0
    %5131 = vmatprep.subr.mxu0 0.0
    %5132 = vmatpush1.msra.mxu0 0.0
    %5133 = vmatprep.subr.mxu0 0.0
    %5134 = vmatpush1.msra.mxu0 0.0
    %5135 = vmatprep.subr.mxu0 0.0
    %5136 = vmatpush1.msra.mxu0 0.0
    %5137 = vmatprep.subr.mxu0 0.0
    %5138 = vmatpush1.msra.mxu0 0.0
    %5139 = vmatprep.subr.mxu0 0.0
    %5140 = vmatpush1.msra.mxu0 0.0
    %5141 = vmatprep.subr.mxu0 0.0
    %5142 = vmatpush1.msra.mxu0 0.0
    %5143 = vmatprep.subr.mxu0 0.0
    %5144 = vmatpush1.msra.mxu0 0.0
    %5145 = vmatprep.mubr.f32.mxu0 0.0
    %5146 = vmatmul.mubr.f32.gmra.mrb[0].mxu0 %v5061
    %v5147 = vpop.f32.mrb[0].mxu0
    %v5148 = vadd.f32 0.0, %v5147
    %v5149 = vpop.f32.mrb[0].mxu0
    %5150 = vdwg.mxu0
    %v5151 = vadd.f32 %v4988, %v5148
    %s5152 = scalar_lea.vmem %s11, 14
    %v5153 = vld [vmem:[%s5152] sm:$0x3]
    %v5155 = vsel %vm4015, %v5153, 0
    %5157 = vmatprep.subr.mxu0 0.0
    %5158 = vmatpush1.msra.mxu0 %v4013
    %5159 = vmatprep.subr.mxu0 0.0
    %5160 = vmatpush1.msra.mxu0 0.0
    %5161 = vmatprep.subr.mxu0 0.0
    %5162 = vmatpush1.msra.mxu0 0.0
    %5163 = vmatprep.subr.mxu0 0.0
    %5164 = vmatpush1.msra.mxu0 0.0
    %5165 = vmatprep.subr.mxu0 0.0
    %5166 = vmatpush1.msra.mxu0 0.0
    %5167 = vmatprep.subr.mxu0 0.0
    %5168 = vmatpush1.msra.mxu0 0.0
    %5169 = vmatprep.subr.mxu0 0.0
    %5170 = vmatpush1.msra.mxu0 0.0
    %5171 = vmatprep.subr.mxu0 0.0
    %5172 = vmatpush1.msra.mxu0 0.0
    %5173 = vmatprep.subr.mxu0 0.0
    %5174 = vmatpush1.msra.mxu0 0.0
    %5175 = vmatprep.subr.mxu0 0.0
    %5176 = vmatpush1.msra.mxu0 0.0
    %5177 = vmatprep.subr.mxu0 0.0
    %5178 = vmatpush1.msra.mxu0 0.0
    %5179 = vmatprep.subr.mxu0 0.0
    %5180 = vmatpush1.msra.mxu0 0.0
    %5181 = vmatprep.subr.mxu0 0.0
    %5182 = vmatpush1.msra.mxu0 0.0
    %5183 = vmatprep.subr.mxu0 0.0
    %5184 = vmatpush1.msra.mxu0 0.0
    %5185 = vmatprep.subr.mxu0 0.0
    %5186 = vmatpush1.msra.mxu0 0.0
    %5187 = vmatprep.subr.mxu0 0.0
    %5188 = vmatpush1.msra.mxu0 0.0
    %5189 = vmatprep.subr.mxu0 0.0
    %5190 = vmatpush1.msra.mxu0 0.0
    %5191 = vmatprep.subr.mxu0 0.0
    %5192 = vmatpush1.msra.mxu0 0.0
    %5193 = vmatprep.subr.mxu0 0.0
    %5194 = vmatpush1.msra.mxu0 0.0
    %5195 = vmatprep.subr.mxu0 0.0
    %5196 = vmatpush1.msra.mxu0 0.0
    %5197 = vmatprep.subr.mxu0 0.0
    %5198 = vmatpush1.msra.mxu0 0.0
    %5199 = vmatprep.subr.mxu0 0.0
    %5200 = vmatpush1.msra.mxu0 0.0
    %5201 = vmatprep.subr.mxu0 0.0
    %5202 = vmatpush1.msra.mxu0 0.0
    %5203 = vmatprep.subr.mxu0 0.0
    %5204 = vmatpush1.msra.mxu0 0.0
    %5205 = vmatprep.subr.mxu0 0.0
    %5206 = vmatpush1.msra.mxu0 0.0
    %5207 = vmatprep.subr.mxu0 0.0
    %5208 = vmatpush1.msra.mxu0 0.0
    %5209 = vmatprep.subr.mxu0 0.0
    %5210 = vmatpush1.msra.mxu0 0.0
    %5211 = vmatprep.subr.mxu0 0.0
    %5212 = vmatpush1.msra.mxu0 0.0
    %5213 = vmatprep.subr.mxu0 0.0
    %5214 = vmatpush1.msra.mxu0 0.0
    %5215 = vmatprep.subr.mxu0 0.0
    %5216 = vmatpush1.msra.mxu0 0.0
    %5217 = vmatprep.subr.mxu0 0.0
    %5218 = vmatpush1.msra.mxu0 0.0
    %5219 = vmatprep.subr.mxu0 0.0
    %5220 = vmatpush1.msra.mxu0 0.0
    %5221 = vmatprep.mubr.f32.mxu0 0.0
    %5222 = vmatmul.mubr.f32.gmra.mrb[0].mxu0 %v5155
    %v5223 = vpop.f32.mrb[0].mxu0
    %v5224 = vadd.f32 0.0, %v5223
    %v5225 = vpop.f32.mrb[0].mxu0
    %5226 = vdwg.mxu0
    %s5227 = scalar_lea.vmem %s12, 896
    %v5228 = vld [vmem:[%s5227] sm:$0xff]
    %v5229 = vld [vmem:[%s5227 + $0x8] sm:$0xff]
    %v5230 = vld [vmem:[%s5227 + $0x10] sm:$0xff]
    %v5231 = vld [vmem:[%s5227 + $0x18] sm:$0xff]
    %v5232 = vld [vmem:[%s5227 + $0x20] sm:$0xff]
    %v5233 = vld [vmem:[%s5227 + $0x28] sm:$0xff]
    %v5234 = vld [vmem:[%s5227 + $0x30] sm:$0xff]
    %v5235 = vld [vmem:[%s5227 + $0x38] sm:$0xff]
    %v5236 = vld [vmem:[%s5227 + $0x40] sm:$0xff]
    %v5237 = vld [vmem:[%s5227 + $0x48] sm:$0xff]
    %v5238 = vld [vmem:[%s5227 + $0x50] sm:$0xff]
    %v5239 = vld [vmem:[%s5227 + $0x58] sm:$0xff]
    %v5240 = vld [vmem:[%s5227 + $0x60] sm:$0xff]
    %v5241 = vld [vmem:[%s5227 + $0x68] sm:$0xff]
    %v5242 = vld [vmem:[%s5227 + $0x70] sm:$0xff]
    %v5243 = vld [vmem:[%s5227 + $0x78] sm:$0xff]
    %5244 = vmatprep.subr.mxu0 0.0
    %5245 = vmatpush1.msra.mxu0 %v5228
    %5246 = vmatprep.subr.mxu0 0.0
    %5247 = vmatpush1.msra.mxu0 %v5229
    %5248 = vmatprep.subr.mxu0 0.0
    %5249 = vmatpush1.msra.mxu0 %v5230
    %5250 = vmatprep.subr.mxu0 0.0
    %5251 = vmatpush1.msra.mxu0 %v5231
    %5252 = vmatprep.subr.mxu0 0.0
    %5253 = vmatpush1.msra.mxu0 %v5232
    %5254 = vmatprep.subr.mxu0 0.0
    %5255 = vmatpush1.msra.mxu0 %v5233
    %5256 = vmatprep.subr.mxu0 0.0
    %5257 = vmatpush1.msra.mxu0 %v5234
    %5258 = vmatprep.subr.mxu0 0.0
    %5259 = vmatpush1.msra.mxu0 %v5235
    %5260 = vmatprep.subr.mxu0 0.0
    %5261 = vmatpush1.msra.mxu0 %v5236
    %5262 = vmatprep.subr.mxu0 0.0
    %5263 = vmatpush1.msra.mxu0 %v5237
    %5264 = vmatprep.subr.mxu0 0.0
    %5265 = vmatpush1.msra.mxu0 %v5238
    %5266 = vmatprep.subr.mxu0 0.0
    %5267 = vmatpush1.msra.mxu0 %v5239
    %5268 = vmatprep.subr.mxu0 0.0
    %5269 = vmatpush1.msra.mxu0 %v5240
    %5270 = vmatprep.subr.mxu0 0.0
    %5271 = vmatpush1.msra.mxu0 %v5241
    %5272 = vmatprep.subr.mxu0 0.0
    %5273 = vmatpush1.msra.mxu0 %v5242
    %5274 = vmatprep.subr.mxu0 0.0
    %5275 = vmatpush1.msra.mxu0 %v5243
    %5276 = vmatprep.subr.mxu0 0.0
    %5277 = vmatpush1.msra.mxu0 0.0
    %5278 = vmatprep.subr.mxu0 0.0
    %5279 = vmatpush1.msra.mxu0 0.0
    %5280 = vmatprep.subr.mxu0 0.0
    %5281 = vmatpush1.msra.mxu0 0.0
    %5282 = vmatprep.subr.mxu0 0.0
    %5283 = vmatpush1.msra.mxu0 0.0
    %5284 = vmatprep.subr.mxu0 0.0
    %5285 = vmatpush1.msra.mxu0 0.0
    %5286 = vmatprep.subr.mxu0 0.0
    %5287 = vmatpush1.msra.mxu0 0.0
    %5288 = vmatprep.subr.mxu0 0.0
    %5289 = vmatpush1.msra.mxu0 0.0
    %5290 = vmatprep.subr.mxu0 0.0
    %5291 = vmatpush1.msra.mxu0 0.0
    %5292 = vmatprep.subr.mxu0 0.0
    %5293 = vmatpush1.msra.mxu0 0.0
    %5294 = vmatprep.subr.mxu0 0.0
    %5295 = vmatpush1.msra.mxu0 0.0
    %5296 = vmatprep.subr.mxu0 0.0
    %5297 = vmatpush1.msra.mxu0 0.0
    %5298 = vmatprep.subr.mxu0 0.0
    %5299 = vmatpush1.msra.mxu0 0.0
    %5300 = vmatprep.subr.mxu0 0.0
    %5301 = vmatpush1.msra.mxu0 0.0
    %5302 = vmatprep.subr.mxu0 0.0
    %5303 = vmatpush1.msra.mxu0 0.0
    %5304 = vmatprep.subr.mxu0 0.0
    %5305 = vmatpush1.msra.mxu0 0.0
    %5306 = vmatprep.subr.mxu0 0.0
    %5307 = vmatpush1.msra.mxu0 0.0
    %5308 = vmatprep.mubr.f32.mxu0 0.0
    %5309 = vmatmul.mubr.f32.gmra.mrb[0].mxu0 %v5224
    %v5310 = vpop.f32.mrb[0].mxu0
    %v5311 = vadd.f32 0.0, %v5310
    %v5312 = vpop.f32.mrb[0].mxu0
    %5313 = vdwg.mxu0
    %v5314 = vadd.f32 %v5151, %v5311
    %s5315 = scalar_lea.vmem %s11, 16
    %v5316 = vld [vmem:[%s5315] sm:$0x3]
    %v5318 = vsel %vm4015, %v5316, 0
    %5320 = vmatprep.subr.mxu0 0.0
    %5321 = vmatpush1.msra.mxu0 %v4013
    %5322 = vmatprep.subr.mxu0 0.0
    %5323 = vmatpush1.msra.mxu0 0.0
    %5324 = vmatprep.subr.mxu0 0.0
    %5325 = vmatpush1.msra.mxu0 0.0
    %5326 = vmatprep.subr.mxu0 0.0
    %5327 = vmatpush1.msra.mxu0 0.0
    %5328 = vmatprep.subr.mxu0 0.0
    %5329 = vmatpush1.msra.mxu0 0.0
    %5330 = vmatprep.subr.mxu0 0.0
    %5331 = vmatpush1.msra.mxu0 0.0
    %5332 = vmatprep.subr.mxu0 0.0
    %5333 = vmatpush1.msra.mxu0 0.0
    %5334 = vmatprep.subr.mxu0 0.0
    %5335 = vmatpush1.msra.mxu0 0.0
    %5336 = vmatprep.subr.mxu0 0.0
    %5337 = vmatpush1.msra.mxu0 0.0
    %5338 = vmatprep.subr.mxu0 0.0
    %5339 = vmatpush1.msra.mxu0 0.0
    %5340 = vmatprep.subr.mxu0 0.0
    %5341 = vmatpush1.msra.mxu0 0.0
    %5342 = vmatprep.subr.mxu0 0.0
    %5343 = vmatpush1.msra.mxu0 0.0
    %5344 = vmatprep.subr.mxu0 0.0
    %5345 = vmatpush1.msra.mxu0 0.0
    %5346 = vmatprep.subr.mxu0 0.0
    %5347 = vmatpush1.msra.mxu0 0.0
    %5348 = vmatprep.subr.mxu0 0.0
    %5349 = vmatpush1.msra.mxu0 0.0
    %5350 = vmatprep.subr.mxu0 0.0
    %5351 = vmatpush1.msra.mxu0 0.0
    %5352 = vmatprep.subr.mxu0 0.0
    %5353 = vmatpush1.msra.mxu0 0.0
    %5354 = vmatprep.subr.mxu0 0.0
    %5355 = vmatpush1.msra.mxu0 0.0
    %5356 = vmatprep.subr.mxu0 0.0
    %5357 = vmatpush1.msra.mxu0 0.0
    %5358 = vmatprep.subr.mxu0 0.0
    %5359 = vmatpush1.msra.mxu0 0.0
    %5360 = vmatprep.subr.mxu0 0.0
    %5361 = vmatpush1.msra.mxu0 0.0
    %5362 = vmatprep.subr.mxu0 0.0
    %5363 = vmatpush1.msra.mxu0 0.0
    %5364 = vmatprep.subr.mxu0 0.0
    %5365 = vmatpush1.msra.mxu0 0.0
    %5366 = vmatprep.subr.mxu0 0.0
    %5367 = vmatpush1.msra.mxu0 0.0
    %5368 = vmatprep.subr.mxu0 0.0
    %5369 = vmatpush1.msra.mxu0 0.0
    %5370 = vmatprep.subr.mxu0 0.0
    %5371 = vmatpush1.msra.mxu0 0.0
    %5372 = vmatprep.subr.mxu0 0.0
    %5373 = vmatpush1.msra.mxu0 0.0
    %5374 = vmatprep.subr.mxu0 0.0
    %5375 = vmatpush1.msra.mxu0 0.0
    %5376 = vmatprep.subr.mxu0 0.0
    %5377 = vmatpush1.msra.mxu0 0.0
    %5378 = vmatprep.subr.mxu0 0.0
    %5379 = vmatpush1.msra.mxu0 0.0
    %5380 = vmatprep.subr.mxu0 0.0
    %5381 = vmatpush1.msra.mxu0 0.0
    %5382 = vmatprep.subr.mxu0 0.0
    %5383 = vmatpush1.msra.mxu0 0.0
    %5384 = vmatprep.mubr.f32.mxu0 0.0
    %5385 = vmatmul.mubr.f32.gmra.mrb[0].mxu0 %v5318
    %v5386 = vpop.f32.mrb[0].mxu0
    %v5387 = vadd.f32 0.0, %v5386
    %v5388 = vpop.f32.mrb[0].mxu0
    %5389 = vdwg.mxu0
    %s5390 = scalar_lea.vmem %s12, 1024
    %v5391 = vld [vmem:[%s5390] sm:$0xff]
    %v5392 = vld [vmem:[%s5390 + $0x8] sm:$0xff]
    %v5393 = vld [vmem:[%s5390 + $0x10] sm:$0xff]
    %v5394 = vld [vmem:[%s5390 + $0x18] sm:$0xff]
    %v5395 = vld [vmem:[%s5390 + $0x20] sm:$0xff]
    %v5396 = vld [vmem:[%s5390 + $0x28] sm:$0xff]
    %v5397 = vld [vmem:[%s5390 + $0x30] sm:$0xff]
    %v5398 = vld [vmem:[%s5390 + $0x38] sm:$0xff]
    %v5399 = vld [vmem:[%s5390 + $0x40] sm:$0xff]
    %v5400 = vld [vmem:[%s5390 + $0x48] sm:$0xff]
    %v5401 = vld [vmem:[%s5390 + $0x50] sm:$0xff]
    %v5402 = vld [vmem:[%s5390 + $0x58] sm:$0xff]
    %v5403 = vld [vmem:[%s5390 + $0x60] sm:$0xff]
    %v5404 = vld [vmem:[%s5390 + $0x68] sm:$0xff]
    %v5405 = vld [vmem:[%s5390 + $0x70] sm:$0xff]
    %v5406 = vld [vmem:[%s5390 + $0x78] sm:$0xff]
    %5407 = vmatprep.subr.mxu0 0.0
    %5408 = vmatpush1.msra.mxu0 %v5391
    %5409 = vmatprep.subr.mxu0 0.0
    %5410 = vmatpush1.msra.mxu0 %v5392
    %5411 = vmatprep.subr.mxu0 0.0
    %5412 = vmatpush1.msra.mxu0 %v5393
    %5413 = vmatprep.subr.mxu0 0.0
    %5414 = vmatpush1.msra.mxu0 %v5394
    %5415 = vmatprep.subr.mxu0 0.0
    %5416 = vmatpush1.msra.mxu0 %v5395
    %5417 = vmatprep.subr.mxu0 0.0
    %5418 = vmatpush1.msra.mxu0 %v5396
    %5419 = vmatprep.subr.mxu0 0.0
    %5420 = vmatpush1.msra.mxu0 %v5397
    %5421 = vmatprep.subr.mxu0 0.0
    %5422 = vmatpush1.msra.mxu0 %v5398
    %5423 = vmatprep.subr.mxu0 0.0
    %5424 = vmatpush1.msra.mxu0 %v5399
    %5425 = vmatprep.subr.mxu0 0.0
    %5426 = vmatpush1.msra.mxu0 %v5400
    %5427 = vmatprep.subr.mxu0 0.0
    %5428 = vmatpush1.msra.mxu0 %v5401
    %5429 = vmatprep.subr.mxu0 0.0
    %5430 = vmatpush1.msra.mxu0 %v5402
    %5431 = vmatprep.subr.mxu0 0.0
    %5432 = vmatpush1.msra.mxu0 %v5403
    %5433 = vmatprep.subr.mxu0 0.0
    %5434 = vmatpush1.msra.mxu0 %v5404
    %5435 = vmatprep.subr.mxu0 0.0
    %5436 = vmatpush1.msra.mxu0 %v5405
    %5437 = vmatprep.subr.mxu0 0.0
    %5438 = vmatpush1.msra.mxu0 %v5406
    %5439 = vmatprep.subr.mxu0 0.0
    %5440 = vmatpush1.msra.mxu0 0.0
    %5441 = vmatprep.subr.mxu0 0.0
    %5442 = vmatpush1.msra.mxu0 0.0
    %5443 = vmatprep.subr.mxu0 0.0
    %5444 = vmatpush1.msra.mxu0 0.0
    %5445 = vmatprep.subr.mxu0 0.0
    %5446 = vmatpush1.msra.mxu0 0.0
    %5447 = vmatprep.subr.mxu0 0.0
    %5448 = vmatpush1.msra.mxu0 0.0
    %5449 = vmatprep.subr.mxu0 0.0
    %5450 = vmatpush1.msra.mxu0 0.0
    %5451 = vmatprep.subr.mxu0 0.0
    %5452 = vmatpush1.msra.mxu0 0.0
    %5453 = vmatprep.subr.mxu0 0.0
    %5454 = vmatpush1.msra.mxu0 0.0
    %5455 = vmatprep.subr.mxu0 0.0
    %5456 = vmatpush1.msra.mxu0 0.0
    %5457 = vmatprep.subr.mxu0 0.0
    %5458 = vmatpush1.msra.mxu0 0.0
    %5459 = vmatprep.subr.mxu0 0.0
    %5460 = vmatpush1.msra.mxu0 0.0
    %5461 = vmatprep.subr.mxu0 0.0
    %5462 = vmatpush1.msra.mxu0 0.0
    %5463 = vmatprep.subr.mxu0 0.0
    %5464 = vmatpush1.msra.mxu0 0.0
    %5465 = vmatprep.subr.mxu0 0.0
    %5466 = vmatpush1.msra.mxu0 0.0
    %5467 = vmatprep.subr.mxu0 0.0
    %5468 = vmatpush1.msra.mxu0 0.0
    %5469 = vmatprep.subr.mxu0 0.0
    %5470 = vmatpush1.msra.mxu0 0.0
    %5471 = vmatprep.mubr.f32.mxu0 0.0
    %5472 = vmatmul.mubr.f32.gmra.mrb[0].mxu0 %v5387
    %v5473 = vpop.f32.mrb[0].mxu0
    %v5474 = vadd.f32 0.0, %v5473
    %v5475 = vpop.f32.mrb[0].mxu0
    %5476 = vdwg.mxu0
    %v5477 = vadd.f32 %v5314, %v5474
    %v5478 = vld [vmem:[%s13] sm:$0x1]
    %v5479 = vlaneseq
    %v5480 = vshrl.u32 %v5479, 7
    %v5481 = vsub.s32 0, %v5480
    %v5482 = vrot.slane %v5478, %v5481
    %v5483 = vadd.f32 %v5477, %v5482
    %vm5484 = vcmp.ge.f32.partialorder %v5483, 0.0
    %v5485 = vmul.f32 %v5483, 0.2
    %v5486 = vsel %vm5484, %v5483, %v5485
    %vm5487 = vcmask 1041408
    %v5488 = vsel %vm5487, %v5486, 0.0
    %v5489 = vrot.slane %v5488, 4
    %v5490 = vadd.f32 %v5488, %v5489
    %v5491 = vrot.slane %v5490, 2
    %v5492 = vadd.f32 %v5490, %v5491
    %v5493 = vrot.slane %v5492, 1
    %v5494 = vadd.f32 %v5492, %v5493
    %v5495 = vmul.f32 %v5486, %v5486
    %v5496 = vsel %vm5487, %v5495, 0.0
    %v5497 = vrot.slane %v5496, 4
    %v5498 = vadd.f32 %v5496, %v5497
    %v5499 = vrot.slane %v5498, 2
    %v5500 = vadd.f32 %v5498, %v5499
    %v5501 = vrot.slane %v5500, 1
    %v5502 = vadd.f32 %v5500, %v5501
    %v5503 = vmul.f32 %v5494, 0.5
    %v5504 = vmul.f32 %v5502, 0.5
    %v5505 = vmul.f32 %v5503, %v5503
    %v5506 = vsub.f32 %v5504, %v5505
    %v5507 = vld [vmem:[%s13 + $0x1] sm:$0x1]
    %v5508 = vadd.f32 %v5506, 0.8
    %v5509 = vrsqrt.pop %v5508
    %v5510 = vmul.f32 %v5507, %v5509
    %v5511 = vld [vmem:[%s13 + $0x2] sm:$0x1]
    %v5512 = vmul.f32 %v5503, %v5510
    %v5513 = vsub.f32 %v5511, %v5512
    %v5514 = vlaneseq
    %v5515 = vshrl.u32 %v5514, 7
    %v5516 = vsub.s32 0, %v5515
    %v5517 = vrot.slane %v5510, %v5516
    %v5518 = vmul.f32 %v5486, %v5517
    %v5519 = vlaneseq
    %v5520 = vshrl.u32 %v5519, 7
    %v5521 = vsub.s32 0, %v5520
    %v5522 = vrot.slane %v5513, %v5521
    %v5523 = vadd.f32 %v5518, %v5522
    %v5524 = vld [vmem:[%s14] sm:$0xff]
    %v5525 = vld [vmem:[%s14 + $0x8] sm:$0xff]
    %v5526 = vld [vmem:[%s14 + $0x10] sm:$0xff]
    %v5527 = vld [vmem:[%s14 + $0x18] sm:$0xff]
    %v5528 = vld [vmem:[%s14 + $0x20] sm:$0xff]
    %v5529 = vld [vmem:[%s14 + $0x28] sm:$0xff]
    %v5530 = vld [vmem:[%s14 + $0x30] sm:$0xff]
    %v5531 = vld [vmem:[%s14 + $0x38] sm:$0xff]
    %v5532 = vld [vmem:[%s14 + $0x40] sm:$0xff]
    %v5533 = vld [vmem:[%s14 + $0x48] sm:$0xff]
    %v5534 = vld [vmem:[%s14 + $0x50] sm:$0xff]
    %v5535 = vld [vmem:[%s14 + $0x58] sm:$0xff]
    %v5536 = vld [vmem:[%s14 + $0x60] sm:$0xff]
    %v5537 = vld [vmem:[%s14 + $0x68] sm:$0xff]
    %v5538 = vld [vmem:[%s14 + $0x70] sm:$0xff]
    %v5539 = vld [vmem:[%s14 + $0x78] sm:$0xff]
    %v5540 = vld [vmem:[#allocation2] sm:$0x1]
    %v5542 = vlaneseq
    %v5543 = vshrl.u32 %v5542, 7
    %v5544 = vsub.s32 0, %v5543
    %v5545 = vrot.slane %v5540, %v5544
    %5547 = vmatprep.subr.mxu0 0.0
    %5548 = vmatpush1.msra.mxu0 %v5524
    %5549 = vmatprep.subr.mxu0 0.0
    %5550 = vmatpush1.msra.mxu0 %v5525
    %5551 = vmatprep.subr.mxu0 0.0
    %5552 = vmatpush1.msra.mxu0 %v5526
    %5553 = vmatprep.subr.mxu0 0.0
    %5554 = vmatpush1.msra.mxu0 %v5527
    %5555 = vmatprep.subr.mxu0 0.0
    %5556 = vmatpush1.msra.mxu0 %v5528
    %5557 = vmatprep.subr.mxu0 0.0
    %5558 = vmatpush1.msra.mxu0 %v5529
    %5559 = vmatprep.subr.mxu0 0.0
    %5560 = vmatpush1.msra.mxu0 %v5530
    %5561 = vmatprep.subr.mxu0 0.0
    %5562 = vmatpush1.msra.mxu0 %v5531
    %5563 = vmatprep.subr.mxu0 0.0
    %5564 = vmatpush1.msra.mxu0 %v5532
    %5565 = vmatprep.subr.mxu0 0.0
    %5566 = vmatpush1.msra.mxu0 %v5533
    %5567 = vmatprep.subr.mxu0 0.0
    %5568 = vmatpush1.msra.mxu0 %v5534
    %5569 = vmatprep.subr.mxu0 0.0
    %5570 = vmatpush1.msra.mxu0 %v5535
    %5571 = vmatprep.subr.mxu0 0.0
    %5572 = vmatpush1.msra.mxu0 %v5536
    %5573 = vmatprep.subr.mxu0 0.0
    %5574 = vmatpush1.msra.mxu0 %v5537
    %5575 = vmatprep.subr.mxu0 0.0
    %5576 = vmatpush1.msra.mxu0 %v5538
    %5577 = vmatprep.subr.mxu0 0.0
    %5578 = vmatpush1.msra.mxu0 %v5539
    %5579 = vmatprep.subr.mxu0 0.0
    %5580 = vmatpush1.msra.mxu0 0.0
    %5581 = vmatprep.subr.mxu0 0.0
    %5582 = vmatpush1.msra.mxu0 0.0
    %5583 = vmatprep.subr.mxu0 0.0
    %5584 = vmatpush1.msra.mxu0 0.0
    %5585 = vmatprep.subr.mxu0 0.0
    %5586 = vmatpush1.msra.mxu0 0.0
    %5587 = vmatprep.subr.mxu0 0.0
    %5588 = vmatpush1.msra.mxu0 0.0
    %5589 = vmatprep.subr.mxu0 0.0
    %5590 = vmatpush1.msra.mxu0 0.0
    %5591 = vmatprep.subr.mxu0 0.0
    %5592 = vmatpush1.msra.mxu0 0.0
    %5593 = vmatprep.subr.mxu0 0.0
    %5594 = vmatpush1.msra.mxu0 0.0
    %5595 = vmatprep.subr.mxu0 0.0
    %5596 = vmatpush1.msra.mxu0 0.0
    %5597 = vmatprep.subr.mxu0 0.0
    %5598 = vmatpush1.msra.mxu0 0.0
    %5599 = vmatprep.subr.mxu0 0.0
    %5600 = vmatpush1.msra.mxu0 0.0
    %5601 = vmatprep.subr.mxu0 0.0
    %5602 = vmatpush1.msra.mxu0 0.0
    %5603 = vmatprep.subr.mxu0 0.0
    %5604 = vmatpush1.msra.mxu0 0.0
    %5605 = vmatprep.subr.mxu0 0.0
    %5606 = vmatpush1.msra.mxu0 0.0
    %5607 = vmatprep.subr.mxu0 0.0
    %5608 = vmatpush1.msra.mxu0 0.0
    %5609 = vmatprep.subr.mxu0 0.0
    %5610 = vmatpush1.msra.mxu0 0.0
    %5611 = vmatprep.mubr.f32.mxu0 0.0
    %5612 = vmatmul.mubr.f32.gmra.mrb[0].mxu0 %v5523
    %v5613 = vpop.f32.mrb[0].mxu0
    %v5614 = vadd.f32 %v5545, %v5613
    %v5615 = vpop.f32.mrb[0].mxu0
    %5616 = vdwg.mxu0
    %vm5617 = vcmask 1024
    %5618 = vst.msk [vmem:[%s20] sm:$0x3] %vm5617, %v5614
    %v5619 = vld [vmem:[%s16] sm:$0xff]
    %v5620 = vld [vmem:[%s16 + $0x8] sm:$0xff]
    %v5621 = vld [vmem:[%s16 + $0x10] sm:$0xff]
    %v5622 = vld [vmem:[%s16 + $0x18] sm:$0xff]
    %v5623 = vld [vmem:[%s16 + $0x20] sm:$0xff]
    %v5624 = vld [vmem:[%s16 + $0x28] sm:$0xff]
    %v5625 = vld [vmem:[%s16 + $0x30] sm:$0xff]
    %v5626 = vld [vmem:[%s16 + $0x38] sm:$0xff]
    %v5627 = vld [vmem:[%s16 + $0x40] sm:$0xff]
    %v5628 = vld [vmem:[%s16 + $0x48] sm:$0xff]
    %v5629 = vld [vmem:[%s16 + $0x50] sm:$0xff]
    %v5630 = vld [vmem:[%s16 + $0x58] sm:$0xff]
    %v5631 = vld [vmem:[%s16 + $0x60] sm:$0xff]
    %v5632 = vld [vmem:[%s16 + $0x68] sm:$0xff]
    %v5633 = vld [vmem:[%s16 + $0x70] sm:$0xff]
    %v5634 = vld [vmem:[%s16 + $0x78] sm:$0xff]
    %v5635 = vld [vmem:[%s17] sm:$0x1]
    %v5637 = vlaneseq
    %v5638 = vshrl.u32 %v5637, 7
    %v5639 = vsub.s32 0, %v5638
    %v5640 = vrot.slane %v5635, %v5639
    %5642 = vmatprep.subr.mxu0 0.0
    %5643 = vmatpush1.msra.mxu0 %v5619
    %5644 = vmatprep.subr.mxu0 0.0
    %5645 = vmatpush1.msra.mxu0 %v5620
    %5646 = vmatprep.subr.mxu0 0.0
    %5647 = vmatpush1.msra.mxu0 %v5621
    %5648 = vmatprep.subr.mxu0 0.0
    %5649 = vmatpush1.msra.mxu0 %v5622
    %5650 = vmatprep.subr.mxu0 0.0
    %5651 = vmatpush1.msra.mxu0 %v5623
    %5652 = vmatprep.subr.mxu0 0.0
    %5653 = vmatpush1.msra.mxu0 %v5624
    %5654 = vmatprep.subr.mxu0 0.0
    %5655 = vmatpush1.msra.mxu0 %v5625
    %5656 = vmatprep.subr.mxu0 0.0
    %5657 = vmatpush1.msra.mxu0 %v5626
    %5658 = vmatprep.subr.mxu0 0.0
    %5659 = vmatpush1.msra.mxu0 %v5627
    %5660 = vmatprep.subr.mxu0 0.0
    %5661 = vmatpush1.msra.mxu0 %v5628
    %5662 = vmatprep.subr.mxu0 0.0
    %5663 = vmatpush1.msra.mxu0 %v5629
    %5664 = vmatprep.subr.mxu0 0.0
    %5665 = vmatpush1.msra.mxu0 %v5630
    %5666 = vmatprep.subr.mxu0 0.0
    %5667 = vmatpush1.msra.mxu0 %v5631
    %5668 = vmatprep.subr.mxu0 0.0
    %5669 = vmatpush1.msra.mxu0 %v5632
    %5670 = vmatprep.subr.mxu0 0.0
    %5671 = vmatpush1.msra.mxu0 %v5633
    %5672 = vmatprep.subr.mxu0 0.0
    %5673 = vmatpush1.msra.mxu0 %v5634
    %5674 = vmatprep.subr.mxu0 0.0
    %5675 = vmatpush1.msra.mxu0 0.0
    %5676 = vmatprep.subr.mxu0 0.0
    %5677 = vmatpush1.msra.mxu0 0.0
    %5678 = vmatprep.subr.mxu0 0.0
    %5679 = vmatpush1.msra.mxu0 0.0
    %5680 = vmatprep.subr.mxu0 0.0
    %5681 = vmatpush1.msra.mxu0 0.0
    %5682 = vmatprep.subr.mxu0 0.0
    %5683 = vmatpush1.msra.mxu0 0.0
    %5684 = vmatprep.subr.mxu0 0.0
    %5685 = vmatpush1.msra.mxu0 0.0
    %5686 = vmatprep.subr.mxu0 0.0
    %5687 = vmatpush1.msra.mxu0 0.0
    %5688 = vmatprep.subr.mxu0 0.0
    %5689 = vmatpush1.msra.mxu0 0.0
    %5690 = vmatprep.subr.mxu0 0.0
    %5691 = vmatpush1.msra.mxu0 0.0
    %5692 = vmatprep.subr.mxu0 0.0
    %5693 = vmatpush1.msra.mxu0 0.0
    %5694 = vmatprep.subr.mxu0 0.0
    %5695 = vmatpush1.msra.mxu0 0.0
    %5696 = vmatprep.subr.mxu0 0.0
    %5697 = vmatpush1.msra.mxu0 0.0
    %5698 = vmatprep.subr.mxu0 0.0
    %5699 = vmatpush1.msra.mxu0 0.0
    %5700 = vmatprep.subr.mxu0 0.0
    %5701 = vmatpush1.msra.mxu0 0.0
    %5702 = vmatprep.subr.mxu0 0.0
    %5703 = vmatpush1.msra.mxu0 0.0
    %5704 = vmatprep.subr.mxu0 0.0
    %5705 = vmatpush1.msra.mxu0 0.0
    %5706 = vmatprep.mubr.f32.mxu0 0.0
    %5707 = vmatmul.mubr.f32.gmra.mrb[0].mxu0 %v5523
    %v5708 = vpop.f32.mrb[0].mxu0
    %v5709 = vadd.f32 %v5640, %v5708
    %v5710 = vpop.f32.mrb[0].mxu0
    %5711 = vdwg.mxu0
    %vm5712 = vcmask 74752
    %v5713 = vsel %vm5712, %v5709, -inf
    %5714 = vmax.xlane.f32.xlu0 %v5713
    %v5715 = vpop.xlane.xlu0 %5714
    %v5716 = vsub.f32 %v5709, %v5715
    %v5717 = vmul.f32 %v5716, 1.442695
    %v5718 = vpow.pop %v5717
    %v5719 = vsel %vm5712, %v5718, 0.0
    %5720 = vadd.xlane.f32.xlu0 %v5719
    %v5721 = vpop.xlane.xlu0 %5720
    %v5722 = vrcp.pop %v5721
    %v5723 = vmul.f32 %v5718, %v5722
    %5724 = vst.msk [vmem:[#allocation3] sm:$0x3] %vm5712, %v5723
    %v5725 = vld [vmem:[%s18] sm:$0xff]
    %v5726 = vld [vmem:[%s18 + $0x8] sm:$0xff]
    %v5727 = vld [vmem:[%s18 + $0x10] sm:$0xff]
    %v5728 = vld [vmem:[%s18 + $0x18] sm:$0xff]
    %v5729 = vld [vmem:[%s18 + $0x20] sm:$0xff]
    %v5730 = vld [vmem:[%s18 + $0x28] sm:$0xff]
    %v5731 = vld [vmem:[%s18 + $0x30] sm:$0xff]
    %v5732 = vld [vmem:[%s18 + $0x38] sm:$0xff]
    %v5733 = vld [vmem:[%s18 + $0x40] sm:$0xff]
    %v5734 = vld [vmem:[%s18 + $0x48] sm:$0xff]
    %v5735 = vld [vmem:[%s18 + $0x50] sm:$0xff]
    %v5736 = vld [vmem:[%s18 + $0x58] sm:$0xff]
    %v5737 = vld [vmem:[%s18 + $0x60] sm:$0xff]
    %v5738 = vld [vmem:[%s18 + $0x68] sm:$0xff]
    %v5739 = vld [vmem:[%s18 + $0x70] sm:$0xff]
    %v5740 = vld [vmem:[%s18 + $0x78] sm:$0xff]
    %v5741 = vld [vmem:[%s19] sm:$0x1]
    %v5743 = vlaneseq
    %v5744 = vshrl.u32 %v5743, 7
    %v5745 = vsub.s32 0, %v5744
    %v5746 = vrot.slane %v5741, %v5745
    %5748 = vmatprep.subr.mxu0 0.0
    %5749 = vmatpush1.msra.mxu0 %v5725
    %5750 = vmatprep.subr.mxu0 0.0
    %5751 = vmatpush1.msra.mxu0 %v5726
    %5752 = vmatprep.subr.mxu0 0.0
    %5753 = vmatpush1.msra.mxu0 %v5727
    %5754 = vmatprep.subr.mxu0 0.0
    %5755 = vmatpush1.msra.mxu0 %v5728
    %5756 = vmatprep.subr.mxu0 0.0
    %5757 = vmatpush1.msra.mxu0 %v5729
    %5758 = vmatprep.subr.mxu0 0.0
    %5759 = vmatpush1.msra.mxu0 %v5730
    %5760 = vmatprep.subr.mxu0 0.0
    %5761 = vmatpush1.msra.mxu0 %v5731
    %5762 = vmatprep.subr.mxu0 0.0
    %5763 = vmatpush1.msra.mxu0 %v5732
    %5764 = vmatprep.subr.mxu0 0.0
    %5765 = vmatpush1.msra.mxu0 %v5733
    %5766 = vmatprep.subr.mxu0 0.0
    %5767 = vmatpush1.msra.mxu0 %v5734
    %5768 = vmatprep.subr.mxu0 0.0
    %5769 = vmatpush1.msra.mxu0 %v5735
    %5770 = vmatprep.subr.mxu0 0.0
    %5771 = vmatpush1.msra.mxu0 %v5736
    %5772 = vmatprep.subr.mxu0 0.0
    %5773 = vmatpush1.msra.mxu0 %v5737
    %5774 = vmatprep.subr.mxu0 0.0
    %5775 = vmatpush1.msra.mxu0 %v5738
    %5776 = vmatprep.subr.mxu0 0.0
    %5777 = vmatpush1.msra.mxu0 %v5739
    %5778 = vmatprep.subr.mxu0 0.0
    %5779 = vmatpush1.msra.mxu0 %v5740
    %5780 = vmatprep.subr.mxu0 0.0
    %5781 = vmatpush1.msra.mxu0 0.0
    %5782 = vmatprep.subr.mxu0 0.0
    %5783 = vmatpush1.msra.mxu0 0.0
    %5784 = vmatprep.subr.mxu0 0.0
    %5785 = vmatpush1.msra.mxu0 0.0
    %5786 = vmatprep.subr.mxu0 0.0
    %5787 = vmatpush1.msra.mxu0 0.0
    %5788 = vmatprep.subr.mxu0 0.0
    %5789 = vmatpush1.msra.mxu0 0.0
    %5790 = vmatprep.subr.mxu0 0.0
    %5791 = vmatpush1.msra.mxu0 0.0
    %5792 = vmatprep.subr.mxu0 0.0
    %5793 = vmatpush1.msra.mxu0 0.0
    %5794 = vmatprep.subr.mxu0 0.0
    %5795 = vmatpush1.msra.mxu0 0.0
    %5796 = vmatprep.subr.mxu0 0.0
    %5797 = vmatpush1.msra.mxu0 0.0
    %5798 = vmatprep.subr.mxu0 0.0
    %5799 = vmatpush1.msra.mxu0 0.0
    %5800 = vmatprep.subr.mxu0 0.0
    %5801 = vmatpush1.msra.mxu0 0.0
    %5802 = vmatprep.subr.mxu0 0.0
    %5803 = vmatpush1.msra.mxu0 0.0
    %5804 = vmatprep.subr.mxu0 0.0
    %5805 = vmatpush1.msra.mxu0 0.0
    %5806 = vmatprep.subr.mxu0 0.0
    %5807 = vmatpush1.msra.mxu0 0.0
    %5808 = vmatprep.subr.mxu0 0.0
    %5809 = vmatpush1.msra.mxu0 0.0
    %5810 = vmatprep.subr.mxu0 0.0
    %5811 = vmatpush1.msra.mxu0 0.0
    %5812 = vmatprep.mubr.f32.mxu0 0.0
    %5813 = vmatmul.mubr.f32.gmra.mrb[0].mxu0 %v5523
    %v5814 = vpop.f32.mrb[0].mxu0
    %v5815 = vadd.f32 %v5746, %v5814
    %v5816 = vpop.f32.mrb[0].mxu0
    %5817 = vdwg.mxu0
    %vm5818 = vcmask 9216
    %5819 = vst.msk [vmem:[#allocation5] sm:$0x3] %vm5818, %v5815
    // Predicated region
    $region82: #{discriminator_forward.1} parent=1 // pred_check
      _
    $region83: #{discriminator_forward.1} parent=1 // pred_check_branch
      %5821 = sbr.rel (0) target = $region85
    $region84: #{discriminator_forward.1} parent=1 // pred_region
      _
    $region85: #{discriminator_forward.1} parent=1 // pred_fallthru
      _
    // Predicated region
    $region86: #{discriminator_forward.1} parent=1 // pred_check
      _
    $region87: #{discriminator_forward.1} parent=1 // pred_check_branch
      %5823 = sbr.rel (0) target = $region89
    $region88: #{discriminator_forward.1} parent=1 // pred_region
      %s5825 = ssub.s32 32, 32
      %5826 = vsyncadd [#allocation4], %s5825
      %s5828 = sshll.u32 [#allocation3], 4
      %s5829 = int_to_ptr.vmem [resolvable:$true] %s5828
      %5831 = dma.vmem_to_hbm [thread:$0]  %s5829, 32, %s21, [#allocation4]
    $region89: #{discriminator_forward.1} parent=1 // pred_fallthru
      _
    // Predicated region
    $region90: #{discriminator_forward.1} parent=1 // pred_check
      _
    $region91: #{discriminator_forward.1} parent=1 // pred_check_branch
      %5833 = sbr.rel (0) target = $region93
    $region92: #{discriminator_forward.1} parent=1 // pred_region
      %s5835 = ssub.s32 32, 32
      %5836 = vsyncadd [#allocation6], %s5835
      %s5838 = sshll.u32 [#allocation5], 4
      %s5839 = int_to_ptr.vmem [resolvable:$true] %s5838
      %5841 = dma.vmem_to_hbm [thread:$0]  %s5839, 32, %s22, [#allocation6]
    $region93: #{discriminator_forward.1} parent=1 // pred_fallthru
      _
    // Predicated region
    $region94: #{discriminator_forward.1} parent=1 // pred_check
      _
    $region95: #{discriminator_forward.1} parent=1 // pred_check_branch
      %5843 = sbr.rel (0) target = $region97
    $region96: #{discriminator_forward.1} parent=1 // pred_region
      _
    $region97: #{discriminator_forward.1} parent=1 // pred_fallthru
      _
    // Predicated region
    $region98: #{discriminator_forward.1} parent=1 // pred_check
      _
    $region99: #{discriminator_forward.1} parent=1 // pred_check_branch
      %5845 = sbr.rel (0) target = $region101
    $region100: #{discriminator_forward.1} parent=1 // pred_region
      %5846 = dma.done [#allocation4], 32
    $region101: #{discriminator_forward.1} parent=1 // pred_fallthru
      _
    // Predicated region
    $region102: #{discriminator_forward.1} parent=1 // pred_check
      _
    $region103: #{discriminator_forward.1} parent=1 // pred_check_branch
      %5848 = sbr.rel (0) target = $region105
    $region104: #{discriminator_forward.1} parent=1 // pred_region
      %5849 = dma.done [#allocation6], 32
    $region105: #{discriminator_forward.1} parent=1 // pred_fallthru
      _
    %5850 = vsyncpa [#allocation4], 1
    %5851 = vsyncpa [#allocation6], 1

</llo_original>
